<compile_context>
chip_gen: v7x
topology: tpu7x:2x2x1
jax: 0.10.0
libtpu: 0.0.40
codegen_flags: <defaults>
</compile_context>

<pallas_src>
import math

import jax
import jax.numpy as jnp
from jax import lax
from jax.experimental import pallas as pl
from jax.experimental.pallas import tpu as pltpu

DIM = 16                              # trunk channel width
NPATHS = DIM                          # parallel dilated 1->1 conv paths
NDIL = NPATHS // 2                    # 8 distinct dilations: 1,2,4,...,128
PKERN = 33                            # kernel size of the parallel paths
MAX_DIL = 2 ** (NDIL - 1)             # 128
PAD_P = MAX_DIL * (PKERN - 1)         # 4096 : halo for the largest-dilation path
PAD4 = 4 * (33 - 1)                   # 128  : halo for the d=4, K=33 convs
PADB = 4 * (129 - 1)                  # 512  : halo for the d=4, K=129 conv
LN_EPS = 1e-5                         # torch.nn.LayerNorm default
ACT_DT = jnp.bfloat16                 # activation / conv-weight dtype for the MXU


def make_kernel(L, lch):
    """Builds the fused forward kernel for sequence length L, chunk width lch."""
    nch = L // lch
    assert nch * lch == L

    def kernel(x_ref, pw_ref, pb_ref,
               wnp_ref, wnt_ref, bn_ref,
               wup_ref, wut_ref, bu_ref,
               wvp_ref, wvt_ref, bv_ref,
               wwp_ref, wwt_ref, bw_ref,
               wbp_ref, wbt_ref, bb_ref,
               wo_ref, bo_ref,
               o_ref,
               xp_ref, a0_ref, a1_ref, a2_ref, a5_ref, os_ref):

        # -- causal zero halos.  Re-zeroed every grid step: scratch is per-core,
        #    so gating on program_id==0 would be wrong under megacore grid
        #    partitioning; the cost is only ~40 vector stores per batch element.
        xp_ref[:, :PAD_P] = jnp.zeros((1, PAD_P), jnp.float32)
        a0_ref[:, :PAD4] = jnp.zeros((DIM, PAD4), ACT_DT)
        a1_ref[:, :PAD4] = jnp.zeros((DIM, PAD4), ACT_DT)
        a2_ref[:, :PAD4] = jnp.zeros((DIM, PAD4), ACT_DT)
        a5_ref[:, :PADB] = jnp.zeros((DIM, PADB), ACT_DT)

        # -- raw input into its padded scratch (lane-dense copy).
        xp_ref[:, PAD_P:] = x_ref[0]

        def each_chunk(stage_fn):
            # Runs stage_fn(off) for every lch-wide chunk of the sequence so the
            # live f32 accumulator stays bounded (no vreg spills at long L).
            if nch == 1:
                stage_fn(0)
            else:
                def body(c, carry):
                    off = c * lch
                    if lch % 128 == 0:
                        off = pl.multiple_of(off, 128)
                    stage_fn(off)
                    return carry
                lax.fori_loop(0, nch, body, 0)

        # ---- stage 1: 16 parallel dilated causal 1->1 convs + ReLU ------------
        # Channels are produced in "dilation-grouped" order (rows 0..7 = one path
        # per dilation 2**g, rows 8..15 = the second path of each dilation); the
        # relabeling is folded into every downstream weight in the wrapper.
        def stage1(off):
            pw = pw_ref[...]                                   # (16, 33) f32
            pb = pb_ref[...]                                   # (16, 1)  f32
            acc_lo = jnp.zeros((NDIL, lch), jnp.float32)
            acc_hi = jnp.zeros((NDIL, lch), jnp.float32)
            for k in range(PKERN):                             # static unroll
                rows = []
                for g in range(NDIL):
                    d = 1 << g
                    start = PAD_P + off - (PKERN - 1 - k) * d
                    rows.append(xp_ref[:, pl.ds(start, lch)])  # (1, lch)
                x8 = jnp.concatenate(rows, axis=0)             # (8, lch), full vreg
                acc_lo = acc_lo + x8 * pw[:NDIL, k:k + 1]
                acc_hi = acc_hi + x8 * pw[NDIL:, k:k + 1]
            y = jnp.concatenate([acc_lo, acc_hi], axis=0) + pb
            a0_ref[:, pl.ds(PAD4 + off, lch)] = jnp.maximum(y, 0.0).astype(ACT_DT)

        each_chunk(stage1)

        # ---- packed causal conv 16->16: (K-1)//8 MXU dots with a 128-wide
        #      contraction (8 taps x 16 channels) + one 16-wide tail-tap dot ----
        def cconv(src_ref, pad, wp_ref, wt_ref, b_ref, ksize, off):
            dil = 4
            ngrp = (ksize - 1) // 8
            base = pad + off - (ksize - 1) * dil
            acc = jnp.zeros((DIM, lch), jnp.float32)
            for g in range(ngrp):                              # static unroll
                taps = [src_ref[:, pl.ds(base + (8 * g + t) * dil, lch)]
                        for t in range(8)]
                xg = jnp.concatenate(taps, axis=0)             # (128, lch) bf16
                acc = acc + jnp.dot(wp_ref[g], xg,
                                    preferred_element_type=jnp.float32)
            xt = src_ref[:, pl.ds(pad + off, lch)]             # tail tap (k = K-1)
            acc = acc + jnp.dot(wt_ref[...], xt,
                                preferred_element_type=jnp.float32)
            return acc + b_ref[...]                            # (16, lch) f32

        def relu_store(dst_ref, off, val):
            dst_ref[:, pl.ds(PAD4 + off, lch)] = jnp.maximum(val, 0.0).astype(ACT_DT)

        # TODO(synk): s5.S5 / s5b / s5c come from an external `s5` package whose
        # definition is not provided; they are treated as identity passthroughs.

        each_chunk(lambda off: relu_store(
            a1_ref, off, cconv(a0_ref, PAD4, wnp_ref, wnt_ref, bn_ref, 33, off)))
        each_chunk(lambda off: relu_store(
            a2_ref, off, cconv(a1_ref, PAD4, wup_ref, wut_ref, bu_ref, 33, off)))
        # conv_v writes back into a1 (conv_n's output is dead): scratch reuse.
        each_chunk(lambda off: relu_store(
            a1_ref, off, cconv(a2_ref, PAD4, wvp_ref, wvt_ref, bv_ref, 33, off)))

        # ---- conv_w -> LayerNorm(channels) -> ReLU -> + parallel-conv residual -
        def stage5(off):
            a4 = cconv(a1_ref, PAD4, wwp_ref, wwt_ref, bw_ref, 33, off)
            mean = jnp.mean(a4, axis=0, keepdims=True)
            var = jnp.mean(jnp.square(a4 - mean), axis=0, keepdims=True)
            ln = (a4 - mean) * lax.rsqrt(var + LN_EPS)
            res = a0_ref[:, pl.ds(PAD4 + off, lch)].astype(jnp.float32)
            r2 = jnp.maximum(ln, 0.0) + res
            a5_ref[:, pl.ds(PADB + off, lch)] = r2.astype(ACT_DT)

        each_chunk(stage5)

        # ---- K=129 d=4 conv -> ReLU -> + residual -> final 1x1 conv (MXU dot) --
        def stage6(off):
            y = cconv(a5_ref, PADB, wbp_ref, wbt_ref, bb_ref, 129, off)
            r2 = a5_ref[:, pl.ds(PADB + off, lch)].astype(jnp.float32)
            y = jnp.maximum(y, 0.0) + r2
            out = jnp.dot(wo_ref[...], y,
                          preferred_element_type=jnp.float32) + bo_ref[...]
            os_ref[:, pl.ds(off, lch)] = out                   # (1, lch)

        each_chunk(stage6)

        o_ref[0] = os_ref[...]                                 # lane-dense (1, L)

    return kernel


def _chunk_len(L):
    for c in (512, 256, 128):
        if L % c == 0:
            return c
    return L


def seq2seq_forward(x, params):
    """x: (B, L, 1) float32 -> (B, L, 1) float32."""
    B, L, _ = x.shape
    lch = _chunk_len(L)

    xl = jnp.transpose(x, (0, 2, 1)).astype(jnp.float32)       # (B, 1, L)

    # Global channel relabeling to dilation-grouped order (exact; wrapper-only).
    perm = jnp.array([0, 2, 4, 6, 8, 10, 12, 14,
                      1, 3, 5, 7, 9, 11, 13, 15], dtype=jnp.int32)

    def conj(w):                          # permute both channel axes of (K,Co,Ci)
        return w[:, perm][:, :, perm]

    def pack(w):                          # (K,16,16) -> (K//8,16,128) + (16,16) bf16
        K = w.shape[0]
        ng = (K - 1) // 8
        wp = (w[:K - 1].reshape(ng, 8, DIM, DIM)
              .transpose(0, 2, 1, 3).reshape(ng, DIM, 8 * DIM))
        return wp.astype(ACT_DT), w[K - 1].astype(ACT_DT)

    pwg = params["pw"][perm].astype(jnp.float32)               # (16, 33)
    pbg = params["pb"][perm].astype(jnp.float32)               # (16, 1)

    conv_args = []
    for name in ("n", "u", "v", "w", "b"):
        wp, wt = pack(conj(params[f"w_{name}"]))
        conv_args += [wp, wt, params[f"b_{name}"][perm]]

    wo = params["w_o"][:, perm]                                # (1, 16)
    bo = params["b_o"]                                         # (1, 1)

    def cspec(a):
        if a.ndim == 2:
            return pl.BlockSpec(a.shape, lambda b: (0, 0))
        return pl.BlockSpec(a.shape, lambda b: (0, 0, 0))

    weight_ops = (pwg, pbg, *conv_args, wo, bo)

    # VMEM budget: scratch + double-buffered I/O blocks + weights, with headroom.
    est = (4 * (PAD_P + L)                     # xp (f32)
           + 3 * 2 * DIM * (PAD4 + L)          # a0, a1, a2 (bf16)
           + 2 * DIM * (PADB + L)              # a5 (bf16)
           + 4 * L                             # output staging scratch (f32)
           + 4 * 4 * L                         # x / out blocks, double-buffered
           + (1 << 20))                        # weights incl. lane padding
    vmem_limit = int(min(max(3 * est // 2, 32 << 20), 56 << 20))

    out = pl.pallas_call(
        make_kernel(L, lch),
        out_shape=jax.ShapeDtypeStruct((B, 1, L), jnp.float32),
        grid_spec=pltpu.PrefetchScalarGridSpec(
            num_scalar_prefetch=0,
            grid=(B,),
            in_specs=[pl.BlockSpec((1, 1, L), lambda b: (b, 0, 0))]
                     + [cspec(a) for a in weight_ops],
            out_specs=pl.BlockSpec((1, 1, L), lambda b: (b, 0, 0)),
            scratch_shapes=[
                pltpu.VMEM((1, PAD_P + L), jnp.float32),       # padded raw input
                pltpu.VMEM((DIM, PAD4 + L), ACT_DT),           # a0 (residual 1)
                pltpu.VMEM((DIM, PAD4 + L), ACT_DT),           # a1 (ping)
                pltpu.VMEM((DIM, PAD4 + L), ACT_DT),           # a2 (pong)
                pltpu.VMEM((DIM, PADB + L), ACT_DT),           # a5 (residual 2)
                pltpu.VMEM((1, L), jnp.float32),               # output staging
            ],
        ),
        compiler_params=pltpu.CompilerParams(
            dimension_semantics=("parallel",),                 # megacore over B
            vmem_limit_bytes=vmem_limit,
        ),
    )(xl, *weight_ops)

    return jnp.transpose(out, (0, 2, 1))                       # (B, L, 1)


# ---------------------------------------------------------------------------
# Parameters (deterministic, torch-Conv1d-like uniform init).
# Conv weights are stored as (K, Cout, Cin) == torch weight (Cout, Cin, K)
# transposed; biases as (C, 1) columns; the final 1x1 conv as (1, 16).
# ---------------------------------------------------------------------------
def init_params(key):
    ks = jax.random.split(key, 14)

    def u(k, shape, fan_in):
        bound = 1.0 / math.sqrt(fan_in)
        return jax.random.uniform(k, shape, jnp.float32, -bound, bound)

    p = {}
    p["pw"] = u(ks[0], (NPATHS, PKERN), PKERN)                 # Conv1d(1,1,33) x16
    p["pb"] = u(ks[1], (NPATHS, 1), PKERN)
    for i, name in enumerate(("n", "u", "v", "w")):            # Conv1d(16,16,33,d=4)
        p[f"w_{name}"] = u(ks[2 + 2 * i], (33, DIM, DIM), DIM * 33)
        p[f"b_{name}"] = u(ks[3 + 2 * i], (DIM, 1), DIM * 33)
    p["w_b"] = u(ks[10], (129, DIM, DIM), DIM * 129)           # Conv1d(16,16,129,d=4)
    p["b_b"] = u(ks[11], (DIM, 1), DIM * 129)
    p["w_o"] = u(ks[12], (1, DIM), DIM)                        # Conv1d(16,1,1)
    p["b_o"] = u(ks[13], (1, 1), DIM)
    return p


def reference_forward(x, p):
    """Pure-JAX f32 reference mirroring the PyTorch forward (S5 = identity)."""
    hi = lax.Precision.HIGHEST
    xc = jnp.transpose(x, (0, 2, 1))                           # (B, 1, L)
    Lr = xc.shape[-1]

    def causal_conv(h, w, b, dil):                             # w: (K, Cout, Cin)
        K = w.shape[0]
        hp = jnp.pad(h, ((0, 0), (0, 0), (dil * (K - 1), 0)))
        out = jnp.zeros((h.shape[0], w.shape[1], Lr), jnp.float32)
        for k in range(K):
            seg = hp[:, :, k * dil: k * dil + Lr]
            out = out + jnp.einsum("oc,bcl->bol", w[k], seg, precision=hi)
        return out + b[None]

    paths = []
    for pth in range(NPATHS):
        d = 2 ** (pth // 2)
        w = p["pw"][pth].reshape(PKERN, 1, 1)
        b = p["pb"][pth].reshape(1, 1)
        paths.append(jax.nn.relu(causal_conv(xc, w, b, d)))
    a0 = jnp.concatenate(paths, axis=1)                        # (B, 16, L)

    h = jax.nn.relu(causal_conv(a0, p["w_n"], p["b_n"], 4))
    h = jax.nn.relu(causal_conv(h, p["w_u"], p["b_u"], 4))
    h = jax.nn.relu(causal_conv(h, p["w_v"], p["b_v"], 4))
    h = causal_conv(h, p["w_w"], p["b_w"], 4)
    mean = jnp.mean(h, axis=1, keepdims=True)
    var = jnp.mean(jnp.square(h - mean), axis=1, keepdims=True)
    h = (h - mean) / jnp.sqrt(var + LN_EPS)
    h = jax.nn.relu(h) + a0
    res2 = h
    h = causal_conv(h, p["w_b"], p["b_b"], 4)
    h = jax.nn.relu(h) + res2
    out = jnp.einsum("oc,bcl->bol", p["w_o"], h, precision=hi) + p["b_o"][None]
    return jnp.transpose(out, (0, 2, 1))


if __name__ == "__main__":
    B, L = 2, 128
    key = jax.random.PRNGKey(0)
    kx, kp = jax.random.split(key)
    x = jax.random.normal(kx, (B, L, 1), dtype=jnp.float32)
    params = init_params(kp)

    fwd = jax.jit(seq2seq_forward)
    y = fwd(x, params)
    jax.block_until_ready(y)

    assert y.shape == (B, L, 1), y.shape
    assert bool(jnp.all(jnp.isfinite(y)))

    # Sanity check of the bf16-MXU kernel against a pure-JAX f32 reference
    # (loose tolerance accounts for the bf16 activation/weight path).
    y_ref = jax.jit(reference_forward)(x, params)
    max_err = float(jnp.max(jnp.abs(y - y_ref)))
    assert max_err < 0.15, f"max abs error vs f32 reference: {max_err}"

    print("KERNEL_OK")
</pallas_src>

<mosaic_0001>
module attributes {stable_mosaic.version = 11 : i64} {
  func.func @kernel(%arg0: i32, %arg1: memref<1x1x128xf32, #tpu.memory_space<vmem>>, %arg2: memref<16x33xf32, #tpu.memory_space<vmem>>, %arg3: memref<16x1xf32, #tpu.memory_space<vmem>>, %arg4: memref<4x16x128xbf16, #tpu.memory_space<vmem>>, %arg5: memref<16x16xbf16, #tpu.memory_space<vmem>>, %arg6: memref<16x1xf32, #tpu.memory_space<vmem>>, %arg7: memref<4x16x128xbf16, #tpu.memory_space<vmem>>, %arg8: memref<16x16xbf16, #tpu.memory_space<vmem>>, %arg9: memref<16x1xf32, #tpu.memory_space<vmem>>, %arg10: memref<4x16x128xbf16, #tpu.memory_space<vmem>>, %arg11: memref<16x16xbf16, #tpu.memory_space<vmem>>, %arg12: memref<16x1xf32, #tpu.memory_space<vmem>>, %arg13: memref<4x16x128xbf16, #tpu.memory_space<vmem>>, %arg14: memref<16x16xbf16, #tpu.memory_space<vmem>>, %arg15: memref<16x1xf32, #tpu.memory_space<vmem>>, %arg16: memref<16x16x128xbf16, #tpu.memory_space<vmem>>, %arg17: memref<16x16xbf16, #tpu.memory_space<vmem>>, %arg18: memref<16x1xf32, #tpu.memory_space<vmem>>, %arg19: memref<1x16xf32, #tpu.memory_space<vmem>>, %arg20: memref<1x1xf32, #tpu.memory_space<vmem>>, %arg21: memref<1x1x128xf32, #tpu.memory_space<vmem>>, %arg22: memref<1x4224xf32, #tpu.memory_space<vmem>>, %arg23: memref<16x256xbf16, #tpu.memory_space<vmem>>, %arg24: memref<16x256xbf16, #tpu.memory_space<vmem>>, %arg25: memref<16x256xbf16, #tpu.memory_space<vmem>>, %arg26: memref<16x640xbf16, #tpu.memory_space<vmem>>, %arg27: memref<1x128xf32, #tpu.memory_space<vmem>>) attributes {dimension_semantics = [#tpu.dimension_semantics<parallel>], iteration_bounds = array<i64: 2>, scalar_prefetch = 0 : i64, scratch_operands = 6 : i64, tpu.core_type = #tpu.core_type<tc>, window_params = [{transform_indices = @transform_0, window_bounds = array<i64: 1, 1, 128>}, {pipeline_mode = #tpu.pipeline_mode<synchronous>, transform_indices = @transform_1, window_bounds = array<i64: 16, 33>}, {pipeline_mode = #tpu.pipeline_mode<synchronous>, transform_indices = @transform_2, window_bounds = array<i64: 16, 1>}, {pipeline_mode = #tpu.pipeline_mode<synchronous>, transform_indices = @transform_3, window_bounds = array<i64: 4, 16, 128>}, {pipeline_mode = #tpu.pipeline_mode<synchronous>, transform_indices = @transform_4, window_bounds = array<i64: 16, 16>}, {pipeline_mode = #tpu.pipeline_mode<synchronous>, transform_indices = @transform_5, window_bounds = array<i64: 16, 1>}, {pipeline_mode = #tpu.pipeline_mode<synchronous>, transform_indices = @transform_6, window_bounds = array<i64: 4, 16, 128>}, {pipeline_mode = #tpu.pipeline_mode<synchronous>, transform_indices = @transform_7, window_bounds = array<i64: 16, 16>}, {pipeline_mode = #tpu.pipeline_mode<synchronous>, transform_indices = @transform_8, window_bounds = array<i64: 16, 1>}, {pipeline_mode = #tpu.pipeline_mode<synchronous>, transform_indices = @transform_9, window_bounds = array<i64: 4, 16, 128>}, {pipeline_mode = #tpu.pipeline_mode<synchronous>, transform_indices = @transform_10, window_bounds = array<i64: 16, 16>}, {pipeline_mode = #tpu.pipeline_mode<synchronous>, transform_indices = @transform_11, window_bounds = array<i64: 16, 1>}, {pipeline_mode = #tpu.pipeline_mode<synchronous>, transform_indices = @transform_12, window_bounds = array<i64: 4, 16, 128>}, {pipeline_mode = #tpu.pipeline_mode<synchronous>, transform_indices = @transform_13, window_bounds = array<i64: 16, 16>}, {pipeline_mode = #tpu.pipeline_mode<synchronous>, transform_indices = @transform_14, window_bounds = array<i64: 16, 1>}, {pipeline_mode = #tpu.pipeline_mode<synchronous>, transform_indices = @transform_15, window_bounds = array<i64: 16, 16, 128>}, {pipeline_mode = #tpu.pipeline_mode<synchronous>, transform_indices = @transform_16, window_bounds = array<i64: 16, 16>}, {pipeline_mode = #tpu.pipeline_mode<synchronous>, transform_indices = @transform_17, window_bounds = array<i64: 16, 1>}, {pipeline_mode = #tpu.pipeline_mode<synchronous>, transform_indices = @transform_18, window_bounds = array<i64: 1, 16>}, {pipeline_mode = #tpu.pipeline_mode<synchronous>, transform_indices = @transform_19, window_bounds = array<i64: 1, 1>}, {transform_indices = @transform_20, window_bounds = array<i64: 1, 1, 128>}]} {
    %cst = arith.constant 0.000000e+00 : f32
    %0 = vector.broadcast %cst : f32 to vector<1x4096xf32>
    %c0 = arith.constant 0 : index
    %c0_0 = arith.constant 0 : index
    %1 = vector.load %arg22[%c0, %c0_0] : memref<1x4224xf32, #tpu.memory_space<vmem>>, vector<1x4096xf32>
    tpu.vector_store %arg22[%c0, %c0_0], %0 {strides = array<i32>} : memref<1x4224xf32, #tpu.memory_space<vmem>>, vector<1x4096xf32>,
    %cst_1 = arith.constant 0.000000e+00 : bf16
    %2 = vector.broadcast %cst_1 : bf16 to vector<16x128xbf16>
    %c0_2 = arith.constant 0 : index
    %c0_3 = arith.constant 0 : index
    %3 = vector.load %arg23[%c0_2, %c0_3] : memref<16x256xbf16, #tpu.memory_space<vmem>>, vector<16x128xbf16>
    tpu.vector_store %arg23[%c0_2, %c0_3], %2 {strides = array<i32>} : memref<16x256xbf16, #tpu.memory_space<vmem>>, vector<16x128xbf16>,
    %cst_4 = arith.constant 0.000000e+00 : bf16
    %4 = vector.broadcast %cst_4 : bf16 to vector<16x128xbf16>
    %c0_5 = arith.constant 0 : index
    %c0_6 = arith.constant 0 : index
    %5 = vector.load %arg24[%c0_5, %c0_6] : memref<16x256xbf16, #tpu.memory_space<vmem>>, vector<16x128xbf16>
    tpu.vector_store %arg24[%c0_5, %c0_6], %4 {strides = array<i32>} : memref<16x256xbf16, #tpu.memory_space<vmem>>, vector<16x128xbf16>,
    %cst_7 = arith.constant 0.000000e+00 : bf16
    %6 = vector.broadcast %cst_7 : bf16 to vector<16x128xbf16>
    %c0_8 = arith.constant 0 : index
    %c0_9 = arith.constant 0 : index
    %7 = vector.load %arg25[%c0_8, %c0_9] : memref<16x256xbf16, #tpu.memory_space<vmem>>, vector<16x128xbf16>
    tpu.vector_store %arg25[%c0_8, %c0_9], %6 {strides = array<i32>} : memref<16x256xbf16, #tpu.memory_space<vmem>>, vector<16x128xbf16>,
    %cst_10 = arith.constant 0.000000e+00 : bf16
    %8 = vector.broadcast %cst_10 : bf16 to vector<16x512xbf16>
    %c0_11 = arith.constant 0 : index
    %c0_12 = arith.constant 0 : index
    %9 = vector.load %arg26[%c0_11, %c0_12] : memref<16x640xbf16, #tpu.memory_space<vmem>>, vector<16x512xbf16>
    tpu.vector_store %arg26[%c0_11, %c0_12], %8 {strides = array<i32>} : memref<16x640xbf16, #tpu.memory_space<vmem>>, vector<16x512xbf16>,
    %c0_13 = arith.constant 0 : index
    %c0_14 = arith.constant 0 : index
    %c0_15 = arith.constant 0 : index
    %10 = vector.load %arg1[%c0_13, %c0_14, %c0_15] : memref<1x1x128xf32, #tpu.memory_space<vmem>>, vector<1x1x128xf32>
    %11 = vector.shape_cast %10 : vector<1x1x128xf32> to vector<1x128xf32>
    %c0_16 = arith.constant 0 : index
    %c4096 = arith.constant 4096 : index
    %12 = vector.load %arg22[%c0_16, %c4096] : memref<1x4224xf32, #tpu.memory_space<vmem>>, vector<1x128xf32>
    tpu.vector_store %arg22[%c0_16, %c4096], %11 {strides = array<i32>} : memref<1x4224xf32, #tpu.memory_space<vmem>>, vector<1x128xf32>,
    %c0_17 = arith.constant 0 : index
    %c0_18 = arith.constant 0 : index
    %13 = vector.load %arg2[%c0_17, %c0_18] : memref<16x33xf32, #tpu.memory_space<vmem>>, vector<16x33xf32>
    %c0_19 = arith.constant 0 : index
    %c0_20 = arith.constant 0 : index
    %14 = vector.load %arg3[%c0_19, %c0_20] : memref<16x1xf32, #tpu.memory_space<vmem>>, vector<16x1xf32>
    %cst_21 = arith.constant 0.000000e+00 : f32
    %15 = vector.broadcast %cst_21 : f32 to vector<8x128xf32>
    %cst_22 = arith.constant 0.000000e+00 : f32
    %16 = vector.broadcast %cst_22 : f32 to vector<8x128xf32>
    %c0_23 = arith.constant 0 : index
    %c4064 = arith.constant 4064 : index
    %17 = vector.load %arg22[%c0_23, %c4064] : memref<1x4224xf32, #tpu.memory_space<vmem>>, vector<1x128xf32>
    %c0_24 = arith.constant 0 : index
    %c4032 = arith.constant 4032 : index
    %18 = vector.load %arg22[%c0_24, %c4032] : memref<1x4224xf32, #tpu.memory_space<vmem>>, vector<1x128xf32>
    %c0_25 = arith.constant 0 : index
    %c3968 = arith.constant 3968 : index
    %19 = vector.load %arg22[%c0_25, %c3968] : memref<1x4224xf32, #tpu.memory_space<vmem>>, vector<1x128xf32>
    %c0_26 = arith.constant 0 : index
    %c3840 = arith.constant 3840 : index
    %20 = vector.load %arg22[%c0_26, %c3840] : memref<1x4224xf32, #tpu.memory_space<vmem>>, vector<1x128xf32>
    %c0_27 = arith.constant 0 : index
    %c3584 = arith.constant 3584 : index
    %21 = vector.load %arg22[%c0_27, %c3584] : memref<1x4224xf32, #tpu.memory_space<vmem>>, vector<1x128xf32>
    %c0_28 = arith.constant 0 : index
    %c3072 = arith.constant 3072 : index
    %22 = vector.load %arg22[%c0_28, %c3072] : memref<1x4224xf32, #tpu.memory_space<vmem>>, vector<1x128xf32>
    %c0_29 = arith.constant 0 : index
    %c2048 = arith.constant 2048 : index
    %23 = vector.load %arg22[%c0_29, %c2048] : memref<1x4224xf32, #tpu.memory_space<vmem>>, vector<1x128xf32>
    %c0_30 = arith.constant 0 : index
    %c0_31 = arith.constant 0 : index
    %24 = vector.load %arg22[%c0_30, %c0_31] : memref<1x4224xf32, #tpu.memory_space<vmem>>, vector<1x128xf32>
    %25 = tpu.concatenate %17, %18, %19, %20, %21, %22, %23, %24 in 0 : vector<1x128xf32>, vector<1x128xf32>, vector<1x128xf32>, vector<1x128xf32>, vector<1x128xf32>, vector<1x128xf32>, vector<1x128xf32>, vector<1x128xf32> -> vector<8x128xf32>
    %26 = vector.extract_strided_slice %13 {offsets = [0, 0], sizes = [8, 1], strides = [1, 1]} : vector<16x33xf32> to vector<8x1xf32>
    %27 = vector.broadcast %26 : vector<8x1xf32> to vector<8x128xf32>
    %28 = arith.mulf %25, %27 : vector<8x128xf32>
    %29 = arith.addf %15, %28 : vector<8x128xf32>
    %30 = vector.extract_strided_slice %13 {offsets = [8, 0], sizes = [8, 1], strides = [1, 1]} : vector<16x33xf32> to vector<8x1xf32>
    %31 = vector.broadcast %30 : vector<8x1xf32> to vector<8x128xf32>
    %32 = arith.mulf %25, %31 : vector<8x128xf32>
    %33 = arith.addf %16, %32 : vector<8x128xf32>
    %c0_32 = arith.constant 0 : index
    %c4065 = arith.constant 4065 : index
    %34 = vector.load %arg22[%c0_32, %c4065] : memref<1x4224xf32, #tpu.memory_space<vmem>>, vector<1x128xf32>
    %c0_33 = arith.constant 0 : index
    %c4034 = arith.constant 4034 : index
    %35 = vector.load %arg22[%c0_33, %c4034] : memref<1x4224xf32, #tpu.memory_space<vmem>>, vector<1x128xf32>
    %c0_34 = arith.constant 0 : index
    %c3972 = arith.constant 3972 : index
    %36 = vector.load %arg22[%c0_34, %c3972] : memref<1x4224xf32, #tpu.memory_space<vmem>>, vector<1x128xf32>
    %c0_35 = arith.constant 0 : index
    %c3848 = arith.constant 3848 : index
    %37 = vector.load %arg22[%c0_35, %c3848] : memref<1x4224xf32, #tpu.memory_space<vmem>>, vector<1x128xf32>
    %c0_36 = arith.constant 0 : index
    %c3600 = arith.constant 3600 : index
    %38 = vector.load %arg22[%c0_36, %c3600] : memref<1x4224xf32, #tpu.memory_space<vmem>>, vector<1x128xf32>
    %c0_37 = arith.constant 0 : index
    %c3104 = arith.constant 3104 : index
    %39 = vector.load %arg22[%c0_37, %c3104] : memref<1x4224xf32, #tpu.memory_space<vmem>>, vector<1x128xf32>
    %c0_38 = arith.constant 0 : index
    %c2112 = arith.constant 2112 : index
    %40 = vector.load %arg22[%c0_38, %c2112] : memref<1x4224xf32, #tpu.memory_space<vmem>>, vector<1x128xf32>
    %c0_39 = arith.constant 0 : index
    %c128 = arith.constant 128 : index
    %41 = vector.load %arg22[%c0_39, %c128] : memref<1x4224xf32, #tpu.memory_space<vmem>>, vector<1x128xf32>
    %42 = tpu.concatenate %34, %35, %36, %37, %38, %39, %40, %41 in 0 : vector<1x128xf32>, vector<1x128xf32>, vector<1x128xf32>, vector<1x128xf32>, vector<1x128xf32>, vector<1x128xf32>, vector<1x128xf32>, vector<1x128xf32> -> vector<8x128xf32>
    %43 = vector.extract_strided_slice %13 {offsets = [0, 1], sizes = [8, 1], strides = [1, 1]} : vector<16x33xf32> to vector<8x1xf32>
    %44 = vector.broadcast %43 : vector<8x1xf32> to vector<8x128xf32>
    %45 = arith.mulf %42, %44 : vector<8x128xf32>
    %46 = arith.addf %29, %45 : vector<8x128xf32>
    %47 = vector.extract_strided_slice %13 {offsets = [8, 1], sizes = [8, 1], strides = [1, 1]} : vector<16x33xf32> to vector<8x1xf32>
    %48 = vector.broadcast %47 : vector<8x1xf32> to vector<8x128xf32>
    %49 = arith.mulf %42, %48 : vector<8x128xf32>
    %50 = arith.addf %33, %49 : vector<8x128xf32>
    %c0_40 = arith.constant 0 : index
    %c4066 = arith.constant 4066 : index
    %51 = vector.load %arg22[%c0_40, %c4066] : memref<1x4224xf32, #tpu.memory_space<vmem>>, vector<1x128xf32>
    %c0_41 = arith.constant 0 : index
    %c4036 = arith.constant 4036 : index
    %52 = vector.load %arg22[%c0_41, %c4036] : memref<1x4224xf32, #tpu.memory_space<vmem>>, vector<1x128xf32>
    %c0_42 = arith.constant 0 : index
    %c3976 = arith.constant 3976 : index
    %53 = vector.load %arg22[%c0_42, %c3976] : memref<1x4224xf32, #tpu.memory_space<vmem>>, vector<1x128xf32>
    %c0_43 = arith.constant 0 : index
    %c3856 = arith.constant 3856 : index
    %54 = vector.load %arg22[%c0_43, %c3856] : memref<1x4224xf32, #tpu.memory_space<vmem>>, vector<1x128xf32>
    %c0_44 = arith.constant 0 : index
    %c3616 = arith.constant 3616 : index
    %55 = vector.load %arg22[%c0_44, %c3616] : memref<1x4224xf32, #tpu.memory_space<vmem>>, vector<1x128xf32>
    %c0_45 = arith.constant 0 : index
    %c3136 = arith.constant 3136 : index
    %56 = vector.load %arg22[%c0_45, %c3136] : memref<1x4224xf32, #tpu.memory_space<vmem>>, vector<1x128xf32>
    %c0_46 = arith.constant 0 : index
    %c2176 = arith.constant 2176 : index
    %57 = vector.load %arg22[%c0_46, %c2176] : memref<1x4224xf32, #tpu.memory_space<vmem>>, vector<1x128xf32>
    %c0_47 = arith.constant 0 : index
    %c256 = arith.constant 256 : index
    %58 = vector.load %arg22[%c0_47, %c256] : memref<1x4224xf32, #tpu.memory_space<vmem>>, vector<1x128xf32>
    %59 = tpu.concatenate %51, %52, %53, %54, %55, %56, %57, %58 in 0 : vector<1x128xf32>, vector<1x128xf32>, vector<1x128xf32>, vector<1x128xf32>, vector<1x128xf32>, vector<1x128xf32>, vector<1x128xf32>, vector<1x128xf32> -> vector<8x128xf32>
    %60 = vector.extract_strided_slice %13 {offsets = [0, 2], sizes = [8, 1], strides = [1, 1]} : vector<16x33xf32> to vector<8x1xf32>
    %61 = vector.broadcast %60 : vector<8x1xf32> to vector<8x128xf32>
    %62 = arith.mulf %59, %61 : vector<8x128xf32>
    %63 = arith.addf %46, %62 : vector<8x128xf32>
    %64 = vector.extract_strided_slice %13 {offsets = [8, 2], sizes = [8, 1], strides = [1, 1]} : vector<16x33xf32> to vector<8x1xf32>
    %65 = vector.broadcast %64 : vector<8x1xf32> to vector<8x128xf32>
    %66 = arith.mulf %59, %65 : vector<8x128xf32>
    %67 = arith.addf %50, %66 : vector<8x128xf32>
    %c0_48 = arith.constant 0 : index
    %c4067 = arith.constant 4067 : index
    %68 = vector.load %arg22[%c0_48, %c4067] : memref<1x4224xf32, #tpu.memory_space<vmem>>, vector<1x128xf32>
    %c0_49 = arith.constant 0 : index
    %c4038 = arith.constant 4038 : index
    %69 = vector.load %arg22[%c0_49, %c4038] : memref<1x4224xf32, #tpu.memory_space<vmem>>, vector<1x128xf32>
    %c0_50 = arith.constant 0 : index
    %c3980 = arith.constant 3980 : index
    %70 = vector.load %arg22[%c0_50, %c3980] : memref<1x4224xf32, #tpu.memory_space<vmem>>, vector<1x128xf32>
    %c0_51 = arith.constant 0 : index
    %c3864 = arith.constant 3864 : index
    %71 = vector.load %arg22[%c0_51, %c3864] : memref<1x4224xf32, #tpu.memory_space<vmem>>, vector<1x128xf32>
    %c0_52 = arith.constant 0 : index
    %c3632 = arith.constant 3632 : index
    %72 = vector.load %arg22[%c0_52, %c3632] : memref<1x4224xf32, #tpu.memory_space<vmem>>, vector<1x128xf32>
    %c0_53 = arith.constant 0 : index
    %c3168 = arith.constant 3168 : index
    %73 = vector.load %arg22[%c0_53, %c3168] : memref<1x4224xf32, #tpu.memory_space<vmem>>, vector<1x128xf32>
    %c0_54 = arith.constant 0 : index
    %c2240 = arith.constant 2240 : index
    %74 = vector.load %arg22[%c0_54, %c2240] : memref<1x4224xf32, #tpu.memory_space<vmem>>, vector<1x128xf32>
    %c0_55 = arith.constant 0 : index
    %c384 = arith.constant 384 : index
    %75 = vector.load %arg22[%c0_55, %c384] : memref<1x4224xf32, #tpu.memory_space<vmem>>, vector<1x128xf32>
    %76 = tpu.concatenate %68, %69, %70, %71, %72, %73, %74, %75 in 0 : vector<1x128xf32>, vector<1x128xf32>, vector<1x128xf32>, vector<1x128xf32>, vector<1x128xf32>, vector<1x128xf32>, vector<1x128xf32>, vector<1x128xf32> -> vector<8x128xf32>
    %77 = vector.extract_strided_slice %13 {offsets = [0, 3], sizes = [8, 1], strides = [1, 1]} : vector<16x33xf32> to vector<8x1xf32>
    %78 = vector.broadcast %77 : vector<8x1xf32> to vector<8x128xf32>
    %79 = arith.mulf %76, %78 : vector<8x128xf32>
    %80 = arith.addf %63, %79 : vector<8x128xf32>
    %81 = vector.extract_strided_slice %13 {offsets = [8, 3], sizes = [8, 1], strides = [1, 1]} : vector<16x33xf32> to vector<8x1xf32>
    %82 = vector.broadcast %81 : vector<8x1xf32> to vector<8x128xf32>
    %83 = arith.mulf %76, %82 : vector<8x128xf32>
    %84 = arith.addf %67, %83 : vector<8x128xf32>
    %c0_56 = arith.constant 0 : index
    %c4068 = arith.constant 4068 : index
    %85 = vector.load %arg22[%c0_56, %c4068] : memref<1x4224xf32, #tpu.memory_space<vmem>>, vector<1x128xf32>
    %c0_57 = arith.constant 0 : index
    %c4040 = arith.constant 4040 : index
    %86 = vector.load %arg22[%c0_57, %c4040] : memref<1x4224xf32, #tpu.memory_space<vmem>>, vector<1x128xf32>
    %c0_58 = arith.constant 0 : index
    %c3984 = arith.constant 3984 : index
    %87 = vector.load %arg22[%c0_58, %c3984] : memref<1x4224xf32, #tpu.memory_space<vmem>>, vector<1x128xf32>
    %c0_59 = arith.constant 0 : index
    %c3872 = arith.constant 3872 : index
    %88 = vector.load %arg22[%c0_59, %c3872] : memref<1x4224xf32, #tpu.memory_space<vmem>>, vector<1x128xf32>
    %c0_60 = arith.constant 0 : index
    %c3648 = arith.constant 3648 : index
    %89 = vector.load %arg22[%c0_60, %c3648] : memref<1x4224xf32, #tpu.memory_space<vmem>>, vector<1x128xf32>
    %c0_61 = arith.constant 0 : index
    %c3200 = arith.constant 3200 : index
    %90 = vector.load %arg22[%c0_61, %c3200] : memref<1x4224xf32, #tpu.memory_space<vmem>>, vector<1x128xf32>
    %c0_62 = arith.constant 0 : index
    %c2304 = arith.constant 2304 : index
    %91 = vector.load %arg22[%c0_62, %c2304] : memref<1x4224xf32, #tpu.memory_space<vmem>>, vector<1x128xf32>
    %c0_63 = arith.constant 0 : index
    %c512 = arith.constant 512 : index
    %92 = vector.load %arg22[%c0_63, %c512] : memref<1x4224xf32, #tpu.memory_space<vmem>>, vector<1x128xf32>
    %93 = tpu.concatenate %85, %86, %87, %88, %89, %90, %91, %92 in 0 : vector<1x128xf32>, vector<1x128xf32>, vector<1x128xf32>, vector<1x128xf32>, vector<1x128xf32>, vector<1x128xf32>, vector<1x128xf32>, vector<1x128xf32> -> vector<8x128xf32>
    %94 = vector.extract_strided_slice %13 {offsets = [0, 4], sizes = [8, 1], strides = [1, 1]} : vector<16x33xf32> to vector<8x1xf32>
    %95 = vector.broadcast %94 : vector<8x1xf32> to vector<8x128xf32>
    %96 = arith.mulf %93, %95 : vector<8x128xf32>
    %97 = arith.addf %80, %96 : vector<8x128xf32>
    %98 = vector.extract_strided_slice %13 {offsets = [8, 4], sizes = [8, 1], strides = [1, 1]} : vector<16x33xf32> to vector<8x1xf32>
    %99 = vector.broadcast %98 : vector<8x1xf32> to vector<8x128xf32>
    %100 = arith.mulf %93, %99 : vector<8x128xf32>
    %101 = arith.addf %84, %100 : vector<8x128xf32>
    %c0_64 = arith.constant 0 : index
    %c4069 = arith.constant 4069 : index
    %102 = vector.load %arg22[%c0_64, %c4069] : memref<1x4224xf32, #tpu.memory_space<vmem>>, vector<1x128xf32>
    %c0_65 = arith.constant 0 : index
    %c4042 = arith.constant 4042 : index
    %103 = vector.load %arg22[%c0_65, %c4042] : memref<1x4224xf32, #tpu.memory_space<vmem>>, vector<1x128xf32>
    %c0_66 = arith.constant 0 : index
    %c3988 = arith.constant 3988 : index
    %104 = vector.load %arg22[%c0_66, %c3988] : memref<1x4224xf32, #tpu.memory_space<vmem>>, vector<1x128xf32>
    %c0_67 = arith.constant 0 : index
    %c3880 = arith.constant 3880 : index
    %105 = vector.load %arg22[%c0_67, %c3880] : memref<1x4224xf32, #tpu.memory_space<vmem>>, vector<1x128xf32>
    %c0_68 = arith.constant 0 : index
    %c3664 = arith.constant 3664 : index
    %106 = vector.load %arg22[%c0_68, %c3664] : memref<1x4224xf32, #tpu.memory_space<vmem>>, vector<1x128xf32>
    %c0_69 = arith.constant 0 : index
    %c3232 = arith.constant 3232 : index
    %107 = vector.load %arg22[%c0_69, %c3232] : memref<1x4224xf32, #tpu.memory_space<vmem>>, vector<1x128xf32>
    %c0_70 = arith.constant 0 : index
    %c2368 = arith.constant 2368 : index
    %108 = vector.load %arg22[%c0_70, %c2368] : memref<1x4224xf32, #tpu.memory_space<vmem>>, vector<1x128xf32>
    %c0_71 = arith.constant 0 : index
    %c640 = arith.constant 640 : index
    %109 = vector.load %arg22[%c0_71, %c640] : memref<1x4224xf32, #tpu.memory_space<vmem>>, vector<1x128xf32>
    %110 = tpu.concatenate %102, %103, %104, %105, %106, %107, %108, %109 in 0 : vector<1x128xf32>, vector<1x128xf32>, vector<1x128xf32>, vector<1x128xf32>, vector<1x128xf32>, vector<1x128xf32>, vector<1x128xf32>, vector<1x128xf32> -> vector<8x128xf32>
    %111 = vector.extract_strided_slice %13 {offsets = [0, 5], sizes = [8, 1], strides = [1, 1]} : vector<16x33xf32> to vector<8x1xf32>
    %112 = vector.broadcast %111 : vector<8x1xf32> to vector<8x128xf32>
    %113 = arith.mulf %110, %112 : vector<8x128xf32>
    %114 = arith.addf %97, %113 : vector<8x128xf32>
    %115 = vector.extract_strided_slice %13 {offsets = [8, 5], sizes = [8, 1], strides = [1, 1]} : vector<16x33xf32> to vector<8x1xf32>
    %116 = vector.broadcast %115 : vector<8x1xf32> to vector<8x128xf32>
    %117 = arith.mulf %110, %116 : vector<8x128xf32>
    %118 = arith.addf %101, %117 : vector<8x128xf32>
    %c0_72 = arith.constant 0 : index
    %c4070 = arith.constant 4070 : index
    %119 = vector.load %arg22[%c0_72, %c4070] : memref<1x4224xf32, #tpu.memory_space<vmem>>, vector<1x128xf32>
    %c0_73 = arith.constant 0 : index
    %c4044 = arith.constant 4044 : index
    %120 = vector.load %arg22[%c0_73, %c4044] : memref<1x4224xf32, #tpu.memory_space<vmem>>, vector<1x128xf32>
    %c0_74 = arith.constant 0 : index
    %c3992 = arith.constant 3992 : index
    %121 = vector.load %arg22[%c0_74, %c3992] : memref<1x4224xf32, #tpu.memory_space<vmem>>, vector<1x128xf32>
    %c0_75 = arith.constant 0 : index
    %c3888 = arith.constant 3888 : index
    %122 = vector.load %arg22[%c0_75, %c3888] : memref<1x4224xf32, #tpu.memory_space<vmem>>, vector<1x128xf32>
    %c0_76 = arith.constant 0 : index
    %c3680 = arith.constant 3680 : index
    %123 = vector.load %arg22[%c0_76, %c3680] : memref<1x4224xf32, #tpu.memory_space<vmem>>, vector<1x128xf32>
    %c0_77 = arith.constant 0 : index
    %c3264 = arith.constant 3264 : index
    %124 = vector.load %arg22[%c0_77, %c3264] : memref<1x4224xf32, #tpu.memory_space<vmem>>, vector<1x128xf32>
    %c0_78 = arith.constant 0 : index
    %c2432 = arith.constant 2432 : index
    %125 = vector.load %arg22[%c0_78, %c2432] : memref<1x4224xf32, #tpu.memory_space<vmem>>, vector<1x128xf32>
    %c0_79 = arith.constant 0 : index
    %c768 = arith.constant 768 : index
    %126 = vector.load %arg22[%c0_79, %c768] : memref<1x4224xf32, #tpu.memory_space<vmem>>, vector<1x128xf32>
    %127 = tpu.concatenate %119, %120, %121, %122, %123, %124, %125, %126 in 0 : vector<1x128xf32>, vector<1x128xf32>, vector<1x128xf32>, vector<1x128xf32>, vector<1x128xf32>, vector<1x128xf32>, vector<1x128xf32>, vector<1x128xf32> -> vector<8x128xf32>
    %128 = vector.extract_strided_slice %13 {offsets = [0, 6], sizes = [8, 1], strides = [1, 1]} : vector<16x33xf32> to vector<8x1xf32>
    %129 = vector.broadcast %128 : vector<8x1xf32> to vector<8x128xf32>
    %130 = arith.mulf %127, %129 : vector<8x128xf32>
    %131 = arith.addf %114, %130 : vector<8x128xf32>
    %132 = vector.extract_strided_slice %13 {offsets = [8, 6], sizes = [8, 1], strides = [1, 1]} : vector<16x33xf32> to vector<8x1xf32>
    %133 = vector.broadcast %132 : vector<8x1xf32> to vector<8x128xf32>
    %134 = arith.mulf %127, %133 : vector<8x128xf32>
    %135 = arith.addf %118, %134 : vector<8x128xf32>
    %c0_80 = arith.constant 0 : index
    %c4071 = arith.constant 4071 : index
    %136 = vector.load %arg22[%c0_80, %c4071] : memref<1x4224xf32, #tpu.memory_space<vmem>>, vector<1x128xf32>
    %c0_81 = arith.constant 0 : index
    %c4046 = arith.constant 4046 : index
    %137 = vector.load %arg22[%c0_81, %c4046] : memref<1x4224xf32, #tpu.memory_space<vmem>>, vector<1x128xf32>
    %c0_82 = arith.constant 0 : index
    %c3996 = arith.constant 3996 : index
    %138 = vector.load %arg22[%c0_82, %c3996] : memref<1x4224xf32, #tpu.memory_space<vmem>>, vector<1x128xf32>
    %c0_83 = arith.constant 0 : index
    %c3896 = arith.constant 3896 : index
    %139 = vector.load %arg22[%c0_83, %c3896] : memref<1x4224xf32, #tpu.memory_space<vmem>>, vector<1x128xf32>
    %c0_84 = arith.constant 0 : index
    %c3696 = arith.constant 3696 : index
    %140 = vector.load %arg22[%c0_84, %c3696] : memref<1x4224xf32, #tpu.memory_space<vmem>>, vector<1x128xf32>
    %c0_85 = arith.constant 0 : index
    %c3296 = arith.constant 3296 : index
    %141 = vector.load %arg22[%c0_85, %c3296] : memref<1x4224xf32, #tpu.memory_space<vmem>>, vector<1x128xf32>
    %c0_86 = arith.constant 0 : index
    %c2496 = arith.constant 2496 : index
    %142 = vector.load %arg22[%c0_86, %c2496] : memref<1x4224xf32, #tpu.memory_space<vmem>>, vector<1x128xf32>
    %c0_87 = arith.constant 0 : index
    %c896 = arith.constant 896 : index
    %143 = vector.load %arg22[%c0_87, %c896] : memref<1x4224xf32, #tpu.memory_space<vmem>>, vector<1x128xf32>
    %144 = tpu.concatenate %136, %137, %138, %139, %140, %141, %142, %143 in 0 : vector<1x128xf32>, vector<1x128xf32>, vector<1x128xf32>, vector<1x128xf32>, vector<1x128xf32>, vector<1x128xf32>, vector<1x128xf32>, vector<1x128xf32> -> vector<8x128xf32>
    %145 = vector.extract_strided_slice %13 {offsets = [0, 7], sizes = [8, 1], strides = [1, 1]} : vector<16x33xf32> to vector<8x1xf32>
    %146 = vector.broadcast %145 : vector<8x1xf32> to vector<8x128xf32>
    %147 = arith.mulf %144, %146 : vector<8x128xf32>
    %148 = arith.addf %131, %147 : vector<8x128xf32>
    %149 = vector.extract_strided_slice %13 {offsets = [8, 7], sizes = [8, 1], strides = [1, 1]} : vector<16x33xf32> to vector<8x1xf32>
    %150 = vector.broadcast %149 : vector<8x1xf32> to vector<8x128xf32>
    %151 = arith.mulf %144, %150 : vector<8x128xf32>
    %152 = arith.addf %135, %151 : vector<8x128xf32>
    %c0_88 = arith.constant 0 : index
    %c4072 = arith.constant 4072 : index
    %153 = vector.load %arg22[%c0_88, %c4072] : memref<1x4224xf32, #tpu.memory_space<vmem>>, vector<1x128xf32>
    %c0_89 = arith.constant 0 : index
    %c4048 = arith.constant 4048 : index
    %154 = vector.load %arg22[%c0_89, %c4048] : memref<1x4224xf32, #tpu.memory_space<vmem>>, vector<1x128xf32>
    %c0_90 = arith.constant 0 : index
    %c4000 = arith.constant 4000 : index
    %155 = vector.load %arg22[%c0_90, %c4000] : memref<1x4224xf32, #tpu.memory_space<vmem>>, vector<1x128xf32>
    %c0_91 = arith.constant 0 : index
    %c3904 = arith.constant 3904 : index
    %156 = vector.load %arg22[%c0_91, %c3904] : memref<1x4224xf32, #tpu.memory_space<vmem>>, vector<1x128xf32>
    %c0_92 = arith.constant 0 : index
    %c3712 = arith.constant 3712 : index
    %157 = vector.load %arg22[%c0_92, %c3712] : memref<1x4224xf32, #tpu.memory_space<vmem>>, vector<1x128xf32>
    %c0_93 = arith.constant 0 : index
    %c3328 = arith.constant 3328 : index
    %158 = vector.load %arg22[%c0_93, %c3328] : memref<1x4224xf32, #tpu.memory_space<vmem>>, vector<1x128xf32>
    %c0_94 = arith.constant 0 : index
    %c2560 = arith.constant 2560 : index
    %159 = vector.load %arg22[%c0_94, %c2560] : memref<1x4224xf32, #tpu.memory_space<vmem>>, vector<1x128xf32>
    %c0_95 = arith.constant 0 : index
    %c1024 = arith.constant 1024 : index
    %160 = vector.load %arg22[%c0_95, %c1024] : memref<1x4224xf32, #tpu.memory_space<vmem>>, vector<1x128xf32>
    %161 = tpu.concatenate %153, %154, %155, %156, %157, %158, %159, %160 in 0 : vector<1x128xf32>, vector<1x128xf32>, vector<1x128xf32>, vector<1x128xf32>, vector<1x128xf32>, vector<1x128xf32>, vector<1x128xf32>, vector<1x128xf32> -> vector<8x128xf32>
    %162 = vector.extract_strided_slice %13 {offsets = [0, 8], sizes = [8, 1], strides = [1, 1]} : vector<16x33xf32> to vector<8x1xf32>
    %163 = vector.broadcast %162 : vector<8x1xf32> to vector<8x128xf32>
    %164 = arith.mulf %161, %163 : vector<8x128xf32>
    %165 = arith.addf %148, %164 : vector<8x128xf32>
    %166 = vector.extract_strided_slice %13 {offsets = [8, 8], sizes = [8, 1], strides = [1, 1]} : vector<16x33xf32> to vector<8x1xf32>
    %167 = vector.broadcast %166 : vector<8x1xf32> to vector<8x128xf32>
    %168 = arith.mulf %161, %167 : vector<8x128xf32>
    %169 = arith.addf %152, %168 : vector<8x128xf32>
    %c0_96 = arith.constant 0 : index
    %c4073 = arith.constant 4073 : index
    %170 = vector.load %arg22[%c0_96, %c4073] : memref<1x4224xf32, #tpu.memory_space<vmem>>, vector<1x128xf32>
    %c0_97 = arith.constant 0 : index
    %c4050 = arith.constant 4050 : index
    %171 = vector.load %arg22[%c0_97, %c4050] : memref<1x4224xf32, #tpu.memory_space<vmem>>, vector<1x128xf32>
    %c0_98 = arith.constant 0 : index
    %c4004 = arith.constant 4004 : index
    %172 = vector.load %arg22[%c0_98, %c4004] : memref<1x4224xf32, #tpu.memory_space<vmem>>, vector<1x128xf32>
    %c0_99 = arith.constant 0 : index
    %c3912 = arith.constant 3912 : index
    %173 = vector.load %arg22[%c0_99, %c3912] : memref<1x4224xf32, #tpu.memory_space<vmem>>, vector<1x128xf32>
    %c0_100 = arith.constant 0 : index
    %c3728 = arith.constant 3728 : index
    %174 = vector.load %arg22[%c0_100, %c3728] : memref<1x4224xf32, #tpu.memory_space<vmem>>, vector<1x128xf32>
    %c0_101 = arith.constant 0 : index
    %c3360 = arith.constant 3360 : index
    %175 = vector.load %arg22[%c0_101, %c3360] : memref<1x4224xf32, #tpu.memory_space<vmem>>, vector<1x128xf32>
    %c0_102 = arith.constant 0 : index
    %c2624 = arith.constant 2624 : index
    %176 = vector.load %arg22[%c0_102, %c2624] : memref<1x4224xf32, #tpu.memory_space<vmem>>, vector<1x128xf32>
    %c0_103 = arith.constant 0 : index
    %c1152 = arith.constant 1152 : index
    %177 = vector.load %arg22[%c0_103, %c1152] : memref<1x4224xf32, #tpu.memory_space<vmem>>, vector<1x128xf32>
    %178 = tpu.concatenate %170, %171, %172, %173, %174, %175, %176, %177 in 0 : vector<1x128xf32>, vector<1x128xf32>, vector<1x128xf32>, vector<1x128xf32>, vector<1x128xf32>, vector<1x128xf32>, vector<1x128xf32>, vector<1x128xf32> -> vector<8x128xf32>
    %179 = vector.extract_strided_slice %13 {offsets = [0, 9], sizes = [8, 1], strides = [1, 1]} : vector<16x33xf32> to vector<8x1xf32>
    %180 = vector.broadcast %179 : vector<8x1xf32> to vector<8x128xf32>
    %181 = arith.mulf %178, %180 : vector<8x128xf32>
    %182 = arith.addf %165, %181 : vector<8x128xf32>
    %183 = vector.extract_strided_slice %13 {offsets = [8, 9], sizes = [8, 1], strides = [1, 1]} : vector<16x33xf32> to vector<8x1xf32>
    %184 = vector.broadcast %183 : vector<8x1xf32> to vector<8x128xf32>
    %185 = arith.mulf %178, %184 : vector<8x128xf32>
    %186 = arith.addf %169, %185 : vector<8x128xf32>
    %c0_104 = arith.constant 0 : index
    %c4074 = arith.constant 4074 : index
    %187 = vector.load %arg22[%c0_104, %c4074] : memref<1x4224xf32, #tpu.memory_space<vmem>>, vector<1x128xf32>
    %c0_105 = arith.constant 0 : index
    %c4052 = arith.constant 4052 : index
    %188 = vector.load %arg22[%c0_105, %c4052] : memref<1x4224xf32, #tpu.memory_space<vmem>>, vector<1x128xf32>
    %c0_106 = arith.constant 0 : index
    %c4008 = arith.constant 4008 : index
    %189 = vector.load %arg22[%c0_106, %c4008] : memref<1x4224xf32, #tpu.memory_space<vmem>>, vector<1x128xf32>
    %c0_107 = arith.constant 0 : index
    %c3920 = arith.constant 3920 : index
    %190 = vector.load %arg22[%c0_107, %c3920] : memref<1x4224xf32, #tpu.memory_space<vmem>>, vector<1x128xf32>
    %c0_108 = arith.constant 0 : index
    %c3744 = arith.constant 3744 : index
    %191 = vector.load %arg22[%c0_108, %c3744] : memref<1x4224xf32, #tpu.memory_space<vmem>>, vector<1x128xf32>
    %c0_109 = arith.constant 0 : index
    %c3392 = arith.constant 3392 : index
    %192 = vector.load %arg22[%c0_109, %c3392] : memref<1x4224xf32, #tpu.memory_space<vmem>>, vector<1x128xf32>
    %c0_110 = arith.constant 0 : index
    %c2688 = arith.constant 2688 : index
    %193 = vector.load %arg22[%c0_110, %c2688] : memref<1x4224xf32, #tpu.memory_space<vmem>>, vector<1x128xf32>
    %c0_111 = arith.constant 0 : index
    %c1280 = arith.constant 1280 : index
    %194 = vector.load %arg22[%c0_111, %c1280] : memref<1x4224xf32, #tpu.memory_space<vmem>>, vector<1x128xf32>
    %195 = tpu.concatenate %187, %188, %189, %190, %191, %192, %193, %194 in 0 : vector<1x128xf32>, vector<1x128xf32>, vector<1x128xf32>, vector<1x128xf32>, vector<1x128xf32>, vector<1x128xf32>, vector<1x128xf32>, vector<1x128xf32> -> vector<8x128xf32>
    %196 = vector.extract_strided_slice %13 {offsets = [0, 10], sizes = [8, 1], strides = [1, 1]} : vector<16x33xf32> to vector<8x1xf32>
    %197 = vector.broadcast %196 : vector<8x1xf32> to vector<8x128xf32>
    %198 = arith.mulf %195, %197 : vector<8x128xf32>
    %199 = arith.addf %182, %198 : vector<8x128xf32>
    %200 = vector.extract_strided_slice %13 {offsets = [8, 10], sizes = [8, 1], strides = [1, 1]} : vector<16x33xf32> to vector<8x1xf32>
    %201 = vector.broadcast %200 : vector<8x1xf32> to vector<8x128xf32>
    %202 = arith.mulf %195, %201 : vector<8x128xf32>
    %203 = arith.addf %186, %202 : vector<8x128xf32>
    %c0_112 = arith.constant 0 : index
    %c4075 = arith.constant 4075 : index
    %204 = vector.load %arg22[%c0_112, %c4075] : memref<1x4224xf32, #tpu.memory_space<vmem>>, vector<1x128xf32>
    %c0_113 = arith.constant 0 : index
    %c4054 = arith.constant 4054 : index
    %205 = vector.load %arg22[%c0_113, %c4054] : memref<1x4224xf32, #tpu.memory_space<vmem>>, vector<1x128xf32>
    %c0_114 = arith.constant 0 : index
    %c4012 = arith.constant 4012 : index
    %206 = vector.load %arg22[%c0_114, %c4012] : memref<1x4224xf32, #tpu.memory_space<vmem>>, vector<1x128xf32>
    %c0_115 = arith.constant 0 : index
    %c3928 = arith.constant 3928 : index
    %207 = vector.load %arg22[%c0_115, %c3928] : memref<1x4224xf32, #tpu.memory_space<vmem>>, vector<1x128xf32>
    %c0_116 = arith.constant 0 : index
    %c3760 = arith.constant 3760 : index
    %208 = vector.load %arg22[%c0_116, %c3760] : memref<1x4224xf32, #tpu.memory_space<vmem>>, vector<1x128xf32>
    %c0_117 = arith.constant 0 : index
    %c3424 = arith.constant 3424 : index
    %209 = vector.load %arg22[%c0_117, %c3424] : memref<1x4224xf32, #tpu.memory_space<vmem>>, vector<1x128xf32>
    %c0_118 = arith.constant 0 : index
    %c2752 = arith.constant 2752 : index
    %210 = vector.load %arg22[%c0_118, %c2752] : memref<1x4224xf32, #tpu.memory_space<vmem>>, vector<1x128xf32>
    %c0_119 = arith.constant 0 : index
    %c1408 = arith.constant 1408 : index
    %211 = vector.load %arg22[%c0_119, %c1408] : memref<1x4224xf32, #tpu.memory_space<vmem>>, vector<1x128xf32>
    %212 = tpu.concatenate %204, %205, %206, %207, %208, %209, %210, %211 in 0 : vector<1x128xf32>, vector<1x128xf32>, vector<1x128xf32>, vector<1x128xf32>, vector<1x128xf32>, vector<1x128xf32>, vector<1x128xf32>, vector<1x128xf32> -> vector<8x128xf32>
    %213 = vector.extract_strided_slice %13 {offsets = [0, 11], sizes = [8, 1], strides = [1, 1]} : vector<16x33xf32> to vector<8x1xf32>
    %214 = vector.broadcast %213 : vector<8x1xf32> to vector<8x128xf32>
    %215 = arith.mulf %212, %214 : vector<8x128xf32>
    %216 = arith.addf %199, %215 : vector<8x128xf32>
    %217 = vector.extract_strided_slice %13 {offsets = [8, 11], sizes = [8, 1], strides = [1, 1]} : vector<16x33xf32> to vector<8x1xf32>
    %218 = vector.broadcast %217 : vector<8x1xf32> to vector<8x128xf32>
    %219 = arith.mulf %212, %218 : vector<8x128xf32>
    %220 = arith.addf %203, %219 : vector<8x128xf32>
    %c0_120 = arith.constant 0 : index
    %c4076 = arith.constant 4076 : index
    %221 = vector.load %arg22[%c0_120, %c4076] : memref<1x4224xf32, #tpu.memory_space<vmem>>, vector<1x128xf32>
    %c0_121 = arith.constant 0 : index
    %c4056 = arith.constant 4056 : index
    %222 = vector.load %arg22[%c0_121, %c4056] : memref<1x4224xf32, #tpu.memory_space<vmem>>, vector<1x128xf32>
    %c0_122 = arith.constant 0 : index
    %c4016 = arith.constant 4016 : index
    %223 = vector.load %arg22[%c0_122, %c4016] : memref<1x4224xf32, #tpu.memory_space<vmem>>, vector<1x128xf32>
    %c0_123 = arith.constant 0 : index
    %c3936 = arith.constant 3936 : index
    %224 = vector.load %arg22[%c0_123, %c3936] : memref<1x4224xf32, #tpu.memory_space<vmem>>, vector<1x128xf32>
    %c0_124 = arith.constant 0 : index
    %c3776 = arith.constant 3776 : index
    %225 = vector.load %arg22[%c0_124, %c3776] : memref<1x4224xf32, #tpu.memory_space<vmem>>, vector<1x128xf32>
    %c0_125 = arith.constant 0 : index
    %c3456 = arith.constant 3456 : index
    %226 = vector.load %arg22[%c0_125, %c3456] : memref<1x4224xf32, #tpu.memory_space<vmem>>, vector<1x128xf32>
    %c0_126 = arith.constant 0 : index
    %c2816 = arith.constant 2816 : index
    %227 = vector.load %arg22[%c0_126, %c2816] : memref<1x4224xf32, #tpu.memory_space<vmem>>, vector<1x128xf32>
    %c0_127 = arith.constant 0 : index
    %c1536 = arith.constant 1536 : index
    %228 = vector.load %arg22[%c0_127, %c1536] : memref<1x4224xf32, #tpu.memory_space<vmem>>, vector<1x128xf32>
    %229 = tpu.concatenate %221, %222, %223, %224, %225, %226, %227, %228 in 0 : vector<1x128xf32>, vector<1x128xf32>, vector<1x128xf32>, vector<1x128xf32>, vector<1x128xf32>, vector<1x128xf32>, vector<1x128xf32>, vector<1x128xf32> -> vector<8x128xf32>
    %230 = vector.extract_strided_slice %13 {offsets = [0, 12], sizes = [8, 1], strides = [1, 1]} : vector<16x33xf32> to vector<8x1xf32>
    %231 = vector.broadcast %230 : vector<8x1xf32> to vector<8x128xf32>
    %232 = arith.mulf %229, %231 : vector<8x128xf32>
    %233 = arith.addf %216, %232 : vector<8x128xf32>
    %234 = vector.extract_strided_slice %13 {offsets = [8, 12], sizes = [8, 1], strides = [1, 1]} : vector<16x33xf32> to vector<8x1xf32>
    %235 = vector.broadcast %234 : vector<8x1xf32> to vector<8x128xf32>
    %236 = arith.mulf %229, %235 : vector<8x128xf32>
    %237 = arith.addf %220, %236 : vector<8x128xf32>
    %c0_128 = arith.constant 0 : index
    %c4077 = arith.constant 4077 : index
    %238 = vector.load %arg22[%c0_128, %c4077] : memref<1x4224xf32, #tpu.memory_space<vmem>>, vector<1x128xf32>
    %c0_129 = arith.constant 0 : index
    %c4058 = arith.constant 4058 : index
    %239 = vector.load %arg22[%c0_129, %c4058] : memref<1x4224xf32, #tpu.memory_space<vmem>>, vector<1x128xf32>
    %c0_130 = arith.constant 0 : index
    %c4020 = arith.constant 4020 : index
    %240 = vector.load %arg22[%c0_130, %c4020] : memref<1x4224xf32, #tpu.memory_space<vmem>>, vector<1x128xf32>
    %c0_131 = arith.constant 0 : index
    %c3944 = arith.constant 3944 : index
    %241 = vector.load %arg22[%c0_131, %c3944] : memref<1x4224xf32, #tpu.memory_space<vmem>>, vector<1x128xf32>
    %c0_132 = arith.constant 0 : index
    %c3792 = arith.constant 3792 : index
    %242 = vector.load %arg22[%c0_132, %c3792] : memref<1x4224xf32, #tpu.memory_space<vmem>>, vector<1x128xf32>
    %c0_133 = arith.constant 0 : index
    %c3488 = arith.constant 3488 : index
    %243 = vector.load %arg22[%c0_133, %c3488] : memref<1x4224xf32, #tpu.memory_space<vmem>>, vector<1x128xf32>
    %c0_134 = arith.constant 0 : index
    %c2880 = arith.constant 2880 : index
    %244 = vector.load %arg22[%c0_134, %c2880] : memref<1x4224xf32, #tpu.memory_space<vmem>>, vector<1x128xf32>
    %c0_135 = arith.constant 0 : index
    %c1664 = arith.constant 1664 : index
    %245 = vector.load %arg22[%c0_135, %c1664] : memref<1x4224xf32, #tpu.memory_space<vmem>>, vector<1x128xf32>
    %246 = tpu.concatenate %238, %239, %240, %241, %242, %243, %244, %245 in 0 : vector<1x128xf32>, vector<1x128xf32>, vector<1x128xf32>, vector<1x128xf32>, vector<1x128xf32>, vector<1x128xf32>, vector<1x128xf32>, vector<1x128xf32> -> vector<8x128xf32>
    %247 = vector.extract_strided_slice %13 {offsets = [0, 13], sizes = [8, 1], strides = [1, 1]} : vector<16x33xf32> to vector<8x1xf32>
    %248 = vector.broadcast %247 : vector<8x1xf32> to vector<8x128xf32>
    %249 = arith.mulf %246, %248 : vector<8x128xf32>
    %250 = arith.addf %233, %249 : vector<8x128xf32>
    %251 = vector.extract_strided_slice %13 {offsets = [8, 13], sizes = [8, 1], strides = [1, 1]} : vector<16x33xf32> to vector<8x1xf32>
    %252 = vector.broadcast %251 : vector<8x1xf32> to vector<8x128xf32>
    %253 = arith.mulf %246, %252 : vector<8x128xf32>
    %254 = arith.addf %237, %253 : vector<8x128xf32>
    %c0_136 = arith.constant 0 : index
    %c4078 = arith.constant 4078 : index
    %255 = vector.load %arg22[%c0_136, %c4078] : memref<1x4224xf32, #tpu.memory_space<vmem>>, vector<1x128xf32>
    %c0_137 = arith.constant 0 : index
    %c4060 = arith.constant 4060 : index
    %256 = vector.load %arg22[%c0_137, %c4060] : memref<1x4224xf32, #tpu.memory_space<vmem>>, vector<1x128xf32>
    %c0_138 = arith.constant 0 : index
    %c4024 = arith.constant 4024 : index
    %257 = vector.load %arg22[%c0_138, %c4024] : memref<1x4224xf32, #tpu.memory_space<vmem>>, vector<1x128xf32>
    %c0_139 = arith.constant 0 : index
    %c3952 = arith.constant 3952 : index
    %258 = vector.load %arg22[%c0_139, %c3952] : memref<1x4224xf32, #tpu.memory_space<vmem>>, vector<1x128xf32>
    %c0_140 = arith.constant 0 : index
    %c3808 = arith.constant 3808 : index
    %259 = vector.load %arg22[%c0_140, %c3808] : memref<1x4224xf32, #tpu.memory_space<vmem>>, vector<1x128xf32>
    %c0_141 = arith.constant 0 : index
    %c3520 = arith.constant 3520 : index
    %260 = vector.load %arg22[%c0_141, %c3520] : memref<1x4224xf32, #tpu.memory_space<vmem>>, vector<1x128xf32>
    %c0_142 = arith.constant 0 : index
    %c2944 = arith.constant 2944 : index
    %261 = vector.load %arg22[%c0_142, %c2944] : memref<1x4224xf32, #tpu.memory_space<vmem>>, vector<1x128xf32>
    %c0_143 = arith.constant 0 : index
    %c1792 = arith.constant 1792 : index
    %262 = vector.load %arg22[%c0_143, %c1792] : memref<1x4224xf32, #tpu.memory_space<vmem>>, vector<1x128xf32>
    %263 = tpu.concatenate %255, %256, %257, %258, %259, %260, %261, %262 in 0 : vector<1x128xf32>, vector<1x128xf32>, vector<1x128xf32>, vector<1x128xf32>, vector<1x128xf32>, vector<1x128xf32>, vector<1x128xf32>, vector<1x128xf32> -> vector<8x128xf32>
    %264 = vector.extract_strided_slice %13 {offsets = [0, 14], sizes = [8, 1], strides = [1, 1]} : vector<16x33xf32> to vector<8x1xf32>
    %265 = vector.broadcast %264 : vector<8x1xf32> to vector<8x128xf32>
    %266 = arith.mulf %263, %265 : vector<8x128xf32>
    %267 = arith.addf %250, %266 : vector<8x128xf32>
    %268 = vector.extract_strided_slice %13 {offsets = [8, 14], sizes = [8, 1], strides = [1, 1]} : vector<16x33xf32> to vector<8x1xf32>
    %269 = vector.broadcast %268 : vector<8x1xf32> to vector<8x128xf32>
    %270 = arith.mulf %263, %269 : vector<8x128xf32>
    %271 = arith.addf %254, %270 : vector<8x128xf32>
    %c0_144 = arith.constant 0 : index
    %c4079 = arith.constant 4079 : index
    %272 = vector.load %arg22[%c0_144, %c4079] : memref<1x4224xf32, #tpu.memory_space<vmem>>, vector<1x128xf32>
    %c0_145 = arith.constant 0 : index
    %c4062 = arith.constant 4062 : index
    %273 = vector.load %arg22[%c0_145, %c4062] : memref<1x4224xf32, #tpu.memory_space<vmem>>, vector<1x128xf32>
    %c0_146 = arith.constant 0 : index
    %c4028 = arith.constant 4028 : index
    %274 = vector.load %arg22[%c0_146, %c4028] : memref<1x4224xf32, #tpu.memory_space<vmem>>, vector<1x128xf32>
    %c0_147 = arith.constant 0 : index
    %c3960 = arith.constant 3960 : index
    %275 = vector.load %arg22[%c0_147, %c3960] : memref<1x4224xf32, #tpu.memory_space<vmem>>, vector<1x128xf32>
    %c0_148 = arith.constant 0 : index
    %c3824 = arith.constant 3824 : index
    %276 = vector.load %arg22[%c0_148, %c3824] : memref<1x4224xf32, #tpu.memory_space<vmem>>, vector<1x128xf32>
    %c0_149 = arith.constant 0 : index
    %c3552 = arith.constant 3552 : index
    %277 = vector.load %arg22[%c0_149, %c3552] : memref<1x4224xf32, #tpu.memory_space<vmem>>, vector<1x128xf32>
    %c0_150 = arith.constant 0 : index
    %c3008 = arith.constant 3008 : index
    %278 = vector.load %arg22[%c0_150, %c3008] : memref<1x4224xf32, #tpu.memory_space<vmem>>, vector<1x128xf32>
    %c0_151 = arith.constant 0 : index
    %c1920 = arith.constant 1920 : index
    %279 = vector.load %arg22[%c0_151, %c1920] : memref<1x4224xf32, #tpu.memory_space<vmem>>, vector<1x128xf32>
    %280 = tpu.concatenate %272, %273, %274, %275, %276, %277, %278, %279 in 0 : vector<1x128xf32>, vector<1x128xf32>, vector<1x128xf32>, vector<1x128xf32>, vector<1x128xf32>, vector<1x128xf32>, vector<1x128xf32>, vector<1x128xf32> -> vector<8x128xf32>
    %281 = vector.extract_strided_slice %13 {offsets = [0, 15], sizes = [8, 1], strides = [1, 1]} : vector<16x33xf32> to vector<8x1xf32>
    %282 = vector.broadcast %281 : vector<8x1xf32> to vector<8x128xf32>
    %283 = arith.mulf %280, %282 : vector<8x128xf32>
    %284 = arith.addf %267, %283 : vector<8x128xf32>
    %285 = vector.extract_strided_slice %13 {offsets = [8, 15], sizes = [8, 1], strides = [1, 1]} : vector<16x33xf32> to vector<8x1xf32>
    %286 = vector.broadcast %285 : vector<8x1xf32> to vector<8x128xf32>
    %287 = arith.mulf %280, %286 : vector<8x128xf32>
    %288 = arith.addf %271, %287 : vector<8x128xf32>
    %c0_152 = arith.constant 0 : index
    %c4080 = arith.constant 4080 : index
    %289 = vector.load %arg22[%c0_152, %c4080] : memref<1x4224xf32, #tpu.memory_space<vmem>>, vector<1x128xf32>
    %c0_153 = arith.constant 0 : index
    %c4064_154 = arith.constant 4064 : index
    %290 = vector.load %arg22[%c0_153, %c4064_154] : memref<1x4224xf32, #tpu.memory_space<vmem>>, vector<1x128xf32>
    %c0_155 = arith.constant 0 : index
    %c4032_156 = arith.constant 4032 : index
    %291 = vector.load %arg22[%c0_155, %c4032_156] : memref<1x4224xf32, #tpu.memory_space<vmem>>, vector<1x128xf32>
    %c0_157 = arith.constant 0 : index
    %c3968_158 = arith.constant 3968 : index
    %292 = vector.load %arg22[%c0_157, %c3968_158] : memref<1x4224xf32, #tpu.memory_space<vmem>>, vector<1x128xf32>
    %c0_159 = arith.constant 0 : index
    %c3840_160 = arith.constant 3840 : index
    %293 = vector.load %arg22[%c0_159, %c3840_160] : memref<1x4224xf32, #tpu.memory_space<vmem>>, vector<1x128xf32>
    %c0_161 = arith.constant 0 : index
    %c3584_162 = arith.constant 3584 : index
    %294 = vector.load %arg22[%c0_161, %c3584_162] : memref<1x4224xf32, #tpu.memory_space<vmem>>, vector<1x128xf32>
    %c0_163 = arith.constant 0 : index
    %c3072_164 = arith.constant 3072 : index
    %295 = vector.load %arg22[%c0_163, %c3072_164] : memref<1x4224xf32, #tpu.memory_space<vmem>>, vector<1x128xf32>
    %c0_165 = arith.constant 0 : index
    %c2048_166 = arith.constant 2048 : index
    %296 = vector.load %arg22[%c0_165, %c2048_166] : memref<1x4224xf32, #tpu.memory_space<vmem>>, vector<1x128xf32>
    %297 = tpu.concatenate %289, %290, %291, %292, %293, %294, %295, %296 in 0 : vector<1x128xf32>, vector<1x128xf32>, vector<1x128xf32>, vector<1x128xf32>, vector<1x128xf32>, vector<1x128xf32>, vector<1x128xf32>, vector<1x128xf32> -> vector<8x128xf32>
    %298 = vector.extract_strided_slice %13 {offsets = [0, 16], sizes = [8, 1], strides = [1, 1]} : vector<16x33xf32> to vector<8x1xf32>
    %299 = vector.broadcast %298 : vector<8x1xf32> to vector<8x128xf32>
    %300 = arith.mulf %297, %299 : vector<8x128xf32>
    %301 = arith.addf %284, %300 : vector<8x128xf32>
    %302 = vector.extract_strided_slice %13 {offsets = [8, 16], sizes = [8, 1], strides = [1, 1]} : vector<16x33xf32> to vector<8x1xf32>
    %303 = vector.broadcast %302 : vector<8x1xf32> to vector<8x128xf32>
    %304 = arith.mulf %297, %303 : vector<8x128xf32>
    %305 = arith.addf %288, %304 : vector<8x128xf32>
    %c0_167 = arith.constant 0 : index
    %c4081 = arith.constant 4081 : index
    %306 = vector.load %arg22[%c0_167, %c4081] : memref<1x4224xf32, #tpu.memory_space<vmem>>, vector<1x128xf32>
    %c0_168 = arith.constant 0 : index
    %c4066_169 = arith.constant 4066 : index
    %307 = vector.load %arg22[%c0_168, %c4066_169] : memref<1x4224xf32, #tpu.memory_space<vmem>>, vector<1x128xf32>
    %c0_170 = arith.constant 0 : index
    %c4036_171 = arith.constant 4036 : index
    %308 = vector.load %arg22[%c0_170, %c4036_171] : memref<1x4224xf32, #tpu.memory_space<vmem>>, vector<1x128xf32>
    %c0_172 = arith.constant 0 : index
    %c3976_173 = arith.constant 3976 : index
    %309 = vector.load %arg22[%c0_172, %c3976_173] : memref<1x4224xf32, #tpu.memory_space<vmem>>, vector<1x128xf32>
    %c0_174 = arith.constant 0 : index
    %c3856_175 = arith.constant 3856 : index
    %310 = vector.load %arg22[%c0_174, %c3856_175] : memref<1x4224xf32, #tpu.memory_space<vmem>>, vector<1x128xf32>
    %c0_176 = arith.constant 0 : index
    %c3616_177 = arith.constant 3616 : index
    %311 = vector.load %arg22[%c0_176, %c3616_177] : memref<1x4224xf32, #tpu.memory_space<vmem>>, vector<1x128xf32>
    %c0_178 = arith.constant 0 : index
    %c3136_179 = arith.constant 3136 : index
    %312 = vector.load %arg22[%c0_178, %c3136_179] : memref<1x4224xf32, #tpu.memory_space<vmem>>, vector<1x128xf32>
    %c0_180 = arith.constant 0 : index
    %c2176_181 = arith.constant 2176 : index
    %313 = vector.load %arg22[%c0_180, %c2176_181] : memref<1x4224xf32, #tpu.memory_space<vmem>>, vector<1x128xf32>
    %314 = tpu.concatenate %306, %307, %308, %309, %310, %311, %312, %313 in 0 : vector<1x128xf32>, vector<1x128xf32>, vector<1x128xf32>, vector<1x128xf32>, vector<1x128xf32>, vector<1x128xf32>, vector<1x128xf32>, vector<1x128xf32> -> vector<8x128xf32>
    %315 = vector.extract_strided_slice %13 {offsets = [0, 17], sizes = [8, 1], strides = [1, 1]} : vector<16x33xf32> to vector<8x1xf32>
    %316 = vector.broadcast %315 : vector<8x1xf32> to vector<8x128xf32>
    %317 = arith.mulf %314, %316 : vector<8x128xf32>
    %318 = arith.addf %301, %317 : vector<8x128xf32>
    %319 = vector.extract_strided_slice %13 {offsets = [8, 17], sizes = [8, 1], strides = [1, 1]} : vector<16x33xf32> to vector<8x1xf32>
    %320 = vector.broadcast %319 : vector<8x1xf32> to vector<8x128xf32>
    %321 = arith.mulf %314, %320 : vector<8x128xf32>
    %322 = arith.addf %305, %321 : vector<8x128xf32>
    %c0_182 = arith.constant 0 : index
    %c4082 = arith.constant 4082 : index
    %323 = vector.load %arg22[%c0_182, %c4082] : memref<1x4224xf32, #tpu.memory_space<vmem>>, vector<1x128xf32>
    %c0_183 = arith.constant 0 : index
    %c4068_184 = arith.constant 4068 : index
    %324 = vector.load %arg22[%c0_183, %c4068_184] : memref<1x4224xf32, #tpu.memory_space<vmem>>, vector<1x128xf32>
    %c0_185 = arith.constant 0 : index
    %c4040_186 = arith.constant 4040 : index
    %325 = vector.load %arg22[%c0_185, %c4040_186] : memref<1x4224xf32, #tpu.memory_space<vmem>>, vector<1x128xf32>
    %c0_187 = arith.constant 0 : index
    %c3984_188 = arith.constant 3984 : index
    %326 = vector.load %arg22[%c0_187, %c3984_188] : memref<1x4224xf32, #tpu.memory_space<vmem>>, vector<1x128xf32>
    %c0_189 = arith.constant 0 : index
    %c3872_190 = arith.constant 3872 : index
    %327 = vector.load %arg22[%c0_189, %c3872_190] : memref<1x4224xf32, #tpu.memory_space<vmem>>, vector<1x128xf32>
    %c0_191 = arith.constant 0 : index
    %c3648_192 = arith.constant 3648 : index
    %328 = vector.load %arg22[%c0_191, %c3648_192] : memref<1x4224xf32, #tpu.memory_space<vmem>>, vector<1x128xf32>
    %c0_193 = arith.constant 0 : index
    %c3200_194 = arith.constant 3200 : index
    %329 = vector.load %arg22[%c0_193, %c3200_194] : memref<1x4224xf32, #tpu.memory_space<vmem>>, vector<1x128xf32>
    %c0_195 = arith.constant 0 : index
    %c2304_196 = arith.constant 2304 : index
    %330 = vector.load %arg22[%c0_195, %c2304_196] : memref<1x4224xf32, #tpu.memory_space<vmem>>, vector<1x128xf32>
    %331 = tpu.concatenate %323, %324, %325, %326, %327, %328, %329, %330 in 0 : vector<1x128xf32>, vector<1x128xf32>, vector<1x128xf32>, vector<1x128xf32>, vector<1x128xf32>, vector<1x128xf32>, vector<1x128xf32>, vector<1x128xf32> -> vector<8x128xf32>
    %332 = vector.extract_strided_slice %13 {offsets = [0, 18], sizes = [8, 1], strides = [1, 1]} : vector<16x33xf32> to vector<8x1xf32>
    %333 = vector.broadcast %332 : vector<8x1xf32> to vector<8x128xf32>
    %334 = arith.mulf %331, %333 : vector<8x128xf32>
    %335 = arith.addf %318, %334 : vector<8x128xf32>
    %336 = vector.extract_strided_slice %13 {offsets = [8, 18], sizes = [8, 1], strides = [1, 1]} : vector<16x33xf32> to vector<8x1xf32>
    %337 = vector.broadcast %336 : vector<8x1xf32> to vector<8x128xf32>
    %338 = arith.mulf %331, %337 : vector<8x128xf32>
    %339 = arith.addf %322, %338 : vector<8x128xf32>
    %c0_197 = arith.constant 0 : index
    %c4083 = arith.constant 4083 : index
    %340 = vector.load %arg22[%c0_197, %c4083] : memref<1x4224xf32, #tpu.memory_space<vmem>>, vector<1x128xf32>
    %c0_198 = arith.constant 0 : index
    %c4070_199 = arith.constant 4070 : index
    %341 = vector.load %arg22[%c0_198, %c4070_199] : memref<1x4224xf32, #tpu.memory_space<vmem>>, vector<1x128xf32>
    %c0_200 = arith.constant 0 : index
    %c4044_201 = arith.constant 4044 : index
    %342 = vector.load %arg22[%c0_200, %c4044_201] : memref<1x4224xf32, #tpu.memory_space<vmem>>, vector<1x128xf32>
    %c0_202 = arith.constant 0 : index
    %c3992_203 = arith.constant 3992 : index
    %343 = vector.load %arg22[%c0_202, %c3992_203] : memref<1x4224xf32, #tpu.memory_space<vmem>>, vector<1x128xf32>
    %c0_204 = arith.constant 0 : index
    %c3888_205 = arith.constant 3888 : index
    %344 = vector.load %arg22[%c0_204, %c3888_205] : memref<1x4224xf32, #tpu.memory_space<vmem>>, vector<1x128xf32>
    %c0_206 = arith.constant 0 : index
    %c3680_207 = arith.constant 3680 : index
    %345 = vector.load %arg22[%c0_206, %c3680_207] : memref<1x4224xf32, #tpu.memory_space<vmem>>, vector<1x128xf32>
    %c0_208 = arith.constant 0 : index
    %c3264_209 = arith.constant 3264 : index
    %346 = vector.load %arg22[%c0_208, %c3264_209] : memref<1x4224xf32, #tpu.memory_space<vmem>>, vector<1x128xf32>
    %c0_210 = arith.constant 0 : index
    %c2432_211 = arith.constant 2432 : index
    %347 = vector.load %arg22[%c0_210, %c2432_211] : memref<1x4224xf32, #tpu.memory_space<vmem>>, vector<1x128xf32>
    %348 = tpu.concatenate %340, %341, %342, %343, %344, %345, %346, %347 in 0 : vector<1x128xf32>, vector<1x128xf32>, vector<1x128xf32>, vector<1x128xf32>, vector<1x128xf32>, vector<1x128xf32>, vector<1x128xf32>, vector<1x128xf32> -> vector<8x128xf32>
    %349 = vector.extract_strided_slice %13 {offsets = [0, 19], sizes = [8, 1], strides = [1, 1]} : vector<16x33xf32> to vector<8x1xf32>
    %350 = vector.broadcast %349 : vector<8x1xf32> to vector<8x128xf32>
    %351 = arith.mulf %348, %350 : vector<8x128xf32>
    %352 = arith.addf %335, %351 : vector<8x128xf32>
    %353 = vector.extract_strided_slice %13 {offsets = [8, 19], sizes = [8, 1], strides = [1, 1]} : vector<16x33xf32> to vector<8x1xf32>
    %354 = vector.broadcast %353 : vector<8x1xf32> to vector<8x128xf32>
    %355 = arith.mulf %348, %354 : vector<8x128xf32>
    %356 = arith.addf %339, %355 : vector<8x128xf32>
    %c0_212 = arith.constant 0 : index
    %c4084 = arith.constant 4084 : index
    %357 = vector.load %arg22[%c0_212, %c4084] : memref<1x4224xf32, #tpu.memory_space<vmem>>, vector<1x128xf32>
    %c0_213 = arith.constant 0 : index
    %c4072_214 = arith.constant 4072 : index
    %358 = vector.load %arg22[%c0_213, %c4072_214] : memref<1x4224xf32, #tpu.memory_space<vmem>>, vector<1x128xf32>
    %c0_215 = arith.constant 0 : index
    %c4048_216 = arith.constant 4048 : index
    %359 = vector.load %arg22[%c0_215, %c4048_216] : memref<1x4224xf32, #tpu.memory_space<vmem>>, vector<1x128xf32>
    %c0_217 = arith.constant 0 : index
    %c4000_218 = arith.constant 4000 : index
    %360 = vector.load %arg22[%c0_217, %c4000_218] : memref<1x4224xf32, #tpu.memory_space<vmem>>, vector<1x128xf32>
    %c0_219 = arith.constant 0 : index
    %c3904_220 = arith.constant 3904 : index
    %361 = vector.load %arg22[%c0_219, %c3904_220] : memref<1x4224xf32, #tpu.memory_space<vmem>>, vector<1x128xf32>
    %c0_221 = arith.constant 0 : index
    %c3712_222 = arith.constant 3712 : index
    %362 = vector.load %arg22[%c0_221, %c3712_222] : memref<1x4224xf32, #tpu.memory_space<vmem>>, vector<1x128xf32>
    %c0_223 = arith.constant 0 : index
    %c3328_224 = arith.constant 3328 : index
    %363 = vector.load %arg22[%c0_223, %c3328_224] : memref<1x4224xf32, #tpu.memory_space<vmem>>, vector<1x128xf32>
    %c0_225 = arith.constant 0 : index
    %c2560_226 = arith.constant 2560 : index
    %364 = vector.load %arg22[%c0_225, %c2560_226] : memref<1x4224xf32, #tpu.memory_space<vmem>>, vector<1x128xf32>
    %365 = tpu.concatenate %357, %358, %359, %360, %361, %362, %363, %364 in 0 : vector<1x128xf32>, vector<1x128xf32>, vector<1x128xf32>, vector<1x128xf32>, vector<1x128xf32>, vector<1x128xf32>, vector<1x128xf32>, vector<1x128xf32> -> vector<8x128xf32>
    %366 = vector.extract_strided_slice %13 {offsets = [0, 20], sizes = [8, 1], strides = [1, 1]} : vector<16x33xf32> to vector<8x1xf32>
    %367 = vector.broadcast %366 : vector<8x1xf32> to vector<8x128xf32>
    %368 = arith.mulf %365, %367 : vector<8x128xf32>
    %369 = arith.addf %352, %368 : vector<8x128xf32>
    %370 = vector.extract_strided_slice %13 {offsets = [8, 20], sizes = [8, 1], strides = [1, 1]} : vector<16x33xf32> to vector<8x1xf32>
    %371 = vector.broadcast %370 : vector<8x1xf32> to vector<8x128xf32>
    %372 = arith.mulf %365, %371 : vector<8x128xf32>
    %373 = arith.addf %356, %372 : vector<8x128xf32>
    %c0_227 = arith.constant 0 : index
    %c4085 = arith.constant 4085 : index
    %374 = vector.load %arg22[%c0_227, %c4085] : memref<1x4224xf32, #tpu.memory_space<vmem>>, vector<1x128xf32>
    %c0_228 = arith.constant 0 : index
    %c4074_229 = arith.constant 4074 : index
    %375 = vector.load %arg22[%c0_228, %c4074_229] : memref<1x4224xf32, #tpu.memory_space<vmem>>, vector<1x128xf32>
    %c0_230 = arith.constant 0 : index
    %c4052_231 = arith.constant 4052 : index
    %376 = vector.load %arg22[%c0_230, %c4052_231] : memref<1x4224xf32, #tpu.memory_space<vmem>>, vector<1x128xf32>
    %c0_232 = arith.constant 0 : index
    %c4008_233 = arith.constant 4008 : index
    %377 = vector.load %arg22[%c0_232, %c4008_233] : memref<1x4224xf32, #tpu.memory_space<vmem>>, vector<1x128xf32>
    %c0_234 = arith.constant 0 : index
    %c3920_235 = arith.constant 3920 : index
    %378 = vector.load %arg22[%c0_234, %c3920_235] : memref<1x4224xf32, #tpu.memory_space<vmem>>, vector<1x128xf32>
    %c0_236 = arith.constant 0 : index
    %c3744_237 = arith.constant 3744 : index
    %379 = vector.load %arg22[%c0_236, %c3744_237] : memref<1x4224xf32, #tpu.memory_space<vmem>>, vector<1x128xf32>
    %c0_238 = arith.constant 0 : index
    %c3392_239 = arith.constant 3392 : index
    %380 = vector.load %arg22[%c0_238, %c3392_239] : memref<1x4224xf32, #tpu.memory_space<vmem>>, vector<1x128xf32>
    %c0_240 = arith.constant 0 : index
    %c2688_241 = arith.constant 2688 : index
    %381 = vector.load %arg22[%c0_240, %c2688_241] : memref<1x4224xf32, #tpu.memory_space<vmem>>, vector<1x128xf32>
    %382 = tpu.concatenate %374, %375, %376, %377, %378, %379, %380, %381 in 0 : vector<1x128xf32>, vector<1x128xf32>, vector<1x128xf32>, vector<1x128xf32>, vector<1x128xf32>, vector<1x128xf32>, vector<1x128xf32>, vector<1x128xf32> -> vector<8x128xf32>
    %383 = vector.extract_strided_slice %13 {offsets = [0, 21], sizes = [8, 1], strides = [1, 1]} : vector<16x33xf32> to vector<8x1xf32>
    %384 = vector.broadcast %383 : vector<8x1xf32> to vector<8x128xf32>
    %385 = arith.mulf %382, %384 : vector<8x128xf32>
    %386 = arith.addf %369, %385 : vector<8x128xf32>
    %387 = vector.extract_strided_slice %13 {offsets = [8, 21], sizes = [8, 1], strides = [1, 1]} : vector<16x33xf32> to vector<8x1xf32>
    %388 = vector.broadcast %387 : vector<8x1xf32> to vector<8x128xf32>
    %389 = arith.mulf %382, %388 : vector<8x128xf32>
    %390 = arith.addf %373, %389 : vector<8x128xf32>
    %c0_242 = arith.constant 0 : index
    %c4086 = arith.constant 4086 : index
    %391 = vector.load %arg22[%c0_242, %c4086] : memref<1x4224xf32, #tpu.memory_space<vmem>>, vector<1x128xf32>
    %c0_243 = arith.constant 0 : index
    %c4076_244 = arith.constant 4076 : index
    %392 = vector.load %arg22[%c0_243, %c4076_244] : memref<1x4224xf32, #tpu.memory_space<vmem>>, vector<1x128xf32>
    %c0_245 = arith.constant 0 : index
    %c4056_246 = arith.constant 4056 : index
    %393 = vector.load %arg22[%c0_245, %c4056_246] : memref<1x4224xf32, #tpu.memory_space<vmem>>, vector<1x128xf32>
    %c0_247 = arith.constant 0 : index
    %c4016_248 = arith.constant 4016 : index
    %394 = vector.load %arg22[%c0_247, %c4016_248] : memref<1x4224xf32, #tpu.memory_space<vmem>>, vector<1x128xf32>
    %c0_249 = arith.constant 0 : index
    %c3936_250 = arith.constant 3936 : index
    %395 = vector.load %arg22[%c0_249, %c3936_250] : memref<1x4224xf32, #tpu.memory_space<vmem>>, vector<1x128xf32>
    %c0_251 = arith.constant 0 : index
    %c3776_252 = arith.constant 3776 : index
    %396 = vector.load %arg22[%c0_251, %c3776_252] : memref<1x4224xf32, #tpu.memory_space<vmem>>, vector<1x128xf32>
    %c0_253 = arith.constant 0 : index
    %c3456_254 = arith.constant 3456 : index
    %397 = vector.load %arg22[%c0_253, %c3456_254] : memref<1x4224xf32, #tpu.memory_space<vmem>>, vector<1x128xf32>
    %c0_255 = arith.constant 0 : index
    %c2816_256 = arith.constant 2816 : index
    %398 = vector.load %arg22[%c0_255, %c2816_256] : memref<1x4224xf32, #tpu.memory_space<vmem>>, vector<1x128xf32>
    %399 = tpu.concatenate %391, %392, %393, %394, %395, %396, %397, %398 in 0 : vector<1x128xf32>, vector<1x128xf32>, vector<1x128xf32>, vector<1x128xf32>, vector<1x128xf32>, vector<1x128xf32>, vector<1x128xf32>, vector<1x128xf32> -> vector<8x128xf32>
    %400 = vector.extract_strided_slice %13 {offsets = [0, 22], sizes = [8, 1], strides = [1, 1]} : vector<16x33xf32> to vector<8x1xf32>
    %401 = vector.broadcast %400 : vector<8x1xf32> to vector<8x128xf32>
    %402 = arith.mulf %399, %401 : vector<8x128xf32>
    %403 = arith.addf %386, %402 : vector<8x128xf32>
    %404 = vector.extract_strided_slice %13 {offsets = [8, 22], sizes = [8, 1], strides = [1, 1]} : vector<16x33xf32> to vector<8x1xf32>
    %405 = vector.broadcast %404 : vector<8x1xf32> to vector<8x128xf32>
    %406 = arith.mulf %399, %405 : vector<8x128xf32>
    %407 = arith.addf %390, %406 : vector<8x128xf32>
    %c0_257 = arith.constant 0 : index
    %c4087 = arith.constant 4087 : index
    %408 = vector.load %arg22[%c0_257, %c4087] : memref<1x4224xf32, #tpu.memory_space<vmem>>, vector<1x128xf32>
    %c0_258 = arith.constant 0 : index
    %c4078_259 = arith.constant 4078 : index
    %409 = vector.load %arg22[%c0_258, %c4078_259] : memref<1x4224xf32, #tpu.memory_space<vmem>>, vector<1x128xf32>
    %c0_260 = arith.constant 0 : index
    %c4060_261 = arith.constant 4060 : index
    %410 = vector.load %arg22[%c0_260, %c4060_261] : memref<1x4224xf32, #tpu.memory_space<vmem>>, vector<1x128xf32>
    %c0_262 = arith.constant 0 : index
    %c4024_263 = arith.constant 4024 : index
    %411 = vector.load %arg22[%c0_262, %c4024_263] : memref<1x4224xf32, #tpu.memory_space<vmem>>, vector<1x128xf32>
    %c0_264 = arith.constant 0 : index
    %c3952_265 = arith.constant 3952 : index
    %412 = vector.load %arg22[%c0_264, %c3952_265] : memref<1x4224xf32, #tpu.memory_space<vmem>>, vector<1x128xf32>
    %c0_266 = arith.constant 0 : index
    %c3808_267 = arith.constant 3808 : index
    %413 = vector.load %arg22[%c0_266, %c3808_267] : memref<1x4224xf32, #tpu.memory_space<vmem>>, vector<1x128xf32>
    %c0_268 = arith.constant 0 : index
    %c3520_269 = arith.constant 3520 : index
    %414 = vector.load %arg22[%c0_268, %c3520_269] : memref<1x4224xf32, #tpu.memory_space<vmem>>, vector<1x128xf32>
    %c0_270 = arith.constant 0 : index
    %c2944_271 = arith.constant 2944 : index
    %415 = vector.load %arg22[%c0_270, %c2944_271] : memref<1x4224xf32, #tpu.memory_space<vmem>>, vector<1x128xf32>
    %416 = tpu.concatenate %408, %409, %410, %411, %412, %413, %414, %415 in 0 : vector<1x128xf32>, vector<1x128xf32>, vector<1x128xf32>, vector<1x128xf32>, vector<1x128xf32>, vector<1x128xf32>, vector<1x128xf32>, vector<1x128xf32> -> vector<8x128xf32>
    %417 = vector.extract_strided_slice %13 {offsets = [0, 23], sizes = [8, 1], strides = [1, 1]} : vector<16x33xf32> to vector<8x1xf32>
    %418 = vector.broadcast %417 : vector<8x1xf32> to vector<8x128xf32>
    %419 = arith.mulf %416, %418 : vector<8x128xf32>
    %420 = arith.addf %403, %419 : vector<8x128xf32>
    %421 = vector.extract_strided_slice %13 {offsets = [8, 23], sizes = [8, 1], strides = [1, 1]} : vector<16x33xf32> to vector<8x1xf32>
    %422 = vector.broadcast %421 : vector<8x1xf32> to vector<8x128xf32>
    %423 = arith.mulf %416, %422 : vector<8x128xf32>
    %424 = arith.addf %407, %423 : vector<8x128xf32>
    %c0_272 = arith.constant 0 : index
    %c4088 = arith.constant 4088 : index
    %425 = vector.load %arg22[%c0_272, %c4088] : memref<1x4224xf32, #tpu.memory_space<vmem>>, vector<1x128xf32>
    %c0_273 = arith.constant 0 : index
    %c4080_274 = arith.constant 4080 : index
    %426 = vector.load %arg22[%c0_273, %c4080_274] : memref<1x4224xf32, #tpu.memory_space<vmem>>, vector<1x128xf32>
    %c0_275 = arith.constant 0 : index
    %c4064_276 = arith.constant 4064 : index
    %427 = vector.load %arg22[%c0_275, %c4064_276] : memref<1x4224xf32, #tpu.memory_space<vmem>>, vector<1x128xf32>
    %c0_277 = arith.constant 0 : index
    %c4032_278 = arith.constant 4032 : index
    %428 = vector.load %arg22[%c0_277, %c4032_278] : memref<1x4224xf32, #tpu.memory_space<vmem>>, vector<1x128xf32>
    %c0_279 = arith.constant 0 : index
    %c3968_280 = arith.constant 3968 : index
    %429 = vector.load %arg22[%c0_279, %c3968_280] : memref<1x4224xf32, #tpu.memory_space<vmem>>, vector<1x128xf32>
    %c0_281 = arith.constant 0 : index
    %c3840_282 = arith.constant 3840 : index
    %430 = vector.load %arg22[%c0_281, %c3840_282] : memref<1x4224xf32, #tpu.memory_space<vmem>>, vector<1x128xf32>
    %c0_283 = arith.constant 0 : index
    %c3584_284 = arith.constant 3584 : index
    %431 = vector.load %arg22[%c0_283, %c3584_284] : memref<1x4224xf32, #tpu.memory_space<vmem>>, vector<1x128xf32>
    %c0_285 = arith.constant 0 : index
    %c3072_286 = arith.constant 3072 : index
    %432 = vector.load %arg22[%c0_285, %c3072_286] : memref<1x4224xf32, #tpu.memory_space<vmem>>, vector<1x128xf32>
    %433 = tpu.concatenate %425, %426, %427, %428, %429, %430, %431, %432 in 0 : vector<1x128xf32>, vector<1x128xf32>, vector<1x128xf32>, vector<1x128xf32>, vector<1x128xf32>, vector<1x128xf32>, vector<1x128xf32>, vector<1x128xf32> -> vector<8x128xf32>
    %434 = vector.extract_strided_slice %13 {offsets = [0, 24], sizes = [8, 1], strides = [1, 1]} : vector<16x33xf32> to vector<8x1xf32>
    %435 = vector.broadcast %434 : vector<8x1xf32> to vector<8x128xf32>
    %436 = arith.mulf %433, %435 : vector<8x128xf32>
    %437 = arith.addf %420, %436 : vector<8x128xf32>
    %438 = vector.extract_strided_slice %13 {offsets = [8, 24], sizes = [8, 1], strides = [1, 1]} : vector<16x33xf32> to vector<8x1xf32>
    %439 = vector.broadcast %438 : vector<8x1xf32> to vector<8x128xf32>
    %440 = arith.mulf %433, %439 : vector<8x128xf32>
    %441 = arith.addf %424, %440 : vector<8x128xf32>
    %c0_287 = arith.constant 0 : index
    %c4089 = arith.constant 4089 : index
    %442 = vector.load %arg22[%c0_287, %c4089] : memref<1x4224xf32, #tpu.memory_space<vmem>>, vector<1x128xf32>
    %c0_288 = arith.constant 0 : index
    %c4082_289 = arith.constant 4082 : index
    %443 = vector.load %arg22[%c0_288, %c4082_289] : memref<1x4224xf32, #tpu.memory_space<vmem>>, vector<1x128xf32>
    %c0_290 = arith.constant 0 : index
    %c4068_291 = arith.constant 4068 : index
    %444 = vector.load %arg22[%c0_290, %c4068_291] : memref<1x4224xf32, #tpu.memory_space<vmem>>, vector<1x128xf32>
    %c0_292 = arith.constant 0 : index
    %c4040_293 = arith.constant 4040 : index
    %445 = vector.load %arg22[%c0_292, %c4040_293] : memref<1x4224xf32, #tpu.memory_space<vmem>>, vector<1x128xf32>
    %c0_294 = arith.constant 0 : index
    %c3984_295 = arith.constant 3984 : index
    %446 = vector.load %arg22[%c0_294, %c3984_295] : memref<1x4224xf32, #tpu.memory_space<vmem>>, vector<1x128xf32>
    %c0_296 = arith.constant 0 : index
    %c3872_297 = arith.constant 3872 : index
    %447 = vector.load %arg22[%c0_296, %c3872_297] : memref<1x4224xf32, #tpu.memory_space<vmem>>, vector<1x128xf32>
    %c0_298 = arith.constant 0 : index
    %c3648_299 = arith.constant 3648 : index
    %448 = vector.load %arg22[%c0_298, %c3648_299] : memref<1x4224xf32, #tpu.memory_space<vmem>>, vector<1x128xf32>
    %c0_300 = arith.constant 0 : index
    %c3200_301 = arith.constant 3200 : index
    %449 = vector.load %arg22[%c0_300, %c3200_301] : memref<1x4224xf32, #tpu.memory_space<vmem>>, vector<1x128xf32>
    %450 = tpu.concatenate %442, %443, %444, %445, %446, %447, %448, %449 in 0 : vector<1x128xf32>, vector<1x128xf32>, vector<1x128xf32>, vector<1x128xf32>, vector<1x128xf32>, vector<1x128xf32>, vector<1x128xf32>, vector<1x128xf32> -> vector<8x128xf32>
    %451 = vector.extract_strided_slice %13 {offsets = [0, 25], sizes = [8, 1], strides = [1, 1]} : vector<16x33xf32> to vector<8x1xf32>
    %452 = vector.broadcast %451 : vector<8x1xf32> to vector<8x128xf32>
    %453 = arith.mulf %450, %452 : vector<8x128xf32>
    %454 = arith.addf %437, %453 : vector<8x128xf32>
    %455 = vector.extract_strided_slice %13 {offsets = [8, 25], sizes = [8, 1], strides = [1, 1]} : vector<16x33xf32> to vector<8x1xf32>
    %456 = vector.broadcast %455 : vector<8x1xf32> to vector<8x128xf32>
    %457 = arith.mulf %450, %456 : vector<8x128xf32>
    %458 = arith.addf %441, %457 : vector<8x128xf32>
    %c0_302 = arith.constant 0 : index
    %c4090 = arith.constant 4090 : index
    %459 = vector.load %arg22[%c0_302, %c4090] : memref<1x4224xf32, #tpu.memory_space<vmem>>, vector<1x128xf32>
    %c0_303 = arith.constant 0 : index
    %c4084_304 = arith.constant 4084 : index
    %460 = vector.load %arg22[%c0_303, %c4084_304] : memref<1x4224xf32, #tpu.memory_space<vmem>>, vector<1x128xf32>
    %c0_305 = arith.constant 0 : index
    %c4072_306 = arith.constant 4072 : index
    %461 = vector.load %arg22[%c0_305, %c4072_306] : memref<1x4224xf32, #tpu.memory_space<vmem>>, vector<1x128xf32>
    %c0_307 = arith.constant 0 : index
    %c4048_308 = arith.constant 4048 : index
    %462 = vector.load %arg22[%c0_307, %c4048_308] : memref<1x4224xf32, #tpu.memory_space<vmem>>, vector<1x128xf32>
    %c0_309 = arith.constant 0 : index
    %c4000_310 = arith.constant 4000 : index
    %463 = vector.load %arg22[%c0_309, %c4000_310] : memref<1x4224xf32, #tpu.memory_space<vmem>>, vector<1x128xf32>
    %c0_311 = arith.constant 0 : index
    %c3904_312 = arith.constant 3904 : index
    %464 = vector.load %arg22[%c0_311, %c3904_312] : memref<1x4224xf32, #tpu.memory_space<vmem>>, vector<1x128xf32>
    %c0_313 = arith.constant 0 : index
    %c3712_314 = arith.constant 3712 : index
    %465 = vector.load %arg22[%c0_313, %c3712_314] : memref<1x4224xf32, #tpu.memory_space<vmem>>, vector<1x128xf32>
    %c0_315 = arith.constant 0 : index
    %c3328_316 = arith.constant 3328 : index
    %466 = vector.load %arg22[%c0_315, %c3328_316] : memref<1x4224xf32, #tpu.memory_space<vmem>>, vector<1x128xf32>
    %467 = tpu.concatenate %459, %460, %461, %462, %463, %464, %465, %466 in 0 : vector<1x128xf32>, vector<1x128xf32>, vector<1x128xf32>, vector<1x128xf32>, vector<1x128xf32>, vector<1x128xf32>, vector<1x128xf32>, vector<1x128xf32> -> vector<8x128xf32>
    %468 = vector.extract_strided_slice %13 {offsets = [0, 26], sizes = [8, 1], strides = [1, 1]} : vector<16x33xf32> to vector<8x1xf32>
    %469 = vector.broadcast %468 : vector<8x1xf32> to vector<8x128xf32>
    %470 = arith.mulf %467, %469 : vector<8x128xf32>
    %471 = arith.addf %454, %470 : vector<8x128xf32>
    %472 = vector.extract_strided_slice %13 {offsets = [8, 26], sizes = [8, 1], strides = [1, 1]} : vector<16x33xf32> to vector<8x1xf32>
    %473 = vector.broadcast %472 : vector<8x1xf32> to vector<8x128xf32>
    %474 = arith.mulf %467, %473 : vector<8x128xf32>
    %475 = arith.addf %458, %474 : vector<8x128xf32>
    %c0_317 = arith.constant 0 : index
    %c4091 = arith.constant 4091 : index
    %476 = vector.load %arg22[%c0_317, %c4091] : memref<1x4224xf32, #tpu.memory_space<vmem>>, vector<1x128xf32>
    %c0_318 = arith.constant 0 : index
    %c4086_319 = arith.constant 4086 : index
    %477 = vector.load %arg22[%c0_318, %c4086_319] : memref<1x4224xf32, #tpu.memory_space<vmem>>, vector<1x128xf32>
    %c0_320 = arith.constant 0 : index
    %c4076_321 = arith.constant 4076 : index
    %478 = vector.load %arg22[%c0_320, %c4076_321] : memref<1x4224xf32, #tpu.memory_space<vmem>>, vector<1x128xf32>
    %c0_322 = arith.constant 0 : index
    %c4056_323 = arith.constant 4056 : index
    %479 = vector.load %arg22[%c0_322, %c4056_323] : memref<1x4224xf32, #tpu.memory_space<vmem>>, vector<1x128xf32>
    %c0_324 = arith.constant 0 : index
    %c4016_325 = arith.constant 4016 : index
    %480 = vector.load %arg22[%c0_324, %c4016_325] : memref<1x4224xf32, #tpu.memory_space<vmem>>, vector<1x128xf32>
    %c0_326 = arith.constant 0 : index
    %c3936_327 = arith.constant 3936 : index
    %481 = vector.load %arg22[%c0_326, %c3936_327] : memref<1x4224xf32, #tpu.memory_space<vmem>>, vector<1x128xf32>
    %c0_328 = arith.constant 0 : index
    %c3776_329 = arith.constant 3776 : index
    %482 = vector.load %arg22[%c0_328, %c3776_329] : memref<1x4224xf32, #tpu.memory_space<vmem>>, vector<1x128xf32>
    %c0_330 = arith.constant 0 : index
    %c3456_331 = arith.constant 3456 : index
    %483 = vector.load %arg22[%c0_330, %c3456_331] : memref<1x4224xf32, #tpu.memory_space<vmem>>, vector<1x128xf32>
    %484 = tpu.concatenate %476, %477, %478, %479, %480, %481, %482, %483 in 0 : vector<1x128xf32>, vector<1x128xf32>, vector<1x128xf32>, vector<1x128xf32>, vector<1x128xf32>, vector<1x128xf32>, vector<1x128xf32>, vector<1x128xf32> -> vector<8x128xf32>
    %485 = vector.extract_strided_slice %13 {offsets = [0, 27], sizes = [8, 1], strides = [1, 1]} : vector<16x33xf32> to vector<8x1xf32>
    %486 = vector.broadcast %485 : vector<8x1xf32> to vector<8x128xf32>
    %487 = arith.mulf %484, %486 : vector<8x128xf32>
    %488 = arith.addf %471, %487 : vector<8x128xf32>
    %489 = vector.extract_strided_slice %13 {offsets = [8, 27], sizes = [8, 1], strides = [1, 1]} : vector<16x33xf32> to vector<8x1xf32>
    %490 = vector.broadcast %489 : vector<8x1xf32> to vector<8x128xf32>
    %491 = arith.mulf %484, %490 : vector<8x128xf32>
    %492 = arith.addf %475, %491 : vector<8x128xf32>
    %c0_332 = arith.constant 0 : index
    %c4092 = arith.constant 4092 : index
    %493 = vector.load %arg22[%c0_332, %c4092] : memref<1x4224xf32, #tpu.memory_space<vmem>>, vector<1x128xf32>
    %c0_333 = arith.constant 0 : index
    %c4088_334 = arith.constant 4088 : index
    %494 = vector.load %arg22[%c0_333, %c4088_334] : memref<1x4224xf32, #tpu.memory_space<vmem>>, vector<1x128xf32>
    %c0_335 = arith.constant 0 : index
    %c4080_336 = arith.constant 4080 : index
    %495 = vector.load %arg22[%c0_335, %c4080_336] : memref<1x4224xf32, #tpu.memory_space<vmem>>, vector<1x128xf32>
    %c0_337 = arith.constant 0 : index
    %c4064_338 = arith.constant 4064 : index
    %496 = vector.load %arg22[%c0_337, %c4064_338] : memref<1x4224xf32, #tpu.memory_space<vmem>>, vector<1x128xf32>
    %c0_339 = arith.constant 0 : index
    %c4032_340 = arith.constant 4032 : index
    %497 = vector.load %arg22[%c0_339, %c4032_340] : memref<1x4224xf32, #tpu.memory_space<vmem>>, vector<1x128xf32>
    %c0_341 = arith.constant 0 : index
    %c3968_342 = arith.constant 3968 : index
    %498 = vector.load %arg22[%c0_341, %c3968_342] : memref<1x4224xf32, #tpu.memory_space<vmem>>, vector<1x128xf32>
    %c0_343 = arith.constant 0 : index
    %c3840_344 = arith.constant 3840 : index
    %499 = vector.load %arg22[%c0_343, %c3840_344] : memref<1x4224xf32, #tpu.memory_space<vmem>>, vector<1x128xf32>
    %c0_345 = arith.constant 0 : index
    %c3584_346 = arith.constant 3584 : index
    %500 = vector.load %arg22[%c0_345, %c3584_346] : memref<1x4224xf32, #tpu.memory_space<vmem>>, vector<1x128xf32>
    %501 = tpu.concatenate %493, %494, %495, %496, %497, %498, %499, %500 in 0 : vector<1x128xf32>, vector<1x128xf32>, vector<1x128xf32>, vector<1x128xf32>, vector<1x128xf32>, vector<1x128xf32>, vector<1x128xf32>, vector<1x128xf32> -> vector<8x128xf32>
    %502 = vector.extract_strided_slice %13 {offsets = [0, 28], sizes = [8, 1], strides = [1, 1]} : vector<16x33xf32> to vector<8x1xf32>
    %503 = vector.broadcast %502 : vector<8x1xf32> to vector<8x128xf32>
    %504 = arith.mulf %501, %503 : vector<8x128xf32>
    %505 = arith.addf %488, %504 : vector<8x128xf32>
    %506 = vector.extract_strided_slice %13 {offsets = [8, 28], sizes = [8, 1], strides = [1, 1]} : vector<16x33xf32> to vector<8x1xf32>
    %507 = vector.broadcast %506 : vector<8x1xf32> to vector<8x128xf32>
    %508 = arith.mulf %501, %507 : vector<8x128xf32>
    %509 = arith.addf %492, %508 : vector<8x128xf32>
    %c0_347 = arith.constant 0 : index
    %c4093 = arith.constant 4093 : index
    %510 = vector.load %arg22[%c0_347, %c4093] : memref<1x4224xf32, #tpu.memory_space<vmem>>, vector<1x128xf32>
    %c0_348 = arith.constant 0 : index
    %c4090_349 = arith.constant 4090 : index
    %511 = vector.load %arg22[%c0_348, %c4090_349] : memref<1x4224xf32, #tpu.memory_space<vmem>>, vector<1x128xf32>
    %c0_350 = arith.constant 0 : index
    %c4084_351 = arith.constant 4084 : index
    %512 = vector.load %arg22[%c0_350, %c4084_351] : memref<1x4224xf32, #tpu.memory_space<vmem>>, vector<1x128xf32>
    %c0_352 = arith.constant 0 : index
    %c4072_353 = arith.constant 4072 : index
    %513 = vector.load %arg22[%c0_352, %c4072_353] : memref<1x4224xf32, #tpu.memory_space<vmem>>, vector<1x128xf32>
    %c0_354 = arith.constant 0 : index
    %c4048_355 = arith.constant 4048 : index
    %514 = vector.load %arg22[%c0_354, %c4048_355] : memref<1x4224xf32, #tpu.memory_space<vmem>>, vector<1x128xf32>
    %c0_356 = arith.constant 0 : index
    %c4000_357 = arith.constant 4000 : index
    %515 = vector.load %arg22[%c0_356, %c4000_357] : memref<1x4224xf32, #tpu.memory_space<vmem>>, vector<1x128xf32>
    %c0_358 = arith.constant 0 : index
    %c3904_359 = arith.constant 3904 : index
    %516 = vector.load %arg22[%c0_358, %c3904_359] : memref<1x4224xf32, #tpu.memory_space<vmem>>, vector<1x128xf32>
    %c0_360 = arith.constant 0 : index
    %c3712_361 = arith.constant 3712 : index
    %517 = vector.load %arg22[%c0_360, %c3712_361] : memref<1x4224xf32, #tpu.memory_space<vmem>>, vector<1x128xf32>
    %518 = tpu.concatenate %510, %511, %512, %513, %514, %515, %516, %517 in 0 : vector<1x128xf32>, vector<1x128xf32>, vector<1x128xf32>, vector<1x128xf32>, vector<1x128xf32>, vector<1x128xf32>, vector<1x128xf32>, vector<1x128xf32> -> vector<8x128xf32>
    %519 = vector.extract_strided_slice %13 {offsets = [0, 29], sizes = [8, 1], strides = [1, 1]} : vector<16x33xf32> to vector<8x1xf32>
    %520 = vector.broadcast %519 : vector<8x1xf32> to vector<8x128xf32>
    %521 = arith.mulf %518, %520 : vector<8x128xf32>
    %522 = arith.addf %505, %521 : vector<8x128xf32>
    %523 = vector.extract_strided_slice %13 {offsets = [8, 29], sizes = [8, 1], strides = [1, 1]} : vector<16x33xf32> to vector<8x1xf32>
    %524 = vector.broadcast %523 : vector<8x1xf32> to vector<8x128xf32>
    %525 = arith.mulf %518, %524 : vector<8x128xf32>
    %526 = arith.addf %509, %525 : vector<8x128xf32>
    %c0_362 = arith.constant 0 : index
    %c4094 = arith.constant 4094 : index
    %527 = vector.load %arg22[%c0_362, %c4094] : memref<1x4224xf32, #tpu.memory_space<vmem>>, vector<1x128xf32>
    %c0_363 = arith.constant 0 : index
    %c4092_364 = arith.constant 4092 : index
    %528 = vector.load %arg22[%c0_363, %c4092_364] : memref<1x4224xf32, #tpu.memory_space<vmem>>, vector<1x128xf32>
    %c0_365 = arith.constant 0 : index
    %c4088_366 = arith.constant 4088 : index
    %529 = vector.load %arg22[%c0_365, %c4088_366] : memref<1x4224xf32, #tpu.memory_space<vmem>>, vector<1x128xf32>
    %c0_367 = arith.constant 0 : index
    %c4080_368 = arith.constant 4080 : index
    %530 = vector.load %arg22[%c0_367, %c4080_368] : memref<1x4224xf32, #tpu.memory_space<vmem>>, vector<1x128xf32>
    %c0_369 = arith.constant 0 : index
    %c4064_370 = arith.constant 4064 : index
    %531 = vector.load %arg22[%c0_369, %c4064_370] : memref<1x4224xf32, #tpu.memory_space<vmem>>, vector<1x128xf32>
    %c0_371 = arith.constant 0 : index
    %c4032_372 = arith.constant 4032 : index
    %532 = vector.load %arg22[%c0_371, %c4032_372] : memref<1x4224xf32, #tpu.memory_space<vmem>>, vector<1x128xf32>
    %c0_373 = arith.constant 0 : index
    %c3968_374 = arith.constant 3968 : index
    %533 = vector.load %arg22[%c0_373, %c3968_374] : memref<1x4224xf32, #tpu.memory_space<vmem>>, vector<1x128xf32>
    %c0_375 = arith.constant 0 : index
    %c3840_376 = arith.constant 3840 : index
    %534 = vector.load %arg22[%c0_375, %c3840_376] : memref<1x4224xf32, #tpu.memory_space<vmem>>, vector<1x128xf32>
    %535 = tpu.concatenate %527, %528, %529, %530, %531, %532, %533, %534 in 0 : vector<1x128xf32>, vector<1x128xf32>, vector<1x128xf32>, vector<1x128xf32>, vector<1x128xf32>, vector<1x128xf32>, vector<1x128xf32>, vector<1x128xf32> -> vector<8x128xf32>
    %536 = vector.extract_strided_slice %13 {offsets = [0, 30], sizes = [8, 1], strides = [1, 1]} : vector<16x33xf32> to vector<8x1xf32>
    %537 = vector.broadcast %536 : vector<8x1xf32> to vector<8x128xf32>
    %538 = arith.mulf %535, %537 : vector<8x128xf32>
    %539 = arith.addf %522, %538 : vector<8x128xf32>
    %540 = vector.extract_strided_slice %13 {offsets = [8, 30], sizes = [8, 1], strides = [1, 1]} : vector<16x33xf32> to vector<8x1xf32>
    %541 = vector.broadcast %540 : vector<8x1xf32> to vector<8x128xf32>
    %542 = arith.mulf %535, %541 : vector<8x128xf32>
    %543 = arith.addf %526, %542 : vector<8x128xf32>
    %c0_377 = arith.constant 0 : index
    %c4095 = arith.constant 4095 : index
    %544 = vector.load %arg22[%c0_377, %c4095] : memref<1x4224xf32, #tpu.memory_space<vmem>>, vector<1x128xf32>
    %c0_378 = arith.constant 0 : index
    %c4094_379 = arith.constant 4094 : index
    %545 = vector.load %arg22[%c0_378, %c4094_379] : memref<1x4224xf32, #tpu.memory_space<vmem>>, vector<1x128xf32>
    %c0_380 = arith.constant 0 : index
    %c4092_381 = arith.constant 4092 : index
    %546 = vector.load %arg22[%c0_380, %c4092_381] : memref<1x4224xf32, #tpu.memory_space<vmem>>, vector<1x128xf32>
    %c0_382 = arith.constant 0 : index
    %c4088_383 = arith.constant 4088 : index
    %547 = vector.load %arg22[%c0_382, %c4088_383] : memref<1x4224xf32, #tpu.memory_space<vmem>>, vector<1x128xf32>
    %c0_384 = arith.constant 0 : index
    %c4080_385 = arith.constant 4080 : index
    %548 = vector.load %arg22[%c0_384, %c4080_385] : memref<1x4224xf32, #tpu.memory_space<vmem>>, vector<1x128xf32>
    %c0_386 = arith.constant 0 : index
    %c4064_387 = arith.constant 4064 : index
    %549 = vector.load %arg22[%c0_386, %c4064_387] : memref<1x4224xf32, #tpu.memory_space<vmem>>, vector<1x128xf32>
    %c0_388 = arith.constant 0 : index
    %c4032_389 = arith.constant 4032 : index
    %550 = vector.load %arg22[%c0_388, %c4032_389] : memref<1x4224xf32, #tpu.memory_space<vmem>>, vector<1x128xf32>
    %c0_390 = arith.constant 0 : index
    %c3968_391 = arith.constant 3968 : index
    %551 = vector.load %arg22[%c0_390, %c3968_391] : memref<1x4224xf32, #tpu.memory_space<vmem>>, vector<1x128xf32>
    %552 = tpu.concatenate %544, %545, %546, %547, %548, %549, %550, %551 in 0 : vector<1x128xf32>, vector<1x128xf32>, vector<1x128xf32>, vector<1x128xf32>, vector<1x128xf32>, vector<1x128xf32>, vector<1x128xf32>, vector<1x128xf32> -> vector<8x128xf32>
    %553 = vector.extract_strided_slice %13 {offsets = [0, 31], sizes = [8, 1], strides = [1, 1]} : vector<16x33xf32> to vector<8x1xf32>
    %554 = vector.broadcast %553 : vector<8x1xf32> to vector<8x128xf32>
    %555 = arith.mulf %552, %554 : vector<8x128xf32>
    %556 = arith.addf %539, %555 : vector<8x128xf32>
    %557 = vector.extract_strided_slice %13 {offsets = [8, 31], sizes = [8, 1], strides = [1, 1]} : vector<16x33xf32> to vector<8x1xf32>
    %558 = vector.broadcast %557 : vector<8x1xf32> to vector<8x128xf32>
    %559 = arith.mulf %552, %558 : vector<8x128xf32>
    %560 = arith.addf %543, %559 : vector<8x128xf32>
    %c0_392 = arith.constant 0 : index
    %c4096_393 = arith.constant 4096 : index
    %561 = vector.load %arg22[%c0_392, %c4096_393] : memref<1x4224xf32, #tpu.memory_space<vmem>>, vector<1x128xf32>
    %c0_394 = arith.constant 0 : index
    %c4096_395 = arith.constant 4096 : index
    %562 = vector.load %arg22[%c0_394, %c4096_395] : memref<1x4224xf32, #tpu.memory_space<vmem>>, vector<1x128xf32>
    %c0_396 = arith.constant 0 : index
    %c4096_397 = arith.constant 4096 : index
    %563 = vector.load %arg22[%c0_396, %c4096_397] : memref<1x4224xf32, #tpu.memory_space<vmem>>, vector<1x128xf32>
    %c0_398 = arith.constant 0 : index
    %c4096_399 = arith.constant 4096 : index
    %564 = vector.load %arg22[%c0_398, %c4096_399] : memref<1x4224xf32, #tpu.memory_space<vmem>>, vector<1x128xf32>
    %c0_400 = arith.constant 0 : index
    %c4096_401 = arith.constant 4096 : index
    %565 = vector.load %arg22[%c0_400, %c4096_401] : memref<1x4224xf32, #tpu.memory_space<vmem>>, vector<1x128xf32>
    %c0_402 = arith.constant 0 : index
    %c4096_403 = arith.constant 4096 : index
    %566 = vector.load %arg22[%c0_402, %c4096_403] : memref<1x4224xf32, #tpu.memory_space<vmem>>, vector<1x128xf32>
    %c0_404 = arith.constant 0 : index
    %c4096_405 = arith.constant 4096 : index
    %567 = vector.load %arg22[%c0_404, %c4096_405] : memref<1x4224xf32, #tpu.memory_space<vmem>>, vector<1x128xf32>
    %c0_406 = arith.constant 0 : index
    %c4096_407 = arith.constant 4096 : index
    %568 = vector.load %arg22[%c0_406, %c4096_407] : memref<1x4224xf32, #tpu.memory_space<vmem>>, vector<1x128xf32>
    %569 = tpu.concatenate %561, %562, %563, %564, %565, %566, %567, %568 in 0 : vector<1x128xf32>, vector<1x128xf32>, vector<1x128xf32>, vector<1x128xf32>, vector<1x128xf32>, vector<1x128xf32>, vector<1x128xf32>, vector<1x128xf32> -> vector<8x128xf32>
    %570 = vector.extract_strided_slice %13 {offsets = [0, 32], sizes = [8, 1], strides = [1, 1]} : vector<16x33xf32> to vector<8x1xf32>
    %571 = vector.broadcast %570 : vector<8x1xf32> to vector<8x128xf32>
    %572 = arith.mulf %569, %571 : vector<8x128xf32>
    %573 = arith.addf %556, %572 : vector<8x128xf32>
    %574 = vector.extract_strided_slice %13 {offsets = [8, 32], sizes = [8, 1], strides = [1, 1]} : vector<16x33xf32> to vector<8x1xf32>
    %575 = vector.broadcast %574 : vector<8x1xf32> to vector<8x128xf32>
    %576 = arith.mulf %569, %575 : vector<8x128xf32>
    %577 = arith.addf %560, %576 : vector<8x128xf32>
    %578 = tpu.concatenate %573, %577 in 0 : vector<8x128xf32>, vector<8x128xf32> -> vector<16x128xf32>
    %579 = vector.broadcast %14 : vector<16x1xf32> to vector<16x128xf32>
    %580 = arith.addf %578, %579 : vector<16x128xf32>
    %cst_408 = arith.constant 0.000000e+00 : f32
    %581 = vector.broadcast %cst_408 : f32 to vector<16x128xf32>
    %582 = arith.maximumf %580, %581 : vector<16x128xf32>
    %583 = arith.truncf %582 : vector<16x128xf32> to vector<16x128xbf16>
    %c0_409 = arith.constant 0 : index
    %c128_410 = arith.constant 128 : index
    %584 = vector.load %arg23[%c0_409, %c128_410] : memref<16x256xbf16, #tpu.memory_space<vmem>>, vector<16x128xbf16>
    tpu.vector_store %arg23[%c0_409, %c128_410], %583 {strides = array<i32>} : memref<16x256xbf16, #tpu.memory_space<vmem>>, vector<16x128xbf16>,
    %cst_411 = arith.constant 0.000000e+00 : f32
    %585 = vector.broadcast %cst_411 : f32 to vector<16x128xf32>
    %c0_412 = arith.constant 0 : index
    %c0_413 = arith.constant 0 : index
    %586 = vector.load %arg23[%c0_412, %c0_413] : memref<16x256xbf16, #tpu.memory_space<vmem>>, vector<16x128xbf16>
    %c0_414 = arith.constant 0 : index
    %c4 = arith.constant 4 : index
    %587 = vector.load %arg23[%c0_414, %c4] : memref<16x256xbf16, #tpu.memory_space<vmem>>, vector<16x128xbf16>
    %c0_415 = arith.constant 0 : index
    %c8 = arith.constant 8 : index
    %588 = vector.load %arg23[%c0_415, %c8] : memref<16x256xbf16, #tpu.memory_space<vmem>>, vector<16x128xbf16>
    %c0_416 = arith.constant 0 : index
    %c12 = arith.constant 12 : index
    %589 = vector.load %arg23[%c0_416, %c12] : memref<16x256xbf16, #tpu.memory_space<vmem>>, vector<16x128xbf16>
    %c0_417 = arith.constant 0 : index
    %c16 = arith.constant 16 : index
    %590 = vector.load %arg23[%c0_417, %c16] : memref<16x256xbf16, #tpu.memory_space<vmem>>, vector<16x128xbf16>
    %c0_418 = arith.constant 0 : index
    %c20 = arith.constant 20 : index
    %591 = vector.load %arg23[%c0_418, %c20] : memref<16x256xbf16, #tpu.memory_space<vmem>>, vector<16x128xbf16>
    %c0_419 = arith.constant 0 : index
    %c24 = arith.constant 24 : index
    %592 = vector.load %arg23[%c0_419, %c24] : memref<16x256xbf16, #tpu.memory_space<vmem>>, vector<16x128xbf16>
    %c0_420 = arith.constant 0 : index
    %c28 = arith.constant 28 : index
    %593 = vector.load %arg23[%c0_420, %c28] : memref<16x256xbf16, #tpu.memory_space<vmem>>, vector<16x128xbf16>
    %594 = tpu.concatenate %586, %587, %588, %589, %590, %591, %592, %593 in 0 : vector<16x128xbf16>, vector<16x128xbf16>, vector<16x128xbf16>, vector<16x128xbf16>, vector<16x128xbf16>, vector<16x128xbf16>, vector<16x128xbf16>, vector<16x128xbf16> -> vector<128x128xbf16>
    %c0_421 = arith.constant 0 : index
    %c0_422 = arith.constant 0 : index
    %c0_423 = arith.constant 0 : index
    %595 = vector.load %arg4[%c0_421, %c0_422, %c0_423] : memref<4x16x128xbf16, #tpu.memory_space<vmem>>, vector<1x16x128xbf16>
    %596 = vector.shape_cast %595 : vector<1x16x128xbf16> to vector<16x128xbf16>
    %cst_424 = arith.constant dense<0.000000e+00> : vector<16x128xf32>
    %597 = tpu.matmul %596, %594, %cst_424 {dimension_numbers = #tpu.dot_dimension_numbers<[1], [0], [0], [1], [0, 0, 1, 1], [], []>} : vector<16x128xbf16>, vector<128x128xbf16>, vector<16x128xf32> -> vector<16x128xf32>
    %598 = arith.addf %585, %597 : vector<16x128xf32>
    %c0_425 = arith.constant 0 : index
    %c32 = arith.constant 32 : index
    %599 = vector.load %arg23[%c0_425, %c32] : memref<16x256xbf16, #tpu.memory_space<vmem>>, vector<16x128xbf16>
    %c0_426 = arith.constant 0 : index
    %c36 = arith.constant 36 : index
    %600 = vector.load %arg23[%c0_426, %c36] : memref<16x256xbf16, #tpu.memory_space<vmem>>, vector<16x128xbf16>
    %c0_427 = arith.constant 0 : index
    %c40 = arith.constant 40 : index
    %601 = vector.load %arg23[%c0_427, %c40] : memref<16x256xbf16, #tpu.memory_space<vmem>>, vector<16x128xbf16>
    %c0_428 = arith.constant 0 : index
    %c44 = arith.constant 44 : index
    %602 = vector.load %arg23[%c0_428, %c44] : memref<16x256xbf16, #tpu.memory_space<vmem>>, vector<16x128xbf16>
    %c0_429 = arith.constant 0 : index
    %c48 = arith.constant 48 : index
    %603 = vector.load %arg23[%c0_429, %c48] : memref<16x256xbf16, #tpu.memory_space<vmem>>, vector<16x128xbf16>
    %c0_430 = arith.constant 0 : index
    %c52 = arith.constant 52 : index
    %604 = vector.load %arg23[%c0_430, %c52] : memref<16x256xbf16, #tpu.memory_space<vmem>>, vector<16x128xbf16>
    %c0_431 = arith.constant 0 : index
    %c56 = arith.constant 56 : index
    %605 = vector.load %arg23[%c0_431, %c56] : memref<16x256xbf16, #tpu.memory_space<vmem>>, vector<16x128xbf16>
    %c0_432 = arith.constant 0 : index
    %c60 = arith.constant 60 : index
    %606 = vector.load %arg23[%c0_432, %c60] : memref<16x256xbf16, #tpu.memory_space<vmem>>, vector<16x128xbf16>
    %607 = tpu.concatenate %599, %600, %601, %602, %603, %604, %605, %606 in 0 : vector<16x128xbf16>, vector<16x128xbf16>, vector<16x128xbf16>, vector<16x128xbf16>, vector<16x128xbf16>, vector<16x128xbf16>, vector<16x128xbf16>, vector<16x128xbf16> -> vector<128x128xbf16>
    %c1 = arith.constant 1 : index
    %c0_433 = arith.constant 0 : index
    %c0_434 = arith.constant 0 : index
    %608 = vector.load %arg4[%c1, %c0_433, %c0_434] : memref<4x16x128xbf16, #tpu.memory_space<vmem>>, vector<1x16x128xbf16>
    %609 = vector.shape_cast %608 : vector<1x16x128xbf16> to vector<16x128xbf16>
    %cst_435 = arith.constant dense<0.000000e+00> : vector<16x128xf32>
    %610 = tpu.matmul %609, %607, %cst_435 {dimension_numbers = #tpu.dot_dimension_numbers<[1], [0], [0], [1], [0, 0, 1, 1], [], []>} : vector<16x128xbf16>, vector<128x128xbf16>, vector<16x128xf32> -> vector<16x128xf32>
    %611 = arith.addf %598, %610 : vector<16x128xf32>
    %c0_436 = arith.constant 0 : index
    %c64 = arith.constant 64 : index
    %612 = vector.load %arg23[%c0_436, %c64] : memref<16x256xbf16, #tpu.memory_space<vmem>>, vector<16x128xbf16>
    %c0_437 = arith.constant 0 : index
    %c68 = arith.constant 68 : index
    %613 = vector.load %arg23[%c0_437, %c68] : memref<16x256xbf16, #tpu.memory_space<vmem>>, vector<16x128xbf16>
    %c0_438 = arith.constant 0 : index
    %c72 = arith.constant 72 : index
    %614 = vector.load %arg23[%c0_438, %c72] : memref<16x256xbf16, #tpu.memory_space<vmem>>, vector<16x128xbf16>
    %c0_439 = arith.constant 0 : index
    %c76 = arith.constant 76 : index
    %615 = vector.load %arg23[%c0_439, %c76] : memref<16x256xbf16, #tpu.memory_space<vmem>>, vector<16x128xbf16>
    %c0_440 = arith.constant 0 : index
    %c80 = arith.constant 80 : index
    %616 = vector.load %arg23[%c0_440, %c80] : memref<16x256xbf16, #tpu.memory_space<vmem>>, vector<16x128xbf16>
    %c0_441 = arith.constant 0 : index
    %c84 = arith.constant 84 : index
    %617 = vector.load %arg23[%c0_441, %c84] : memref<16x256xbf16, #tpu.memory_space<vmem>>, vector<16x128xbf16>
    %c0_442 = arith.constant 0 : index
    %c88 = arith.constant 88 : index
    %618 = vector.load %arg23[%c0_442, %c88] : memref<16x256xbf16, #tpu.memory_space<vmem>>, vector<16x128xbf16>
    %c0_443 = arith.constant 0 : index
    %c92 = arith.constant 92 : index
    %619 = vector.load %arg23[%c0_443, %c92] : memref<16x256xbf16, #tpu.memory_space<vmem>>, vector<16x128xbf16>
    %620 = tpu.concatenate %612, %613, %614, %615, %616, %617, %618, %619 in 0 : vector<16x128xbf16>, vector<16x128xbf16>, vector<16x128xbf16>, vector<16x128xbf16>, vector<16x128xbf16>, vector<16x128xbf16>, vector<16x128xbf16>, vector<16x128xbf16> -> vector<128x128xbf16>
    %c2 = arith.constant 2 : index
    %c0_444 = arith.constant 0 : index
    %c0_445 = arith.constant 0 : index
    %621 = vector.load %arg4[%c2, %c0_444, %c0_445] : memref<4x16x128xbf16, #tpu.memory_space<vmem>>, vector<1x16x128xbf16>
    %622 = vector.shape_cast %621 : vector<1x16x128xbf16> to vector<16x128xbf16>
    %cst_446 = arith.constant dense<0.000000e+00> : vector<16x128xf32>
    %623 = tpu.matmul %622, %620, %cst_446 {dimension_numbers = #tpu.dot_dimension_numbers<[1], [0], [0], [1], [0, 0, 1, 1], [], []>} : vector<16x128xbf16>, vector<128x128xbf16>, vector<16x128xf32> -> vector<16x128xf32>
    %624 = arith.addf %611, %623 : vector<16x128xf32>
    %c0_447 = arith.constant 0 : index
    %c96 = arith.constant 96 : index
    %625 = vector.load %arg23[%c0_447, %c96] : memref<16x256xbf16, #tpu.memory_space<vmem>>, vector<16x128xbf16>
    %c0_448 = arith.constant 0 : index
    %c100 = arith.constant 100 : index
    %626 = vector.load %arg23[%c0_448, %c100] : memref<16x256xbf16, #tpu.memory_space<vmem>>, vector<16x128xbf16>
    %c0_449 = arith.constant 0 : index
    %c104 = arith.constant 104 : index
    %627 = vector.load %arg23[%c0_449, %c104] : memref<16x256xbf16, #tpu.memory_space<vmem>>, vector<16x128xbf16>
    %c0_450 = arith.constant 0 : index
    %c108 = arith.constant 108 : index
    %628 = vector.load %arg23[%c0_450, %c108] : memref<16x256xbf16, #tpu.memory_space<vmem>>, vector<16x128xbf16>
    %c0_451 = arith.constant 0 : index
    %c112 = arith.constant 112 : index
    %629 = vector.load %arg23[%c0_451, %c112] : memref<16x256xbf16, #tpu.memory_space<vmem>>, vector<16x128xbf16>
    %c0_452 = arith.constant 0 : index
    %c116 = arith.constant 116 : index
    %630 = vector.load %arg23[%c0_452, %c116] : memref<16x256xbf16, #tpu.memory_space<vmem>>, vector<16x128xbf16>
    %c0_453 = arith.constant 0 : index
    %c120 = arith.constant 120 : index
    %631 = vector.load %arg23[%c0_453, %c120] : memref<16x256xbf16, #tpu.memory_space<vmem>>, vector<16x128xbf16>
    %c0_454 = arith.constant 0 : index
    %c124 = arith.constant 124 : index
    %632 = vector.load %arg23[%c0_454, %c124] : memref<16x256xbf16, #tpu.memory_space<vmem>>, vector<16x128xbf16>
    %633 = tpu.concatenate %625, %626, %627, %628, %629, %630, %631, %632 in 0 : vector<16x128xbf16>, vector<16x128xbf16>, vector<16x128xbf16>, vector<16x128xbf16>, vector<16x128xbf16>, vector<16x128xbf16>, vector<16x128xbf16>, vector<16x128xbf16> -> vector<128x128xbf16>
    %c3 = arith.constant 3 : index
    %c0_455 = arith.constant 0 : index
    %c0_456 = arith.constant 0 : index
    %634 = vector.load %arg4[%c3, %c0_455, %c0_456] : memref<4x16x128xbf16, #tpu.memory_space<vmem>>, vector<1x16x128xbf16>
    %635 = vector.shape_cast %634 : vector<1x16x128xbf16> to vector<16x128xbf16>
    %cst_457 = arith.constant dense<0.000000e+00> : vector<16x128xf32>
    %636 = tpu.matmul %635, %633, %cst_457 {dimension_numbers = #tpu.dot_dimension_numbers<[1], [0], [0], [1], [0, 0, 1, 1], [], []>} : vector<16x128xbf16>, vector<128x128xbf16>, vector<16x128xf32> -> vector<16x128xf32>
    %637 = arith.addf %624, %636 : vector<16x128xf32>
    %c0_458 = arith.constant 0 : index
    %c128_459 = arith.constant 128 : index
    %638 = vector.load %arg23[%c0_458, %c128_459] : memref<16x256xbf16, #tpu.memory_space<vmem>>, vector<16x128xbf16>
    %c0_460 = arith.constant 0 : index
    %c0_461 = arith.constant 0 : index
    %639 = vector.load %arg5[%c0_460, %c0_461] : memref<16x16xbf16, #tpu.memory_space<vmem>>, vector<16x16xbf16>
    %cst_462 = arith.constant dense<0.000000e+00> : vector<16x128xf32>
    %640 = tpu.matmul %639, %638, %cst_462 {dimension_numbers = #tpu.dot_dimension_numbers<[1], [0], [0], [1], [0, 0, 1, 1], [], []>} : vector<16x16xbf16>, vector<16x128xbf16>, vector<16x128xf32> -> vector<16x128xf32>
    %641 = arith.addf %637, %640 : vector<16x128xf32>
    %c0_463 = arith.constant 0 : index
    %c0_464 = arith.constant 0 : index
    %642 = vector.load %arg6[%c0_463, %c0_464] : memref<16x1xf32, #tpu.memory_space<vmem>>, vector<16x1xf32>
    %643 = vector.broadcast %642 : vector<16x1xf32> to vector<16x128xf32>
    %644 = arith.addf %641, %643 : vector<16x128xf32>
    %cst_465 = arith.constant 0.000000e+00 : f32
    %645 = vector.broadcast %cst_465 : f32 to vector<16x128xf32>
    %646 = arith.maximumf %644, %645 : vector<16x128xf32>
    %647 = arith.truncf %646 : vector<16x128xf32> to vector<16x128xbf16>
    %c0_466 = arith.constant 0 : index
    %c128_467 = arith.constant 128 : index
    %648 = vector.load %arg24[%c0_466, %c128_467] : memref<16x256xbf16, #tpu.memory_space<vmem>>, vector<16x128xbf16>
    tpu.vector_store %arg24[%c0_466, %c128_467], %647 {strides = array<i32>} : memref<16x256xbf16, #tpu.memory_space<vmem>>, vector<16x128xbf16>,
    %cst_468 = arith.constant 0.000000e+00 : f32
    %649 = vector.broadcast %cst_468 : f32 to vector<16x128xf32>
    %c0_469 = arith.constant 0 : index
    %c0_470 = arith.constant 0 : index
    %650 = vector.load %arg24[%c0_469, %c0_470] : memref<16x256xbf16, #tpu.memory_space<vmem>>, vector<16x128xbf16>
    %c0_471 = arith.constant 0 : index
    %c4_472 = arith.constant 4 : index
    %651 = vector.load %arg24[%c0_471, %c4_472] : memref<16x256xbf16, #tpu.memory_space<vmem>>, vector<16x128xbf16>
    %c0_473 = arith.constant 0 : index
    %c8_474 = arith.constant 8 : index
    %652 = vector.load %arg24[%c0_473, %c8_474] : memref<16x256xbf16, #tpu.memory_space<vmem>>, vector<16x128xbf16>
    %c0_475 = arith.constant 0 : index
    %c12_476 = arith.constant 12 : index
    %653 = vector.load %arg24[%c0_475, %c12_476] : memref<16x256xbf16, #tpu.memory_space<vmem>>, vector<16x128xbf16>
    %c0_477 = arith.constant 0 : index
    %c16_478 = arith.constant 16 : index
    %654 = vector.load %arg24[%c0_477, %c16_478] : memref<16x256xbf16, #tpu.memory_space<vmem>>, vector<16x128xbf16>
    %c0_479 = arith.constant 0 : index
    %c20_480 = arith.constant 20 : index
    %655 = vector.load %arg24[%c0_479, %c20_480] : memref<16x256xbf16, #tpu.memory_space<vmem>>, vector<16x128xbf16>
    %c0_481 = arith.constant 0 : index
    %c24_482 = arith.constant 24 : index
    %656 = vector.load %arg24[%c0_481, %c24_482] : memref<16x256xbf16, #tpu.memory_space<vmem>>, vector<16x128xbf16>
    %c0_483 = arith.constant 0 : index
    %c28_484 = arith.constant 28 : index
    %657 = vector.load %arg24[%c0_483, %c28_484] : memref<16x256xbf16, #tpu.memory_space<vmem>>, vector<16x128xbf16>
    %658 = tpu.concatenate %650, %651, %652, %653, %654, %655, %656, %657 in 0 : vector<16x128xbf16>, vector<16x128xbf16>, vector<16x128xbf16>, vector<16x128xbf16>, vector<16x128xbf16>, vector<16x128xbf16>, vector<16x128xbf16>, vector<16x128xbf16> -> vector<128x128xbf16>
    %c0_485 = arith.constant 0 : index
    %c0_486 = arith.constant 0 : index
    %c0_487 = arith.constant 0 : index
    %659 = vector.load %arg7[%c0_485, %c0_486, %c0_487] : memref<4x16x128xbf16, #tpu.memory_space<vmem>>, vector<1x16x128xbf16>
    %660 = vector.shape_cast %659 : vector<1x16x128xbf16> to vector<16x128xbf16>
    %cst_488 = arith.constant dense<0.000000e+00> : vector<16x128xf32>
    %661 = tpu.matmul %660, %658, %cst_488 {dimension_numbers = #tpu.dot_dimension_numbers<[1], [0], [0], [1], [0, 0, 1, 1], [], []>} : vector<16x128xbf16>, vector<128x128xbf16>, vector<16x128xf32> -> vector<16x128xf32>
    %662 = arith.addf %649, %661 : vector<16x128xf32>
    %c0_489 = arith.constant 0 : index
    %c32_490 = arith.constant 32 : index
    %663 = vector.load %arg24[%c0_489, %c32_490] : memref<16x256xbf16, #tpu.memory_space<vmem>>, vector<16x128xbf16>
    %c0_491 = arith.constant 0 : index
    %c36_492 = arith.constant 36 : index
    %664 = vector.load %arg24[%c0_491, %c36_492] : memref<16x256xbf16, #tpu.memory_space<vmem>>, vector<16x128xbf16>
    %c0_493 = arith.constant 0 : index
    %c40_494 = arith.constant 40 : index
    %665 = vector.load %arg24[%c0_493, %c40_494] : memref<16x256xbf16, #tpu.memory_space<vmem>>, vector<16x128xbf16>
    %c0_495 = arith.constant 0 : index
    %c44_496 = arith.constant 44 : index
    %666 = vector.load %arg24[%c0_495, %c44_496] : memref<16x256xbf16, #tpu.memory_space<vmem>>, vector<16x128xbf16>
    %c0_497 = arith.constant 0 : index
    %c48_498 = arith.constant 48 : index
    %667 = vector.load %arg24[%c0_497, %c48_498] : memref<16x256xbf16, #tpu.memory_space<vmem>>, vector<16x128xbf16>
    %c0_499 = arith.constant 0 : index
    %c52_500 = arith.constant 52 : index
    %668 = vector.load %arg24[%c0_499, %c52_500] : memref<16x256xbf16, #tpu.memory_space<vmem>>, vector<16x128xbf16>
    %c0_501 = arith.constant 0 : index
    %c56_502 = arith.constant 56 : index
    %669 = vector.load %arg24[%c0_501, %c56_502] : memref<16x256xbf16, #tpu.memory_space<vmem>>, vector<16x128xbf16>
    %c0_503 = arith.constant 0 : index
    %c60_504 = arith.constant 60 : index
    %670 = vector.load %arg24[%c0_503, %c60_504] : memref<16x256xbf16, #tpu.memory_space<vmem>>, vector<16x128xbf16>
    %671 = tpu.concatenate %663, %664, %665, %666, %667, %668, %669, %670 in 0 : vector<16x128xbf16>, vector<16x128xbf16>, vector<16x128xbf16>, vector<16x128xbf16>, vector<16x128xbf16>, vector<16x128xbf16>, vector<16x128xbf16>, vector<16x128xbf16> -> vector<128x128xbf16>
    %c1_505 = arith.constant 1 : index
    %c0_506 = arith.constant 0 : index
    %c0_507 = arith.constant 0 : index
    %672 = vector.load %arg7[%c1_505, %c0_506, %c0_507] : memref<4x16x128xbf16, #tpu.memory_space<vmem>>, vector<1x16x128xbf16>
    %673 = vector.shape_cast %672 : vector<1x16x128xbf16> to vector<16x128xbf16>
    %cst_508 = arith.constant dense<0.000000e+00> : vector<16x128xf32>
    %674 = tpu.matmul %673, %671, %cst_508 {dimension_numbers = #tpu.dot_dimension_numbers<[1], [0], [0], [1], [0, 0, 1, 1], [], []>} : vector<16x128xbf16>, vector<128x128xbf16>, vector<16x128xf32> -> vector<16x128xf32>
    %675 = arith.addf %662, %674 : vector<16x128xf32>
    %c0_509 = arith.constant 0 : index
    %c64_510 = arith.constant 64 : index
    %676 = vector.load %arg24[%c0_509, %c64_510] : memref<16x256xbf16, #tpu.memory_space<vmem>>, vector<16x128xbf16>
    %c0_511 = arith.constant 0 : index
    %c68_512 = arith.constant 68 : index
    %677 = vector.load %arg24[%c0_511, %c68_512] : memref<16x256xbf16, #tpu.memory_space<vmem>>, vector<16x128xbf16>
    %c0_513 = arith.constant 0 : index
    %c72_514 = arith.constant 72 : index
    %678 = vector.load %arg24[%c0_513, %c72_514] : memref<16x256xbf16, #tpu.memory_space<vmem>>, vector<16x128xbf16>
    %c0_515 = arith.constant 0 : index
    %c76_516 = arith.constant 76 : index
    %679 = vector.load %arg24[%c0_515, %c76_516] : memref<16x256xbf16, #tpu.memory_space<vmem>>, vector<16x128xbf16>
    %c0_517 = arith.constant 0 : index
    %c80_518 = arith.constant 80 : index
    %680 = vector.load %arg24[%c0_517, %c80_518] : memref<16x256xbf16, #tpu.memory_space<vmem>>, vector<16x128xbf16>
    %c0_519 = arith.constant 0 : index
    %c84_520 = arith.constant 84 : index
    %681 = vector.load %arg24[%c0_519, %c84_520] : memref<16x256xbf16, #tpu.memory_space<vmem>>, vector<16x128xbf16>
    %c0_521 = arith.constant 0 : index
    %c88_522 = arith.constant 88 : index
    %682 = vector.load %arg24[%c0_521, %c88_522] : memref<16x256xbf16, #tpu.memory_space<vmem>>, vector<16x128xbf16>
    %c0_523 = arith.constant 0 : index
    %c92_524 = arith.constant 92 : index
    %683 = vector.load %arg24[%c0_523, %c92_524] : memref<16x256xbf16, #tpu.memory_space<vmem>>, vector<16x128xbf16>
    %684 = tpu.concatenate %676, %677, %678, %679, %680, %681, %682, %683 in 0 : vector<16x128xbf16>, vector<16x128xbf16>, vector<16x128xbf16>, vector<16x128xbf16>, vector<16x128xbf16>, vector<16x128xbf16>, vector<16x128xbf16>, vector<16x128xbf16> -> vector<128x128xbf16>
    %c2_525 = arith.constant 2 : index
    %c0_526 = arith.constant 0 : index
    %c0_527 = arith.constant 0 : index
    %685 = vector.load %arg7[%c2_525, %c0_526, %c0_527] : memref<4x16x128xbf16, #tpu.memory_space<vmem>>, vector<1x16x128xbf16>
    %686 = vector.shape_cast %685 : vector<1x16x128xbf16> to vector<16x128xbf16>
    %cst_528 = arith.constant dense<0.000000e+00> : vector<16x128xf32>
    %687 = tpu.matmul %686, %684, %cst_528 {dimension_numbers = #tpu.dot_dimension_numbers<[1], [0], [0], [1], [0, 0, 1, 1], [], []>} : vector<16x128xbf16>, vector<128x128xbf16>, vector<16x128xf32> -> vector<16x128xf32>
    %688 = arith.addf %675, %687 : vector<16x128xf32>
    %c0_529 = arith.constant 0 : index
    %c96_530 = arith.constant 96 : index
    %689 = vector.load %arg24[%c0_529, %c96_530] : memref<16x256xbf16, #tpu.memory_space<vmem>>, vector<16x128xbf16>
    %c0_531 = arith.constant 0 : index
    %c100_532 = arith.constant 100 : index
    %690 = vector.load %arg24[%c0_531, %c100_532] : memref<16x256xbf16, #tpu.memory_space<vmem>>, vector<16x128xbf16>
    %c0_533 = arith.constant 0 : index
    %c104_534 = arith.constant 104 : index
    %691 = vector.load %arg24[%c0_533, %c104_534] : memref<16x256xbf16, #tpu.memory_space<vmem>>, vector<16x128xbf16>
    %c0_535 = arith.constant 0 : index
    %c108_536 = arith.constant 108 : index
    %692 = vector.load %arg24[%c0_535, %c108_536] : memref<16x256xbf16, #tpu.memory_space<vmem>>, vector<16x128xbf16>
    %c0_537 = arith.constant 0 : index
    %c112_538 = arith.constant 112 : index
    %693 = vector.load %arg24[%c0_537, %c112_538] : memref<16x256xbf16, #tpu.memory_space<vmem>>, vector<16x128xbf16>
    %c0_539 = arith.constant 0 : index
    %c116_540 = arith.constant 116 : index
    %694 = vector.load %arg24[%c0_539, %c116_540] : memref<16x256xbf16, #tpu.memory_space<vmem>>, vector<16x128xbf16>
    %c0_541 = arith.constant 0 : index
    %c120_542 = arith.constant 120 : index
    %695 = vector.load %arg24[%c0_541, %c120_542] : memref<16x256xbf16, #tpu.memory_space<vmem>>, vector<16x128xbf16>
    %c0_543 = arith.constant 0 : index
    %c124_544 = arith.constant 124 : index
    %696 = vector.load %arg24[%c0_543, %c124_544] : memref<16x256xbf16, #tpu.memory_space<vmem>>, vector<16x128xbf16>
    %697 = tpu.concatenate %689, %690, %691, %692, %693, %694, %695, %696 in 0 : vector<16x128xbf16>, vector<16x128xbf16>, vector<16x128xbf16>, vector<16x128xbf16>, vector<16x128xbf16>, vector<16x128xbf16>, vector<16x128xbf16>, vector<16x128xbf16> -> vector<128x128xbf16>
    %c3_545 = arith.constant 3 : index
    %c0_546 = arith.constant 0 : index
    %c0_547 = arith.constant 0 : index
    %698 = vector.load %arg7[%c3_545, %c0_546, %c0_547] : memref<4x16x128xbf16, #tpu.memory_space<vmem>>, vector<1x16x128xbf16>
    %699 = vector.shape_cast %698 : vector<1x16x128xbf16> to vector<16x128xbf16>
    %cst_548 = arith.constant dense<0.000000e+00> : vector<16x128xf32>
    %700 = tpu.matmul %699, %697, %cst_548 {dimension_numbers = #tpu.dot_dimension_numbers<[1], [0], [0], [1], [0, 0, 1, 1], [], []>} : vector<16x128xbf16>, vector<128x128xbf16>, vector<16x128xf32> -> vector<16x128xf32>
    %701 = arith.addf %688, %700 : vector<16x128xf32>
    %c0_549 = arith.constant 0 : index
    %c128_550 = arith.constant 128 : index
    %702 = vector.load %arg24[%c0_549, %c128_550] : memref<16x256xbf16, #tpu.memory_space<vmem>>, vector<16x128xbf16>
    %c0_551 = arith.constant 0 : index
    %c0_552 = arith.constant 0 : index
    %703 = vector.load %arg8[%c0_551, %c0_552] : memref<16x16xbf16, #tpu.memory_space<vmem>>, vector<16x16xbf16>
    %cst_553 = arith.constant dense<0.000000e+00> : vector<16x128xf32>
    %704 = tpu.matmul %703, %702, %cst_553 {dimension_numbers = #tpu.dot_dimension_numbers<[1], [0], [0], [1], [0, 0, 1, 1], [], []>} : vector<16x16xbf16>, vector<16x128xbf16>, vector<16x128xf32> -> vector<16x128xf32>
    %705 = arith.addf %701, %704 : vector<16x128xf32>
    %c0_554 = arith.constant 0 : index
    %c0_555 = arith.constant 0 : index
    %706 = vector.load %arg9[%c0_554, %c0_555] : memref<16x1xf32, #tpu.memory_space<vmem>>, vector<16x1xf32>
    %707 = vector.broadcast %706 : vector<16x1xf32> to vector<16x128xf32>
    %708 = arith.addf %705, %707 : vector<16x128xf32>
    %cst_556 = arith.constant 0.000000e+00 : f32
    %709 = vector.broadcast %cst_556 : f32 to vector<16x128xf32>
    %710 = arith.maximumf %708, %709 : vector<16x128xf32>
    %711 = arith.truncf %710 : vector<16x128xf32> to vector<16x128xbf16>
    %c0_557 = arith.constant 0 : index
    %c128_558 = arith.constant 128 : index
    %712 = vector.load %arg25[%c0_557, %c128_558] : memref<16x256xbf16, #tpu.memory_space<vmem>>, vector<16x128xbf16>
    tpu.vector_store %arg25[%c0_557, %c128_558], %711 {strides = array<i32>} : memref<16x256xbf16, #tpu.memory_space<vmem>>, vector<16x128xbf16>,
    %cst_559 = arith.constant 0.000000e+00 : f32
    %713 = vector.broadcast %cst_559 : f32 to vector<16x128xf32>
    %c0_560 = arith.constant 0 : index
    %c0_561 = arith.constant 0 : index
    %714 = vector.load %arg25[%c0_560, %c0_561] : memref<16x256xbf16, #tpu.memory_space<vmem>>, vector<16x128xbf16>
    %c0_562 = arith.constant 0 : index
    %c4_563 = arith.constant 4 : index
    %715 = vector.load %arg25[%c0_562, %c4_563] : memref<16x256xbf16, #tpu.memory_space<vmem>>, vector<16x128xbf16>
    %c0_564 = arith.constant 0 : index
    %c8_565 = arith.constant 8 : index
    %716 = vector.load %arg25[%c0_564, %c8_565] : memref<16x256xbf16, #tpu.memory_space<vmem>>, vector<16x128xbf16>
    %c0_566 = arith.constant 0 : index
    %c12_567 = arith.constant 12 : index
    %717 = vector.load %arg25[%c0_566, %c12_567] : memref<16x256xbf16, #tpu.memory_space<vmem>>, vector<16x128xbf16>
    %c0_568 = arith.constant 0 : index
    %c16_569 = arith.constant 16 : index
    %718 = vector.load %arg25[%c0_568, %c16_569] : memref<16x256xbf16, #tpu.memory_space<vmem>>, vector<16x128xbf16>
    %c0_570 = arith.constant 0 : index
    %c20_571 = arith.constant 20 : index
    %719 = vector.load %arg25[%c0_570, %c20_571] : memref<16x256xbf16, #tpu.memory_space<vmem>>, vector<16x128xbf16>
    %c0_572 = arith.constant 0 : index
    %c24_573 = arith.constant 24 : index
    %720 = vector.load %arg25[%c0_572, %c24_573] : memref<16x256xbf16, #tpu.memory_space<vmem>>, vector<16x128xbf16>
    %c0_574 = arith.constant 0 : index
    %c28_575 = arith.constant 28 : index
    %721 = vector.load %arg25[%c0_574, %c28_575] : memref<16x256xbf16, #tpu.memory_space<vmem>>, vector<16x128xbf16>
    %722 = tpu.concatenate %714, %715, %716, %717, %718, %719, %720, %721 in 0 : vector<16x128xbf16>, vector<16x128xbf16>, vector<16x128xbf16>, vector<16x128xbf16>, vector<16x128xbf16>, vector<16x128xbf16>, vector<16x128xbf16>, vector<16x128xbf16> -> vector<128x128xbf16>
    %c0_576 = arith.constant 0 : index
    %c0_577 = arith.constant 0 : index
    %c0_578 = arith.constant 0 : index
    %723 = vector.load %arg10[%c0_576, %c0_577, %c0_578] : memref<4x16x128xbf16, #tpu.memory_space<vmem>>, vector<1x16x128xbf16>
    %724 = vector.shape_cast %723 : vector<1x16x128xbf16> to vector<16x128xbf16>
    %cst_579 = arith.constant dense<0.000000e+00> : vector<16x128xf32>
    %725 = tpu.matmul %724, %722, %cst_579 {dimension_numbers = #tpu.dot_dimension_numbers<[1], [0], [0], [1], [0, 0, 1, 1], [], []>} : vector<16x128xbf16>, vector<128x128xbf16>, vector<16x128xf32> -> vector<16x128xf32>
    %726 = arith.addf %713, %725 : vector<16x128xf32>
    %c0_580 = arith.constant 0 : index
    %c32_581 = arith.constant 32 : index
    %727 = vector.load %arg25[%c0_580, %c32_581] : memref<16x256xbf16, #tpu.memory_space<vmem>>, vector<16x128xbf16>
    %c0_582 = arith.constant 0 : index
    %c36_583 = arith.constant 36 : index
    %728 = vector.load %arg25[%c0_582, %c36_583] : memref<16x256xbf16, #tpu.memory_space<vmem>>, vector<16x128xbf16>
    %c0_584 = arith.constant 0 : index
    %c40_585 = arith.constant 40 : index
    %729 = vector.load %arg25[%c0_584, %c40_585] : memref<16x256xbf16, #tpu.memory_space<vmem>>, vector<16x128xbf16>
    %c0_586 = arith.constant 0 : index
    %c44_587 = arith.constant 44 : index
    %730 = vector.load %arg25[%c0_586, %c44_587] : memref<16x256xbf16, #tpu.memory_space<vmem>>, vector<16x128xbf16>
    %c0_588 = arith.constant 0 : index
    %c48_589 = arith.constant 48 : index
    %731 = vector.load %arg25[%c0_588, %c48_589] : memref<16x256xbf16, #tpu.memory_space<vmem>>, vector<16x128xbf16>
    %c0_590 = arith.constant 0 : index
    %c52_591 = arith.constant 52 : index
    %732 = vector.load %arg25[%c0_590, %c52_591] : memref<16x256xbf16, #tpu.memory_space<vmem>>, vector<16x128xbf16>
    %c0_592 = arith.constant 0 : index
    %c56_593 = arith.constant 56 : index
    %733 = vector.load %arg25[%c0_592, %c56_593] : memref<16x256xbf16, #tpu.memory_space<vmem>>, vector<16x128xbf16>
    %c0_594 = arith.constant 0 : index
    %c60_595 = arith.constant 60 : index
    %734 = vector.load %arg25[%c0_594, %c60_595] : memref<16x256xbf16, #tpu.memory_space<vmem>>, vector<16x128xbf16>
    %735 = tpu.concatenate %727, %728, %729, %730, %731, %732, %733, %734 in 0 : vector<16x128xbf16>, vector<16x128xbf16>, vector<16x128xbf16>, vector<16x128xbf16>, vector<16x128xbf16>, vector<16x128xbf16>, vector<16x128xbf16>, vector<16x128xbf16> -> vector<128x128xbf16>
    %c1_596 = arith.constant 1 : index
    %c0_597 = arith.constant 0 : index
    %c0_598 = arith.constant 0 : index
    %736 = vector.load %arg10[%c1_596, %c0_597, %c0_598] : memref<4x16x128xbf16, #tpu.memory_space<vmem>>, vector<1x16x128xbf16>
    %737 = vector.shape_cast %736 : vector<1x16x128xbf16> to vector<16x128xbf16>
    %cst_599 = arith.constant dense<0.000000e+00> : vector<16x128xf32>
    %738 = tpu.matmul %737, %735, %cst_599 {dimension_numbers = #tpu.dot_dimension_numbers<[1], [0], [0], [1], [0, 0, 1, 1], [], []>} : vector<16x128xbf16>, vector<128x128xbf16>, vector<16x128xf32> -> vector<16x128xf32>
    %739 = arith.addf %726, %738 : vector<16x128xf32>
    %c0_600 = arith.constant 0 : index
    %c64_601 = arith.constant 64 : index
    %740 = vector.load %arg25[%c0_600, %c64_601] : memref<16x256xbf16, #tpu.memory_space<vmem>>, vector<16x128xbf16>
    %c0_602 = arith.constant 0 : index
    %c68_603 = arith.constant 68 : index
    %741 = vector.load %arg25[%c0_602, %c68_603] : memref<16x256xbf16, #tpu.memory_space<vmem>>, vector<16x128xbf16>
    %c0_604 = arith.constant 0 : index
    %c72_605 = arith.constant 72 : index
    %742 = vector.load %arg25[%c0_604, %c72_605] : memref<16x256xbf16, #tpu.memory_space<vmem>>, vector<16x128xbf16>
    %c0_606 = arith.constant 0 : index
    %c76_607 = arith.constant 76 : index
    %743 = vector.load %arg25[%c0_606, %c76_607] : memref<16x256xbf16, #tpu.memory_space<vmem>>, vector<16x128xbf16>
    %c0_608 = arith.constant 0 : index
    %c80_609 = arith.constant 80 : index
    %744 = vector.load %arg25[%c0_608, %c80_609] : memref<16x256xbf16, #tpu.memory_space<vmem>>, vector<16x128xbf16>
    %c0_610 = arith.constant 0 : index
    %c84_611 = arith.constant 84 : index
    %745 = vector.load %arg25[%c0_610, %c84_611] : memref<16x256xbf16, #tpu.memory_space<vmem>>, vector<16x128xbf16>
    %c0_612 = arith.constant 0 : index
    %c88_613 = arith.constant 88 : index
    %746 = vector.load %arg25[%c0_612, %c88_613] : memref<16x256xbf16, #tpu.memory_space<vmem>>, vector<16x128xbf16>
    %c0_614 = arith.constant 0 : index
    %c92_615 = arith.constant 92 : index
    %747 = vector.load %arg25[%c0_614, %c92_615] : memref<16x256xbf16, #tpu.memory_space<vmem>>, vector<16x128xbf16>
    %748 = tpu.concatenate %740, %741, %742, %743, %744, %745, %746, %747 in 0 : vector<16x128xbf16>, vector<16x128xbf16>, vector<16x128xbf16>, vector<16x128xbf16>, vector<16x128xbf16>, vector<16x128xbf16>, vector<16x128xbf16>, vector<16x128xbf16> -> vector<128x128xbf16>
    %c2_616 = arith.constant 2 : index
    %c0_617 = arith.constant 0 : index
    %c0_618 = arith.constant 0 : index
    %749 = vector.load %arg10[%c2_616, %c0_617, %c0_618] : memref<4x16x128xbf16, #tpu.memory_space<vmem>>, vector<1x16x128xbf16>
    %750 = vector.shape_cast %749 : vector<1x16x128xbf16> to vector<16x128xbf16>
    %cst_619 = arith.constant dense<0.000000e+00> : vector<16x128xf32>
    %751 = tpu.matmul %750, %748, %cst_619 {dimension_numbers = #tpu.dot_dimension_numbers<[1], [0], [0], [1], [0, 0, 1, 1], [], []>} : vector<16x128xbf16>, vector<128x128xbf16>, vector<16x128xf32> -> vector<16x128xf32>
    %752 = arith.addf %739, %751 : vector<16x128xf32>
    %c0_620 = arith.constant 0 : index
    %c96_621 = arith.constant 96 : index
    %753 = vector.load %arg25[%c0_620, %c96_621] : memref<16x256xbf16, #tpu.memory_space<vmem>>, vector<16x128xbf16>
    %c0_622 = arith.constant 0 : index
    %c100_623 = arith.constant 100 : index
    %754 = vector.load %arg25[%c0_622, %c100_623] : memref<16x256xbf16, #tpu.memory_space<vmem>>, vector<16x128xbf16>
    %c0_624 = arith.constant 0 : index
    %c104_625 = arith.constant 104 : index
    %755 = vector.load %arg25[%c0_624, %c104_625] : memref<16x256xbf16, #tpu.memory_space<vmem>>, vector<16x128xbf16>
    %c0_626 = arith.constant 0 : index
    %c108_627 = arith.constant 108 : index
    %756 = vector.load %arg25[%c0_626, %c108_627] : memref<16x256xbf16, #tpu.memory_space<vmem>>, vector<16x128xbf16>
    %c0_628 = arith.constant 0 : index
    %c112_629 = arith.constant 112 : index
    %757 = vector.load %arg25[%c0_628, %c112_629] : memref<16x256xbf16, #tpu.memory_space<vmem>>, vector<16x128xbf16>
    %c0_630 = arith.constant 0 : index
    %c116_631 = arith.constant 116 : index
    %758 = vector.load %arg25[%c0_630, %c116_631] : memref<16x256xbf16, #tpu.memory_space<vmem>>, vector<16x128xbf16>
    %c0_632 = arith.constant 0 : index
    %c120_633 = arith.constant 120 : index
    %759 = vector.load %arg25[%c0_632, %c120_633] : memref<16x256xbf16, #tpu.memory_space<vmem>>, vector<16x128xbf16>
    %c0_634 = arith.constant 0 : index
    %c124_635 = arith.constant 124 : index
    %760 = vector.load %arg25[%c0_634, %c124_635] : memref<16x256xbf16, #tpu.memory_space<vmem>>, vector<16x128xbf16>
    %761 = tpu.concatenate %753, %754, %755, %756, %757, %758, %759, %760 in 0 : vector<16x128xbf16>, vector<16x128xbf16>, vector<16x128xbf16>, vector<16x128xbf16>, vector<16x128xbf16>, vector<16x128xbf16>, vector<16x128xbf16>, vector<16x128xbf16> -> vector<128x128xbf16>
    %c3_636 = arith.constant 3 : index
    %c0_637 = arith.constant 0 : index
    %c0_638 = arith.constant 0 : index
    %762 = vector.load %arg10[%c3_636, %c0_637, %c0_638] : memref<4x16x128xbf16, #tpu.memory_space<vmem>>, vector<1x16x128xbf16>
    %763 = vector.shape_cast %762 : vector<1x16x128xbf16> to vector<16x128xbf16>
    %cst_639 = arith.constant dense<0.000000e+00> : vector<16x128xf32>
    %764 = tpu.matmul %763, %761, %cst_639 {dimension_numbers = #tpu.dot_dimension_numbers<[1], [0], [0], [1], [0, 0, 1, 1], [], []>} : vector<16x128xbf16>, vector<128x128xbf16>, vector<16x128xf32> -> vector<16x128xf32>
    %765 = arith.addf %752, %764 : vector<16x128xf32>
    %c0_640 = arith.constant 0 : index
    %c128_641 = arith.constant 128 : index
    %766 = vector.load %arg25[%c0_640, %c128_641] : memref<16x256xbf16, #tpu.memory_space<vmem>>, vector<16x128xbf16>
    %c0_642 = arith.constant 0 : index
    %c0_643 = arith.constant 0 : index
    %767 = vector.load %arg11[%c0_642, %c0_643] : memref<16x16xbf16, #tpu.memory_space<vmem>>, vector<16x16xbf16>
    %cst_644 = arith.constant dense<0.000000e+00> : vector<16x128xf32>
    %768 = tpu.matmul %767, %766, %cst_644 {dimension_numbers = #tpu.dot_dimension_numbers<[1], [0], [0], [1], [0, 0, 1, 1], [], []>} : vector<16x16xbf16>, vector<16x128xbf16>, vector<16x128xf32> -> vector<16x128xf32>
    %769 = arith.addf %765, %768 : vector<16x128xf32>
    %c0_645 = arith.constant 0 : index
    %c0_646 = arith.constant 0 : index
    %770 = vector.load %arg12[%c0_645, %c0_646] : memref<16x1xf32, #tpu.memory_space<vmem>>, vector<16x1xf32>
    %771 = vector.broadcast %770 : vector<16x1xf32> to vector<16x128xf32>
    %772 = arith.addf %769, %771 : vector<16x128xf32>
    %cst_647 = arith.constant 0.000000e+00 : f32
    %773 = vector.broadcast %cst_647 : f32 to vector<16x128xf32>
    %774 = arith.maximumf %772, %773 : vector<16x128xf32>
    %775 = arith.truncf %774 : vector<16x128xf32> to vector<16x128xbf16>
    %c0_648 = arith.constant 0 : index
    %c128_649 = arith.constant 128 : index
    %776 = vector.load %arg24[%c0_648, %c128_649] : memref<16x256xbf16, #tpu.memory_space<vmem>>, vector<16x128xbf16>
    tpu.vector_store %arg24[%c0_648, %c128_649], %775 {strides = array<i32>} : memref<16x256xbf16, #tpu.memory_space<vmem>>, vector<16x128xbf16>,
    %cst_650 = arith.constant 0.000000e+00 : f32
    %777 = vector.broadcast %cst_650 : f32 to vector<16x128xf32>
    %c0_651 = arith.constant 0 : index
    %c0_652 = arith.constant 0 : index
    %778 = vector.load %arg24[%c0_651, %c0_652] : memref<16x256xbf16, #tpu.memory_space<vmem>>, vector<16x128xbf16>
    %c0_653 = arith.constant 0 : index
    %c4_654 = arith.constant 4 : index
    %779 = vector.load %arg24[%c0_653, %c4_654] : memref<16x256xbf16, #tpu.memory_space<vmem>>, vector<16x128xbf16>
    %c0_655 = arith.constant 0 : index
    %c8_656 = arith.constant 8 : index
    %780 = vector.load %arg24[%c0_655, %c8_656] : memref<16x256xbf16, #tpu.memory_space<vmem>>, vector<16x128xbf16>
    %c0_657 = arith.constant 0 : index
    %c12_658 = arith.constant 12 : index
    %781 = vector.load %arg24[%c0_657, %c12_658] : memref<16x256xbf16, #tpu.memory_space<vmem>>, vector<16x128xbf16>
    %c0_659 = arith.constant 0 : index
    %c16_660 = arith.constant 16 : index
    %782 = vector.load %arg24[%c0_659, %c16_660] : memref<16x256xbf16, #tpu.memory_space<vmem>>, vector<16x128xbf16>
    %c0_661 = arith.constant 0 : index
    %c20_662 = arith.constant 20 : index
    %783 = vector.load %arg24[%c0_661, %c20_662] : memref<16x256xbf16, #tpu.memory_space<vmem>>, vector<16x128xbf16>
    %c0_663 = arith.constant 0 : index
    %c24_664 = arith.constant 24 : index
    %784 = vector.load %arg24[%c0_663, %c24_664] : memref<16x256xbf16, #tpu.memory_space<vmem>>, vector<16x128xbf16>
    %c0_665 = arith.constant 0 : index
    %c28_666 = arith.constant 28 : index
    %785 = vector.load %arg24[%c0_665, %c28_666] : memref<16x256xbf16, #tpu.memory_space<vmem>>, vector<16x128xbf16>
    %786 = tpu.concatenate %778, %779, %780, %781, %782, %783, %784, %785 in 0 : vector<16x128xbf16>, vector<16x128xbf16>, vector<16x128xbf16>, vector<16x128xbf16>, vector<16x128xbf16>, vector<16x128xbf16>, vector<16x128xbf16>, vector<16x128xbf16> -> vector<128x128xbf16>
    %c0_667 = arith.constant 0 : index
    %c0_668 = arith.constant 0 : index
    %c0_669 = arith.constant 0 : index
    %787 = vector.load %arg13[%c0_667, %c0_668, %c0_669] : memref<4x16x128xbf16, #tpu.memory_space<vmem>>, vector<1x16x128xbf16>
    %788 = vector.shape_cast %787 : vector<1x16x128xbf16> to vector<16x128xbf16>
    %cst_670 = arith.constant dense<0.000000e+00> : vector<16x128xf32>
    %789 = tpu.matmul %788, %786, %cst_670 {dimension_numbers = #tpu.dot_dimension_numbers<[1], [0], [0], [1], [0, 0, 1, 1], [], []>} : vector<16x128xbf16>, vector<128x128xbf16>, vector<16x128xf32> -> vector<16x128xf32>
    %790 = arith.addf %777, %789 : vector<16x128xf32>
    %c0_671 = arith.constant 0 : index
    %c32_672 = arith.constant 32 : index
    %791 = vector.load %arg24[%c0_671, %c32_672] : memref<16x256xbf16, #tpu.memory_space<vmem>>, vector<16x128xbf16>
    %c0_673 = arith.constant 0 : index
    %c36_674 = arith.constant 36 : index
    %792 = vector.load %arg24[%c0_673, %c36_674] : memref<16x256xbf16, #tpu.memory_space<vmem>>, vector<16x128xbf16>
    %c0_675 = arith.constant 0 : index
    %c40_676 = arith.constant 40 : index
    %793 = vector.load %arg24[%c0_675, %c40_676] : memref<16x256xbf16, #tpu.memory_space<vmem>>, vector<16x128xbf16>
    %c0_677 = arith.constant 0 : index
    %c44_678 = arith.constant 44 : index
    %794 = vector.load %arg24[%c0_677, %c44_678] : memref<16x256xbf16, #tpu.memory_space<vmem>>, vector<16x128xbf16>
    %c0_679 = arith.constant 0 : index
    %c48_680 = arith.constant 48 : index
    %795 = vector.load %arg24[%c0_679, %c48_680] : memref<16x256xbf16, #tpu.memory_space<vmem>>, vector<16x128xbf16>
    %c0_681 = arith.constant 0 : index
    %c52_682 = arith.constant 52 : index
    %796 = vector.load %arg24[%c0_681, %c52_682] : memref<16x256xbf16, #tpu.memory_space<vmem>>, vector<16x128xbf16>
    %c0_683 = arith.constant 0 : index
    %c56_684 = arith.constant 56 : index
    %797 = vector.load %arg24[%c0_683, %c56_684] : memref<16x256xbf16, #tpu.memory_space<vmem>>, vector<16x128xbf16>
    %c0_685 = arith.constant 0 : index
    %c60_686 = arith.constant 60 : index
    %798 = vector.load %arg24[%c0_685, %c60_686] : memref<16x256xbf16, #tpu.memory_space<vmem>>, vector<16x128xbf16>
    %799 = tpu.concatenate %791, %792, %793, %794, %795, %796, %797, %798 in 0 : vector<16x128xbf16>, vector<16x128xbf16>, vector<16x128xbf16>, vector<16x128xbf16>, vector<16x128xbf16>, vector<16x128xbf16>, vector<16x128xbf16>, vector<16x128xbf16> -> vector<128x128xbf16>
    %c1_687 = arith.constant 1 : index
    %c0_688 = arith.constant 0 : index
    %c0_689 = arith.constant 0 : index
    %800 = vector.load %arg13[%c1_687, %c0_688, %c0_689] : memref<4x16x128xbf16, #tpu.memory_space<vmem>>, vector<1x16x128xbf16>
    %801 = vector.shape_cast %800 : vector<1x16x128xbf16> to vector<16x128xbf16>
    %cst_690 = arith.constant dense<0.000000e+00> : vector<16x128xf32>
    %802 = tpu.matmul %801, %799, %cst_690 {dimension_numbers = #tpu.dot_dimension_numbers<[1], [0], [0], [1], [0, 0, 1, 1], [], []>} : vector<16x128xbf16>, vector<128x128xbf16>, vector<16x128xf32> -> vector<16x128xf32>
    %803 = arith.addf %790, %802 : vector<16x128xf32>
    %c0_691 = arith.constant 0 : index
    %c64_692 = arith.constant 64 : index
    %804 = vector.load %arg24[%c0_691, %c64_692] : memref<16x256xbf16, #tpu.memory_space<vmem>>, vector<16x128xbf16>
    %c0_693 = arith.constant 0 : index
    %c68_694 = arith.constant 68 : index
    %805 = vector.load %arg24[%c0_693, %c68_694] : memref<16x256xbf16, #tpu.memory_space<vmem>>, vector<16x128xbf16>
    %c0_695 = arith.constant 0 : index
    %c72_696 = arith.constant 72 : index
    %806 = vector.load %arg24[%c0_695, %c72_696] : memref<16x256xbf16, #tpu.memory_space<vmem>>, vector<16x128xbf16>
    %c0_697 = arith.constant 0 : index
    %c76_698 = arith.constant 76 : index
    %807 = vector.load %arg24[%c0_697, %c76_698] : memref<16x256xbf16, #tpu.memory_space<vmem>>, vector<16x128xbf16>
    %c0_699 = arith.constant 0 : index
    %c80_700 = arith.constant 80 : index
    %808 = vector.load %arg24[%c0_699, %c80_700] : memref<16x256xbf16, #tpu.memory_space<vmem>>, vector<16x128xbf16>
    %c0_701 = arith.constant 0 : index
    %c84_702 = arith.constant 84 : index
    %809 = vector.load %arg24[%c0_701, %c84_702] : memref<16x256xbf16, #tpu.memory_space<vmem>>, vector<16x128xbf16>
    %c0_703 = arith.constant 0 : index
    %c88_704 = arith.constant 88 : index
    %810 = vector.load %arg24[%c0_703, %c88_704] : memref<16x256xbf16, #tpu.memory_space<vmem>>, vector<16x128xbf16>
    %c0_705 = arith.constant 0 : index
    %c92_706 = arith.constant 92 : index
    %811 = vector.load %arg24[%c0_705, %c92_706] : memref<16x256xbf16, #tpu.memory_space<vmem>>, vector<16x128xbf16>
    %812 = tpu.concatenate %804, %805, %806, %807, %808, %809, %810, %811 in 0 : vector<16x128xbf16>, vector<16x128xbf16>, vector<16x128xbf16>, vector<16x128xbf16>, vector<16x128xbf16>, vector<16x128xbf16>, vector<16x128xbf16>, vector<16x128xbf16> -> vector<128x128xbf16>
    %c2_707 = arith.constant 2 : index
    %c0_708 = arith.constant 0 : index
    %c0_709 = arith.constant 0 : index
    %813 = vector.load %arg13[%c2_707, %c0_708, %c0_709] : memref<4x16x128xbf16, #tpu.memory_space<vmem>>, vector<1x16x128xbf16>
    %814 = vector.shape_cast %813 : vector<1x16x128xbf16> to vector<16x128xbf16>
    %cst_710 = arith.constant dense<0.000000e+00> : vector<16x128xf32>
    %815 = tpu.matmul %814, %812, %cst_710 {dimension_numbers = #tpu.dot_dimension_numbers<[1], [0], [0], [1], [0, 0, 1, 1], [], []>} : vector<16x128xbf16>, vector<128x128xbf16>, vector<16x128xf32> -> vector<16x128xf32>
    %816 = arith.addf %803, %815 : vector<16x128xf32>
    %c0_711 = arith.constant 0 : index
    %c96_712 = arith.constant 96 : index
    %817 = vector.load %arg24[%c0_711, %c96_712] : memref<16x256xbf16, #tpu.memory_space<vmem>>, vector<16x128xbf16>
    %c0_713 = arith.constant 0 : index
    %c100_714 = arith.constant 100 : index
    %818 = vector.load %arg24[%c0_713, %c100_714] : memref<16x256xbf16, #tpu.memory_space<vmem>>, vector<16x128xbf16>
    %c0_715 = arith.constant 0 : index
    %c104_716 = arith.constant 104 : index
    %819 = vector.load %arg24[%c0_715, %c104_716] : memref<16x256xbf16, #tpu.memory_space<vmem>>, vector<16x128xbf16>
    %c0_717 = arith.constant 0 : index
    %c108_718 = arith.constant 108 : index
    %820 = vector.load %arg24[%c0_717, %c108_718] : memref<16x256xbf16, #tpu.memory_space<vmem>>, vector<16x128xbf16>
    %c0_719 = arith.constant 0 : index
    %c112_720 = arith.constant 112 : index
    %821 = vector.load %arg24[%c0_719, %c112_720] : memref<16x256xbf16, #tpu.memory_space<vmem>>, vector<16x128xbf16>
    %c0_721 = arith.constant 0 : index
    %c116_722 = arith.constant 116 : index
    %822 = vector.load %arg24[%c0_721, %c116_722] : memref<16x256xbf16, #tpu.memory_space<vmem>>, vector<16x128xbf16>
    %c0_723 = arith.constant 0 : index
    %c120_724 = arith.constant 120 : index
    %823 = vector.load %arg24[%c0_723, %c120_724] : memref<16x256xbf16, #tpu.memory_space<vmem>>, vector<16x128xbf16>
    %c0_725 = arith.constant 0 : index
    %c124_726 = arith.constant 124 : index
    %824 = vector.load %arg24[%c0_725, %c124_726] : memref<16x256xbf16, #tpu.memory_space<vmem>>, vector<16x128xbf16>
    %825 = tpu.concatenate %817, %818, %819, %820, %821, %822, %823, %824 in 0 : vector<16x128xbf16>, vector<16x128xbf16>, vector<16x128xbf16>, vector<16x128xbf16>, vector<16x128xbf16>, vector<16x128xbf16>, vector<16x128xbf16>, vector<16x128xbf16> -> vector<128x128xbf16>
    %c3_727 = arith.constant 3 : index
    %c0_728 = arith.constant 0 : index
    %c0_729 = arith.constant 0 : index
    %826 = vector.load %arg13[%c3_727, %c0_728, %c0_729] : memref<4x16x128xbf16, #tpu.memory_space<vmem>>, vector<1x16x128xbf16>
    %827 = vector.shape_cast %826 : vector<1x16x128xbf16> to vector<16x128xbf16>
    %cst_730 = arith.constant dense<0.000000e+00> : vector<16x128xf32>
    %828 = tpu.matmul %827, %825, %cst_730 {dimension_numbers = #tpu.dot_dimension_numbers<[1], [0], [0], [1], [0, 0, 1, 1], [], []>} : vector<16x128xbf16>, vector<128x128xbf16>, vector<16x128xf32> -> vector<16x128xf32>
    %829 = arith.addf %816, %828 : vector<16x128xf32>
    %c0_731 = arith.constant 0 : index
    %c128_732 = arith.constant 128 : index
    %830 = vector.load %arg24[%c0_731, %c128_732] : memref<16x256xbf16, #tpu.memory_space<vmem>>, vector<16x128xbf16>
    %c0_733 = arith.constant 0 : index
    %c0_734 = arith.constant 0 : index
    %831 = vector.load %arg14[%c0_733, %c0_734] : memref<16x16xbf16, #tpu.memory_space<vmem>>, vector<16x16xbf16>
    %cst_735 = arith.constant dense<0.000000e+00> : vector<16x128xf32>
    %832 = tpu.matmul %831, %830, %cst_735 {dimension_numbers = #tpu.dot_dimension_numbers<[1], [0], [0], [1], [0, 0, 1, 1], [], []>} : vector<16x16xbf16>, vector<16x128xbf16>, vector<16x128xf32> -> vector<16x128xf32>
    %833 = arith.addf %829, %832 : vector<16x128xf32>
    %c0_736 = arith.constant 0 : index
    %c0_737 = arith.constant 0 : index
    %834 = vector.load %arg15[%c0_736, %c0_737] : memref<16x1xf32, #tpu.memory_space<vmem>>, vector<16x1xf32>
    %835 = vector.broadcast %834 : vector<16x1xf32> to vector<16x128xf32>
    %836 = arith.addf %833, %835 : vector<16x128xf32>
    %cst_738 = arith.constant dense<0.000000e+00> : vector<128xf32>
    %837 = vector.multi_reduction <add>, %836, %cst_738 [0] : vector<16x128xf32> to vector<128xf32>
    %838 = vector.shape_cast %837 : vector<128xf32> to vector<1x128xf32>
    %cst_739 = arith.constant 1.600000e+01 : f32
    %839 = vector.broadcast %cst_739 : f32 to vector<1x128xf32>
    %840 = arith.divf %838, %839 : vector<1x128xf32>
    %841 = vector.broadcast %840 : vector<1x128xf32> to vector<16x128xf32>
    %842 = arith.subf %836, %841 : vector<16x128xf32>
    %843 = arith.mulf %842, %842 : vector<16x128xf32>
    %cst_740 = arith.constant dense<0.000000e+00> : vector<128xf32>
    %844 = vector.multi_reduction <add>, %843, %cst_740 [0] : vector<16x128xf32> to vector<128xf32>
    %845 = vector.shape_cast %844 : vector<128xf32> to vector<1x128xf32>
    %cst_741 = arith.constant 1.600000e+01 : f32
    %846 = vector.broadcast %cst_741 : f32 to vector<1x128xf32>
    %847 = arith.divf %845, %846 : vector<1x128xf32>
    %848 = vector.broadcast %840 : vector<1x128xf32> to vector<16x128xf32>
    %849 = arith.subf %836, %848 : vector<16x128xf32>
    %cst_742 = arith.constant 9.99999974E-6 : f32
    %850 = vector.broadcast %cst_742 : f32 to vector<1x128xf32>
    %851 = arith.addf %847, %850 : vector<1x128xf32>
    %852 = math.rsqrt %851 : vector<1x128xf32>
    %853 = vector.broadcast %852 : vector<1x128xf32> to vector<16x128xf32>
    %854 = arith.mulf %849, %853 : vector<16x128xf32>
    %c0_743 = arith.constant 0 : index
    %c128_744 = arith.constant 128 : index
    %855 = vector.load %arg23[%c0_743, %c128_744] : memref<16x256xbf16, #tpu.memory_space<vmem>>, vector<16x128xbf16>
    %856 = arith.extf %855 : vector<16x128xbf16> to vector<16x128xf32>
    %cst_745 = arith.constant 0.000000e+00 : f32
    %857 = vector.broadcast %cst_745 : f32 to vector<16x128xf32>
    %858 = arith.maximumf %854, %857 : vector<16x128xf32>
    %859 = arith.addf %858, %856 : vector<16x128xf32>
    %860 = arith.truncf %859 : vector<16x128xf32> to vector<16x128xbf16>
    %c0_746 = arith.constant 0 : index
    %c512_747 = arith.constant 512 : index
    %861 = vector.load %arg26[%c0_746, %c512_747] : memref<16x640xbf16, #tpu.memory_space<vmem>>, vector<16x128xbf16>
    tpu.vector_store %arg26[%c0_746, %c512_747], %860 {strides = array<i32>} : memref<16x640xbf16, #tpu.memory_space<vmem>>, vector<16x128xbf16>,
    %cst_748 = arith.constant 0.000000e+00 : f32
    %862 = vector.broadcast %cst_748 : f32 to vector<16x128xf32>
    %c0_749 = arith.constant 0 : index
    %c0_750 = arith.constant 0 : index
    %863 = vector.load %arg26[%c0_749, %c0_750] : memref<16x640xbf16, #tpu.memory_space<vmem>>, vector<16x128xbf16>
    %c0_751 = arith.constant 0 : index
    %c4_752 = arith.constant 4 : index
    %864 = vector.load %arg26[%c0_751, %c4_752] : memref<16x640xbf16, #tpu.memory_space<vmem>>, vector<16x128xbf16>
    %c0_753 = arith.constant 0 : index
    %c8_754 = arith.constant 8 : index
    %865 = vector.load %arg26[%c0_753, %c8_754] : memref<16x640xbf16, #tpu.memory_space<vmem>>, vector<16x128xbf16>
    %c0_755 = arith.constant 0 : index
    %c12_756 = arith.constant 12 : index
    %866 = vector.load %arg26[%c0_755, %c12_756] : memref<16x640xbf16, #tpu.memory_space<vmem>>, vector<16x128xbf16>
    %c0_757 = arith.constant 0 : index
    %c16_758 = arith.constant 16 : index
    %867 = vector.load %arg26[%c0_757, %c16_758] : memref<16x640xbf16, #tpu.memory_space<vmem>>, vector<16x128xbf16>
    %c0_759 = arith.constant 0 : index
    %c20_760 = arith.constant 20 : index
    %868 = vector.load %arg26[%c0_759, %c20_760] : memref<16x640xbf16, #tpu.memory_space<vmem>>, vector<16x128xbf16>
    %c0_761 = arith.constant 0 : index
    %c24_762 = arith.constant 24 : index
    %869 = vector.load %arg26[%c0_761, %c24_762] : memref<16x640xbf16, #tpu.memory_space<vmem>>, vector<16x128xbf16>
    %c0_763 = arith.constant 0 : index
    %c28_764 = arith.constant 28 : index
    %870 = vector.load %arg26[%c0_763, %c28_764] : memref<16x640xbf16, #tpu.memory_space<vmem>>, vector<16x128xbf16>
    %871 = tpu.concatenate %863, %864, %865, %866, %867, %868, %869, %870 in 0 : vector<16x128xbf16>, vector<16x128xbf16>, vector<16x128xbf16>, vector<16x128xbf16>, vector<16x128xbf16>, vector<16x128xbf16>, vector<16x128xbf16>, vector<16x128xbf16> -> vector<128x128xbf16>
    %c0_765 = arith.constant 0 : index
    %c0_766 = arith.constant 0 : index
    %c0_767 = arith.constant 0 : index
    %872 = vector.load %arg16[%c0_765, %c0_766, %c0_767] : memref<16x16x128xbf16, #tpu.memory_space<vmem>>, vector<1x16x128xbf16>
    %873 = vector.shape_cast %872 : vector<1x16x128xbf16> to vector<16x128xbf16>
    %cst_768 = arith.constant dense<0.000000e+00> : vector<16x128xf32>
    %874 = tpu.matmul %873, %871, %cst_768 {dimension_numbers = #tpu.dot_dimension_numbers<[1], [0], [0], [1], [0, 0, 1, 1], [], []>} : vector<16x128xbf16>, vector<128x128xbf16>, vector<16x128xf32> -> vector<16x128xf32>
    %875 = arith.addf %862, %874 : vector<16x128xf32>
    %c0_769 = arith.constant 0 : index
    %c32_770 = arith.constant 32 : index
    %876 = vector.load %arg26[%c0_769, %c32_770] : memref<16x640xbf16, #tpu.memory_space<vmem>>, vector<16x128xbf16>
    %c0_771 = arith.constant 0 : index
    %c36_772 = arith.constant 36 : index
    %877 = vector.load %arg26[%c0_771, %c36_772] : memref<16x640xbf16, #tpu.memory_space<vmem>>, vector<16x128xbf16>
    %c0_773 = arith.constant 0 : index
    %c40_774 = arith.constant 40 : index
    %878 = vector.load %arg26[%c0_773, %c40_774] : memref<16x640xbf16, #tpu.memory_space<vmem>>, vector<16x128xbf16>
    %c0_775 = arith.constant 0 : index
    %c44_776 = arith.constant 44 : index
    %879 = vector.load %arg26[%c0_775, %c44_776] : memref<16x640xbf16, #tpu.memory_space<vmem>>, vector<16x128xbf16>
    %c0_777 = arith.constant 0 : index
    %c48_778 = arith.constant 48 : index
    %880 = vector.load %arg26[%c0_777, %c48_778] : memref<16x640xbf16, #tpu.memory_space<vmem>>, vector<16x128xbf16>
    %c0_779 = arith.constant 0 : index
    %c52_780 = arith.constant 52 : index
    %881 = vector.load %arg26[%c0_779, %c52_780] : memref<16x640xbf16, #tpu.memory_space<vmem>>, vector<16x128xbf16>
    %c0_781 = arith.constant 0 : index
    %c56_782 = arith.constant 56 : index
    %882 = vector.load %arg26[%c0_781, %c56_782] : memref<16x640xbf16, #tpu.memory_space<vmem>>, vector<16x128xbf16>
    %c0_783 = arith.constant 0 : index
    %c60_784 = arith.constant 60 : index
    %883 = vector.load %arg26[%c0_783, %c60_784] : memref<16x640xbf16, #tpu.memory_space<vmem>>, vector<16x128xbf16>
    %884 = tpu.concatenate %876, %877, %878, %879, %880, %881, %882, %883 in 0 : vector<16x128xbf16>, vector<16x128xbf16>, vector<16x128xbf16>, vector<16x128xbf16>, vector<16x128xbf16>, vector<16x128xbf16>, vector<16x128xbf16>, vector<16x128xbf16> -> vector<128x128xbf16>
    %c1_785 = arith.constant 1 : index
    %c0_786 = arith.constant 0 : index
    %c0_787 = arith.constant 0 : index
    %885 = vector.load %arg16[%c1_785, %c0_786, %c0_787] : memref<16x16x128xbf16, #tpu.memory_space<vmem>>, vector<1x16x128xbf16>
    %886 = vector.shape_cast %885 : vector<1x16x128xbf16> to vector<16x128xbf16>
    %cst_788 = arith.constant dense<0.000000e+00> : vector<16x128xf32>
    %887 = tpu.matmul %886, %884, %cst_788 {dimension_numbers = #tpu.dot_dimension_numbers<[1], [0], [0], [1], [0, 0, 1, 1], [], []>} : vector<16x128xbf16>, vector<128x128xbf16>, vector<16x128xf32> -> vector<16x128xf32>
    %888 = arith.addf %875, %887 : vector<16x128xf32>
    %c0_789 = arith.constant 0 : index
    %c64_790 = arith.constant 64 : index
    %889 = vector.load %arg26[%c0_789, %c64_790] : memref<16x640xbf16, #tpu.memory_space<vmem>>, vector<16x128xbf16>
    %c0_791 = arith.constant 0 : index
    %c68_792 = arith.constant 68 : index
    %890 = vector.load %arg26[%c0_791, %c68_792] : memref<16x640xbf16, #tpu.memory_space<vmem>>, vector<16x128xbf16>
    %c0_793 = arith.constant 0 : index
    %c72_794 = arith.constant 72 : index
    %891 = vector.load %arg26[%c0_793, %c72_794] : memref<16x640xbf16, #tpu.memory_space<vmem>>, vector<16x128xbf16>
    %c0_795 = arith.constant 0 : index
    %c76_796 = arith.constant 76 : index
    %892 = vector.load %arg26[%c0_795, %c76_796] : memref<16x640xbf16, #tpu.memory_space<vmem>>, vector<16x128xbf16>
    %c0_797 = arith.constant 0 : index
    %c80_798 = arith.constant 80 : index
    %893 = vector.load %arg26[%c0_797, %c80_798] : memref<16x640xbf16, #tpu.memory_space<vmem>>, vector<16x128xbf16>
    %c0_799 = arith.constant 0 : index
    %c84_800 = arith.constant 84 : index
    %894 = vector.load %arg26[%c0_799, %c84_800] : memref<16x640xbf16, #tpu.memory_space<vmem>>, vector<16x128xbf16>
    %c0_801 = arith.constant 0 : index
    %c88_802 = arith.constant 88 : index
    %895 = vector.load %arg26[%c0_801, %c88_802] : memref<16x640xbf16, #tpu.memory_space<vmem>>, vector<16x128xbf16>
    %c0_803 = arith.constant 0 : index
    %c92_804 = arith.constant 92 : index
    %896 = vector.load %arg26[%c0_803, %c92_804] : memref<16x640xbf16, #tpu.memory_space<vmem>>, vector<16x128xbf16>
    %897 = tpu.concatenate %889, %890, %891, %892, %893, %894, %895, %896 in 0 : vector<16x128xbf16>, vector<16x128xbf16>, vector<16x128xbf16>, vector<16x128xbf16>, vector<16x128xbf16>, vector<16x128xbf16>, vector<16x128xbf16>, vector<16x128xbf16> -> vector<128x128xbf16>
    %c2_805 = arith.constant 2 : index
    %c0_806 = arith.constant 0 : index
    %c0_807 = arith.constant 0 : index
    %898 = vector.load %arg16[%c2_805, %c0_806, %c0_807] : memref<16x16x128xbf16, #tpu.memory_space<vmem>>, vector<1x16x128xbf16>
    %899 = vector.shape_cast %898 : vector<1x16x128xbf16> to vector<16x128xbf16>
    %cst_808 = arith.constant dense<0.000000e+00> : vector<16x128xf32>
    %900 = tpu.matmul %899, %897, %cst_808 {dimension_numbers = #tpu.dot_dimension_numbers<[1], [0], [0], [1], [0, 0, 1, 1], [], []>} : vector<16x128xbf16>, vector<128x128xbf16>, vector<16x128xf32> -> vector<16x128xf32>
    %901 = arith.addf %888, %900 : vector<16x128xf32>
    %c0_809 = arith.constant 0 : index
    %c96_810 = arith.constant 96 : index
    %902 = vector.load %arg26[%c0_809, %c96_810] : memref<16x640xbf16, #tpu.memory_space<vmem>>, vector<16x128xbf16>
    %c0_811 = arith.constant 0 : index
    %c100_812 = arith.constant 100 : index
    %903 = vector.load %arg26[%c0_811, %c100_812] : memref<16x640xbf16, #tpu.memory_space<vmem>>, vector<16x128xbf16>
    %c0_813 = arith.constant 0 : index
    %c104_814 = arith.constant 104 : index
    %904 = vector.load %arg26[%c0_813, %c104_814] : memref<16x640xbf16, #tpu.memory_space<vmem>>, vector<16x128xbf16>
    %c0_815 = arith.constant 0 : index
    %c108_816 = arith.constant 108 : index
    %905 = vector.load %arg26[%c0_815, %c108_816] : memref<16x640xbf16, #tpu.memory_space<vmem>>, vector<16x128xbf16>
    %c0_817 = arith.constant 0 : index
    %c112_818 = arith.constant 112 : index
    %906 = vector.load %arg26[%c0_817, %c112_818] : memref<16x640xbf16, #tpu.memory_space<vmem>>, vector<16x128xbf16>
    %c0_819 = arith.constant 0 : index
    %c116_820 = arith.constant 116 : index
    %907 = vector.load %arg26[%c0_819, %c116_820] : memref<16x640xbf16, #tpu.memory_space<vmem>>, vector<16x128xbf16>
    %c0_821 = arith.constant 0 : index
    %c120_822 = arith.constant 120 : index
    %908 = vector.load %arg26[%c0_821, %c120_822] : memref<16x640xbf16, #tpu.memory_space<vmem>>, vector<16x128xbf16>
    %c0_823 = arith.constant 0 : index
    %c124_824 = arith.constant 124 : index
    %909 = vector.load %arg26[%c0_823, %c124_824] : memref<16x640xbf16, #tpu.memory_space<vmem>>, vector<16x128xbf16>
    %910 = tpu.concatenate %902, %903, %904, %905, %906, %907, %908, %909 in 0 : vector<16x128xbf16>, vector<16x128xbf16>, vector<16x128xbf16>, vector<16x128xbf16>, vector<16x128xbf16>, vector<16x128xbf16>, vector<16x128xbf16>, vector<16x128xbf16> -> vector<128x128xbf16>
    %c3_825 = arith.constant 3 : index
    %c0_826 = arith.constant 0 : index
    %c0_827 = arith.constant 0 : index
    %911 = vector.load %arg16[%c3_825, %c0_826, %c0_827] : memref<16x16x128xbf16, #tpu.memory_space<vmem>>, vector<1x16x128xbf16>
    %912 = vector.shape_cast %911 : vector<1x16x128xbf16> to vector<16x128xbf16>
    %cst_828 = arith.constant dense<0.000000e+00> : vector<16x128xf32>
    %913 = tpu.matmul %912, %910, %cst_828 {dimension_numbers = #tpu.dot_dimension_numbers<[1], [0], [0], [1], [0, 0, 1, 1], [], []>} : vector<16x128xbf16>, vector<128x128xbf16>, vector<16x128xf32> -> vector<16x128xf32>
    %914 = arith.addf %901, %913 : vector<16x128xf32>
    %c0_829 = arith.constant 0 : index
    %c128_830 = arith.constant 128 : index
    %915 = vector.load %arg26[%c0_829, %c128_830] : memref<16x640xbf16, #tpu.memory_space<vmem>>, vector<16x128xbf16>
    %c0_831 = arith.constant 0 : index
    %c132 = arith.constant 132 : index
    %916 = vector.load %arg26[%c0_831, %c132] : memref<16x640xbf16, #tpu.memory_space<vmem>>, vector<16x128xbf16>
    %c0_832 = arith.constant 0 : index
    %c136 = arith.constant 136 : index
    %917 = vector.load %arg26[%c0_832, %c136] : memref<16x640xbf16, #tpu.memory_space<vmem>>, vector<16x128xbf16>
    %c0_833 = arith.constant 0 : index
    %c140 = arith.constant 140 : index
    %918 = vector.load %arg26[%c0_833, %c140] : memref<16x640xbf16, #tpu.memory_space<vmem>>, vector<16x128xbf16>
    %c0_834 = arith.constant 0 : index
    %c144 = arith.constant 144 : index
    %919 = vector.load %arg26[%c0_834, %c144] : memref<16x640xbf16, #tpu.memory_space<vmem>>, vector<16x128xbf16>
    %c0_835 = arith.constant 0 : index
    %c148 = arith.constant 148 : index
    %920 = vector.load %arg26[%c0_835, %c148] : memref<16x640xbf16, #tpu.memory_space<vmem>>, vector<16x128xbf16>
    %c0_836 = arith.constant 0 : index
    %c152 = arith.constant 152 : index
    %921 = vector.load %arg26[%c0_836, %c152] : memref<16x640xbf16, #tpu.memory_space<vmem>>, vector<16x128xbf16>
    %c0_837 = arith.constant 0 : index
    %c156 = arith.constant 156 : index
    %922 = vector.load %arg26[%c0_837, %c156] : memref<16x640xbf16, #tpu.memory_space<vmem>>, vector<16x128xbf16>
    %923 = tpu.concatenate %915, %916, %917, %918, %919, %920, %921, %922 in 0 : vector<16x128xbf16>, vector<16x128xbf16>, vector<16x128xbf16>, vector<16x128xbf16>, vector<16x128xbf16>, vector<16x128xbf16>, vector<16x128xbf16>, vector<16x128xbf16> -> vector<128x128xbf16>
    %c4_838 = arith.constant 4 : index
    %c0_839 = arith.constant 0 : index
    %c0_840 = arith.constant 0 : index
    %924 = vector.load %arg16[%c4_838, %c0_839, %c0_840] : memref<16x16x128xbf16, #tpu.memory_space<vmem>>, vector<1x16x128xbf16>
    %925 = vector.shape_cast %924 : vector<1x16x128xbf16> to vector<16x128xbf16>
    %cst_841 = arith.constant dense<0.000000e+00> : vector<16x128xf32>
    %926 = tpu.matmul %925, %923, %cst_841 {dimension_numbers = #tpu.dot_dimension_numbers<[1], [0], [0], [1], [0, 0, 1, 1], [], []>} : vector<16x128xbf16>, vector<128x128xbf16>, vector<16x128xf32> -> vector<16x128xf32>
    %927 = arith.addf %914, %926 : vector<16x128xf32>
    %c0_842 = arith.constant 0 : index
    %c160 = arith.constant 160 : index
    %928 = vector.load %arg26[%c0_842, %c160] : memref<16x640xbf16, #tpu.memory_space<vmem>>, vector<16x128xbf16>
    %c0_843 = arith.constant 0 : index
    %c164 = arith.constant 164 : index
    %929 = vector.load %arg26[%c0_843, %c164] : memref<16x640xbf16, #tpu.memory_space<vmem>>, vector<16x128xbf16>
    %c0_844 = arith.constant 0 : index
    %c168 = arith.constant 168 : index
    %930 = vector.load %arg26[%c0_844, %c168] : memref<16x640xbf16, #tpu.memory_space<vmem>>, vector<16x128xbf16>
    %c0_845 = arith.constant 0 : index
    %c172 = arith.constant 172 : index
    %931 = vector.load %arg26[%c0_845, %c172] : memref<16x640xbf16, #tpu.memory_space<vmem>>, vector<16x128xbf16>
    %c0_846 = arith.constant 0 : index
    %c176 = arith.constant 176 : index
    %932 = vector.load %arg26[%c0_846, %c176] : memref<16x640xbf16, #tpu.memory_space<vmem>>, vector<16x128xbf16>
    %c0_847 = arith.constant 0 : index
    %c180 = arith.constant 180 : index
    %933 = vector.load %arg26[%c0_847, %c180] : memref<16x640xbf16, #tpu.memory_space<vmem>>, vector<16x128xbf16>
    %c0_848 = arith.constant 0 : index
    %c184 = arith.constant 184 : index
    %934 = vector.load %arg26[%c0_848, %c184] : memref<16x640xbf16, #tpu.memory_space<vmem>>, vector<16x128xbf16>
    %c0_849 = arith.constant 0 : index
    %c188 = arith.constant 188 : index
    %935 = vector.load %arg26[%c0_849, %c188] : memref<16x640xbf16, #tpu.memory_space<vmem>>, vector<16x128xbf16>
    %936 = tpu.concatenate %928, %929, %930, %931, %932, %933, %934, %935 in 0 : vector<16x128xbf16>, vector<16x128xbf16>, vector<16x128xbf16>, vector<16x128xbf16>, vector<16x128xbf16>, vector<16x128xbf16>, vector<16x128xbf16>, vector<16x128xbf16> -> vector<128x128xbf16>
    %c5 = arith.constant 5 : index
    %c0_850 = arith.constant 0 : index
    %c0_851 = arith.constant 0 : index
    %937 = vector.load %arg16[%c5, %c0_850, %c0_851] : memref<16x16x128xbf16, #tpu.memory_space<vmem>>, vector<1x16x128xbf16>
    %938 = vector.shape_cast %937 : vector<1x16x128xbf16> to vector<16x128xbf16>
    %cst_852 = arith.constant dense<0.000000e+00> : vector<16x128xf32>
    %939 = tpu.matmul %938, %936, %cst_852 {dimension_numbers = #tpu.dot_dimension_numbers<[1], [0], [0], [1], [0, 0, 1, 1], [], []>} : vector<16x128xbf16>, vector<128x128xbf16>, vector<16x128xf32> -> vector<16x128xf32>
    %940 = arith.addf %927, %939 : vector<16x128xf32>
    %c0_853 = arith.constant 0 : index
    %c192 = arith.constant 192 : index
    %941 = vector.load %arg26[%c0_853, %c192] : memref<16x640xbf16, #tpu.memory_space<vmem>>, vector<16x128xbf16>
    %c0_854 = arith.constant 0 : index
    %c196 = arith.constant 196 : index
    %942 = vector.load %arg26[%c0_854, %c196] : memref<16x640xbf16, #tpu.memory_space<vmem>>, vector<16x128xbf16>
    %c0_855 = arith.constant 0 : index
    %c200 = arith.constant 200 : index
    %943 = vector.load %arg26[%c0_855, %c200] : memref<16x640xbf16, #tpu.memory_space<vmem>>, vector<16x128xbf16>
    %c0_856 = arith.constant 0 : index
    %c204 = arith.constant 204 : index
    %944 = vector.load %arg26[%c0_856, %c204] : memref<16x640xbf16, #tpu.memory_space<vmem>>, vector<16x128xbf16>
    %c0_857 = arith.constant 0 : index
    %c208 = arith.constant 208 : index
    %945 = vector.load %arg26[%c0_857, %c208] : memref<16x640xbf16, #tpu.memory_space<vmem>>, vector<16x128xbf16>
    %c0_858 = arith.constant 0 : index
    %c212 = arith.constant 212 : index
    %946 = vector.load %arg26[%c0_858, %c212] : memref<16x640xbf16, #tpu.memory_space<vmem>>, vector<16x128xbf16>
    %c0_859 = arith.constant 0 : index
    %c216 = arith.constant 216 : index
    %947 = vector.load %arg26[%c0_859, %c216] : memref<16x640xbf16, #tpu.memory_space<vmem>>, vector<16x128xbf16>
    %c0_860 = arith.constant 0 : index
    %c220 = arith.constant 220 : index
    %948 = vector.load %arg26[%c0_860, %c220] : memref<16x640xbf16, #tpu.memory_space<vmem>>, vector<16x128xbf16>
    %949 = tpu.concatenate %941, %942, %943, %944, %945, %946, %947, %948 in 0 : vector<16x128xbf16>, vector<16x128xbf16>, vector<16x128xbf16>, vector<16x128xbf16>, vector<16x128xbf16>, vector<16x128xbf16>, vector<16x128xbf16>, vector<16x128xbf16> -> vector<128x128xbf16>
    %c6 = arith.constant 6 : index
    %c0_861 = arith.constant 0 : index
    %c0_862 = arith.constant 0 : index
    %950 = vector.load %arg16[%c6, %c0_861, %c0_862] : memref<16x16x128xbf16, #tpu.memory_space<vmem>>, vector<1x16x128xbf16>
    %951 = vector.shape_cast %950 : vector<1x16x128xbf16> to vector<16x128xbf16>
    %cst_863 = arith.constant dense<0.000000e+00> : vector<16x128xf32>
    %952 = tpu.matmul %951, %949, %cst_863 {dimension_numbers = #tpu.dot_dimension_numbers<[1], [0], [0], [1], [0, 0, 1, 1], [], []>} : vector<16x128xbf16>, vector<128x128xbf16>, vector<16x128xf32> -> vector<16x128xf32>
    %953 = arith.addf %940, %952 : vector<16x128xf32>
    %c0_864 = arith.constant 0 : index
    %c224 = arith.constant 224 : index
    %954 = vector.load %arg26[%c0_864, %c224] : memref<16x640xbf16, #tpu.memory_space<vmem>>, vector<16x128xbf16>
    %c0_865 = arith.constant 0 : index
    %c228 = arith.constant 228 : index
    %955 = vector.load %arg26[%c0_865, %c228] : memref<16x640xbf16, #tpu.memory_space<vmem>>, vector<16x128xbf16>
    %c0_866 = arith.constant 0 : index
    %c232 = arith.constant 232 : index
    %956 = vector.load %arg26[%c0_866, %c232] : memref<16x640xbf16, #tpu.memory_space<vmem>>, vector<16x128xbf16>
    %c0_867 = arith.constant 0 : index
    %c236 = arith.constant 236 : index
    %957 = vector.load %arg26[%c0_867, %c236] : memref<16x640xbf16, #tpu.memory_space<vmem>>, vector<16x128xbf16>
    %c0_868 = arith.constant 0 : index
    %c240 = arith.constant 240 : index
    %958 = vector.load %arg26[%c0_868, %c240] : memref<16x640xbf16, #tpu.memory_space<vmem>>, vector<16x128xbf16>
    %c0_869 = arith.constant 0 : index
    %c244 = arith.constant 244 : index
    %959 = vector.load %arg26[%c0_869, %c244] : memref<16x640xbf16, #tpu.memory_space<vmem>>, vector<16x128xbf16>
    %c0_870 = arith.constant 0 : index
    %c248 = arith.constant 248 : index
    %960 = vector.load %arg26[%c0_870, %c248] : memref<16x640xbf16, #tpu.memory_space<vmem>>, vector<16x128xbf16>
    %c0_871 = arith.constant 0 : index
    %c252 = arith.constant 252 : index
    %961 = vector.load %arg26[%c0_871, %c252] : memref<16x640xbf16, #tpu.memory_space<vmem>>, vector<16x128xbf16>
    %962 = tpu.concatenate %954, %955, %956, %957, %958, %959, %960, %961 in 0 : vector<16x128xbf16>, vector<16x128xbf16>, vector<16x128xbf16>, vector<16x128xbf16>, vector<16x128xbf16>, vector<16x128xbf16>, vector<16x128xbf16>, vector<16x128xbf16> -> vector<128x128xbf16>
    %c7 = arith.constant 7 : index
    %c0_872 = arith.constant 0 : index
    %c0_873 = arith.constant 0 : index
    %963 = vector.load %arg16[%c7, %c0_872, %c0_873] : memref<16x16x128xbf16, #tpu.memory_space<vmem>>, vector<1x16x128xbf16>
    %964 = vector.shape_cast %963 : vector<1x16x128xbf16> to vector<16x128xbf16>
    %cst_874 = arith.constant dense<0.000000e+00> : vector<16x128xf32>
    %965 = tpu.matmul %964, %962, %cst_874 {dimension_numbers = #tpu.dot_dimension_numbers<[1], [0], [0], [1], [0, 0, 1, 1], [], []>} : vector<16x128xbf16>, vector<128x128xbf16>, vector<16x128xf32> -> vector<16x128xf32>
    %966 = arith.addf %953, %965 : vector<16x128xf32>
    %c0_875 = arith.constant 0 : index
    %c256_876 = arith.constant 256 : index
    %967 = vector.load %arg26[%c0_875, %c256_876] : memref<16x640xbf16, #tpu.memory_space<vmem>>, vector<16x128xbf16>
    %c0_877 = arith.constant 0 : index
    %c260 = arith.constant 260 : index
    %968 = vector.load %arg26[%c0_877, %c260] : memref<16x640xbf16, #tpu.memory_space<vmem>>, vector<16x128xbf16>
    %c0_878 = arith.constant 0 : index
    %c264 = arith.constant 264 : index
    %969 = vector.load %arg26[%c0_878, %c264] : memref<16x640xbf16, #tpu.memory_space<vmem>>, vector<16x128xbf16>
    %c0_879 = arith.constant 0 : index
    %c268 = arith.constant 268 : index
    %970 = vector.load %arg26[%c0_879, %c268] : memref<16x640xbf16, #tpu.memory_space<vmem>>, vector<16x128xbf16>
    %c0_880 = arith.constant 0 : index
    %c272 = arith.constant 272 : index
    %971 = vector.load %arg26[%c0_880, %c272] : memref<16x640xbf16, #tpu.memory_space<vmem>>, vector<16x128xbf16>
    %c0_881 = arith.constant 0 : index
    %c276 = arith.constant 276 : index
    %972 = vector.load %arg26[%c0_881, %c276] : memref<16x640xbf16, #tpu.memory_space<vmem>>, vector<16x128xbf16>
    %c0_882 = arith.constant 0 : index
    %c280 = arith.constant 280 : index
    %973 = vector.load %arg26[%c0_882, %c280] : memref<16x640xbf16, #tpu.memory_space<vmem>>, vector<16x128xbf16>
    %c0_883 = arith.constant 0 : index
    %c284 = arith.constant 284 : index
    %974 = vector.load %arg26[%c0_883, %c284] : memref<16x640xbf16, #tpu.memory_space<vmem>>, vector<16x128xbf16>
    %975 = tpu.concatenate %967, %968, %969, %970, %971, %972, %973, %974 in 0 : vector<16x128xbf16>, vector<16x128xbf16>, vector<16x128xbf16>, vector<16x128xbf16>, vector<16x128xbf16>, vector<16x128xbf16>, vector<16x128xbf16>, vector<16x128xbf16> -> vector<128x128xbf16>
    %c8_884 = arith.constant 8 : index
    %c0_885 = arith.constant 0 : index
    %c0_886 = arith.constant 0 : index
    %976 = vector.load %arg16[%c8_884, %c0_885, %c0_886] : memref<16x16x128xbf16, #tpu.memory_space<vmem>>, vector<1x16x128xbf16>
    %977 = vector.shape_cast %976 : vector<1x16x128xbf16> to vector<16x128xbf16>
    %cst_887 = arith.constant dense<0.000000e+00> : vector<16x128xf32>
    %978 = tpu.matmul %977, %975, %cst_887 {dimension_numbers = #tpu.dot_dimension_numbers<[1], [0], [0], [1], [0, 0, 1, 1], [], []>} : vector<16x128xbf16>, vector<128x128xbf16>, vector<16x128xf32> -> vector<16x128xf32>
    %979 = arith.addf %966, %978 : vector<16x128xf32>
    %c0_888 = arith.constant 0 : index
    %c288 = arith.constant 288 : index
    %980 = vector.load %arg26[%c0_888, %c288] : memref<16x640xbf16, #tpu.memory_space<vmem>>, vector<16x128xbf16>
    %c0_889 = arith.constant 0 : index
    %c292 = arith.constant 292 : index
    %981 = vector.load %arg26[%c0_889, %c292] : memref<16x640xbf16, #tpu.memory_space<vmem>>, vector<16x128xbf16>
    %c0_890 = arith.constant 0 : index
    %c296 = arith.constant 296 : index
    %982 = vector.load %arg26[%c0_890, %c296] : memref<16x640xbf16, #tpu.memory_space<vmem>>, vector<16x128xbf16>
    %c0_891 = arith.constant 0 : index
    %c300 = arith.constant 300 : index
    %983 = vector.load %arg26[%c0_891, %c300] : memref<16x640xbf16, #tpu.memory_space<vmem>>, vector<16x128xbf16>
    %c0_892 = arith.constant 0 : index
    %c304 = arith.constant 304 : index
    %984 = vector.load %arg26[%c0_892, %c304] : memref<16x640xbf16, #tpu.memory_space<vmem>>, vector<16x128xbf16>
    %c0_893 = arith.constant 0 : index
    %c308 = arith.constant 308 : index
    %985 = vector.load %arg26[%c0_893, %c308] : memref<16x640xbf16, #tpu.memory_space<vmem>>, vector<16x128xbf16>
    %c0_894 = arith.constant 0 : index
    %c312 = arith.constant 312 : index
    %986 = vector.load %arg26[%c0_894, %c312] : memref<16x640xbf16, #tpu.memory_space<vmem>>, vector<16x128xbf16>
    %c0_895 = arith.constant 0 : index
    %c316 = arith.constant 316 : index
    %987 = vector.load %arg26[%c0_895, %c316] : memref<16x640xbf16, #tpu.memory_space<vmem>>, vector<16x128xbf16>
    %988 = tpu.concatenate %980, %981, %982, %983, %984, %985, %986, %987 in 0 : vector<16x128xbf16>, vector<16x128xbf16>, vector<16x128xbf16>, vector<16x128xbf16>, vector<16x128xbf16>, vector<16x128xbf16>, vector<16x128xbf16>, vector<16x128xbf16> -> vector<128x128xbf16>
    %c9 = arith.constant 9 : index
    %c0_896 = arith.constant 0 : index
    %c0_897 = arith.constant 0 : index
    %989 = vector.load %arg16[%c9, %c0_896, %c0_897] : memref<16x16x128xbf16, #tpu.memory_space<vmem>>, vector<1x16x128xbf16>
    %990 = vector.shape_cast %989 : vector<1x16x128xbf16> to vector<16x128xbf16>
    %cst_898 = arith.constant dense<0.000000e+00> : vector<16x128xf32>
    %991 = tpu.matmul %990, %988, %cst_898 {dimension_numbers = #tpu.dot_dimension_numbers<[1], [0], [0], [1], [0, 0, 1, 1], [], []>} : vector<16x128xbf16>, vector<128x128xbf16>, vector<16x128xf32> -> vector<16x128xf32>
    %992 = arith.addf %979, %991 : vector<16x128xf32>
    %c0_899 = arith.constant 0 : index
    %c320 = arith.constant 320 : index
    %993 = vector.load %arg26[%c0_899, %c320] : memref<16x640xbf16, #tpu.memory_space<vmem>>, vector<16x128xbf16>
    %c0_900 = arith.constant 0 : index
    %c324 = arith.constant 324 : index
    %994 = vector.load %arg26[%c0_900, %c324] : memref<16x640xbf16, #tpu.memory_space<vmem>>, vector<16x128xbf16>
    %c0_901 = arith.constant 0 : index
    %c328 = arith.constant 328 : index
    %995 = vector.load %arg26[%c0_901, %c328] : memref<16x640xbf16, #tpu.memory_space<vmem>>, vector<16x128xbf16>
    %c0_902 = arith.constant 0 : index
    %c332 = arith.constant 332 : index
    %996 = vector.load %arg26[%c0_902, %c332] : memref<16x640xbf16, #tpu.memory_space<vmem>>, vector<16x128xbf16>
    %c0_903 = arith.constant 0 : index
    %c336 = arith.constant 336 : index
    %997 = vector.load %arg26[%c0_903, %c336] : memref<16x640xbf16, #tpu.memory_space<vmem>>, vector<16x128xbf16>
    %c0_904 = arith.constant 0 : index
    %c340 = arith.constant 340 : index
    %998 = vector.load %arg26[%c0_904, %c340] : memref<16x640xbf16, #tpu.memory_space<vmem>>, vector<16x128xbf16>
    %c0_905 = arith.constant 0 : index
    %c344 = arith.constant 344 : index
    %999 = vector.load %arg26[%c0_905, %c344] : memref<16x640xbf16, #tpu.memory_space<vmem>>, vector<16x128xbf16>
    %c0_906 = arith.constant 0 : index
    %c348 = arith.constant 348 : index
    %1000 = vector.load %arg26[%c0_906, %c348] : memref<16x640xbf16, #tpu.memory_space<vmem>>, vector<16x128xbf16>
    %1001 = tpu.concatenate %993, %994, %995, %996, %997, %998, %999, %1000 in 0 : vector<16x128xbf16>, vector<16x128xbf16>, vector<16x128xbf16>, vector<16x128xbf16>, vector<16x128xbf16>, vector<16x128xbf16>, vector<16x128xbf16>, vector<16x128xbf16> -> vector<128x128xbf16>
    %c10 = arith.constant 10 : index
    %c0_907 = arith.constant 0 : index
    %c0_908 = arith.constant 0 : index
    %1002 = vector.load %arg16[%c10, %c0_907, %c0_908] : memref<16x16x128xbf16, #tpu.memory_space<vmem>>, vector<1x16x128xbf16>
    %1003 = vector.shape_cast %1002 : vector<1x16x128xbf16> to vector<16x128xbf16>
    %cst_909 = arith.constant dense<0.000000e+00> : vector<16x128xf32>
    %1004 = tpu.matmul %1003, %1001, %cst_909 {dimension_numbers = #tpu.dot_dimension_numbers<[1], [0], [0], [1], [0, 0, 1, 1], [], []>} : vector<16x128xbf16>, vector<128x128xbf16>, vector<16x128xf32> -> vector<16x128xf32>
    %1005 = arith.addf %992, %1004 : vector<16x128xf32>
    %c0_910 = arith.constant 0 : index
    %c352 = arith.constant 352 : index
    %1006 = vector.load %arg26[%c0_910, %c352] : memref<16x640xbf16, #tpu.memory_space<vmem>>, vector<16x128xbf16>
    %c0_911 = arith.constant 0 : index
    %c356 = arith.constant 356 : index
    %1007 = vector.load %arg26[%c0_911, %c356] : memref<16x640xbf16, #tpu.memory_space<vmem>>, vector<16x128xbf16>
    %c0_912 = arith.constant 0 : index
    %c360 = arith.constant 360 : index
    %1008 = vector.load %arg26[%c0_912, %c360] : memref<16x640xbf16, #tpu.memory_space<vmem>>, vector<16x128xbf16>
    %c0_913 = arith.constant 0 : index
    %c364 = arith.constant 364 : index
    %1009 = vector.load %arg26[%c0_913, %c364] : memref<16x640xbf16, #tpu.memory_space<vmem>>, vector<16x128xbf16>
    %c0_914 = arith.constant 0 : index
    %c368 = arith.constant 368 : index
    %1010 = vector.load %arg26[%c0_914, %c368] : memref<16x640xbf16, #tpu.memory_space<vmem>>, vector<16x128xbf16>
    %c0_915 = arith.constant 0 : index
    %c372 = arith.constant 372 : index
    %1011 = vector.load %arg26[%c0_915, %c372] : memref<16x640xbf16, #tpu.memory_space<vmem>>, vector<16x128xbf16>
    %c0_916 = arith.constant 0 : index
    %c376 = arith.constant 376 : index
    %1012 = vector.load %arg26[%c0_916, %c376] : memref<16x640xbf16, #tpu.memory_space<vmem>>, vector<16x128xbf16>
    %c0_917 = arith.constant 0 : index
    %c380 = arith.constant 380 : index
    %1013 = vector.load %arg26[%c0_917, %c380] : memref<16x640xbf16, #tpu.memory_space<vmem>>, vector<16x128xbf16>
    %1014 = tpu.concatenate %1006, %1007, %1008, %1009, %1010, %1011, %1012, %1013 in 0 : vector<16x128xbf16>, vector<16x128xbf16>, vector<16x128xbf16>, vector<16x128xbf16>, vector<16x128xbf16>, vector<16x128xbf16>, vector<16x128xbf16>, vector<16x128xbf16> -> vector<128x128xbf16>
    %c11 = arith.constant 11 : index
    %c0_918 = arith.constant 0 : index
    %c0_919 = arith.constant 0 : index
    %1015 = vector.load %arg16[%c11, %c0_918, %c0_919] : memref<16x16x128xbf16, #tpu.memory_space<vmem>>, vector<1x16x128xbf16>
    %1016 = vector.shape_cast %1015 : vector<1x16x128xbf16> to vector<16x128xbf16>
    %cst_920 = arith.constant dense<0.000000e+00> : vector<16x128xf32>
    %1017 = tpu.matmul %1016, %1014, %cst_920 {dimension_numbers = #tpu.dot_dimension_numbers<[1], [0], [0], [1], [0, 0, 1, 1], [], []>} : vector<16x128xbf16>, vector<128x128xbf16>, vector<16x128xf32> -> vector<16x128xf32>
    %1018 = arith.addf %1005, %1017 : vector<16x128xf32>
    %c0_921 = arith.constant 0 : index
    %c384_922 = arith.constant 384 : index
    %1019 = vector.load %arg26[%c0_921, %c384_922] : memref<16x640xbf16, #tpu.memory_space<vmem>>, vector<16x128xbf16>
    %c0_923 = arith.constant 0 : index
    %c388 = arith.constant 388 : index
    %1020 = vector.load %arg26[%c0_923, %c388] : memref<16x640xbf16, #tpu.memory_space<vmem>>, vector<16x128xbf16>
    %c0_924 = arith.constant 0 : index
    %c392 = arith.constant 392 : index
    %1021 = vector.load %arg26[%c0_924, %c392] : memref<16x640xbf16, #tpu.memory_space<vmem>>, vector<16x128xbf16>
    %c0_925 = arith.constant 0 : index
    %c396 = arith.constant 396 : index
    %1022 = vector.load %arg26[%c0_925, %c396] : memref<16x640xbf16, #tpu.memory_space<vmem>>, vector<16x128xbf16>
    %c0_926 = arith.constant 0 : index
    %c400 = arith.constant 400 : index
    %1023 = vector.load %arg26[%c0_926, %c400] : memref<16x640xbf16, #tpu.memory_space<vmem>>, vector<16x128xbf16>
    %c0_927 = arith.constant 0 : index
    %c404 = arith.constant 404 : index
    %1024 = vector.load %arg26[%c0_927, %c404] : memref<16x640xbf16, #tpu.memory_space<vmem>>, vector<16x128xbf16>
    %c0_928 = arith.constant 0 : index
    %c408 = arith.constant 408 : index
    %1025 = vector.load %arg26[%c0_928, %c408] : memref<16x640xbf16, #tpu.memory_space<vmem>>, vector<16x128xbf16>
    %c0_929 = arith.constant 0 : index
    %c412 = arith.constant 412 : index
    %1026 = vector.load %arg26[%c0_929, %c412] : memref<16x640xbf16, #tpu.memory_space<vmem>>, vector<16x128xbf16>
    %1027 = tpu.concatenate %1019, %1020, %1021, %1022, %1023, %1024, %1025, %1026 in 0 : vector<16x128xbf16>, vector<16x128xbf16>, vector<16x128xbf16>, vector<16x128xbf16>, vector<16x128xbf16>, vector<16x128xbf16>, vector<16x128xbf16>, vector<16x128xbf16> -> vector<128x128xbf16>
    %c12_930 = arith.constant 12 : index
    %c0_931 = arith.constant 0 : index
    %c0_932 = arith.constant 0 : index
    %1028 = vector.load %arg16[%c12_930, %c0_931, %c0_932] : memref<16x16x128xbf16, #tpu.memory_space<vmem>>, vector<1x16x128xbf16>
    %1029 = vector.shape_cast %1028 : vector<1x16x128xbf16> to vector<16x128xbf16>
    %cst_933 = arith.constant dense<0.000000e+00> : vector<16x128xf32>
    %1030 = tpu.matmul %1029, %1027, %cst_933 {dimension_numbers = #tpu.dot_dimension_numbers<[1], [0], [0], [1], [0, 0, 1, 1], [], []>} : vector<16x128xbf16>, vector<128x128xbf16>, vector<16x128xf32> -> vector<16x128xf32>
    %1031 = arith.addf %1018, %1030 : vector<16x128xf32>
    %c0_934 = arith.constant 0 : index
    %c416 = arith.constant 416 : index
    %1032 = vector.load %arg26[%c0_934, %c416] : memref<16x640xbf16, #tpu.memory_space<vmem>>, vector<16x128xbf16>
    %c0_935 = arith.constant 0 : index
    %c420 = arith.constant 420 : index
    %1033 = vector.load %arg26[%c0_935, %c420] : memref<16x640xbf16, #tpu.memory_space<vmem>>, vector<16x128xbf16>
    %c0_936 = arith.constant 0 : index
    %c424 = arith.constant 424 : index
    %1034 = vector.load %arg26[%c0_936, %c424] : memref<16x640xbf16, #tpu.memory_space<vmem>>, vector<16x128xbf16>
    %c0_937 = arith.constant 0 : index
    %c428 = arith.constant 428 : index
    %1035 = vector.load %arg26[%c0_937, %c428] : memref<16x640xbf16, #tpu.memory_space<vmem>>, vector<16x128xbf16>
    %c0_938 = arith.constant 0 : index
    %c432 = arith.constant 432 : index
    %1036 = vector.load %arg26[%c0_938, %c432] : memref<16x640xbf16, #tpu.memory_space<vmem>>, vector<16x128xbf16>
    %c0_939 = arith.constant 0 : index
    %c436 = arith.constant 436 : index
    %1037 = vector.load %arg26[%c0_939, %c436] : memref<16x640xbf16, #tpu.memory_space<vmem>>, vector<16x128xbf16>
    %c0_940 = arith.constant 0 : index
    %c440 = arith.constant 440 : index
    %1038 = vector.load %arg26[%c0_940, %c440] : memref<16x640xbf16, #tpu.memory_space<vmem>>, vector<16x128xbf16>
    %c0_941 = arith.constant 0 : index
    %c444 = arith.constant 444 : index
    %1039 = vector.load %arg26[%c0_941, %c444] : memref<16x640xbf16, #tpu.memory_space<vmem>>, vector<16x128xbf16>
    %1040 = tpu.concatenate %1032, %1033, %1034, %1035, %1036, %1037, %1038, %1039 in 0 : vector<16x128xbf16>, vector<16x128xbf16>, vector<16x128xbf16>, vector<16x128xbf16>, vector<16x128xbf16>, vector<16x128xbf16>, vector<16x128xbf16>, vector<16x128xbf16> -> vector<128x128xbf16>
    %c13 = arith.constant 13 : index
    %c0_942 = arith.constant 0 : index
    %c0_943 = arith.constant 0 : index
    %1041 = vector.load %arg16[%c13, %c0_942, %c0_943] : memref<16x16x128xbf16, #tpu.memory_space<vmem>>, vector<1x16x128xbf16>
    %1042 = vector.shape_cast %1041 : vector<1x16x128xbf16> to vector<16x128xbf16>
    %cst_944 = arith.constant dense<0.000000e+00> : vector<16x128xf32>
    %1043 = tpu.matmul %1042, %1040, %cst_944 {dimension_numbers = #tpu.dot_dimension_numbers<[1], [0], [0], [1], [0, 0, 1, 1], [], []>} : vector<16x128xbf16>, vector<128x128xbf16>, vector<16x128xf32> -> vector<16x128xf32>
    %1044 = arith.addf %1031, %1043 : vector<16x128xf32>
    %c0_945 = arith.constant 0 : index
    %c448 = arith.constant 448 : index
    %1045 = vector.load %arg26[%c0_945, %c448] : memref<16x640xbf16, #tpu.memory_space<vmem>>, vector<16x128xbf16>
    %c0_946 = arith.constant 0 : index
    %c452 = arith.constant 452 : index
    %1046 = vector.load %arg26[%c0_946, %c452] : memref<16x640xbf16, #tpu.memory_space<vmem>>, vector<16x128xbf16>
    %c0_947 = arith.constant 0 : index
    %c456 = arith.constant 456 : index
    %1047 = vector.load %arg26[%c0_947, %c456] : memref<16x640xbf16, #tpu.memory_space<vmem>>, vector<16x128xbf16>
    %c0_948 = arith.constant 0 : index
    %c460 = arith.constant 460 : index
    %1048 = vector.load %arg26[%c0_948, %c460] : memref<16x640xbf16, #tpu.memory_space<vmem>>, vector<16x128xbf16>
    %c0_949 = arith.constant 0 : index
    %c464 = arith.constant 464 : index
    %1049 = vector.load %arg26[%c0_949, %c464] : memref<16x640xbf16, #tpu.memory_space<vmem>>, vector<16x128xbf16>
    %c0_950 = arith.constant 0 : index
    %c468 = arith.constant 468 : index
    %1050 = vector.load %arg26[%c0_950, %c468] : memref<16x640xbf16, #tpu.memory_space<vmem>>, vector<16x128xbf16>
    %c0_951 = arith.constant 0 : index
    %c472 = arith.constant 472 : index
    %1051 = vector.load %arg26[%c0_951, %c472] : memref<16x640xbf16, #tpu.memory_space<vmem>>, vector<16x128xbf16>
    %c0_952 = arith.constant 0 : index
    %c476 = arith.constant 476 : index
    %1052 = vector.load %arg26[%c0_952, %c476] : memref<16x640xbf16, #tpu.memory_space<vmem>>, vector<16x128xbf16>
    %1053 = tpu.concatenate %1045, %1046, %1047, %1048, %1049, %1050, %1051, %1052 in 0 : vector<16x128xbf16>, vector<16x128xbf16>, vector<16x128xbf16>, vector<16x128xbf16>, vector<16x128xbf16>, vector<16x128xbf16>, vector<16x128xbf16>, vector<16x128xbf16> -> vector<128x128xbf16>
    %c14 = arith.constant 14 : index
    %c0_953 = arith.constant 0 : index
    %c0_954 = arith.constant 0 : index
    %1054 = vector.load %arg16[%c14, %c0_953, %c0_954] : memref<16x16x128xbf16, #tpu.memory_space<vmem>>, vector<1x16x128xbf16>
    %1055 = vector.shape_cast %1054 : vector<1x16x128xbf16> to vector<16x128xbf16>
    %cst_955 = arith.constant dense<0.000000e+00> : vector<16x128xf32>
    %1056 = tpu.matmul %1055, %1053, %cst_955 {dimension_numbers = #tpu.dot_dimension_numbers<[1], [0], [0], [1], [0, 0, 1, 1], [], []>} : vector<16x128xbf16>, vector<128x128xbf16>, vector<16x128xf32> -> vector<16x128xf32>
    %1057 = arith.addf %1044, %1056 : vector<16x128xf32>
    %c0_956 = arith.constant 0 : index
    %c480 = arith.constant 480 : index
    %1058 = vector.load %arg26[%c0_956, %c480] : memref<16x640xbf16, #tpu.memory_space<vmem>>, vector<16x128xbf16>
    %c0_957 = arith.constant 0 : index
    %c484 = arith.constant 484 : index
    %1059 = vector.load %arg26[%c0_957, %c484] : memref<16x640xbf16, #tpu.memory_space<vmem>>, vector<16x128xbf16>
    %c0_958 = arith.constant 0 : index
    %c488 = arith.constant 488 : index
    %1060 = vector.load %arg26[%c0_958, %c488] : memref<16x640xbf16, #tpu.memory_space<vmem>>, vector<16x128xbf16>
    %c0_959 = arith.constant 0 : index
    %c492 = arith.constant 492 : index
    %1061 = vector.load %arg26[%c0_959, %c492] : memref<16x640xbf16, #tpu.memory_space<vmem>>, vector<16x128xbf16>
    %c0_960 = arith.constant 0 : index
    %c496 = arith.constant 496 : index
    %1062 = vector.load %arg26[%c0_960, %c496] : memref<16x640xbf16, #tpu.memory_space<vmem>>, vector<16x128xbf16>
    %c0_961 = arith.constant 0 : index
    %c500 = arith.constant 500 : index
    %1063 = vector.load %arg26[%c0_961, %c500] : memref<16x640xbf16, #tpu.memory_space<vmem>>, vector<16x128xbf16>
    %c0_962 = arith.constant 0 : index
    %c504 = arith.constant 504 : index
    %1064 = vector.load %arg26[%c0_962, %c504] : memref<16x640xbf16, #tpu.memory_space<vmem>>, vector<16x128xbf16>
    %c0_963 = arith.constant 0 : index
    %c508 = arith.constant 508 : index
    %1065 = vector.load %arg26[%c0_963, %c508] : memref<16x640xbf16, #tpu.memory_space<vmem>>, vector<16x128xbf16>
    %1066 = tpu.concatenate %1058, %1059, %1060, %1061, %1062, %1063, %1064, %1065 in 0 : vector<16x128xbf16>, vector<16x128xbf16>, vector<16x128xbf16>, vector<16x128xbf16>, vector<16x128xbf16>, vector<16x128xbf16>, vector<16x128xbf16>, vector<16x128xbf16> -> vector<128x128xbf16>
    %c15 = arith.constant 15 : index
    %c0_964 = arith.constant 0 : index
    %c0_965 = arith.constant 0 : index
    %1067 = vector.load %arg16[%c15, %c0_964, %c0_965] : memref<16x16x128xbf16, #tpu.memory_space<vmem>>, vector<1x16x128xbf16>
    %1068 = vector.shape_cast %1067 : vector<1x16x128xbf16> to vector<16x128xbf16>
    %cst_966 = arith.constant dense<0.000000e+00> : vector<16x128xf32>
    %1069 = tpu.matmul %1068, %1066, %cst_966 {dimension_numbers = #tpu.dot_dimension_numbers<[1], [0], [0], [1], [0, 0, 1, 1], [], []>} : vector<16x128xbf16>, vector<128x128xbf16>, vector<16x128xf32> -> vector<16x128xf32>
    %1070 = arith.addf %1057, %1069 : vector<16x128xf32>
    %c0_967 = arith.constant 0 : index
    %c512_968 = arith.constant 512 : index
    %1071 = vector.load %arg26[%c0_967, %c512_968] : memref<16x640xbf16, #tpu.memory_space<vmem>>, vector<16x128xbf16>
    %c0_969 = arith.constant 0 : index
    %c0_970 = arith.constant 0 : index
    %1072 = vector.load %arg17[%c0_969, %c0_970] : memref<16x16xbf16, #tpu.memory_space<vmem>>, vector<16x16xbf16>
    %cst_971 = arith.constant dense<0.000000e+00> : vector<16x128xf32>
    %1073 = tpu.matmul %1072, %1071, %cst_971 {dimension_numbers = #tpu.dot_dimension_numbers<[1], [0], [0], [1], [0, 0, 1, 1], [], []>} : vector<16x16xbf16>, vector<16x128xbf16>, vector<16x128xf32> -> vector<16x128xf32>
    %1074 = arith.addf %1070, %1073 : vector<16x128xf32>
    %c0_972 = arith.constant 0 : index
    %c0_973 = arith.constant 0 : index
    %1075 = vector.load %arg18[%c0_972, %c0_973] : memref<16x1xf32, #tpu.memory_space<vmem>>, vector<16x1xf32>
    %1076 = vector.broadcast %1075 : vector<16x1xf32> to vector<16x128xf32>
    %1077 = arith.addf %1074, %1076 : vector<16x128xf32>
    %c0_974 = arith.constant 0 : index
    %c512_975 = arith.constant 512 : index
    %1078 = vector.load %arg26[%c0_974, %c512_975] : memref<16x640xbf16, #tpu.memory_space<vmem>>, vector<16x128xbf16>
    %1079 = arith.extf %1078 : vector<16x128xbf16> to vector<16x128xf32>
    %cst_976 = arith.constant 0.000000e+00 : f32
    %1080 = vector.broadcast %cst_976 : f32 to vector<16x128xf32>
    %1081 = arith.maximumf %1077, %1080 : vector<16x128xf32>
    %1082 = arith.addf %1081, %1079 : vector<16x128xf32>
    %c0_977 = arith.constant 0 : index
    %c0_978 = arith.constant 0 : index
    %1083 = vector.load %arg19[%c0_977, %c0_978] : memref<1x16xf32, #tpu.memory_space<vmem>>, vector<1x16xf32>
    %cst_979 = arith.constant dense<0.000000e+00> : vector<1x128xf32>
    %1084 = tpu.matmul %1083, %1082, %cst_979 {dimension_numbers = #tpu.dot_dimension_numbers<[1], [0], [0], [1], [0, 0, 1, 1], [], []>} : vector<1x16xf32>, vector<16x128xf32>, vector<1x128xf32> -> vector<1x128xf32>
    %c0_980 = arith.constant 0 : index
    %c0_981 = arith.constant 0 : index
    %1085 = vector.load %arg20[%c0_980, %c0_981] : memref<1x1xf32, #tpu.memory_space<vmem>>, vector<1x1xf32>
    %1086 = vector.broadcast %1085 : vector<1x1xf32> to vector<1x128xf32>
    %1087 = arith.addf %1084, %1086 : vector<1x128xf32>
    %c0_982 = arith.constant 0 : index
    %c0_983 = arith.constant 0 : index
    %1088 = vector.load %arg27[%c0_982, %c0_983] : memref<1x128xf32, #tpu.memory_space<vmem>>, vector<1x128xf32>
    tpu.vector_store %arg27[%c0_982, %c0_983], %1087 {strides = array<i32>} : memref<1x128xf32, #tpu.memory_space<vmem>>, vector<1x128xf32>,
    %c0_984 = arith.constant 0 : index
    %c0_985 = arith.constant 0 : index
    %1089 = vector.load %arg27[%c0_984, %c0_985] : memref<1x128xf32, #tpu.memory_space<vmem>>, vector<1x128xf32>
    %c0_986 = arith.constant 0 : index
    %c0_987 = arith.constant 0 : index
    %c0_988 = arith.constant 0 : index
    %1090 = vector.load %arg21[%c0_986, %c0_987, %c0_988] : memref<1x1x128xf32, #tpu.memory_space<vmem>>, vector<1x1x128xf32>
    %1091 = vector.shape_cast %1090 : vector<1x1x128xf32> to vector<1x128xf32>
    %1092 = vector.shape_cast %1089 : vector<1x128xf32> to vector<1x1x128xf32>
    tpu.vector_store %arg21[%c0_986, %c0_987, %c0_988], %1092 {strides = array<i32>} : memref<1x1x128xf32, #tpu.memory_space<vmem>>, vector<1x1x128xf32>,
    return
  }
  func.func @transform_0(%arg0: i32) -> (i32, i32, i32) {
    %c0_i32 = arith.constant 0 : i32
    %c0_i32_0 = arith.constant 0 : i32
    %c0_i32_1 = arith.constant 0 : i32
    return %arg0, %c0_i32, %c0_i32_0 : i32, i32, i32
  }
  func.func @transform_1(%arg0: i32) -> (i32, i32) {
    %c0_i32 = arith.constant 0 : i32
    %c0_i32_0 = arith.constant 0 : i32
    %c0_i32_1 = arith.constant 0 : i32
    return %c0_i32, %c0_i32_0 : i32, i32
  }
  func.func @transform_2(%arg0: i32) -> (i32, i32) {
    %c0_i32 = arith.constant 0 : i32
    %c0_i32_0 = arith.constant 0 : i32
    %c0_i32_1 = arith.constant 0 : i32
    return %c0_i32, %c0_i32_0 : i32, i32
  }
  func.func @transform_3(%arg0: i32) -> (i32, i32, i32) {
    %c0_i32 = arith.constant 0 : i32
    %c0_i32_0 = arith.constant 0 : i32
    %c0_i32_1 = arith.constant 0 : i32
    %c0_i32_2 = arith.constant 0 : i32
    return %c0_i32, %c0_i32_0, %c0_i32_1 : i32, i32, i32
  }
  func.func @transform_4(%arg0: i32) -> (i32, i32) {
    %c0_i32 = arith.constant 0 : i32
    %c0_i32_0 = arith.constant 0 : i32
    %c0_i32_1 = arith.constant 0 : i32
    return %c0_i32, %c0_i32_0 : i32, i32
  }
  func.func @transform_5(%arg0: i32) -> (i32, i32) {
    %c0_i32 = arith.constant 0 : i32
    %c0_i32_0 = arith.constant 0 : i32
    %c0_i32_1 = arith.constant 0 : i32
    return %c0_i32, %c0_i32_0 : i32, i32
  }
  func.func @transform_6(%arg0: i32) -> (i32, i32, i32) {
    %c0_i32 = arith.constant 0 : i32
    %c0_i32_0 = arith.constant 0 : i32
    %c0_i32_1 = arith.constant 0 : i32
    %c0_i32_2 = arith.constant 0 : i32
    return %c0_i32, %c0_i32_0, %c0_i32_1 : i32, i32, i32
  }
  func.func @transform_7(%arg0: i32) -> (i32, i32) {
    %c0_i32 = arith.constant 0 : i32
    %c0_i32_0 = arith.constant 0 : i32
    %c0_i32_1 = arith.constant 0 : i32
    return %c0_i32, %c0_i32_0 : i32, i32
  }
  func.func @transform_8(%arg0: i32) -> (i32, i32) {
    %c0_i32 = arith.constant 0 : i32
    %c0_i32_0 = arith.constant 0 : i32
    %c0_i32_1 = arith.constant 0 : i32
    return %c0_i32, %c0_i32_0 : i32, i32
  }
  func.func @transform_9(%arg0: i32) -> (i32, i32, i32) {
    %c0_i32 = arith.constant 0 : i32
    %c0_i32_0 = arith.constant 0 : i32
    %c0_i32_1 = arith.constant 0 : i32
    %c0_i32_2 = arith.constant 0 : i32
    return %c0_i32, %c0_i32_0, %c0_i32_1 : i32, i32, i32
  }
  func.func @transform_10(%arg0: i32) -> (i32, i32) {
    %c0_i32 = arith.constant 0 : i32
    %c0_i32_0 = arith.constant 0 : i32
    %c0_i32_1 = arith.constant 0 : i32
    return %c0_i32, %c0_i32_0 : i32, i32
  }
  func.func @transform_11(%arg0: i32) -> (i32, i32) {
    %c0_i32 = arith.constant 0 : i32
    %c0_i32_0 = arith.constant 0 : i32
    %c0_i32_1 = arith.constant 0 : i32
    return %c0_i32, %c0_i32_0 : i32, i32
  }
  func.func @transform_12(%arg0: i32) -> (i32, i32, i32) {
    %c0_i32 = arith.constant 0 : i32
    %c0_i32_0 = arith.constant 0 : i32
    %c0_i32_1 = arith.constant 0 : i32
    %c0_i32_2 = arith.constant 0 : i32
    return %c0_i32, %c0_i32_0, %c0_i32_1 : i32, i32, i32
  }
  func.func @transform_13(%arg0: i32) -> (i32, i32) {
    %c0_i32 = arith.constant 0 : i32
    %c0_i32_0 = arith.constant 0 : i32
    %c0_i32_1 = arith.constant 0 : i32
    return %c0_i32, %c0_i32_0 : i32, i32
  }
  func.func @transform_14(%arg0: i32) -> (i32, i32) {
    %c0_i32 = arith.constant 0 : i32
    %c0_i32_0 = arith.constant 0 : i32
    %c0_i32_1 = arith.constant 0 : i32
    return %c0_i32, %c0_i32_0 : i32, i32
  }
  func.func @transform_15(%arg0: i32) -> (i32, i32, i32) {
    %c0_i32 = arith.constant 0 : i32
    %c0_i32_0 = arith.constant 0 : i32
    %c0_i32_1 = arith.constant 0 : i32
    %c0_i32_2 = arith.constant 0 : i32
    return %c0_i32, %c0_i32_0, %c0_i32_1 : i32, i32, i32
  }
  func.func @transform_16(%arg0: i32) -> (i32, i32) {
    %c0_i32 = arith.constant 0 : i32
    %c0_i32_0 = arith.constant 0 : i32
    %c0_i32_1 = arith.constant 0 : i32
    return %c0_i32, %c0_i32_0 : i32, i32
  }
  func.func @transform_17(%arg0: i32) -> (i32, i32) {
    %c0_i32 = arith.constant 0 : i32
    %c0_i32_0 = arith.constant 0 : i32
    %c0_i32_1 = arith.constant 0 : i32
    return %c0_i32, %c0_i32_0 : i32, i32
  }
  func.func @transform_18(%arg0: i32) -> (i32, i32) {
    %c0_i32 = arith.constant 0 : i32
    %c0_i32_0 = arith.constant 0 : i32
    %c0_i32_1 = arith.constant 0 : i32
    return %c0_i32, %c0_i32_0 : i32, i32
  }
  func.func @transform_19(%arg0: i32) -> (i32, i32) {
    %c0_i32 = arith.constant 0 : i32
    %c0_i32_0 = arith.constant 0 : i32
    %c0_i32_1 = arith.constant 0 : i32
    return %c0_i32, %c0_i32_0 : i32, i32
  }
  func.func @transform_20(%arg0: i32) -> (i32, i32, i32) {
    %c0_i32 = arith.constant 0 : i32
    %c0_i32_0 = arith.constant 0 : i32
    %c0_i32_1 = arith.constant 0 : i32
    return %arg0, %c0_i32, %c0_i32_0 : i32, i32, i32
  }
}

</mosaic_0001>

<llo_original>
// kernel: seq2seq_forward.1
$region0: #{seq2seq_forward.1}
  #allocation0 [shape = 'u32[]', space=smem, size = 0x4, offset = 0x4, fixed_abs, tag = 'smem constant byte address 0x4 - core index']
  #allocation1 [shape = 'u32[144,128]{1,0:T(1,128)}', space=vmem, size = 0x12000, scoped, tag = 'internal scratch']
  #allocation2 [shape = 'f32[1,4224]{1,0:T(1,128)}', space=vmem, size = 0x4200, scoped, tag = 'scratch operand']
  #allocation3 [shape = 'bf16[16,256]{1,0:T(16,128)(2,1)}', space=vmem, size = 0x2000, scoped, tag = 'scratch operand']
  #allocation4 [shape = 'bf16[16,256]{1,0:T(16,128)(2,1)}', space=vmem, size = 0x2000, scoped, tag = 'scratch operand']
  #allocation5 [shape = 'bf16[16,256]{1,0:T(16,128)(2,1)}', space=vmem, size = 0x2000, scoped, tag = 'scratch operand']
  #allocation6 [shape = 'bf16[16,640]{1,0:T(16,128)(2,1)}', space=vmem, size = 0x5000, scoped, tag = 'scratch operand']
  #allocation7 [shape = 'f32[1,128]{1,0:T(1,128)}', space=vmem, size = 0x200, scoped, tag = 'scratch operand']
  #allocation8 [shape = 'f32[1,1]{1,0:T(1,128)S(1)}', space=vmem, size = 0x200, scoped, tag = 'scoped memory for seq2seq_forward.1']
  %s0 = inlined_call_operand.vmem [shape: f32[2,1,128], index: 0, kind: input, shape index: {}]
  %s1 = inlined_call_operand.vmem [shape: f32[16,33], index: 1, kind: input, shape index: {}]
  %s2 = inlined_call_operand.vmem [shape: f32[16,1], index: 2, kind: input, shape index: {}]
  %s3 = inlined_call_operand.vmem [shape: bf16[4,16,128], index: 3, kind: input, shape index: {}]
  %s4 = inlined_call_operand.vmem [shape: bf16[16,16], index: 4, kind: input, shape index: {}]
  %s5 = inlined_call_operand.vmem [shape: f32[16,1], index: 5, kind: input, shape index: {}]
  %s6 = inlined_call_operand.vmem [shape: bf16[4,16,128], index: 6, kind: input, shape index: {}]
  %s7 = inlined_call_operand.vmem [shape: bf16[16,16], index: 7, kind: input, shape index: {}]
  %s8 = inlined_call_operand.vmem [shape: f32[16,1], index: 8, kind: input, shape index: {}]
  %s9 = inlined_call_operand.vmem [shape: bf16[4,16,128], index: 9, kind: input, shape index: {}]
  %s10 = inlined_call_operand.vmem [shape: bf16[16,16], index: 10, kind: input, shape index: {}]
  %s11 = inlined_call_operand.vmem [shape: f32[16,1], index: 11, kind: input, shape index: {}]
  %s12 = inlined_call_operand.vmem [shape: bf16[4,16,128], index: 12, kind: input, shape index: {}]
  %s13 = inlined_call_operand.vmem [shape: bf16[16,16], index: 13, kind: input, shape index: {}]
  %s14 = inlined_call_operand.vmem [shape: f32[16,1], index: 14, kind: input, shape index: {}]
  %s15 = inlined_call_operand.vmem [shape: bf16[16,16,128], index: 15, kind: input, shape index: {}]
  %s16 = inlined_call_operand.vmem [shape: bf16[16,16], index: 16, kind: input, shape index: {}]
  %s17 = inlined_call_operand.vmem [shape: f32[16,1], index: 17, kind: input, shape index: {}]
  %s18 = inlined_call_operand.vmem [shape: f32[1,16], index: 18, kind: input, shape index: {}]
  %s19 = inlined_call_operand.<no memory space> [shape: f32[1,1], index: 19, kind: input, shape index: {}]
  %s20 = inlined_call_operand.hbm [shape: f32[2,1,128], index: 20, kind: output, shape index: {}]
  %s21 = sld [smem:[#allocation0]]
  $region113: #{seq2seq_forward.1} parent=0
    _
  %s23 = ssub.s32 1, %s21
  %s24 = scalar_select 0, %s23, %s21
  %v25 = vstv %s19
  %26 = vst [vmem:[#allocation8] sm:$0x1] %v25
  $region1: #{seq2seq_forward.1} parent=0
    #allocation9 [shape = 'u8[1024]{0}', space=vmem, size = 0x400, scoped, tag = 'output window, operand 0']
    #allocation10 [shape = 's32[2]{0}', space=sflag, size = 0x8, scoped, tag = 'scoped memory for seq2seq_forward.1']
    %27 = vsyncpa [#allocation10], 0
    %s28 = scalar_lea.sflag [#allocation10], 1
    %29 = vsyncpa %s28, 0
    loop: start=0, step=1, limit=4
    $region2: #{seq2seq_forward.1} parent=1 // loop_pre_header
      _
    $region3: #{seq2seq_forward.1} parent=1 // loop_header
      %s31 = sphi 0, %s35
      %p32 = scmp.ge.s32.totalorder %s31, 4
      %s41 = sphi 0, %s43
      %s44 = sphi 0, %s41
      %s45 = sphi 0, %s44
      %s61 = sphi 0, %s45
      %s65 = sphi 0, %s65
      %s67 = sphi 0, %s65
      %s68 = sphi 0, %s67
      %s82 = sphi 0, %s68
      %s86 = sphi 0, %s86
      %s88 = sphi 0, %s86
      %s89 = sphi 0, %s88
      %s103 = sphi 0, %s89
      %s107 = sphi 0, %s107
      %s109 = sphi 0, %s107
      %s110 = sphi 0, %s109
      %s124 = sphi 0, %s110
      %s128 = sphi 0, %s128
      %s130 = sphi 0, %s128
      %s131 = sphi 0, %s130
      %s145 = sphi 0, %s131
      %s149 = sphi 0, %s149
      %s151 = sphi 0, %s149
      %s152 = sphi 0, %s151
      %s166 = sphi 0, %s152
      %s170 = sphi 0, %s170
      %s172 = sphi 0, %s170
      %s173 = sphi 0, %s172
      %s187 = sphi 0, %s173
      %s191 = sphi 0, %s191
      %s193 = sphi 0, %s191
      %s194 = sphi 0, %s193
      %s208 = sphi 0, %s194
      %s212 = sphi 0, %s212
      %s214 = sphi 0, %s212
      %s215 = sphi 0, %s214
      %s229 = sphi 0, %s215
      %s233 = sphi 0, %s233
      %s235 = sphi 0, %s233
      %s236 = sphi 0, %s235
      %s250 = sphi 0, %s236
      %s254 = sphi 0, %s254
      %s256 = sphi 0, %s254
      %s257 = sphi 0, %s256
      %s271 = sphi 0, %s257
      %s275 = sphi 0, %s275
      %s277 = sphi 0, %s275
      %s278 = sphi 0, %s277
      %s292 = sphi 0, %s278
      %s296 = sphi 0, %s296
      %s298 = sphi 0, %s296
      %s299 = sphi 0, %s298
      %s313 = sphi 0, %s299
      %s317 = sphi 0, %s317
      %s319 = sphi 0, %s317
      %s320 = sphi 0, %s319
      %s334 = sphi 0, %s320
      %s338 = sphi 0, %s338
      %s340 = sphi 0, %s338
      %s341 = sphi 0, %s340
      %s355 = sphi 0, %s341
      %s359 = sphi 0, %s359
      %s361 = sphi 0, %s359
      %s362 = sphi 0, %s361
      %s376 = sphi 0, %s362
      %s380 = sphi 0, %s380
      %s382 = sphi 0, %s380
      %s383 = sphi 0, %s382
      %s397 = sphi 0, %s383
      %s401 = sphi 0, %s401
      %s403 = sphi 0, %s401
      %s404 = sphi 0, %s403
      %s418 = sphi 0, %s404
      %s422 = sphi 0, %s422
      %s424 = sphi 0, %s422
      %s425 = sphi 0, %s424
      %s439 = sphi 0, %s425
      %s443 = sphi 0, %s443
      %s445 = sphi 0, %s443
      %s446 = sphi 0, %s445
      %s460 = sphi 0, %s446
      %s466 = sphi 0, %s468
      %s469 = sphi 0, %s466
      %s470 = sphi 0, %s469
      %s486 = sphi 0, %s470
    $region4: #{seq2seq_forward.1} parent=1 // loop_header_branch
      %34 = sbr.rel (%p32) target = $region8
    $region5: #{seq2seq_forward.1} parent=1 // loop_body
      %s36 = ssub.s32 %s31, 1
      %s37 = ssub.s32 %s31, 2
      %s38 = sadd.s32 %s31, 1
      %s39 = ssub.s32 %s31, %s38
      %p40 = scmp.eq.s32.totalorder %s39, 0
      %s42 = sadd.s32 %s41, 1
      %s43 = scalar_select %p40, %s41, %s42
      %p46 = pneg %p40
      %p47 = scmp.eq.s32.totalorder %s31, 1
      %p48 = por %p46, %p47
      %p49 = scmp.ne.s32.totalorder %s41, %s44
      %p50 = scmp.eq.s32.totalorder %s31, 0
      %p51 = por %p49, %p50
      %p52 = scmp.ne.s32.totalorder %s41, %s44
      %p53 = scmp.eq.s32.totalorder %s36, 1
      %p54 = por %p52, %p53
      %p55 = scmp.ne.s32.totalorder %s44, %s45
      %p56 = scmp.eq.s32.totalorder %s36, 0
      %p57 = por %p55, %p56
      %p58 = scmp.ne.s32.totalorder %s44, %s45
      %p59 = scmp.eq.s32.totalorder %s37, 1
      %p60 = por %p58, %p59
      %p62 = scmp.ne.s32.totalorder %s45, %s61
      %p63 = scmp.eq.s32.totalorder %s37, 0
      %p64 = por %p62, %p63
      %s66 = sadd.s32 %s65, 1
      %p69 = scmp.eq.s32.totalorder %s31, 1
      %p70 = scmp.ne.s32.totalorder %s65, %s67
      %p71 = scmp.eq.s32.totalorder %s31, 0
      %p72 = por %p70, %p71
      %p73 = scmp.ne.s32.totalorder %s65, %s67
      %p74 = scmp.eq.s32.totalorder %s36, 1
      %p75 = por %p73, %p74
      %p76 = scmp.ne.s32.totalorder %s67, %s68
      %p77 = scmp.eq.s32.totalorder %s36, 0
      %p78 = por %p76, %p77
      %p79 = scmp.ne.s32.totalorder %s67, %s68
      %p80 = scmp.eq.s32.totalorder %s37, 1
      %p81 = por %p79, %p80
      %p83 = scmp.ne.s32.totalorder %s68, %s82
      %p84 = scmp.eq.s32.totalorder %s37, 0
      %p85 = por %p83, %p84
      %s87 = sadd.s32 %s86, 1
      %p90 = scmp.eq.s32.totalorder %s31, 1
      %p91 = scmp.ne.s32.totalorder %s86, %s88
      %p92 = scmp.eq.s32.totalorder %s31, 0
      %p93 = por %p91, %p92
      %p94 = scmp.ne.s32.totalorder %s86, %s88
      %p95 = scmp.eq.s32.totalorder %s36, 1
      %p96 = por %p94, %p95
      %p97 = scmp.ne.s32.totalorder %s88, %s89
      %p98 = scmp.eq.s32.totalorder %s36, 0
      %p99 = por %p97, %p98
      %p100 = scmp.ne.s32.totalorder %s88, %s89
      %p101 = scmp.eq.s32.totalorder %s37, 1
      %p102 = por %p100, %p101
      %p104 = scmp.ne.s32.totalorder %s89, %s103
      %p105 = scmp.eq.s32.totalorder %s37, 0
      %p106 = por %p104, %p105
      %s108 = sadd.s32 %s107, 1
      %p111 = scmp.eq.s32.totalorder %s31, 1
      %p112 = scmp.ne.s32.totalorder %s107, %s109
      %p113 = scmp.eq.s32.totalorder %s31, 0
      %p114 = por %p112, %p113
      %p115 = scmp.ne.s32.totalorder %s107, %s109
      %p116 = scmp.eq.s32.totalorder %s36, 1
      %p117 = por %p115, %p116
      %p118 = scmp.ne.s32.totalorder %s109, %s110
      %p119 = scmp.eq.s32.totalorder %s36, 0
      %p120 = por %p118, %p119
      %p121 = scmp.ne.s32.totalorder %s109, %s110
      %p122 = scmp.eq.s32.totalorder %s37, 1
      %p123 = por %p121, %p122
      %p125 = scmp.ne.s32.totalorder %s110, %s124
      %p126 = scmp.eq.s32.totalorder %s37, 0
      %p127 = por %p125, %p126
      %s129 = sadd.s32 %s128, 1
      %p132 = scmp.eq.s32.totalorder %s31, 1
      %p133 = scmp.ne.s32.totalorder %s128, %s130
      %p134 = scmp.eq.s32.totalorder %s31, 0
      %p135 = por %p133, %p134
      %p136 = scmp.ne.s32.totalorder %s128, %s130
      %p137 = scmp.eq.s32.totalorder %s36, 1
      %p138 = por %p136, %p137
      %p139 = scmp.ne.s32.totalorder %s130, %s131
      %p140 = scmp.eq.s32.totalorder %s36, 0
      %p141 = por %p139, %p140
      %p142 = scmp.ne.s32.totalorder %s130, %s131
      %p143 = scmp.eq.s32.totalorder %s37, 1
      %p144 = por %p142, %p143
      %p146 = scmp.ne.s32.totalorder %s131, %s145
      %p147 = scmp.eq.s32.totalorder %s37, 0
      %p148 = por %p146, %p147
      %s150 = sadd.s32 %s149, 1
      %p153 = scmp.eq.s32.totalorder %s31, 1
      %p154 = scmp.ne.s32.totalorder %s149, %s151
      %p155 = scmp.eq.s32.totalorder %s31, 0
      %p156 = por %p154, %p155
      %p157 = scmp.ne.s32.totalorder %s149, %s151
      %p158 = scmp.eq.s32.totalorder %s36, 1
      %p159 = por %p157, %p158
      %p160 = scmp.ne.s32.totalorder %s151, %s152
      %p161 = scmp.eq.s32.totalorder %s36, 0
      %p162 = por %p160, %p161
      %p163 = scmp.ne.s32.totalorder %s151, %s152
      %p164 = scmp.eq.s32.totalorder %s37, 1
      %p165 = por %p163, %p164
      %p167 = scmp.ne.s32.totalorder %s152, %s166
      %p168 = scmp.eq.s32.totalorder %s37, 0
      %p169 = por %p167, %p168
      %s171 = sadd.s32 %s170, 1
      %p174 = scmp.eq.s32.totalorder %s31, 1
      %p175 = scmp.ne.s32.totalorder %s170, %s172
      %p176 = scmp.eq.s32.totalorder %s31, 0
      %p177 = por %p175, %p176
      %p178 = scmp.ne.s32.totalorder %s170, %s172
      %p179 = scmp.eq.s32.totalorder %s36, 1
      %p180 = por %p178, %p179
      %p181 = scmp.ne.s32.totalorder %s172, %s173
      %p182 = scmp.eq.s32.totalorder %s36, 0
      %p183 = por %p181, %p182
      %p184 = scmp.ne.s32.totalorder %s172, %s173
      %p185 = scmp.eq.s32.totalorder %s37, 1
      %p186 = por %p184, %p185
      %p188 = scmp.ne.s32.totalorder %s173, %s187
      %p189 = scmp.eq.s32.totalorder %s37, 0
      %p190 = por %p188, %p189
      %s192 = sadd.s32 %s191, 1
      %p195 = scmp.eq.s32.totalorder %s31, 1
      %p196 = scmp.ne.s32.totalorder %s191, %s193
      %p197 = scmp.eq.s32.totalorder %s31, 0
      %p198 = por %p196, %p197
      %p199 = scmp.ne.s32.totalorder %s191, %s193
      %p200 = scmp.eq.s32.totalorder %s36, 1
      %p201 = por %p199, %p200
      %p202 = scmp.ne.s32.totalorder %s193, %s194
      %p203 = scmp.eq.s32.totalorder %s36, 0
      %p204 = por %p202, %p203
      %p205 = scmp.ne.s32.totalorder %s193, %s194
      %p206 = scmp.eq.s32.totalorder %s37, 1
      %p207 = por %p205, %p206
      %p209 = scmp.ne.s32.totalorder %s194, %s208
      %p210 = scmp.eq.s32.totalorder %s37, 0
      %p211 = por %p209, %p210
      %s213 = sadd.s32 %s212, 1
      %p216 = scmp.eq.s32.totalorder %s31, 1
      %p217 = scmp.ne.s32.totalorder %s212, %s214
      %p218 = scmp.eq.s32.totalorder %s31, 0
      %p219 = por %p217, %p218
      %p220 = scmp.ne.s32.totalorder %s212, %s214
      %p221 = scmp.eq.s32.totalorder %s36, 1
      %p222 = por %p220, %p221
      %p223 = scmp.ne.s32.totalorder %s214, %s215
      %p224 = scmp.eq.s32.totalorder %s36, 0
      %p225 = por %p223, %p224
      %p226 = scmp.ne.s32.totalorder %s214, %s215
      %p227 = scmp.eq.s32.totalorder %s37, 1
      %p228 = por %p226, %p227
      %p230 = scmp.ne.s32.totalorder %s215, %s229
      %p231 = scmp.eq.s32.totalorder %s37, 0
      %p232 = por %p230, %p231
      %s234 = sadd.s32 %s233, 1
      %p237 = scmp.eq.s32.totalorder %s31, 1
      %p238 = scmp.ne.s32.totalorder %s233, %s235
      %p239 = scmp.eq.s32.totalorder %s31, 0
      %p240 = por %p238, %p239
      %p241 = scmp.ne.s32.totalorder %s233, %s235
      %p242 = scmp.eq.s32.totalorder %s36, 1
      %p243 = por %p241, %p242
      %p244 = scmp.ne.s32.totalorder %s235, %s236
      %p245 = scmp.eq.s32.totalorder %s36, 0
      %p246 = por %p244, %p245
      %p247 = scmp.ne.s32.totalorder %s235, %s236
      %p248 = scmp.eq.s32.totalorder %s37, 1
      %p249 = por %p247, %p248
      %p251 = scmp.ne.s32.totalorder %s236, %s250
      %p252 = scmp.eq.s32.totalorder %s37, 0
      %p253 = por %p251, %p252
      %s255 = sadd.s32 %s254, 1
      %p258 = scmp.eq.s32.totalorder %s31, 1
      %p259 = scmp.ne.s32.totalorder %s254, %s256
      %p260 = scmp.eq.s32.totalorder %s31, 0
      %p261 = por %p259, %p260
      %p262 = scmp.ne.s32.totalorder %s254, %s256
      %p263 = scmp.eq.s32.totalorder %s36, 1
      %p264 = por %p262, %p263
      %p265 = scmp.ne.s32.totalorder %s256, %s257
      %p266 = scmp.eq.s32.totalorder %s36, 0
      %p267 = por %p265, %p266
      %p268 = scmp.ne.s32.totalorder %s256, %s257
      %p269 = scmp.eq.s32.totalorder %s37, 1
      %p270 = por %p268, %p269
      %p272 = scmp.ne.s32.totalorder %s257, %s271
      %p273 = scmp.eq.s32.totalorder %s37, 0
      %p274 = por %p272, %p273
      %s276 = sadd.s32 %s275, 1
      %p279 = scmp.eq.s32.totalorder %s31, 1
      %p280 = scmp.ne.s32.totalorder %s275, %s277
      %p281 = scmp.eq.s32.totalorder %s31, 0
      %p282 = por %p280, %p281
      %p283 = scmp.ne.s32.totalorder %s275, %s277
      %p284 = scmp.eq.s32.totalorder %s36, 1
      %p285 = por %p283, %p284
      %p286 = scmp.ne.s32.totalorder %s277, %s278
      %p287 = scmp.eq.s32.totalorder %s36, 0
      %p288 = por %p286, %p287
      %p289 = scmp.ne.s32.totalorder %s277, %s278
      %p290 = scmp.eq.s32.totalorder %s37, 1
      %p291 = por %p289, %p290
      %p293 = scmp.ne.s32.totalorder %s278, %s292
      %p294 = scmp.eq.s32.totalorder %s37, 0
      %p295 = por %p293, %p294
      %s297 = sadd.s32 %s296, 1
      %p300 = scmp.eq.s32.totalorder %s31, 1
      %p301 = scmp.ne.s32.totalorder %s296, %s298
      %p302 = scmp.eq.s32.totalorder %s31, 0
      %p303 = por %p301, %p302
      %p304 = scmp.ne.s32.totalorder %s296, %s298
      %p305 = scmp.eq.s32.totalorder %s36, 1
      %p306 = por %p304, %p305
      %p307 = scmp.ne.s32.totalorder %s298, %s299
      %p308 = scmp.eq.s32.totalorder %s36, 0
      %p309 = por %p307, %p308
      %p310 = scmp.ne.s32.totalorder %s298, %s299
      %p311 = scmp.eq.s32.totalorder %s37, 1
      %p312 = por %p310, %p311
      %p314 = scmp.ne.s32.totalorder %s299, %s313
      %p315 = scmp.eq.s32.totalorder %s37, 0
      %p316 = por %p314, %p315
      %s318 = sadd.s32 %s317, 1
      %p321 = scmp.eq.s32.totalorder %s31, 1
      %p322 = scmp.ne.s32.totalorder %s317, %s319
      %p323 = scmp.eq.s32.totalorder %s31, 0
      %p324 = por %p322, %p323
      %p325 = scmp.ne.s32.totalorder %s317, %s319
      %p326 = scmp.eq.s32.totalorder %s36, 1
      %p327 = por %p325, %p326
      %p328 = scmp.ne.s32.totalorder %s319, %s320
      %p329 = scmp.eq.s32.totalorder %s36, 0
      %p330 = por %p328, %p329
      %p331 = scmp.ne.s32.totalorder %s319, %s320
      %p332 = scmp.eq.s32.totalorder %s37, 1
      %p333 = por %p331, %p332
      %p335 = scmp.ne.s32.totalorder %s320, %s334
      %p336 = scmp.eq.s32.totalorder %s37, 0
      %p337 = por %p335, %p336
      %s339 = sadd.s32 %s338, 1
      %p342 = scmp.eq.s32.totalorder %s31, 1
      %p343 = scmp.ne.s32.totalorder %s338, %s340
      %p344 = scmp.eq.s32.totalorder %s31, 0
      %p345 = por %p343, %p344
      %p346 = scmp.ne.s32.totalorder %s338, %s340
      %p347 = scmp.eq.s32.totalorder %s36, 1
      %p348 = por %p346, %p347
      %p349 = scmp.ne.s32.totalorder %s340, %s341
      %p350 = scmp.eq.s32.totalorder %s36, 0
      %p351 = por %p349, %p350
      %p352 = scmp.ne.s32.totalorder %s340, %s341
      %p353 = scmp.eq.s32.totalorder %s37, 1
      %p354 = por %p352, %p353
      %p356 = scmp.ne.s32.totalorder %s341, %s355
      %p357 = scmp.eq.s32.totalorder %s37, 0
      %p358 = por %p356, %p357
      %s360 = sadd.s32 %s359, 1
      %p363 = scmp.eq.s32.totalorder %s31, 1
      %p364 = scmp.ne.s32.totalorder %s359, %s361
      %p365 = scmp.eq.s32.totalorder %s31, 0
      %p366 = por %p364, %p365
      %p367 = scmp.ne.s32.totalorder %s359, %s361
      %p368 = scmp.eq.s32.totalorder %s36, 1
      %p369 = por %p367, %p368
      %p370 = scmp.ne.s32.totalorder %s361, %s362
      %p371 = scmp.eq.s32.totalorder %s36, 0
      %p372 = por %p370, %p371
      %p373 = scmp.ne.s32.totalorder %s361, %s362
      %p374 = scmp.eq.s32.totalorder %s37, 1
      %p375 = por %p373, %p374
      %p377 = scmp.ne.s32.totalorder %s362, %s376
      %p378 = scmp.eq.s32.totalorder %s37, 0
      %p379 = por %p377, %p378
      %s381 = sadd.s32 %s380, 1
      %p384 = scmp.eq.s32.totalorder %s31, 1
      %p385 = scmp.ne.s32.totalorder %s380, %s382
      %p386 = scmp.eq.s32.totalorder %s31, 0
      %p387 = por %p385, %p386
      %p388 = scmp.ne.s32.totalorder %s380, %s382
      %p389 = scmp.eq.s32.totalorder %s36, 1
      %p390 = por %p388, %p389
      %p391 = scmp.ne.s32.totalorder %s382, %s383
      %p392 = scmp.eq.s32.totalorder %s36, 0
      %p393 = por %p391, %p392
      %p394 = scmp.ne.s32.totalorder %s382, %s383
      %p395 = scmp.eq.s32.totalorder %s37, 1
      %p396 = por %p394, %p395
      %p398 = scmp.ne.s32.totalorder %s383, %s397
      %p399 = scmp.eq.s32.totalorder %s37, 0
      %p400 = por %p398, %p399
      %s402 = sadd.s32 %s401, 1
      %p405 = scmp.eq.s32.totalorder %s31, 1
      %p406 = scmp.ne.s32.totalorder %s401, %s403
      %p407 = scmp.eq.s32.totalorder %s31, 0
      %p408 = por %p406, %p407
      %p409 = scmp.ne.s32.totalorder %s401, %s403
      %p410 = scmp.eq.s32.totalorder %s36, 1
      %p411 = por %p409, %p410
      %p412 = scmp.ne.s32.totalorder %s403, %s404
      %p413 = scmp.eq.s32.totalorder %s36, 0
      %p414 = por %p412, %p413
      %p415 = scmp.ne.s32.totalorder %s403, %s404
      %p416 = scmp.eq.s32.totalorder %s37, 1
      %p417 = por %p415, %p416
      %p419 = scmp.ne.s32.totalorder %s404, %s418
      %p420 = scmp.eq.s32.totalorder %s37, 0
      %p421 = por %p419, %p420
      %s423 = sadd.s32 %s422, 1
      %p426 = scmp.eq.s32.totalorder %s31, 1
      %p427 = scmp.ne.s32.totalorder %s422, %s424
      %p428 = scmp.eq.s32.totalorder %s31, 0
      %p429 = por %p427, %p428
      %p430 = scmp.ne.s32.totalorder %s422, %s424
      %p431 = scmp.eq.s32.totalorder %s36, 1
      %p432 = por %p430, %p431
      %p433 = scmp.ne.s32.totalorder %s424, %s425
      %p434 = scmp.eq.s32.totalorder %s36, 0
      %p435 = por %p433, %p434
      %p436 = scmp.ne.s32.totalorder %s424, %s425
      %p437 = scmp.eq.s32.totalorder %s37, 1
      %p438 = por %p436, %p437
      %p440 = scmp.ne.s32.totalorder %s425, %s439
      %p441 = scmp.eq.s32.totalorder %s37, 0
      %p442 = por %p440, %p441
      %s444 = sadd.s32 %s443, 1
      %p447 = scmp.eq.s32.totalorder %s31, 1
      %p448 = scmp.ne.s32.totalorder %s443, %s445
      %p449 = scmp.eq.s32.totalorder %s31, 0
      %p450 = por %p448, %p449
      %p451 = scmp.ne.s32.totalorder %s443, %s445
      %p452 = scmp.eq.s32.totalorder %s36, 1
      %p453 = por %p451, %p452
      %p454 = scmp.ne.s32.totalorder %s445, %s446
      %p455 = scmp.eq.s32.totalorder %s36, 0
      %p456 = por %p454, %p455
      %p457 = scmp.ne.s32.totalorder %s445, %s446
      %p458 = scmp.eq.s32.totalorder %s37, 1
      %p459 = por %p457, %p458
      %p461 = scmp.ne.s32.totalorder %s446, %s460
      %p462 = scmp.eq.s32.totalorder %s37, 0
      %p463 = por %p461, %p462
      %s464 = ssub.s32 %s31, %s38
      %p465 = scmp.eq.s32.totalorder %s464, 0
      %s467 = sadd.s32 %s466, 1
      %s468 = scalar_select %p465, %s466, %s467
      %p471 = pneg %p465
      %p472 = scmp.eq.s32.totalorder %s31, 1
      %p473 = por %p471, %p472
      %p474 = scmp.ne.s32.totalorder %s466, %s469
      %p475 = scmp.eq.s32.totalorder %s31, 0
      %p476 = por %p474, %p475
      %p477 = scmp.ne.s32.totalorder %s466, %s469
      %p478 = scmp.eq.s32.totalorder %s36, 1
      %p479 = por %p477, %p478
      %p480 = scmp.ne.s32.totalorder %s469, %s470
      %p481 = scmp.eq.s32.totalorder %s36, 0
      %p482 = por %p480, %p481
      %p483 = scmp.ne.s32.totalorder %s469, %s470
      %p484 = scmp.eq.s32.totalorder %s37, 1
      %p485 = por %p483, %p484
      %p487 = scmp.ne.s32.totalorder %s470, %s486
      %p488 = scmp.eq.s32.totalorder %s37, 0
      %p489 = por %p487, %p488
      %p490 = scmp.le.s32.totalorder 1, %s31
      %p491 = scmp.lt.s32.totalorder %s31, 3
      %p492 = pnand %p490, %p491
      %p493 = pneg %p492
      // Predicated region
      $region9: #{seq2seq_forward.1} parent=5 // pred_check
        _
      $region10: #{seq2seq_forward.1} parent=5 // pred_check_branch
        %495 = sbr.rel (%p492) target = $region12
      $region11: #{seq2seq_forward.1} parent=5 // pred_region
        %s496 = ssub.s32 %s31, 1
        // Predicated region
        $region13: #{seq2seq_forward.1} parent=11 // pred_check
          %p497 = pneg %p78
        $region14: #{seq2seq_forward.1} parent=11 // pred_check_branch
          %499 = sbr.rel (%p497) target = $region16
        $region15: #{seq2seq_forward.1} parent=11 // pred_region
          _
        $region16: #{seq2seq_forward.1} parent=11 // pred_fallthru
          _
        // Predicated region
        $region17: #{seq2seq_forward.1} parent=11 // pred_check
          %p500 = pneg %p99
        $region18: #{seq2seq_forward.1} parent=11 // pred_check_branch
          %502 = sbr.rel (%p500) target = $region20
        $region19: #{seq2seq_forward.1} parent=11 // pred_region
          _
        $region20: #{seq2seq_forward.1} parent=11 // pred_fallthru
          _
        // Predicated region
        $region21: #{seq2seq_forward.1} parent=11 // pred_check
          %p503 = pneg %p120
        $region22: #{seq2seq_forward.1} parent=11 // pred_check_branch
          %505 = sbr.rel (%p503) target = $region24
        $region23: #{seq2seq_forward.1} parent=11 // pred_region
          _
        $region24: #{seq2seq_forward.1} parent=11 // pred_fallthru
          _
        // Predicated region
        $region25: #{seq2seq_forward.1} parent=11 // pred_check
          %p506 = pneg %p141
        $region26: #{seq2seq_forward.1} parent=11 // pred_check_branch
          %508 = sbr.rel (%p506) target = $region28
        $region27: #{seq2seq_forward.1} parent=11 // pred_region
          _
        $region28: #{seq2seq_forward.1} parent=11 // pred_fallthru
          _
        // Predicated region
        $region29: #{seq2seq_forward.1} parent=11 // pred_check
          %p509 = pneg %p162
        $region30: #{seq2seq_forward.1} parent=11 // pred_check_branch
          %511 = sbr.rel (%p509) target = $region32
        $region31: #{seq2seq_forward.1} parent=11 // pred_region
          _
        $region32: #{seq2seq_forward.1} parent=11 // pred_fallthru
          _
        // Predicated region
        $region33: #{seq2seq_forward.1} parent=11 // pred_check
          %p512 = pneg %p183
        $region34: #{seq2seq_forward.1} parent=11 // pred_check_branch
          %514 = sbr.rel (%p512) target = $region36
        $region35: #{seq2seq_forward.1} parent=11 // pred_region
          _
        $region36: #{seq2seq_forward.1} parent=11 // pred_fallthru
          _
        // Predicated region
        $region37: #{seq2seq_forward.1} parent=11 // pred_check
          %p515 = pneg %p204
        $region38: #{seq2seq_forward.1} parent=11 // pred_check_branch
          %517 = sbr.rel (%p515) target = $region40
        $region39: #{seq2seq_forward.1} parent=11 // pred_region
          _
        $region40: #{seq2seq_forward.1} parent=11 // pred_fallthru
          _
        // Predicated region
        $region41: #{seq2seq_forward.1} parent=11 // pred_check
          %p518 = pneg %p225
        $region42: #{seq2seq_forward.1} parent=11 // pred_check_branch
          %520 = sbr.rel (%p518) target = $region44
        $region43: #{seq2seq_forward.1} parent=11 // pred_region
          _
        $region44: #{seq2seq_forward.1} parent=11 // pred_fallthru
          _
        // Predicated region
        $region45: #{seq2seq_forward.1} parent=11 // pred_check
          %p521 = pneg %p246
        $region46: #{seq2seq_forward.1} parent=11 // pred_check_branch
          %523 = sbr.rel (%p521) target = $region48
        $region47: #{seq2seq_forward.1} parent=11 // pred_region
          _
        $region48: #{seq2seq_forward.1} parent=11 // pred_fallthru
          _
        // Predicated region
        $region49: #{seq2seq_forward.1} parent=11 // pred_check
          %p524 = pneg %p267
        $region50: #{seq2seq_forward.1} parent=11 // pred_check_branch
          %526 = sbr.rel (%p524) target = $region52
        $region51: #{seq2seq_forward.1} parent=11 // pred_region
          _
        $region52: #{seq2seq_forward.1} parent=11 // pred_fallthru
          _
        // Predicated region
        $region53: #{seq2seq_forward.1} parent=11 // pred_check
          %p527 = pneg %p288
        $region54: #{seq2seq_forward.1} parent=11 // pred_check_branch
          %529 = sbr.rel (%p527) target = $region56
        $region55: #{seq2seq_forward.1} parent=11 // pred_region
          _
        $region56: #{seq2seq_forward.1} parent=11 // pred_fallthru
          _
        // Predicated region
        $region57: #{seq2seq_forward.1} parent=11 // pred_check
          %p530 = pneg %p309
        $region58: #{seq2seq_forward.1} parent=11 // pred_check_branch
          %532 = sbr.rel (%p530) target = $region60
        $region59: #{seq2seq_forward.1} parent=11 // pred_region
          _
        $region60: #{seq2seq_forward.1} parent=11 // pred_fallthru
          _
        // Predicated region
        $region61: #{seq2seq_forward.1} parent=11 // pred_check
          %p533 = pneg %p330
        $region62: #{seq2seq_forward.1} parent=11 // pred_check_branch
          %535 = sbr.rel (%p533) target = $region64
        $region63: #{seq2seq_forward.1} parent=11 // pred_region
          _
        $region64: #{seq2seq_forward.1} parent=11 // pred_fallthru
          _
        // Predicated region
        $region65: #{seq2seq_forward.1} parent=11 // pred_check
          %p536 = pneg %p351
        $region66: #{seq2seq_forward.1} parent=11 // pred_check_branch
          %538 = sbr.rel (%p536) target = $region68
        $region67: #{seq2seq_forward.1} parent=11 // pred_region
          _
        $region68: #{seq2seq_forward.1} parent=11 // pred_fallthru
          _
        // Predicated region
        $region69: #{seq2seq_forward.1} parent=11 // pred_check
          %p539 = pneg %p372
        $region70: #{seq2seq_forward.1} parent=11 // pred_check_branch
          %541 = sbr.rel (%p539) target = $region72
        $region71: #{seq2seq_forward.1} parent=11 // pred_region
          _
        $region72: #{seq2seq_forward.1} parent=11 // pred_fallthru
          _
        // Predicated region
        $region73: #{seq2seq_forward.1} parent=11 // pred_check
          %p542 = pneg %p393
        $region74: #{seq2seq_forward.1} parent=11 // pred_check_branch
          %544 = sbr.rel (%p542) target = $region76
        $region75: #{seq2seq_forward.1} parent=11 // pred_region
          _
        $region76: #{seq2seq_forward.1} parent=11 // pred_fallthru
          _
        // Predicated region
        $region77: #{seq2seq_forward.1} parent=11 // pred_check
          %p545 = pneg %p414
        $region78: #{seq2seq_forward.1} parent=11 // pred_check_branch
          %547 = sbr.rel (%p545) target = $region80
        $region79: #{seq2seq_forward.1} parent=11 // pred_region
          _
        $region80: #{seq2seq_forward.1} parent=11 // pred_fallthru
          _
        // Predicated region
        $region81: #{seq2seq_forward.1} parent=11 // pred_check
          %p548 = pneg %p435
        $region82: #{seq2seq_forward.1} parent=11 // pred_check_branch
          %550 = sbr.rel (%p548) target = $region84
        $region83: #{seq2seq_forward.1} parent=11 // pred_region
          _
        $region84: #{seq2seq_forward.1} parent=11 // pred_fallthru
          _
        // Predicated region
        $region85: #{seq2seq_forward.1} parent=11 // pred_check
          %p551 = pneg %p456
        $region86: #{seq2seq_forward.1} parent=11 // pred_check_branch
          %553 = sbr.rel (%p551) target = $region88
        $region87: #{seq2seq_forward.1} parent=11 // pred_region
          _
        $region88: #{seq2seq_forward.1} parent=11 // pred_fallthru
          _
      $region12: #{seq2seq_forward.1} parent=5 // pred_fallthru
        _
      %p554 = scmp.lt.s32.totalorder %s31, 2
      // Predicated region
      $region89: #{seq2seq_forward.1} parent=5 // pred_check
        %p555 = pneg %p554
      $region90: #{seq2seq_forward.1} parent=5 // pred_check_branch
        %557 = sbr.rel (%p555) target = $region92
      $region91: #{seq2seq_forward.1} parent=5 // pred_region
        // Predicated region
        $region93: #{seq2seq_forward.1} parent=91 // pred_check
          %p558 = pneg %p51
        $region94: #{seq2seq_forward.1} parent=91 // pred_check_branch
          %560 = sbr.rel (%p558) target = $region96
        $region95: #{seq2seq_forward.1} parent=91 // pred_region
          %p561 = scmp.lt.s32.totalorder %s31, 1
          %s562 = scalar_select %p561, %s31, 1
          %s563 = scalar_lea.vmem %s0, %s562
        $region96: #{seq2seq_forward.1} parent=91 // pred_fallthru
          _
      $region92: #{seq2seq_forward.1} parent=5 // pred_fallthru
        _
      %p564 = scmp.le.s32.totalorder 1, %s31
      %p565 = scmp.lt.s32.totalorder %s31, 3
      %p566 = pnand %p564, %p565
      %p567 = pneg %p566
      // Predicated region
      $region97: #{seq2seq_forward.1} parent=5 // pred_check
        _
      $region98: #{seq2seq_forward.1} parent=5 // pred_check_branch
        %569 = sbr.rel (%p566) target = $region100
      $region99: #{seq2seq_forward.1} parent=5 // pred_region
        %s570 = ssub.s32 %s31, 1
        %p571 = scmp.lt.s32.totalorder %s36, 1
        %s572 = scalar_select %p571, %s36, 1
        %s573 = scalar_lea.vmem %s0, %s572
        %p574 = pneg %p57
        %p575 = pneg %p54
        %p576 = pneg %p78
        %p577 = pneg %p75
        %p578 = pneg %p99
        %p579 = pneg %p96
        %p580 = pneg %p120
        %p581 = pneg %p117
        %p582 = pneg %p141
        %p583 = pneg %p138
        %p584 = pneg %p162
        %p585 = pneg %p159
        %p586 = pneg %p183
        %p587 = pneg %p180
        %p588 = pneg %p204
        %p589 = pneg %p201
        %p590 = pneg %p225
        %p591 = pneg %p222
        %p592 = pneg %p246
        %p593 = pneg %p243
        %p594 = pneg %p267
        %p595 = pneg %p264
        %p596 = pneg %p288
        %p597 = pneg %p285
        %p598 = pneg %p309
        %p599 = pneg %p306
        %p600 = pneg %p330
        %p601 = pneg %p327
        %p602 = pneg %p351
        %p603 = pneg %p348
        %p604 = pneg %p372
        %p605 = pneg %p369
        %p606 = pneg %p393
        %p607 = pneg %p390
        %p608 = pneg %p414
        %p609 = pneg %p411
        %p610 = pneg %p435
        %p611 = pneg %p432
        %p612 = pneg %p456
        %p613 = pneg %p453
        %p614 = pneg %p482
        %p615 = pneg %p479
        %s616 = sand.u32 %s469, 1
        %s617 = scalar_lea.sflag [#allocation10], %s616
        %s618 = sand.u32 %s469, 1
        %s619 = scalar_lea.vmem [#allocation9], %s618
        %p620 = scmp.lt.s32.totalorder %s36, 1
        %s621 = scalar_select %p620, %s36, 1
        %s622 = scalar_lea.vmem %s0, %s621
        %624 = vst [vmem:[#allocation2] sm:$0xff] 0.0
        %625 = vst [vmem:[#allocation2 + $0x8] sm:$0xff] 0.0
        %626 = vst [vmem:[#allocation2 + $0x10] sm:$0xff] 0.0
        %627 = vst [vmem:[#allocation2 + $0x18] sm:$0xff] 0.0
        %628 = vst [vmem:[#allocation3] sm:$0xff] 0
        %629 = vst [vmem:[#allocation4] sm:$0xff] 0
        %630 = vst [vmem:[#allocation5] sm:$0xff] 0
        %631 = vst [vmem:[#allocation6] sm:$0xff] 0
        %632 = vst [vmem:[#allocation6 + $0x8] sm:$0xff] 0
        %633 = vst [vmem:[#allocation6 + $0x10] sm:$0xff] 0
        %634 = vst [vmem:[#allocation6 + $0x18] sm:$0xff] 0
        %v635 = vld [vmem:[%s622] sm:$0x1]
        %v636 = vlaneseq
        %vm637 = vcmp.ge.s32.totalorder %v636, 0
        %vm638 = vcmp.lt.s32.totalorder %v636, 128
        %vm639 = vmand %vm637, %vm638
        %640 = vst.msk [vmem:[#allocation2 + $0x20] sm:$0x1] %vm639, %v635
        %v641 = vld [vmem:[%s1] sm:$0xff]
        %v642 = vld [vmem:[%s1 + $0x8] sm:$0xff]
        %v643 = vld [vmem:[%s2] sm:$0xff]
        %v644 = vld [vmem:[%s2 + $0x8] sm:$0xff]
        %v645 = vld [vmem:[#allocation2 + $0x1f] sm:$0x3]
        %v646 = vld [vmem:[#allocation2 + $0x1f] sm:$0x1]
        %v647 = vld [vmem:[#allocation2 + $0x1e] sm:$0x1]
        %v648 = vld [vmem:[#allocation2 + $0x1c] sm:$0x1]
        %v649 = vld [vmem:[#allocation2 + $0x18] sm:$0x1]
        %v650 = vld [vmem:[#allocation2 + $0x10] sm:$0x1]
        %v651 = vld [vmem:[#allocation2] sm:$0x1]
        %v653 = vlaneseq
        %v654 = vshrl.u32 %v653, 7
        %v655 = vsub.s32 0, %v654
        %v656 = vrot.slane %v645, %v655
        %v657 = vlaneseq
        %v658 = vshrl.u32 %v657, 7
        %v659 = vsub.s32 1, %v658
        %v660 = vrot.slane %v645, %v659
        %663 = vrot.lane.b32.xlu0 %v656, 32
        %v664 = vpop.permute.xlu0 %663
        %665 = vrot.lane.b32.xlu0 %v660, 32
        %v666 = vpop.permute.xlu0 %665
        %vm667 = vcmask 261120
        %v668 = vsel %vm667, %v664, %v666
        %v672 = vlaneseq
        %v673 = vshrl.u32 %v672, 7
        %v674 = vsub.s32 0, %v673
        %v675 = vrot.slane %v646, %v674
        %676 = vrot.lane.b32.xlu0 %v675, 96
        %v677 = vpop.permute.xlu0 %676
        %v680 = vlaneseq
        %v681 = vshrl.u32 %v680, 7
        %v682 = vsub.s32 0, %v681
        %v683 = vrot.slane %v647, %v682
        %684 = vrot.lane.b32.xlu0 %v683, 96
        %v685 = vpop.permute.xlu0 %684
        %v688 = vlaneseq
        %v689 = vshrl.u32 %v688, 7
        %v690 = vsub.s32 0, %v689
        %v691 = vrot.slane %v648, %v690
        %692 = vrot.lane.b32.xlu0 %v691, 96
        %v693 = vpop.permute.xlu0 %692
        %v696 = vlaneseq
        %v697 = vshrl.u32 %v696, 7
        %v698 = vsub.s32 0, %v697
        %v699 = vrot.slane %v649, %v698
        %700 = vrot.lane.b32.xlu0 %v699, 96
        %v701 = vpop.permute.xlu0 %700
        %v704 = vlaneseq
        %v705 = vshrl.u32 %v704, 7
        %v706 = vsub.s32 0, %v705
        %v707 = vrot.slane %v650, %v706
        %708 = vrot.lane.b32.xlu0 %v707, 96
        %v709 = vpop.permute.xlu0 %708
        %v712 = vlaneseq
        %v713 = vshrl.u32 %v712, 7
        %v714 = vsub.s32 0, %v713
        %v715 = vrot.slane %v651, %v714
        %716 = vrot.lane.b32.xlu0 %v715, 96
        %v717 = vpop.permute.xlu0 %716
        %vm719 = vcmask 1040384
        %v720 = vsel %vm719, %v656, %v664
        %v721 = vsel %vm719, %v660, %v668
        %vm722 = vcmask 1041408
        %v723 = vsel %vm722, %v720, %v677
        %v724 = vsel %vm722, %v721, %v677
        %vm725 = vcmask 1042432
        %v726 = vsel %vm725, %v723, %v685
        %v727 = vsel %vm725, %v724, %v685
        %vm728 = vcmask 1043456
        %v729 = vsel %vm728, %v726, %v693
        %v730 = vsel %vm728, %v727, %v693
        %vm731 = vcmask 1044480
        %v732 = vsel %vm731, %v729, %v701
        %v733 = vsel %vm731, %v730, %v701
        %vm734 = vcmask 1045504
        %v735 = vsel %vm734, %v732, %v709
        %v736 = vsel %vm734, %v733, %v709
        %vm737 = vcmask 1046528
        %v738 = vsel %vm737, %v735, %v717
        %v739 = vsel %vm737, %v736, %v717
        %741 = vset.pattern.permute.xlu0 0
        %742 = vperm.xlu0 %741, %v641
        %v743 = vpop.permute.xlu0 %742
        %v745 = vmul.f32 %v738, %v743
        %v746 = vmul.f32 %v739, %v743
        %v747 = vadd.f32 %v745, 0.0
        %v748 = vadd.f32 %v746, 0.0
        %750 = vset.pattern.permute.xlu0 0
        %751 = vperm.xlu0 %750, %v642
        %v752 = vpop.permute.xlu0 %751
        %v754 = vmul.f32 %v738, %v752
        %v755 = vmul.f32 %v739, %v752
        %v756 = vadd.f32 %v754, 0.0
        %v757 = vadd.f32 %v755, 0.0
        %v758 = vld [vmem:[#allocation2 + $0x1e] sm:$0x3]
        %v759 = vld [vmem:[#allocation2 + $0x1c] sm:$0x3]
        %v760 = vld [vmem:[#allocation2 + $0x18] sm:$0x3]
        %v761 = vld [vmem:[#allocation2 + $0x10] sm:$0x3]
        %v762 = vld [vmem:[#allocation2 + $0x1] sm:$0x1]
        %763 = vrot.lane.b32.xlu0 %v656, 31
        %v764 = vpop.permute.xlu0 %763
        %765 = vrot.lane.b32.xlu0 %v660, 31
        %v766 = vpop.permute.xlu0 %765
        %vm767 = vcmask 252928
        %v768 = vsel %vm767, %v764, %v766
        %771 = vrot.lane.b32.xlu0 %v656, 93
        %v772 = vpop.permute.xlu0 %771
        %773 = vrot.lane.b32.xlu0 %v660, 93
        %v774 = vpop.permute.xlu0 %773
        %vm775 = vcmask 760832
        %v776 = vsel %vm775, %v772, %v774
        %v780 = vlaneseq
        %v781 = vshrl.u32 %v780, 7
        %v782 = vsub.s32 0, %v781
        %v783 = vrot.slane %v758, %v782
        %v784 = vlaneseq
        %v785 = vshrl.u32 %v784, 7
        %v786 = vsub.s32 1, %v785
        %v787 = vrot.slane %v758, %v786
        %788 = vrot.lane.b32.xlu0 %v783, 89
        %v789 = vpop.permute.xlu0 %788
        %790 = vrot.lane.b32.xlu0 %v787, 89
        %v791 = vpop.permute.xlu0 %790
        %vm792 = vcmask 728064
        %v793 = vsel %vm792, %v789, %v791
        %v797 = vlaneseq
        %v798 = vshrl.u32 %v797, 7
        %v799 = vsub.s32 0, %v798
        %v800 = vrot.slane %v759, %v799
        %v801 = vlaneseq
        %v802 = vshrl.u32 %v801, 7
        %v803 = vsub.s32 1, %v802
        %v804 = vrot.slane %v759, %v803
        %805 = vrot.lane.b32.xlu0 %v800, 81
        %v806 = vpop.permute.xlu0 %805
        %807 = vrot.lane.b32.xlu0 %v804, 81
        %v808 = vpop.permute.xlu0 %807
        %vm809 = vcmask 662528
        %v810 = vsel %vm809, %v806, %v808
        %v814 = vlaneseq
        %v815 = vshrl.u32 %v814, 7
        %v816 = vsub.s32 0, %v815
        %v817 = vrot.slane %v760, %v816
        %v818 = vlaneseq
        %v819 = vshrl.u32 %v818, 7
        %v820 = vsub.s32 1, %v819
        %v821 = vrot.slane %v760, %v820
        %822 = vrot.lane.b32.xlu0 %v817, 65
        %v823 = vpop.permute.xlu0 %822
        %824 = vrot.lane.b32.xlu0 %v821, 65
        %v825 = vpop.permute.xlu0 %824
        %vm826 = vcmask 531456
        %v827 = vsel %vm826, %v823, %v825
        %v831 = vlaneseq
        %v832 = vshrl.u32 %v831, 7
        %v833 = vsub.s32 0, %v832
        %v834 = vrot.slane %v761, %v833
        %v835 = vlaneseq
        %v836 = vshrl.u32 %v835, 7
        %v837 = vsub.s32 1, %v836
        %v838 = vrot.slane %v761, %v837
        %839 = vrot.lane.b32.xlu0 %v834, 33
        %v840 = vpop.permute.xlu0 %839
        %841 = vrot.lane.b32.xlu0 %v838, 33
        %v842 = vpop.permute.xlu0 %841
        %vm843 = vcmask 269312
        %v844 = vsel %vm843, %v840, %v842
        %v848 = vlaneseq
        %v849 = vshrl.u32 %v848, 7
        %v850 = vsub.s32 0, %v849
        %v851 = vrot.slane %v762, %v850
        %852 = vrot.lane.b32.xlu0 %v851, 97
        %v853 = vpop.permute.xlu0 %852
        %v855 = vsel %vm719, %v656, %v764
        %v856 = vsel %vm719, %v660, %v768
        %v857 = vsel %vm722, %v855, %v772
        %v858 = vsel %vm722, %v856, %v776
        %v859 = vsel %vm725, %v857, %v789
        %v860 = vsel %vm725, %v858, %v793
        %v861 = vsel %vm728, %v859, %v806
        %v862 = vsel %vm728, %v860, %v810
        %v863 = vsel %vm731, %v861, %v823
        %v864 = vsel %vm731, %v862, %v827
        %v865 = vsel %vm734, %v863, %v840
        %v866 = vsel %vm734, %v864, %v844
        %v867 = vsel %vm737, %v865, %v853
        %v868 = vsel %vm737, %v866, %v853
        %869 = vset.pattern.permute.xlu0 1
        %870 = vperm.xlu0 %869, %v641
        %v871 = vpop.permute.xlu0 %870
        %v873 = vmul.f32 %v867, %v871
        %v874 = vmul.f32 %v868, %v871
        %877 = vrot.lane.b32.xlu0 %v873, 127
        %v878 = vpop.permute.xlu0 %877
        %879 = vrot.lane.b32.xlu0 %v874, 127
        %v880 = vpop.permute.xlu0 %879
        %vm881 = vcmask 1039360
        %v882 = vsel %vm881, %v878, %v880
        %v885 = vadd.f32 %v747, %v882
        %v886 = vadd.f32 %v748, %v880
        %887 = vset.pattern.permute.xlu0 1
        %888 = vperm.xlu0 %887, %v642
        %v889 = vpop.permute.xlu0 %888
        %v891 = vmul.f32 %v867, %v889
        %v892 = vmul.f32 %v868, %v889
        %895 = vrot.lane.b32.xlu0 %v891, 127
        %v896 = vpop.permute.xlu0 %895
        %897 = vrot.lane.b32.xlu0 %v892, 127
        %v898 = vpop.permute.xlu0 %897
        %v899 = vsel %vm881, %v896, %v898
        %v902 = vadd.f32 %v756, %v899
        %v903 = vadd.f32 %v757, %v898
        %v904 = vld [vmem:[#allocation2 + $0x11] sm:$0x1]
        %v905 = vld [vmem:[#allocation2 + $0x2] sm:$0x1]
        %906 = vrot.lane.b32.xlu0 %v656, 30
        %v907 = vpop.permute.xlu0 %906
        %908 = vrot.lane.b32.xlu0 %v660, 30
        %v909 = vpop.permute.xlu0 %908
        %vm910 = vcmask 244736
        %v911 = vsel %vm910, %v907, %v909
        %914 = vrot.lane.b32.xlu0 %v656, 90
        %v915 = vpop.permute.xlu0 %914
        %916 = vrot.lane.b32.xlu0 %v660, 90
        %v917 = vpop.permute.xlu0 %916
        %vm918 = vcmask 736256
        %v919 = vsel %vm918, %v915, %v917
        %922 = vrot.lane.b32.xlu0 %v783, 82
        %v923 = vpop.permute.xlu0 %922
        %924 = vrot.lane.b32.xlu0 %v787, 82
        %v925 = vpop.permute.xlu0 %924
        %vm926 = vcmask 670720
        %v927 = vsel %vm926, %v923, %v925
        %930 = vrot.lane.b32.xlu0 %v800, 66
        %v931 = vpop.permute.xlu0 %930
        %932 = vrot.lane.b32.xlu0 %v804, 66
        %v933 = vpop.permute.xlu0 %932
        %vm934 = vcmask 539648
        %v935 = vsel %vm934, %v931, %v933
        %938 = vrot.lane.b32.xlu0 %v817, 34
        %v939 = vpop.permute.xlu0 %938
        %940 = vrot.lane.b32.xlu0 %v821, 34
        %v941 = vpop.permute.xlu0 %940
        %vm942 = vcmask 277504
        %v943 = vsel %vm942, %v939, %v941
        %v947 = vlaneseq
        %v948 = vshrl.u32 %v947, 7
        %v949 = vsub.s32 0, %v948
        %v950 = vrot.slane %v904, %v949
        %951 = vrot.lane.b32.xlu0 %v950, 98
        %v952 = vpop.permute.xlu0 %951
        %v955 = vlaneseq
        %v956 = vshrl.u32 %v955, 7
        %v957 = vsub.s32 0, %v956
        %v958 = vrot.slane %v905, %v957
        %959 = vrot.lane.b32.xlu0 %v958, 98
        %v960 = vpop.permute.xlu0 %959
        %v962 = vsel %vm719, %v656, %v907
        %v963 = vsel %vm719, %v660, %v911
        %v964 = vsel %vm722, %v962, %v915
        %v965 = vsel %vm722, %v963, %v919
        %v966 = vsel %vm725, %v964, %v923
        %v967 = vsel %vm725, %v965, %v927
        %v968 = vsel %vm728, %v966, %v931
        %v969 = vsel %vm728, %v967, %v935
        %v970 = vsel %vm731, %v968, %v939
        %v971 = vsel %vm731, %v969, %v943
        %v972 = vsel %vm734, %v970, %v952
        %v973 = vsel %vm734, %v971, %v952
        %v974 = vsel %vm737, %v972, %v960
        %v975 = vsel %vm737, %v973, %v960
        %976 = vset.pattern.permute.xlu0 2
        %977 = vperm.xlu0 %976, %v641
        %v978 = vpop.permute.xlu0 %977
        %v980 = vmul.f32 %v974, %v978
        %v981 = vmul.f32 %v975, %v978
        %984 = vrot.lane.b32.xlu0 %v980, 126
        %v985 = vpop.permute.xlu0 %984
        %986 = vrot.lane.b32.xlu0 %v981, 126
        %v987 = vpop.permute.xlu0 %986
        %vm988 = vcmask 1031168
        %v989 = vsel %vm988, %v985, %v987
        %v992 = vadd.f32 %v885, %v989
        %v993 = vadd.f32 %v886, %v987
        %994 = vset.pattern.permute.xlu0 2
        %995 = vperm.xlu0 %994, %v642
        %v996 = vpop.permute.xlu0 %995
        %v998 = vmul.f32 %v974, %v996
        %v999 = vmul.f32 %v975, %v996
        %1002 = vrot.lane.b32.xlu0 %v998, 126
        %v1003 = vpop.permute.xlu0 %1002
        %1004 = vrot.lane.b32.xlu0 %v999, 126
        %v1005 = vpop.permute.xlu0 %1004
        %v1006 = vsel %vm988, %v1003, %v1005
        %v1009 = vadd.f32 %v902, %v1006
        %v1010 = vadd.f32 %v903, %v1005
        %v1011 = vld [vmem:[#allocation2 + $0x11] sm:$0x3]
        %v1012 = vld [vmem:[#allocation2 + $0x3] sm:$0x1]
        %1013 = vrot.lane.b32.xlu0 %v656, 29
        %v1014 = vpop.permute.xlu0 %1013
        %1015 = vrot.lane.b32.xlu0 %v660, 29
        %v1016 = vpop.permute.xlu0 %1015
        %vm1017 = vcmask 236544
        %v1018 = vsel %vm1017, %v1014, %v1016
        %1021 = vrot.lane.b32.xlu0 %v656, 87
        %v1022 = vpop.permute.xlu0 %1021
        %1023 = vrot.lane.b32.xlu0 %v660, 87
        %v1024 = vpop.permute.xlu0 %1023
        %vm1025 = vcmask 711680
        %v1026 = vsel %vm1025, %v1022, %v1024
        %1029 = vrot.lane.b32.xlu0 %v783, 75
        %v1030 = vpop.permute.xlu0 %1029
        %1031 = vrot.lane.b32.xlu0 %v787, 75
        %v1032 = vpop.permute.xlu0 %1031
        %vm1033 = vcmask 613376
        %v1034 = vsel %vm1033, %v1030, %v1032
        %1037 = vrot.lane.b32.xlu0 %v800, 51
        %v1038 = vpop.permute.xlu0 %1037
        %1039 = vrot.lane.b32.xlu0 %v804, 51
        %v1040 = vpop.permute.xlu0 %1039
        %vm1041 = vcmask 416768
        %v1042 = vsel %vm1041, %v1038, %v1040
        %1045 = vrot.lane.b32.xlu0 %v817, 3
        %v1046 = vpop.permute.xlu0 %1045
        %1047 = vrot.lane.b32.xlu0 %v821, 3
        %v1048 = vpop.permute.xlu0 %1047
        %vm1049 = vcmask 23552
        %v1050 = vsel %vm1049, %v1046, %v1048
        %v1054 = vlaneseq
        %v1055 = vshrl.u32 %v1054, 7
        %v1056 = vsub.s32 0, %v1055
        %v1057 = vrot.slane %v1011, %v1056
        %v1058 = vlaneseq
        %v1059 = vshrl.u32 %v1058, 7
        %v1060 = vsub.s32 1, %v1059
        %v1061 = vrot.slane %v1011, %v1060
        %1062 = vrot.lane.b32.xlu0 %v1057, 35
        %v1063 = vpop.permute.xlu0 %1062
        %1064 = vrot.lane.b32.xlu0 %v1061, 35
        %v1065 = vpop.permute.xlu0 %1064
        %vm1066 = vcmask 285696
        %v1067 = vsel %vm1066, %v1063, %v1065
        %v1071 = vlaneseq
        %v1072 = vshrl.u32 %v1071, 7
        %v1073 = vsub.s32 0, %v1072
        %v1074 = vrot.slane %v1012, %v1073
        %1075 = vrot.lane.b32.xlu0 %v1074, 99
        %v1076 = vpop.permute.xlu0 %1075
        %v1078 = vsel %vm719, %v656, %v1014
        %v1079 = vsel %vm719, %v660, %v1018
        %v1080 = vsel %vm722, %v1078, %v1022
        %v1081 = vsel %vm722, %v1079, %v1026
        %v1082 = vsel %vm725, %v1080, %v1030
        %v1083 = vsel %vm725, %v1081, %v1034
        %v1084 = vsel %vm728, %v1082, %v1038
        %v1085 = vsel %vm728, %v1083, %v1042
        %v1086 = vsel %vm731, %v1084, %v1046
        %v1087 = vsel %vm731, %v1085, %v1050
        %v1088 = vsel %vm734, %v1086, %v1063
        %v1089 = vsel %vm734, %v1087, %v1067
        %v1090 = vsel %vm737, %v1088, %v1076
        %v1091 = vsel %vm737, %v1089, %v1076
        %1092 = vset.pattern.permute.xlu0 3
        %1093 = vperm.xlu0 %1092, %v641
        %v1094 = vpop.permute.xlu0 %1093
        %v1096 = vmul.f32 %v1090, %v1094
        %v1097 = vmul.f32 %v1091, %v1094
        %1100 = vrot.lane.b32.xlu0 %v1096, 125
        %v1101 = vpop.permute.xlu0 %1100
        %1102 = vrot.lane.b32.xlu0 %v1097, 125
        %v1103 = vpop.permute.xlu0 %1102
        %vm1104 = vcmask 1022976
        %v1105 = vsel %vm1104, %v1101, %v1103
        %v1108 = vadd.f32 %v992, %v1105
        %v1109 = vadd.f32 %v993, %v1103
        %1110 = vset.pattern.permute.xlu0 3
        %1111 = vperm.xlu0 %1110, %v642
        %v1112 = vpop.permute.xlu0 %1111
        %v1114 = vmul.f32 %v1090, %v1112
        %v1115 = vmul.f32 %v1091, %v1112
        %1118 = vrot.lane.b32.xlu0 %v1114, 125
        %v1119 = vpop.permute.xlu0 %1118
        %1120 = vrot.lane.b32.xlu0 %v1115, 125
        %v1121 = vpop.permute.xlu0 %1120
        %v1122 = vsel %vm1104, %v1119, %v1121
        %v1125 = vadd.f32 %v1009, %v1122
        %v1126 = vadd.f32 %v1010, %v1121
        %v1127 = vld [vmem:[#allocation2 + $0x19] sm:$0x1]
        %v1128 = vld [vmem:[#allocation2 + $0x12] sm:$0x1]
        %v1129 = vld [vmem:[#allocation2 + $0x4] sm:$0x1]
        %1130 = vrot.lane.b32.xlu0 %v656, 28
        %v1131 = vpop.permute.xlu0 %1130
        %1132 = vrot.lane.b32.xlu0 %v660, 28
        %v1133 = vpop.permute.xlu0 %1132
        %vm1134 = vcmask 228352
        %v1135 = vsel %vm1134, %v1131, %v1133
        %1138 = vrot.lane.b32.xlu0 %v656, 84
        %v1139 = vpop.permute.xlu0 %1138
        %1140 = vrot.lane.b32.xlu0 %v660, 84
        %v1141 = vpop.permute.xlu0 %1140
        %vm1142 = vcmask 687104
        %v1143 = vsel %vm1142, %v1139, %v1141
        %1146 = vrot.lane.b32.xlu0 %v783, 68
        %v1147 = vpop.permute.xlu0 %1146
        %1148 = vrot.lane.b32.xlu0 %v787, 68
        %v1149 = vpop.permute.xlu0 %1148
        %vm1150 = vcmask 556032
        %v1151 = vsel %vm1150, %v1147, %v1149
        %1154 = vrot.lane.b32.xlu0 %v800, 36
        %v1155 = vpop.permute.xlu0 %1154
        %1156 = vrot.lane.b32.xlu0 %v804, 36
        %v1157 = vpop.permute.xlu0 %1156
        %vm1158 = vcmask 293888
        %v1159 = vsel %vm1158, %v1155, %v1157
        %v1163 = vlaneseq
        %v1164 = vshrl.u32 %v1163, 7
        %v1165 = vsub.s32 0, %v1164
        %v1166 = vrot.slane %v1127, %v1165
        %1167 = vrot.lane.b32.xlu0 %v1166, 100
        %v1168 = vpop.permute.xlu0 %1167
        %v1171 = vlaneseq
        %v1172 = vshrl.u32 %v1171, 7
        %v1173 = vsub.s32 0, %v1172
        %v1174 = vrot.slane %v1128, %v1173
        %1175 = vrot.lane.b32.xlu0 %v1174, 100
        %v1176 = vpop.permute.xlu0 %1175
        %v1179 = vlaneseq
        %v1180 = vshrl.u32 %v1179, 7
        %v1181 = vsub.s32 0, %v1180
        %v1182 = vrot.slane %v1129, %v1181
        %1183 = vrot.lane.b32.xlu0 %v1182, 100
        %v1184 = vpop.permute.xlu0 %1183
        %v1186 = vsel %vm719, %v656, %v1131
        %v1187 = vsel %vm719, %v660, %v1135
        %v1188 = vsel %vm722, %v1186, %v1139
        %v1189 = vsel %vm722, %v1187, %v1143
        %v1190 = vsel %vm725, %v1188, %v1147
        %v1191 = vsel %vm725, %v1189, %v1151
        %v1192 = vsel %vm728, %v1190, %v1155
        %v1193 = vsel %vm728, %v1191, %v1159
        %v1194 = vsel %vm731, %v1192, %v1168
        %v1195 = vsel %vm731, %v1193, %v1168
        %v1196 = vsel %vm734, %v1194, %v1176
        %v1197 = vsel %vm734, %v1195, %v1176
        %v1198 = vsel %vm737, %v1196, %v1184
        %v1199 = vsel %vm737, %v1197, %v1184
        %1200 = vset.pattern.permute.xlu0 4
        %1201 = vperm.xlu0 %1200, %v641
        %v1202 = vpop.permute.xlu0 %1201
        %v1204 = vmul.f32 %v1198, %v1202
        %v1205 = vmul.f32 %v1199, %v1202
        %1208 = vrot.lane.b32.xlu0 %v1204, 124
        %v1209 = vpop.permute.xlu0 %1208
        %1210 = vrot.lane.b32.xlu0 %v1205, 124
        %v1211 = vpop.permute.xlu0 %1210
        %vm1212 = vcmask 1014784
        %v1213 = vsel %vm1212, %v1209, %v1211
        %v1216 = vadd.f32 %v1108, %v1213
        %v1217 = vadd.f32 %v1109, %v1211
        %1218 = vset.pattern.permute.xlu0 4
        %1219 = vperm.xlu0 %1218, %v642
        %v1220 = vpop.permute.xlu0 %1219
        %v1222 = vmul.f32 %v1198, %v1220
        %v1223 = vmul.f32 %v1199, %v1220
        %1226 = vrot.lane.b32.xlu0 %v1222, 124
        %v1227 = vpop.permute.xlu0 %1226
        %1228 = vrot.lane.b32.xlu0 %v1223, 124
        %v1229 = vpop.permute.xlu0 %1228
        %v1230 = vsel %vm1212, %v1227, %v1229
        %v1233 = vadd.f32 %v1125, %v1230
        %v1234 = vadd.f32 %v1126, %v1229
        %v1235 = vld [vmem:[#allocation2 + $0x19] sm:$0x3]
        %v1236 = vld [vmem:[#allocation2 + $0x12] sm:$0x3]
        %v1237 = vld [vmem:[#allocation2 + $0x5] sm:$0x1]
        %1238 = vrot.lane.b32.xlu0 %v656, 27
        %v1239 = vpop.permute.xlu0 %1238
        %1240 = vrot.lane.b32.xlu0 %v660, 27
        %v1241 = vpop.permute.xlu0 %1240
        %vm1242 = vcmask 220160
        %v1243 = vsel %vm1242, %v1239, %v1241
        %1246 = vrot.lane.b32.xlu0 %v656, 81
        %v1247 = vpop.permute.xlu0 %1246
        %1248 = vrot.lane.b32.xlu0 %v660, 81
        %v1249 = vpop.permute.xlu0 %1248
        %v1250 = vsel %vm809, %v1247, %v1249
        %1253 = vrot.lane.b32.xlu0 %v783, 61
        %v1254 = vpop.permute.xlu0 %1253
        %1255 = vrot.lane.b32.xlu0 %v787, 61
        %v1256 = vpop.permute.xlu0 %1255
        %vm1257 = vcmask 498688
        %v1258 = vsel %vm1257, %v1254, %v1256
        %1261 = vrot.lane.b32.xlu0 %v800, 21
        %v1262 = vpop.permute.xlu0 %1261
        %1263 = vrot.lane.b32.xlu0 %v804, 21
        %v1264 = vpop.permute.xlu0 %1263
        %vm1265 = vcmask 171008
        %v1266 = vsel %vm1265, %v1262, %v1264
        %v1270 = vlaneseq
        %v1271 = vshrl.u32 %v1270, 7
        %v1272 = vsub.s32 0, %v1271
        %v1273 = vrot.slane %v1235, %v1272
        %v1274 = vlaneseq
        %v1275 = vshrl.u32 %v1274, 7
        %v1276 = vsub.s32 1, %v1275
        %v1277 = vrot.slane %v1235, %v1276
        %1278 = vrot.lane.b32.xlu0 %v1273, 69
        %v1279 = vpop.permute.xlu0 %1278
        %1280 = vrot.lane.b32.xlu0 %v1277, 69
        %v1281 = vpop.permute.xlu0 %1280
        %vm1282 = vcmask 564224
        %v1283 = vsel %vm1282, %v1279, %v1281
        %v1287 = vlaneseq
        %v1288 = vshrl.u32 %v1287, 7
        %v1289 = vsub.s32 0, %v1288
        %v1290 = vrot.slane %v1236, %v1289
        %v1291 = vlaneseq
        %v1292 = vshrl.u32 %v1291, 7
        %v1293 = vsub.s32 1, %v1292
        %v1294 = vrot.slane %v1236, %v1293
        %1295 = vrot.lane.b32.xlu0 %v1290, 37
        %v1296 = vpop.permute.xlu0 %1295
        %1297 = vrot.lane.b32.xlu0 %v1294, 37
        %v1298 = vpop.permute.xlu0 %1297
        %vm1299 = vcmask 302080
        %v1300 = vsel %vm1299, %v1296, %v1298
        %v1304 = vlaneseq
        %v1305 = vshrl.u32 %v1304, 7
        %v1306 = vsub.s32 0, %v1305
        %v1307 = vrot.slane %v1237, %v1306
        %1308 = vrot.lane.b32.xlu0 %v1307, 101
        %v1309 = vpop.permute.xlu0 %1308
        %v1311 = vsel %vm719, %v656, %v1239
        %v1312 = vsel %vm719, %v660, %v1243
        %v1313 = vsel %vm722, %v1311, %v1247
        %v1314 = vsel %vm722, %v1312, %v1250
        %v1315 = vsel %vm725, %v1313, %v1254
        %v1316 = vsel %vm725, %v1314, %v1258
        %v1317 = vsel %vm728, %v1315, %v1262
        %v1318 = vsel %vm728, %v1316, %v1266
        %v1319 = vsel %vm731, %v1317, %v1279
        %v1320 = vsel %vm731, %v1318, %v1283
        %v1321 = vsel %vm734, %v1319, %v1296
        %v1322 = vsel %vm734, %v1320, %v1300
        %v1323 = vsel %vm737, %v1321, %v1309
        %v1324 = vsel %vm737, %v1322, %v1309
        %1325 = vset.pattern.permute.xlu0 5
        %1326 = vperm.xlu0 %1325, %v641
        %v1327 = vpop.permute.xlu0 %1326
        %v1329 = vmul.f32 %v1323, %v1327
        %v1330 = vmul.f32 %v1324, %v1327
        %1333 = vrot.lane.b32.xlu0 %v1329, 123
        %v1334 = vpop.permute.xlu0 %1333
        %1335 = vrot.lane.b32.xlu0 %v1330, 123
        %v1336 = vpop.permute.xlu0 %1335
        %vm1337 = vcmask 1006592
        %v1338 = vsel %vm1337, %v1334, %v1336
        %v1341 = vadd.f32 %v1216, %v1338
        %v1342 = vadd.f32 %v1217, %v1336
        %1343 = vset.pattern.permute.xlu0 5
        %1344 = vperm.xlu0 %1343, %v642
        %v1345 = vpop.permute.xlu0 %1344
        %v1347 = vmul.f32 %v1323, %v1345
        %v1348 = vmul.f32 %v1324, %v1345
        %1351 = vrot.lane.b32.xlu0 %v1347, 123
        %v1352 = vpop.permute.xlu0 %1351
        %1353 = vrot.lane.b32.xlu0 %v1348, 123
        %v1354 = vpop.permute.xlu0 %1353
        %v1355 = vsel %vm1337, %v1352, %v1354
        %v1358 = vadd.f32 %v1233, %v1355
        %v1359 = vadd.f32 %v1234, %v1354
        %v1360 = vld [vmem:[#allocation2 + $0x13] sm:$0x1]
        %v1361 = vld [vmem:[#allocation2 + $0x6] sm:$0x1]
        %1362 = vrot.lane.b32.xlu0 %v656, 26
        %v1363 = vpop.permute.xlu0 %1362
        %1364 = vrot.lane.b32.xlu0 %v660, 26
        %v1365 = vpop.permute.xlu0 %1364
        %vm1366 = vcmask 211968
        %v1367 = vsel %vm1366, %v1363, %v1365
        %1370 = vrot.lane.b32.xlu0 %v656, 78
        %v1371 = vpop.permute.xlu0 %1370
        %1372 = vrot.lane.b32.xlu0 %v660, 78
        %v1373 = vpop.permute.xlu0 %1372
        %vm1374 = vcmask 637952
        %v1375 = vsel %vm1374, %v1371, %v1373
        %1378 = vrot.lane.b32.xlu0 %v783, 54
        %v1379 = vpop.permute.xlu0 %1378
        %1380 = vrot.lane.b32.xlu0 %v787, 54
        %v1381 = vpop.permute.xlu0 %1380
        %vm1382 = vcmask 441344
        %v1383 = vsel %vm1382, %v1379, %v1381
        %1386 = vrot.lane.b32.xlu0 %v800, 6
        %v1387 = vpop.permute.xlu0 %1386
        %1388 = vrot.lane.b32.xlu0 %v804, 6
        %v1389 = vpop.permute.xlu0 %1388
        %vm1390 = vcmask 48128
        %v1391 = vsel %vm1390, %v1387, %v1389
        %1394 = vrot.lane.b32.xlu0 %v1273, 38
        %v1395 = vpop.permute.xlu0 %1394
        %1396 = vrot.lane.b32.xlu0 %v1277, 38
        %v1397 = vpop.permute.xlu0 %1396
        %vm1398 = vcmask 310272
        %v1399 = vsel %vm1398, %v1395, %v1397
        %v1403 = vlaneseq
        %v1404 = vshrl.u32 %v1403, 7
        %v1405 = vsub.s32 0, %v1404
        %v1406 = vrot.slane %v1360, %v1405
        %1407 = vrot.lane.b32.xlu0 %v1406, 102
        %v1408 = vpop.permute.xlu0 %1407
        %v1411 = vlaneseq
        %v1412 = vshrl.u32 %v1411, 7
        %v1413 = vsub.s32 0, %v1412
        %v1414 = vrot.slane %v1361, %v1413
        %1415 = vrot.lane.b32.xlu0 %v1414, 102
        %v1416 = vpop.permute.xlu0 %1415
        %v1418 = vsel %vm719, %v656, %v1363
        %v1419 = vsel %vm719, %v660, %v1367
        %v1420 = vsel %vm722, %v1418, %v1371
        %v1421 = vsel %vm722, %v1419, %v1375
        %v1422 = vsel %vm725, %v1420, %v1379
        %v1423 = vsel %vm725, %v1421, %v1383
        %v1424 = vsel %vm728, %v1422, %v1387
        %v1425 = vsel %vm728, %v1423, %v1391
        %v1426 = vsel %vm731, %v1424, %v1395
        %v1427 = vsel %vm731, %v1425, %v1399
        %v1428 = vsel %vm734, %v1426, %v1408
        %v1429 = vsel %vm734, %v1427, %v1408
        %v1430 = vsel %vm737, %v1428, %v1416
        %v1431 = vsel %vm737, %v1429, %v1416
        %1432 = vset.pattern.permute.xlu0 6
        %1433 = vperm.xlu0 %1432, %v641
        %v1434 = vpop.permute.xlu0 %1433
        %v1436 = vmul.f32 %v1430, %v1434
        %v1437 = vmul.f32 %v1431, %v1434
        %1440 = vrot.lane.b32.xlu0 %v1436, 122
        %v1441 = vpop.permute.xlu0 %1440
        %1442 = vrot.lane.b32.xlu0 %v1437, 122
        %v1443 = vpop.permute.xlu0 %1442
        %vm1444 = vcmask 998400
        %v1445 = vsel %vm1444, %v1441, %v1443
        %v1448 = vadd.f32 %v1341, %v1445
        %v1449 = vadd.f32 %v1342, %v1443
        %1450 = vset.pattern.permute.xlu0 6
        %1451 = vperm.xlu0 %1450, %v642
        %v1452 = vpop.permute.xlu0 %1451
        %v1454 = vmul.f32 %v1430, %v1452
        %v1455 = vmul.f32 %v1431, %v1452
        %1458 = vrot.lane.b32.xlu0 %v1454, 122
        %v1459 = vpop.permute.xlu0 %1458
        %1460 = vrot.lane.b32.xlu0 %v1455, 122
        %v1461 = vpop.permute.xlu0 %1460
        %v1462 = vsel %vm1444, %v1459, %v1461
        %v1465 = vadd.f32 %v1358, %v1462
        %v1466 = vadd.f32 %v1359, %v1461
        %v1467 = vld [vmem:[#allocation2 + $0x13] sm:$0x3]
        %v1468 = vld [vmem:[#allocation2 + $0x7] sm:$0x1]
        %1469 = vrot.lane.b32.xlu0 %v656, 25
        %v1470 = vpop.permute.xlu0 %1469
        %1471 = vrot.lane.b32.xlu0 %v660, 25
        %v1472 = vpop.permute.xlu0 %1471
        %vm1473 = vcmask 203776
        %v1474 = vsel %vm1473, %v1470, %v1472
        %1477 = vrot.lane.b32.xlu0 %v656, 75
        %v1478 = vpop.permute.xlu0 %1477
        %1479 = vrot.lane.b32.xlu0 %v660, 75
        %v1480 = vpop.permute.xlu0 %1479
        %v1481 = vsel %vm1033, %v1478, %v1480
        %1484 = vrot.lane.b32.xlu0 %v783, 47
        %v1485 = vpop.permute.xlu0 %1484
        %1486 = vrot.lane.b32.xlu0 %v787, 47
        %v1487 = vpop.permute.xlu0 %1486
        %vm1488 = vcmask 384000
        %v1489 = vsel %vm1488, %v1485, %v1487
        %1492 = vrot.lane.b32.xlu0 %v800, 119
        %v1493 = vpop.permute.xlu0 %1492
        %1494 = vrot.lane.b32.xlu0 %v804, 119
        %v1495 = vpop.permute.xlu0 %1494
        %vm1496 = vcmask 973824
        %v1497 = vsel %vm1496, %v1493, %v1495
        %1500 = vrot.lane.b32.xlu0 %v1273, 7
        %v1501 = vpop.permute.xlu0 %1500
        %1502 = vrot.lane.b32.xlu0 %v1277, 7
        %v1503 = vpop.permute.xlu0 %1502
        %vm1504 = vcmask 56320
        %v1505 = vsel %vm1504, %v1501, %v1503
        %v1509 = vlaneseq
        %v1510 = vshrl.u32 %v1509, 7
        %v1511 = vsub.s32 0, %v1510
        %v1512 = vrot.slane %v1467, %v1511
        %v1513 = vlaneseq
        %v1514 = vshrl.u32 %v1513, 7
        %v1515 = vsub.s32 1, %v1514
        %v1516 = vrot.slane %v1467, %v1515
        %1517 = vrot.lane.b32.xlu0 %v1512, 39
        %v1518 = vpop.permute.xlu0 %1517
        %1519 = vrot.lane.b32.xlu0 %v1516, 39
        %v1520 = vpop.permute.xlu0 %1519
        %vm1521 = vcmask 318464
        %v1522 = vsel %vm1521, %v1518, %v1520
        %v1526 = vlaneseq
        %v1527 = vshrl.u32 %v1526, 7
        %v1528 = vsub.s32 0, %v1527
        %v1529 = vrot.slane %v1468, %v1528
        %1530 = vrot.lane.b32.xlu0 %v1529, 103
        %v1531 = vpop.permute.xlu0 %1530
        %v1533 = vsel %vm719, %v656, %v1470
        %v1534 = vsel %vm719, %v660, %v1474
        %v1535 = vsel %vm722, %v1533, %v1478
        %v1536 = vsel %vm722, %v1534, %v1481
        %v1537 = vsel %vm725, %v1535, %v1485
        %v1538 = vsel %vm725, %v1536, %v1489
        %v1539 = vsel %vm728, %v1537, %v1497
        %v1540 = vsel %vm728, %v1538, %v1495
        %v1541 = vsel %vm731, %v1539, %v1501
        %v1542 = vsel %vm731, %v1540, %v1505
        %v1543 = vsel %vm734, %v1541, %v1518
        %v1544 = vsel %vm734, %v1542, %v1522
        %v1545 = vsel %vm737, %v1543, %v1531
        %v1546 = vsel %vm737, %v1544, %v1531
        %1547 = vset.pattern.permute.xlu0 7
        %1548 = vperm.xlu0 %1547, %v641
        %v1549 = vpop.permute.xlu0 %1548
        %v1551 = vmul.f32 %v1545, %v1549
        %v1552 = vmul.f32 %v1546, %v1549
        %1555 = vrot.lane.b32.xlu0 %v1551, 121
        %v1556 = vpop.permute.xlu0 %1555
        %1557 = vrot.lane.b32.xlu0 %v1552, 121
        %v1558 = vpop.permute.xlu0 %1557
        %vm1559 = vcmask 990208
        %v1560 = vsel %vm1559, %v1556, %v1558
        %v1563 = vadd.f32 %v1448, %v1560
        %v1564 = vadd.f32 %v1449, %v1558
        %1565 = vset.pattern.permute.xlu0 7
        %1566 = vperm.xlu0 %1565, %v642
        %v1567 = vpop.permute.xlu0 %1566
        %v1569 = vmul.f32 %v1545, %v1567
        %v1570 = vmul.f32 %v1546, %v1567
        %1573 = vrot.lane.b32.xlu0 %v1569, 121
        %v1574 = vpop.permute.xlu0 %1573
        %1575 = vrot.lane.b32.xlu0 %v1570, 121
        %v1576 = vpop.permute.xlu0 %1575
        %v1577 = vsel %vm1559, %v1574, %v1576
        %v1580 = vadd.f32 %v1465, %v1577
        %v1581 = vadd.f32 %v1466, %v1576
        %v1582 = vld [vmem:[#allocation2 + $0x1d] sm:$0x1]
        %v1583 = vld [vmem:[#allocation2 + $0x1a] sm:$0x1]
        %v1584 = vld [vmem:[#allocation2 + $0x14] sm:$0x1]
        %v1585 = vld [vmem:[#allocation2 + $0x8] sm:$0x1]
        %1586 = vrot.lane.b32.xlu0 %v656, 24
        %v1587 = vpop.permute.xlu0 %1586
        %1588 = vrot.lane.b32.xlu0 %v660, 24
        %v1589 = vpop.permute.xlu0 %1588
        %vm1590 = vcmask 195584
        %v1591 = vsel %vm1590, %v1587, %v1589
        %1594 = vrot.lane.b32.xlu0 %v656, 72
        %v1595 = vpop.permute.xlu0 %1594
        %1596 = vrot.lane.b32.xlu0 %v660, 72
        %v1597 = vpop.permute.xlu0 %1596
        %vm1598 = vcmask 588800
        %v1599 = vsel %vm1598, %v1595, %v1597
        %1602 = vrot.lane.b32.xlu0 %v783, 40
        %v1603 = vpop.permute.xlu0 %1602
        %1604 = vrot.lane.b32.xlu0 %v787, 40
        %v1605 = vpop.permute.xlu0 %1604
        %vm1606 = vcmask 326656
        %v1607 = vsel %vm1606, %v1603, %v1605
        %v1611 = vlaneseq
        %v1612 = vshrl.u32 %v1611, 7
        %v1613 = vsub.s32 0, %v1612
        %v1614 = vrot.slane %v1582, %v1613
        %1615 = vrot.lane.b32.xlu0 %v1614, 104
        %v1616 = vpop.permute.xlu0 %1615
        %v1619 = vlaneseq
        %v1620 = vshrl.u32 %v1619, 7
        %v1621 = vsub.s32 0, %v1620
        %v1622 = vrot.slane %v1583, %v1621
        %1623 = vrot.lane.b32.xlu0 %v1622, 104
        %v1624 = vpop.permute.xlu0 %1623
        %v1627 = vlaneseq
        %v1628 = vshrl.u32 %v1627, 7
        %v1629 = vsub.s32 0, %v1628
        %v1630 = vrot.slane %v1584, %v1629
        %1631 = vrot.lane.b32.xlu0 %v1630, 104
        %v1632 = vpop.permute.xlu0 %1631
        %v1635 = vlaneseq
        %v1636 = vshrl.u32 %v1635, 7
        %v1637 = vsub.s32 0, %v1636
        %v1638 = vrot.slane %v1585, %v1637
        %1639 = vrot.lane.b32.xlu0 %v1638, 104
        %v1640 = vpop.permute.xlu0 %1639
        %v1642 = vsel %vm719, %v656, %v1587
        %v1643 = vsel %vm719, %v660, %v1591
        %v1644 = vsel %vm722, %v1642, %v1595
        %v1645 = vsel %vm722, %v1643, %v1599
        %v1646 = vsel %vm725, %v1644, %v1603
        %v1647 = vsel %vm725, %v1645, %v1607
        %v1648 = vsel %vm728, %v1646, %v1616
        %v1649 = vsel %vm728, %v1647, %v1616
        %v1650 = vsel %vm731, %v1648, %v1624
        %v1651 = vsel %vm731, %v1649, %v1624
        %v1652 = vsel %vm734, %v1650, %v1632
        %v1653 = vsel %vm734, %v1651, %v1632
        %v1654 = vsel %vm737, %v1652, %v1640
        %v1655 = vsel %vm737, %v1653, %v1640
        %1656 = vset.pattern.permute.xlu0 8
        %1657 = vperm.xlu0 %1656, %v641
        %v1658 = vpop.permute.xlu0 %1657
        %v1660 = vmul.f32 %v1654, %v1658
        %v1661 = vmul.f32 %v1655, %v1658
        %1664 = vrot.lane.b32.xlu0 %v1660, 120
        %v1665 = vpop.permute.xlu0 %1664
        %1666 = vrot.lane.b32.xlu0 %v1661, 120
        %v1667 = vpop.permute.xlu0 %1666
        %vm1668 = vcmask 982016
        %v1669 = vsel %vm1668, %v1665, %v1667
        %v1672 = vadd.f32 %v1563, %v1669
        %v1673 = vadd.f32 %v1564, %v1667
        %1674 = vset.pattern.permute.xlu0 8
        %1675 = vperm.xlu0 %1674, %v642
        %v1676 = vpop.permute.xlu0 %1675
        %v1678 = vmul.f32 %v1654, %v1676
        %v1679 = vmul.f32 %v1655, %v1676
        %1682 = vrot.lane.b32.xlu0 %v1678, 120
        %v1683 = vpop.permute.xlu0 %1682
        %1684 = vrot.lane.b32.xlu0 %v1679, 120
        %v1685 = vpop.permute.xlu0 %1684
        %v1686 = vsel %vm1668, %v1683, %v1685
        %v1689 = vadd.f32 %v1580, %v1686
        %v1690 = vadd.f32 %v1581, %v1685
        %v1691 = vld [vmem:[#allocation2 + $0x1d] sm:$0x3]
        %v1692 = vld [vmem:[#allocation2 + $0x1a] sm:$0x3]
        %v1693 = vld [vmem:[#allocation2 + $0x14] sm:$0x3]
        %v1694 = vld [vmem:[#allocation2 + $0x9] sm:$0x1]
        %1695 = vrot.lane.b32.xlu0 %v656, 23
        %v1696 = vpop.permute.xlu0 %1695
        %1697 = vrot.lane.b32.xlu0 %v660, 23
        %v1698 = vpop.permute.xlu0 %1697
        %vm1699 = vcmask 187392
        %v1700 = vsel %vm1699, %v1696, %v1698
        %1703 = vrot.lane.b32.xlu0 %v656, 69
        %v1704 = vpop.permute.xlu0 %1703
        %1705 = vrot.lane.b32.xlu0 %v660, 69
        %v1706 = vpop.permute.xlu0 %1705
        %v1707 = vsel %vm1282, %v1704, %v1706
        %1710 = vrot.lane.b32.xlu0 %v783, 33
        %v1711 = vpop.permute.xlu0 %1710
        %1712 = vrot.lane.b32.xlu0 %v787, 33
        %v1713 = vpop.permute.xlu0 %1712
        %v1714 = vsel %vm843, %v1711, %v1713
        %v1718 = vlaneseq
        %v1719 = vshrl.u32 %v1718, 7
        %v1720 = vsub.s32 0, %v1719
        %v1721 = vrot.slane %v1691, %v1720
        %v1722 = vlaneseq
        %v1723 = vshrl.u32 %v1722, 7
        %v1724 = vsub.s32 1, %v1723
        %v1725 = vrot.slane %v1691, %v1724
        %1726 = vrot.lane.b32.xlu0 %v1721, 89
        %v1727 = vpop.permute.xlu0 %1726
        %1728 = vrot.lane.b32.xlu0 %v1725, 89
        %v1729 = vpop.permute.xlu0 %1728
        %v1730 = vsel %vm792, %v1727, %v1729
        %v1734 = vlaneseq
        %v1735 = vshrl.u32 %v1734, 7
        %v1736 = vsub.s32 0, %v1735
        %v1737 = vrot.slane %v1692, %v1736
        %v1738 = vlaneseq
        %v1739 = vshrl.u32 %v1738, 7
        %v1740 = vsub.s32 1, %v1739
        %v1741 = vrot.slane %v1692, %v1740
        %1742 = vrot.lane.b32.xlu0 %v1737, 73
        %v1743 = vpop.permute.xlu0 %1742
        %1744 = vrot.lane.b32.xlu0 %v1741, 73
        %v1745 = vpop.permute.xlu0 %1744
        %vm1746 = vcmask 596992
        %v1747 = vsel %vm1746, %v1743, %v1745
        %v1751 = vlaneseq
        %v1752 = vshrl.u32 %v1751, 7
        %v1753 = vsub.s32 0, %v1752
        %v1754 = vrot.slane %v1693, %v1753
        %v1755 = vlaneseq
        %v1756 = vshrl.u32 %v1755, 7
        %v1757 = vsub.s32 1, %v1756
        %v1758 = vrot.slane %v1693, %v1757
        %1759 = vrot.lane.b32.xlu0 %v1754, 41
        %v1760 = vpop.permute.xlu0 %1759
        %1761 = vrot.lane.b32.xlu0 %v1758, 41
        %v1762 = vpop.permute.xlu0 %1761
        %vm1763 = vcmask 334848
        %v1764 = vsel %vm1763, %v1760, %v1762
        %v1768 = vlaneseq
        %v1769 = vshrl.u32 %v1768, 7
        %v1770 = vsub.s32 0, %v1769
        %v1771 = vrot.slane %v1694, %v1770
        %1772 = vrot.lane.b32.xlu0 %v1771, 105
        %v1773 = vpop.permute.xlu0 %1772
        %v1775 = vsel %vm719, %v656, %v1696
        %v1776 = vsel %vm719, %v660, %v1700
        %v1777 = vsel %vm722, %v1775, %v1704
        %v1778 = vsel %vm722, %v1776, %v1707
        %v1779 = vsel %vm725, %v1777, %v1711
        %v1780 = vsel %vm725, %v1778, %v1714
        %v1781 = vsel %vm728, %v1779, %v1727
        %v1782 = vsel %vm728, %v1780, %v1730
        %v1783 = vsel %vm731, %v1781, %v1743
        %v1784 = vsel %vm731, %v1782, %v1747
        %v1785 = vsel %vm734, %v1783, %v1760
        %v1786 = vsel %vm734, %v1784, %v1764
        %v1787 = vsel %vm737, %v1785, %v1773
        %v1788 = vsel %vm737, %v1786, %v1773
        %1789 = vset.pattern.permute.xlu0 9
        %1790 = vperm.xlu0 %1789, %v641
        %v1791 = vpop.permute.xlu0 %1790
        %v1793 = vmul.f32 %v1787, %v1791
        %v1794 = vmul.f32 %v1788, %v1791
        %1797 = vrot.lane.b32.xlu0 %v1793, 119
        %v1798 = vpop.permute.xlu0 %1797
        %1799 = vrot.lane.b32.xlu0 %v1794, 119
        %v1800 = vpop.permute.xlu0 %1799
        %v1801 = vsel %vm1496, %v1798, %v1800
        %v1804 = vadd.f32 %v1672, %v1801
        %v1805 = vadd.f32 %v1673, %v1800
        %1806 = vset.pattern.permute.xlu0 9
        %1807 = vperm.xlu0 %1806, %v642
        %v1808 = vpop.permute.xlu0 %1807
        %v1810 = vmul.f32 %v1787, %v1808
        %v1811 = vmul.f32 %v1788, %v1808
        %1814 = vrot.lane.b32.xlu0 %v1810, 119
        %v1815 = vpop.permute.xlu0 %1814
        %1816 = vrot.lane.b32.xlu0 %v1811, 119
        %v1817 = vpop.permute.xlu0 %1816
        %v1818 = vsel %vm1496, %v1815, %v1817
        %v1821 = vadd.f32 %v1689, %v1818
        %v1822 = vadd.f32 %v1690, %v1817
        %v1823 = vld [vmem:[#allocation2 + $0x15] sm:$0x1]
        %v1824 = vld [vmem:[#allocation2 + $0xa] sm:$0x1]
        %1825 = vrot.lane.b32.xlu0 %v656, 22
        %v1826 = vpop.permute.xlu0 %1825
        %1827 = vrot.lane.b32.xlu0 %v660, 22
        %v1828 = vpop.permute.xlu0 %1827
        %vm1829 = vcmask 179200
        %v1830 = vsel %vm1829, %v1826, %v1828
        %1833 = vrot.lane.b32.xlu0 %v656, 66
        %v1834 = vpop.permute.xlu0 %1833
        %1835 = vrot.lane.b32.xlu0 %v660, 66
        %v1836 = vpop.permute.xlu0 %1835
        %v1837 = vsel %vm934, %v1834, %v1836
        %1840 = vrot.lane.b32.xlu0 %v783, 26
        %v1841 = vpop.permute.xlu0 %1840
        %1842 = vrot.lane.b32.xlu0 %v787, 26
        %v1843 = vpop.permute.xlu0 %1842
        %v1844 = vsel %vm1366, %v1841, %v1843
        %1847 = vrot.lane.b32.xlu0 %v1721, 74
        %v1848 = vpop.permute.xlu0 %1847
        %1849 = vrot.lane.b32.xlu0 %v1725, 74
        %v1850 = vpop.permute.xlu0 %1849
        %vm1851 = vcmask 605184
        %v1852 = vsel %vm1851, %v1848, %v1850
        %1855 = vrot.lane.b32.xlu0 %v1737, 42
        %v1856 = vpop.permute.xlu0 %1855
        %1857 = vrot.lane.b32.xlu0 %v1741, 42
        %v1858 = vpop.permute.xlu0 %1857
        %vm1859 = vcmask 343040
        %v1860 = vsel %vm1859, %v1856, %v1858
        %v1864 = vlaneseq
        %v1865 = vshrl.u32 %v1864, 7
        %v1866 = vsub.s32 0, %v1865
        %v1867 = vrot.slane %v1823, %v1866
        %1868 = vrot.lane.b32.xlu0 %v1867, 106
        %v1869 = vpop.permute.xlu0 %1868
        %v1872 = vlaneseq
        %v1873 = vshrl.u32 %v1872, 7
        %v1874 = vsub.s32 0, %v1873
        %v1875 = vrot.slane %v1824, %v1874
        %1876 = vrot.lane.b32.xlu0 %v1875, 106
        %v1877 = vpop.permute.xlu0 %1876
        %v1879 = vsel %vm719, %v656, %v1826
        %v1880 = vsel %vm719, %v660, %v1830
        %v1881 = vsel %vm722, %v1879, %v1834
        %v1882 = vsel %vm722, %v1880, %v1837
        %v1883 = vsel %vm725, %v1881, %v1841
        %v1884 = vsel %vm725, %v1882, %v1844
        %v1885 = vsel %vm728, %v1883, %v1848
        %v1886 = vsel %vm728, %v1884, %v1852
        %v1887 = vsel %vm731, %v1885, %v1856
        %v1888 = vsel %vm731, %v1886, %v1860
        %v1889 = vsel %vm734, %v1887, %v1869
        %v1890 = vsel %vm734, %v1888, %v1869
        %v1891 = vsel %vm737, %v1889, %v1877
        %v1892 = vsel %vm737, %v1890, %v1877
        %1893 = vset.pattern.permute.xlu0 10
        %1894 = vperm.xlu0 %1893, %v641
        %v1895 = vpop.permute.xlu0 %1894
        %v1897 = vmul.f32 %v1891, %v1895
        %v1898 = vmul.f32 %v1892, %v1895
        %1901 = vrot.lane.b32.xlu0 %v1897, 118
        %v1902 = vpop.permute.xlu0 %1901
        %1903 = vrot.lane.b32.xlu0 %v1898, 118
        %v1904 = vpop.permute.xlu0 %1903
        %vm1905 = vcmask 965632
        %v1906 = vsel %vm1905, %v1902, %v1904
        %v1909 = vadd.f32 %v1804, %v1906
        %v1910 = vadd.f32 %v1805, %v1904
        %1911 = vset.pattern.permute.xlu0 10
        %1912 = vperm.xlu0 %1911, %v642
        %v1913 = vpop.permute.xlu0 %1912
        %v1915 = vmul.f32 %v1891, %v1913
        %v1916 = vmul.f32 %v1892, %v1913
        %1919 = vrot.lane.b32.xlu0 %v1915, 118
        %v1920 = vpop.permute.xlu0 %1919
        %1921 = vrot.lane.b32.xlu0 %v1916, 118
        %v1922 = vpop.permute.xlu0 %1921
        %v1923 = vsel %vm1905, %v1920, %v1922
        %v1926 = vadd.f32 %v1821, %v1923
        %v1927 = vadd.f32 %v1822, %v1922
        %v1928 = vld [vmem:[#allocation2 + $0x15] sm:$0x3]
        %v1929 = vld [vmem:[#allocation2 + $0xb] sm:$0x1]
        %1930 = vrot.lane.b32.xlu0 %v656, 21
        %v1931 = vpop.permute.xlu0 %1930
        %1932 = vrot.lane.b32.xlu0 %v660, 21
        %v1933 = vpop.permute.xlu0 %1932
        %v1934 = vsel %vm1265, %v1931, %v1933
        %1937 = vrot.lane.b32.xlu0 %v656, 63
        %v1938 = vpop.permute.xlu0 %1937
        %1939 = vrot.lane.b32.xlu0 %v660, 63
        %v1940 = vpop.permute.xlu0 %1939
        %vm1941 = vcmask 515072
        %v1942 = vsel %vm1941, %v1938, %v1940
        %1945 = vrot.lane.b32.xlu0 %v783, 19
        %v1946 = vpop.permute.xlu0 %1945
        %1947 = vrot.lane.b32.xlu0 %v787, 19
        %v1948 = vpop.permute.xlu0 %1947
        %vm1949 = vcmask 154624
        %v1950 = vsel %vm1949, %v1946, %v1948
        %1953 = vrot.lane.b32.xlu0 %v1721, 59
        %v1954 = vpop.permute.xlu0 %1953
        %1955 = vrot.lane.b32.xlu0 %v1725, 59
        %v1956 = vpop.permute.xlu0 %1955
        %vm1957 = vcmask 482304
        %v1958 = vsel %vm1957, %v1954, %v1956
        %1961 = vrot.lane.b32.xlu0 %v1737, 11
        %v1962 = vpop.permute.xlu0 %1961
        %1963 = vrot.lane.b32.xlu0 %v1741, 11
        %v1964 = vpop.permute.xlu0 %1963
        %vm1965 = vcmask 89088
        %v1966 = vsel %vm1965, %v1962, %v1964
        %v1970 = vlaneseq
        %v1971 = vshrl.u32 %v1970, 7
        %v1972 = vsub.s32 0, %v1971
        %v1973 = vrot.slane %v1928, %v1972
        %v1974 = vlaneseq
        %v1975 = vshrl.u32 %v1974, 7
        %v1976 = vsub.s32 1, %v1975
        %v1977 = vrot.slane %v1928, %v1976
        %1978 = vrot.lane.b32.xlu0 %v1973, 43
        %v1979 = vpop.permute.xlu0 %1978
        %1980 = vrot.lane.b32.xlu0 %v1977, 43
        %v1981 = vpop.permute.xlu0 %1980
        %vm1982 = vcmask 351232
        %v1983 = vsel %vm1982, %v1979, %v1981
        %v1987 = vlaneseq
        %v1988 = vshrl.u32 %v1987, 7
        %v1989 = vsub.s32 0, %v1988
        %v1990 = vrot.slane %v1929, %v1989
        %1991 = vrot.lane.b32.xlu0 %v1990, 107
        %v1992 = vpop.permute.xlu0 %1991
        %v1994 = vsel %vm719, %v656, %v1931
        %v1995 = vsel %vm719, %v660, %v1934
        %v1996 = vsel %vm722, %v1994, %v1938
        %v1997 = vsel %vm722, %v1995, %v1942
        %v1998 = vsel %vm725, %v1996, %v1946
        %v1999 = vsel %vm725, %v1997, %v1950
        %v2000 = vsel %vm728, %v1998, %v1954
        %v2001 = vsel %vm728, %v1999, %v1958
        %v2002 = vsel %vm731, %v2000, %v1962
        %v2003 = vsel %vm731, %v2001, %v1966
        %v2004 = vsel %vm734, %v2002, %v1979
        %v2005 = vsel %vm734, %v2003, %v1983
        %v2006 = vsel %vm737, %v2004, %v1992
        %v2007 = vsel %vm737, %v2005, %v1992
        %2008 = vset.pattern.permute.xlu0 11
        %2009 = vperm.xlu0 %2008, %v641
        %v2010 = vpop.permute.xlu0 %2009
        %v2012 = vmul.f32 %v2006, %v2010
        %v2013 = vmul.f32 %v2007, %v2010
        %2016 = vrot.lane.b32.xlu0 %v2012, 117
        %v2017 = vpop.permute.xlu0 %2016
        %2018 = vrot.lane.b32.xlu0 %v2013, 117
        %v2019 = vpop.permute.xlu0 %2018
        %vm2020 = vcmask 957440
        %v2021 = vsel %vm2020, %v2017, %v2019
        %v2024 = vadd.f32 %v1909, %v2021
        %v2025 = vadd.f32 %v1910, %v2019
        %2026 = vset.pattern.permute.xlu0 11
        %2027 = vperm.xlu0 %2026, %v642
        %v2028 = vpop.permute.xlu0 %2027
        %v2030 = vmul.f32 %v2006, %v2028
        %v2031 = vmul.f32 %v2007, %v2028
        %2034 = vrot.lane.b32.xlu0 %v2030, 117
        %v2035 = vpop.permute.xlu0 %2034
        %2036 = vrot.lane.b32.xlu0 %v2031, 117
        %v2037 = vpop.permute.xlu0 %2036
        %v2038 = vsel %vm2020, %v2035, %v2037
        %v2041 = vadd.f32 %v1926, %v2038
        %v2042 = vadd.f32 %v1927, %v2037
        %v2043 = vld [vmem:[#allocation2 + $0x1b] sm:$0x1]
        %v2044 = vld [vmem:[#allocation2 + $0x16] sm:$0x1]
        %v2045 = vld [vmem:[#allocation2 + $0xc] sm:$0x1]
        %2046 = vrot.lane.b32.xlu0 %v656, 20
        %v2047 = vpop.permute.xlu0 %2046
        %2048 = vrot.lane.b32.xlu0 %v660, 20
        %v2049 = vpop.permute.xlu0 %2048
        %vm2050 = vcmask 162816
        %v2051 = vsel %vm2050, %v2047, %v2049
        %2054 = vrot.lane.b32.xlu0 %v656, 60
        %v2055 = vpop.permute.xlu0 %2054
        %2056 = vrot.lane.b32.xlu0 %v660, 60
        %v2057 = vpop.permute.xlu0 %2056
        %vm2058 = vcmask 490496
        %v2059 = vsel %vm2058, %v2055, %v2057
        %2062 = vrot.lane.b32.xlu0 %v783, 12
        %v2063 = vpop.permute.xlu0 %2062
        %2064 = vrot.lane.b32.xlu0 %v787, 12
        %v2065 = vpop.permute.xlu0 %2064
        %vm2066 = vcmask 97280
        %v2067 = vsel %vm2066, %v2063, %v2065
        %2070 = vrot.lane.b32.xlu0 %v1721, 44
        %v2071 = vpop.permute.xlu0 %2070
        %2072 = vrot.lane.b32.xlu0 %v1725, 44
        %v2073 = vpop.permute.xlu0 %2072
        %vm2074 = vcmask 359424
        %v2075 = vsel %vm2074, %v2071, %v2073
        %v2079 = vlaneseq
        %v2080 = vshrl.u32 %v2079, 7
        %v2081 = vsub.s32 0, %v2080
        %v2082 = vrot.slane %v2043, %v2081
        %2083 = vrot.lane.b32.xlu0 %v2082, 108
        %v2084 = vpop.permute.xlu0 %2083
        %v2087 = vlaneseq
        %v2088 = vshrl.u32 %v2087, 7
        %v2089 = vsub.s32 0, %v2088
        %v2090 = vrot.slane %v2044, %v2089
        %2091 = vrot.lane.b32.xlu0 %v2090, 108
        %v2092 = vpop.permute.xlu0 %2091
        %v2095 = vlaneseq
        %v2096 = vshrl.u32 %v2095, 7
        %v2097 = vsub.s32 0, %v2096
        %v2098 = vrot.slane %v2045, %v2097
        %2099 = vrot.lane.b32.xlu0 %v2098, 108
        %v2100 = vpop.permute.xlu0 %2099
        %v2102 = vsel %vm719, %v656, %v2047
        %v2103 = vsel %vm719, %v660, %v2051
        %v2104 = vsel %vm722, %v2102, %v2055
        %v2105 = vsel %vm722, %v2103, %v2059
        %v2106 = vsel %vm725, %v2104, %v2063
        %v2107 = vsel %vm725, %v2105, %v2067
        %v2108 = vsel %vm728, %v2106, %v2071
        %v2109 = vsel %vm728, %v2107, %v2075
        %v2110 = vsel %vm731, %v2108, %v2084
        %v2111 = vsel %vm731, %v2109, %v2084
        %v2112 = vsel %vm734, %v2110, %v2092
        %v2113 = vsel %vm734, %v2111, %v2092
        %v2114 = vsel %vm737, %v2112, %v2100
        %v2115 = vsel %vm737, %v2113, %v2100
        %2116 = vset.pattern.permute.xlu0 12
        %2117 = vperm.xlu0 %2116, %v641
        %v2118 = vpop.permute.xlu0 %2117
        %v2120 = vmul.f32 %v2114, %v2118
        %v2121 = vmul.f32 %v2115, %v2118
        %2124 = vrot.lane.b32.xlu0 %v2120, 116
        %v2125 = vpop.permute.xlu0 %2124
        %2126 = vrot.lane.b32.xlu0 %v2121, 116
        %v2127 = vpop.permute.xlu0 %2126
        %vm2128 = vcmask 949248
        %v2129 = vsel %vm2128, %v2125, %v2127
        %v2132 = vadd.f32 %v2024, %v2129
        %v2133 = vadd.f32 %v2025, %v2127
        %2134 = vset.pattern.permute.xlu0 12
        %2135 = vperm.xlu0 %2134, %v642
        %v2136 = vpop.permute.xlu0 %2135
        %v2138 = vmul.f32 %v2114, %v2136
        %v2139 = vmul.f32 %v2115, %v2136
        %2142 = vrot.lane.b32.xlu0 %v2138, 116
        %v2143 = vpop.permute.xlu0 %2142
        %2144 = vrot.lane.b32.xlu0 %v2139, 116
        %v2145 = vpop.permute.xlu0 %2144
        %v2146 = vsel %vm2128, %v2143, %v2145
        %v2149 = vadd.f32 %v2041, %v2146
        %v2150 = vadd.f32 %v2042, %v2145
        %v2151 = vld [vmem:[#allocation2 + $0x1b] sm:$0x3]
        %v2152 = vld [vmem:[#allocation2 + $0x16] sm:$0x3]
        %v2153 = vld [vmem:[#allocation2 + $0xd] sm:$0x1]
        %2154 = vrot.lane.b32.xlu0 %v656, 19
        %v2155 = vpop.permute.xlu0 %2154
        %2156 = vrot.lane.b32.xlu0 %v660, 19
        %v2157 = vpop.permute.xlu0 %2156
        %v2158 = vsel %vm1949, %v2155, %v2157
        %2161 = vrot.lane.b32.xlu0 %v656, 57
        %v2162 = vpop.permute.xlu0 %2161
        %2163 = vrot.lane.b32.xlu0 %v660, 57
        %v2164 = vpop.permute.xlu0 %2163
        %vm2165 = vcmask 465920
        %v2166 = vsel %vm2165, %v2162, %v2164
        %2169 = vrot.lane.b32.xlu0 %v783, 5
        %v2170 = vpop.permute.xlu0 %2169
        %2171 = vrot.lane.b32.xlu0 %v787, 5
        %v2172 = vpop.permute.xlu0 %2171
        %vm2173 = vcmask 39936
        %v2174 = vsel %vm2173, %v2170, %v2172
        %2177 = vrot.lane.b32.xlu0 %v1721, 29
        %v2178 = vpop.permute.xlu0 %2177
        %2179 = vrot.lane.b32.xlu0 %v1725, 29
        %v2180 = vpop.permute.xlu0 %2179
        %v2181 = vsel %vm1017, %v2178, %v2180
        %v2185 = vlaneseq
        %v2186 = vshrl.u32 %v2185, 7
        %v2187 = vsub.s32 0, %v2186
        %v2188 = vrot.slane %v2151, %v2187
        %v2189 = vlaneseq
        %v2190 = vshrl.u32 %v2189, 7
        %v2191 = vsub.s32 1, %v2190
        %v2192 = vrot.slane %v2151, %v2191
        %2193 = vrot.lane.b32.xlu0 %v2188, 77
        %v2194 = vpop.permute.xlu0 %2193
        %2195 = vrot.lane.b32.xlu0 %v2192, 77
        %v2196 = vpop.permute.xlu0 %2195
        %vm2197 = vcmask 629760
        %v2198 = vsel %vm2197, %v2194, %v2196
        %v2202 = vlaneseq
        %v2203 = vshrl.u32 %v2202, 7
        %v2204 = vsub.s32 0, %v2203
        %v2205 = vrot.slane %v2152, %v2204
        %v2206 = vlaneseq
        %v2207 = vshrl.u32 %v2206, 7
        %v2208 = vsub.s32 1, %v2207
        %v2209 = vrot.slane %v2152, %v2208
        %2210 = vrot.lane.b32.xlu0 %v2205, 45
        %v2211 = vpop.permute.xlu0 %2210
        %2212 = vrot.lane.b32.xlu0 %v2209, 45
        %v2213 = vpop.permute.xlu0 %2212
        %vm2214 = vcmask 367616
        %v2215 = vsel %vm2214, %v2211, %v2213
        %v2219 = vlaneseq
        %v2220 = vshrl.u32 %v2219, 7
        %v2221 = vsub.s32 0, %v2220
        %v2222 = vrot.slane %v2153, %v2221
        %2223 = vrot.lane.b32.xlu0 %v2222, 109
        %v2224 = vpop.permute.xlu0 %2223
        %v2226 = vsel %vm719, %v656, %v2155
        %v2227 = vsel %vm719, %v660, %v2158
        %v2228 = vsel %vm722, %v2226, %v2162
        %v2229 = vsel %vm722, %v2227, %v2166
        %v2230 = vsel %vm725, %v2228, %v2170
        %v2231 = vsel %vm725, %v2229, %v2174
        %v2232 = vsel %vm728, %v2230, %v2178
        %v2233 = vsel %vm728, %v2231, %v2181
        %v2234 = vsel %vm731, %v2232, %v2194
        %v2235 = vsel %vm731, %v2233, %v2198
        %v2236 = vsel %vm734, %v2234, %v2211
        %v2237 = vsel %vm734, %v2235, %v2215
        %v2238 = vsel %vm737, %v2236, %v2224
        %v2239 = vsel %vm737, %v2237, %v2224
        %2240 = vset.pattern.permute.xlu0 13
        %2241 = vperm.xlu0 %2240, %v641
        %v2242 = vpop.permute.xlu0 %2241
        %v2244 = vmul.f32 %v2238, %v2242
        %v2245 = vmul.f32 %v2239, %v2242
        %2248 = vrot.lane.b32.xlu0 %v2244, 115
        %v2249 = vpop.permute.xlu0 %2248
        %2250 = vrot.lane.b32.xlu0 %v2245, 115
        %v2251 = vpop.permute.xlu0 %2250
        %vm2252 = vcmask 941056
        %v2253 = vsel %vm2252, %v2249, %v2251
        %v2256 = vadd.f32 %v2132, %v2253
        %v2257 = vadd.f32 %v2133, %v2251
        %2258 = vset.pattern.permute.xlu0 13
        %2259 = vperm.xlu0 %2258, %v642
        %v2260 = vpop.permute.xlu0 %2259
        %v2262 = vmul.f32 %v2238, %v2260
        %v2263 = vmul.f32 %v2239, %v2260
        %2266 = vrot.lane.b32.xlu0 %v2262, 115
        %v2267 = vpop.permute.xlu0 %2266
        %2268 = vrot.lane.b32.xlu0 %v2263, 115
        %v2269 = vpop.permute.xlu0 %2268
        %v2270 = vsel %vm2252, %v2267, %v2269
        %v2273 = vadd.f32 %v2149, %v2270
        %v2274 = vadd.f32 %v2150, %v2269
        %v2275 = vld [vmem:[#allocation2 + $0x17] sm:$0x1]
        %v2276 = vld [vmem:[#allocation2 + $0xe] sm:$0x1]
        %2277 = vrot.lane.b32.xlu0 %v656, 18
        %v2278 = vpop.permute.xlu0 %2277
        %2279 = vrot.lane.b32.xlu0 %v660, 18
        %v2280 = vpop.permute.xlu0 %2279
        %vm2281 = vcmask 146432
        %v2282 = vsel %vm2281, %v2278, %v2280
        %2285 = vrot.lane.b32.xlu0 %v656, 54
        %v2286 = vpop.permute.xlu0 %2285
        %2287 = vrot.lane.b32.xlu0 %v660, 54
        %v2288 = vpop.permute.xlu0 %2287
        %v2289 = vsel %vm1382, %v2286, %v2288
        %2292 = vrot.lane.b32.xlu0 %v783, 126
        %v2293 = vpop.permute.xlu0 %2292
        %2294 = vrot.lane.b32.xlu0 %v787, 126
        %v2295 = vpop.permute.xlu0 %2294
        %v2296 = vsel %vm988, %v2293, %v2295
        %2299 = vrot.lane.b32.xlu0 %v1721, 14
        %v2300 = vpop.permute.xlu0 %2299
        %2301 = vrot.lane.b32.xlu0 %v1725, 14
        %v2302 = vpop.permute.xlu0 %2301
        %vm2303 = vcmask 113664
        %v2304 = vsel %vm2303, %v2300, %v2302
        %2307 = vrot.lane.b32.xlu0 %v2188, 46
        %v2308 = vpop.permute.xlu0 %2307
        %2309 = vrot.lane.b32.xlu0 %v2192, 46
        %v2310 = vpop.permute.xlu0 %2309
        %vm2311 = vcmask 375808
        %v2312 = vsel %vm2311, %v2308, %v2310
        %v2316 = vlaneseq
        %v2317 = vshrl.u32 %v2316, 7
        %v2318 = vsub.s32 0, %v2317
        %v2319 = vrot.slane %v2275, %v2318
        %2320 = vrot.lane.b32.xlu0 %v2319, 110
        %v2321 = vpop.permute.xlu0 %2320
        %v2324 = vlaneseq
        %v2325 = vshrl.u32 %v2324, 7
        %v2326 = vsub.s32 0, %v2325
        %v2327 = vrot.slane %v2276, %v2326
        %2328 = vrot.lane.b32.xlu0 %v2327, 110
        %v2329 = vpop.permute.xlu0 %2328
        %v2331 = vsel %vm719, %v656, %v2278
        %v2332 = vsel %vm719, %v660, %v2282
        %v2333 = vsel %vm722, %v2331, %v2286
        %v2334 = vsel %vm722, %v2332, %v2289
        %v2335 = vsel %vm725, %v2333, %v2296
        %v2336 = vsel %vm725, %v2334, %v2295
        %v2337 = vsel %vm728, %v2335, %v2300
        %v2338 = vsel %vm728, %v2336, %v2304
        %v2339 = vsel %vm731, %v2337, %v2308
        %v2340 = vsel %vm731, %v2338, %v2312
        %v2341 = vsel %vm734, %v2339, %v2321
        %v2342 = vsel %vm734, %v2340, %v2321
        %v2343 = vsel %vm737, %v2341, %v2329
        %v2344 = vsel %vm737, %v2342, %v2329
        %2345 = vset.pattern.permute.xlu0 14
        %2346 = vperm.xlu0 %2345, %v641
        %v2347 = vpop.permute.xlu0 %2346
        %v2349 = vmul.f32 %v2343, %v2347
        %v2350 = vmul.f32 %v2344, %v2347
        %2353 = vrot.lane.b32.xlu0 %v2349, 114
        %v2354 = vpop.permute.xlu0 %2353
        %2355 = vrot.lane.b32.xlu0 %v2350, 114
        %v2356 = vpop.permute.xlu0 %2355
        %vm2357 = vcmask 932864
        %v2358 = vsel %vm2357, %v2354, %v2356
        %v2361 = vadd.f32 %v2256, %v2358
        %v2362 = vadd.f32 %v2257, %v2356
        %2363 = vset.pattern.permute.xlu0 14
        %2364 = vperm.xlu0 %2363, %v642
        %v2365 = vpop.permute.xlu0 %2364
        %v2367 = vmul.f32 %v2343, %v2365
        %v2368 = vmul.f32 %v2344, %v2365
        %2371 = vrot.lane.b32.xlu0 %v2367, 114
        %v2372 = vpop.permute.xlu0 %2371
        %2373 = vrot.lane.b32.xlu0 %v2368, 114
        %v2374 = vpop.permute.xlu0 %2373
        %v2375 = vsel %vm2357, %v2372, %v2374
        %v2378 = vadd.f32 %v2273, %v2375
        %v2379 = vadd.f32 %v2274, %v2374
        %v2380 = vld [vmem:[#allocation2 + $0x17] sm:$0x3]
        %v2381 = vld [vmem:[#allocation2 + $0xf] sm:$0x1]
        %2382 = vrot.lane.b32.xlu0 %v656, 17
        %v2383 = vpop.permute.xlu0 %2382
        %2384 = vrot.lane.b32.xlu0 %v660, 17
        %v2385 = vpop.permute.xlu0 %2384
        %vm2386 = vcmask 138240
        %v2387 = vsel %vm2386, %v2383, %v2385
        %2390 = vrot.lane.b32.xlu0 %v656, 51
        %v2391 = vpop.permute.xlu0 %2390
        %2392 = vrot.lane.b32.xlu0 %v660, 51
        %v2393 = vpop.permute.xlu0 %2392
        %v2394 = vsel %vm1041, %v2391, %v2393
        %2397 = vrot.lane.b32.xlu0 %v783, 119
        %v2398 = vpop.permute.xlu0 %2397
        %2399 = vrot.lane.b32.xlu0 %v787, 119
        %v2400 = vpop.permute.xlu0 %2399
        %v2401 = vsel %vm1496, %v2398, %v2400
        %2404 = vrot.lane.b32.xlu0 %v1721, 127
        %v2405 = vpop.permute.xlu0 %2404
        %2406 = vrot.lane.b32.xlu0 %v1725, 127
        %v2407 = vpop.permute.xlu0 %2406
        %v2408 = vsel %vm881, %v2405, %v2407
        %2411 = vrot.lane.b32.xlu0 %v2188, 15
        %v2412 = vpop.permute.xlu0 %2411
        %2413 = vrot.lane.b32.xlu0 %v2192, 15
        %v2414 = vpop.permute.xlu0 %2413
        %vm2415 = vcmask 121856
        %v2416 = vsel %vm2415, %v2412, %v2414
        %v2420 = vlaneseq
        %v2421 = vshrl.u32 %v2420, 7
        %v2422 = vsub.s32 0, %v2421
        %v2423 = vrot.slane %v2380, %v2422
        %v2424 = vlaneseq
        %v2425 = vshrl.u32 %v2424, 7
        %v2426 = vsub.s32 1, %v2425
        %v2427 = vrot.slane %v2380, %v2426
        %2428 = vrot.lane.b32.xlu0 %v2423, 47
        %v2429 = vpop.permute.xlu0 %2428
        %2430 = vrot.lane.b32.xlu0 %v2427, 47
        %v2431 = vpop.permute.xlu0 %2430
        %v2432 = vsel %vm1488, %v2429, %v2431
        %v2436 = vlaneseq
        %v2437 = vshrl.u32 %v2436, 7
        %v2438 = vsub.s32 0, %v2437
        %v2439 = vrot.slane %v2381, %v2438
        %2440 = vrot.lane.b32.xlu0 %v2439, 111
        %v2441 = vpop.permute.xlu0 %2440
        %v2443 = vsel %vm719, %v656, %v2383
        %v2444 = vsel %vm719, %v660, %v2387
        %v2445 = vsel %vm722, %v2443, %v2391
        %v2446 = vsel %vm722, %v2444, %v2394
        %v2447 = vsel %vm725, %v2445, %v2401
        %v2448 = vsel %vm725, %v2446, %v2400
        %v2449 = vsel %vm728, %v2447, %v2408
        %v2450 = vsel %vm728, %v2448, %v2407
        %v2451 = vsel %vm731, %v2449, %v2412
        %v2452 = vsel %vm731, %v2450, %v2416
        %v2453 = vsel %vm734, %v2451, %v2429
        %v2454 = vsel %vm734, %v2452, %v2432
        %v2455 = vsel %vm737, %v2453, %v2441
        %v2456 = vsel %vm737, %v2454, %v2441
        %2457 = vset.pattern.permute.xlu0 15
        %2458 = vperm.xlu0 %2457, %v641
        %v2459 = vpop.permute.xlu0 %2458
        %v2461 = vmul.f32 %v2455, %v2459
        %v2462 = vmul.f32 %v2456, %v2459
        %2465 = vrot.lane.b32.xlu0 %v2461, 113
        %v2466 = vpop.permute.xlu0 %2465
        %2467 = vrot.lane.b32.xlu0 %v2462, 113
        %v2468 = vpop.permute.xlu0 %2467
        %vm2469 = vcmask 924672
        %v2470 = vsel %vm2469, %v2466, %v2468
        %v2473 = vadd.f32 %v2361, %v2470
        %v2474 = vadd.f32 %v2362, %v2468
        %2475 = vset.pattern.permute.xlu0 15
        %2476 = vperm.xlu0 %2475, %v642
        %v2477 = vpop.permute.xlu0 %2476
        %v2479 = vmul.f32 %v2455, %v2477
        %v2480 = vmul.f32 %v2456, %v2477
        %2483 = vrot.lane.b32.xlu0 %v2479, 113
        %v2484 = vpop.permute.xlu0 %2483
        %2485 = vrot.lane.b32.xlu0 %v2480, 113
        %v2486 = vpop.permute.xlu0 %2485
        %v2487 = vsel %vm2469, %v2484, %v2486
        %v2490 = vadd.f32 %v2378, %v2487
        %v2491 = vadd.f32 %v2379, %v2486
        %2492 = vrot.lane.b32.xlu0 %v656, 16
        %v2493 = vpop.permute.xlu0 %2492
        %2494 = vrot.lane.b32.xlu0 %v660, 16
        %v2495 = vpop.permute.xlu0 %2494
        %vm2496 = vcmask 130048
        %v2497 = vsel %vm2496, %v2493, %v2495
        %2500 = vrot.lane.b32.xlu0 %v656, 48
        %v2501 = vpop.permute.xlu0 %2500
        %2502 = vrot.lane.b32.xlu0 %v660, 48
        %v2503 = vpop.permute.xlu0 %2502
        %vm2504 = vcmask 392192
        %v2505 = vsel %vm2504, %v2501, %v2503
        %2508 = vrot.lane.b32.xlu0 %v675, 112
        %v2509 = vpop.permute.xlu0 %2508
        %2511 = vrot.lane.b32.xlu0 %v683, 112
        %v2512 = vpop.permute.xlu0 %2511
        %2514 = vrot.lane.b32.xlu0 %v691, 112
        %v2515 = vpop.permute.xlu0 %2514
        %2517 = vrot.lane.b32.xlu0 %v699, 112
        %v2518 = vpop.permute.xlu0 %2517
        %2520 = vrot.lane.b32.xlu0 %v707, 112
        %v2521 = vpop.permute.xlu0 %2520
        %v2523 = vsel %vm719, %v656, %v2493
        %v2524 = vsel %vm719, %v660, %v2497
        %v2525 = vsel %vm722, %v2523, %v2501
        %v2526 = vsel %vm722, %v2524, %v2505
        %v2527 = vsel %vm725, %v2525, %v2509
        %v2528 = vsel %vm725, %v2526, %v2509
        %v2529 = vsel %vm728, %v2527, %v2512
        %v2530 = vsel %vm728, %v2528, %v2512
        %v2531 = vsel %vm731, %v2529, %v2515
        %v2532 = vsel %vm731, %v2530, %v2515
        %v2533 = vsel %vm734, %v2531, %v2518
        %v2534 = vsel %vm734, %v2532, %v2518
        %v2535 = vsel %vm737, %v2533, %v2521
        %v2536 = vsel %vm737, %v2534, %v2521
        %2537 = vset.pattern.permute.xlu0 16
        %2538 = vperm.xlu0 %2537, %v641
        %v2539 = vpop.permute.xlu0 %2538
        %v2541 = vmul.f32 %v2535, %v2539
        %v2542 = vmul.f32 %v2536, %v2539
        %2545 = vrot.lane.b32.xlu0 %v2541, 112
        %v2546 = vpop.permute.xlu0 %2545
        %2547 = vrot.lane.b32.xlu0 %v2542, 112
        %v2548 = vpop.permute.xlu0 %2547
        %vm2549 = vcmask 916480
        %v2550 = vsel %vm2549, %v2546, %v2548
        %v2553 = vadd.f32 %v2473, %v2550
        %v2554 = vadd.f32 %v2474, %v2548
        %2555 = vset.pattern.permute.xlu0 16
        %2556 = vperm.xlu0 %2555, %v642
        %v2557 = vpop.permute.xlu0 %2556
        %v2559 = vmul.f32 %v2535, %v2557
        %v2560 = vmul.f32 %v2536, %v2557
        %2563 = vrot.lane.b32.xlu0 %v2559, 112
        %v2564 = vpop.permute.xlu0 %2563
        %2565 = vrot.lane.b32.xlu0 %v2560, 112
        %v2566 = vpop.permute.xlu0 %2565
        %v2567 = vsel %vm2549, %v2564, %v2566
        %v2570 = vadd.f32 %v2490, %v2567
        %v2571 = vadd.f32 %v2491, %v2566
        %2572 = vrot.lane.b32.xlu0 %v656, 15
        %v2573 = vpop.permute.xlu0 %2572
        %2574 = vrot.lane.b32.xlu0 %v660, 15
        %v2575 = vpop.permute.xlu0 %2574
        %v2576 = vsel %vm2415, %v2573, %v2575
        %2579 = vrot.lane.b32.xlu0 %v656, 45
        %v2580 = vpop.permute.xlu0 %2579
        %2581 = vrot.lane.b32.xlu0 %v660, 45
        %v2582 = vpop.permute.xlu0 %2581
        %v2583 = vsel %vm2214, %v2580, %v2582
        %2586 = vrot.lane.b32.xlu0 %v656, 105
        %v2587 = vpop.permute.xlu0 %2586
        %2588 = vrot.lane.b32.xlu0 %v660, 105
        %v2589 = vpop.permute.xlu0 %2588
        %vm2590 = vcmask 859136
        %v2591 = vsel %vm2590, %v2587, %v2589
        %2594 = vrot.lane.b32.xlu0 %v783, 97
        %v2595 = vpop.permute.xlu0 %2594
        %2596 = vrot.lane.b32.xlu0 %v787, 97
        %v2597 = vpop.permute.xlu0 %2596
        %vm2598 = vcmask 793600
        %v2599 = vsel %vm2598, %v2595, %v2597
        %2602 = vrot.lane.b32.xlu0 %v817, 49
        %v2603 = vpop.permute.xlu0 %2602
        %2604 = vrot.lane.b32.xlu0 %v821, 49
        %v2605 = vpop.permute.xlu0 %2604
        %vm2606 = vcmask 400384
        %v2607 = vsel %vm2606, %v2603, %v2605
        %2610 = vrot.lane.b32.xlu0 %v950, 113
        %v2611 = vpop.permute.xlu0 %2610
        %v2613 = vsel %vm719, %v656, %v2573
        %v2614 = vsel %vm719, %v660, %v2576
        %v2615 = vsel %vm722, %v2613, %v2580
        %v2616 = vsel %vm722, %v2614, %v2583
        %v2617 = vsel %vm725, %v2615, %v2587
        %v2618 = vsel %vm725, %v2616, %v2591
        %v2619 = vsel %vm728, %v2617, %v2595
        %v2620 = vsel %vm728, %v2618, %v2599
        %v2621 = vsel %vm731, %v2619, %v806
        %v2622 = vsel %vm731, %v2620, %v810
        %v2623 = vsel %vm734, %v2621, %v2603
        %v2624 = vsel %vm734, %v2622, %v2607
        %v2625 = vsel %vm737, %v2623, %v2611
        %v2626 = vsel %vm737, %v2624, %v2611
        %2627 = vset.pattern.permute.xlu0 17
        %2628 = vperm.xlu0 %2627, %v641
        %v2629 = vpop.permute.xlu0 %2628
        %v2631 = vmul.f32 %v2625, %v2629
        %v2632 = vmul.f32 %v2626, %v2629
        %2635 = vrot.lane.b32.xlu0 %v2631, 111
        %v2636 = vpop.permute.xlu0 %2635
        %2637 = vrot.lane.b32.xlu0 %v2632, 111
        %v2638 = vpop.permute.xlu0 %2637
        %vm2639 = vcmask 908288
        %v2640 = vsel %vm2639, %v2636, %v2638
        %v2643 = vadd.f32 %v2553, %v2640
        %v2644 = vadd.f32 %v2554, %v2638
        %2645 = vset.pattern.permute.xlu0 17
        %2646 = vperm.xlu0 %2645, %v642
        %v2647 = vpop.permute.xlu0 %2646
        %v2649 = vmul.f32 %v2625, %v2647
        %v2650 = vmul.f32 %v2626, %v2647
        %2653 = vrot.lane.b32.xlu0 %v2649, 111
        %v2654 = vpop.permute.xlu0 %2653
        %2655 = vrot.lane.b32.xlu0 %v2650, 111
        %v2656 = vpop.permute.xlu0 %2655
        %v2657 = vsel %vm2639, %v2654, %v2656
        %v2660 = vadd.f32 %v2570, %v2657
        %v2661 = vadd.f32 %v2571, %v2656
        %2662 = vrot.lane.b32.xlu0 %v656, 14
        %v2663 = vpop.permute.xlu0 %2662
        %2664 = vrot.lane.b32.xlu0 %v660, 14
        %v2665 = vpop.permute.xlu0 %2664
        %v2666 = vsel %vm2303, %v2663, %v2665
        %2669 = vrot.lane.b32.xlu0 %v656, 42
        %v2670 = vpop.permute.xlu0 %2669
        %2671 = vrot.lane.b32.xlu0 %v660, 42
        %v2672 = vpop.permute.xlu0 %2671
        %v2673 = vsel %vm1859, %v2670, %v2672
        %2676 = vrot.lane.b32.xlu0 %v656, 98
        %v2677 = vpop.permute.xlu0 %2676
        %2678 = vrot.lane.b32.xlu0 %v660, 98
        %v2679 = vpop.permute.xlu0 %2678
        %vm2680 = vcmask 801792
        %v2681 = vsel %vm2680, %v2677, %v2679
        %2684 = vrot.lane.b32.xlu0 %v800, 50
        %v2685 = vpop.permute.xlu0 %2684
        %2686 = vrot.lane.b32.xlu0 %v804, 50
        %v2687 = vpop.permute.xlu0 %2686
        %vm2688 = vcmask 408576
        %v2689 = vsel %vm2688, %v2685, %v2687
        %2692 = vrot.lane.b32.xlu0 %v1166, 114
        %v2693 = vpop.permute.xlu0 %2692
        %2695 = vrot.lane.b32.xlu0 %v1174, 114
        %v2696 = vpop.permute.xlu0 %2695
        %v2698 = vsel %vm719, %v656, %v2663
        %v2699 = vsel %vm719, %v660, %v2666
        %v2700 = vsel %vm722, %v2698, %v2670
        %v2701 = vsel %vm722, %v2699, %v2673
        %v2702 = vsel %vm725, %v2700, %v2677
        %v2703 = vsel %vm725, %v2701, %v2681
        %v2704 = vsel %vm728, %v2702, %v923
        %v2705 = vsel %vm728, %v2703, %v927
        %v2706 = vsel %vm731, %v2704, %v2685
        %v2707 = vsel %vm731, %v2705, %v2689
        %v2708 = vsel %vm734, %v2706, %v2693
        %v2709 = vsel %vm734, %v2707, %v2693
        %v2710 = vsel %vm737, %v2708, %v2696
        %v2711 = vsel %vm737, %v2709, %v2696
        %2712 = vset.pattern.permute.xlu0 18
        %2713 = vperm.xlu0 %2712, %v641
        %v2714 = vpop.permute.xlu0 %2713
        %v2716 = vmul.f32 %v2710, %v2714
        %v2717 = vmul.f32 %v2711, %v2714
        %2720 = vrot.lane.b32.xlu0 %v2716, 110
        %v2721 = vpop.permute.xlu0 %2720
        %2722 = vrot.lane.b32.xlu0 %v2717, 110
        %v2723 = vpop.permute.xlu0 %2722
        %vm2724 = vcmask 900096
        %v2725 = vsel %vm2724, %v2721, %v2723
        %v2728 = vadd.f32 %v2643, %v2725
        %v2729 = vadd.f32 %v2644, %v2723
        %2730 = vset.pattern.permute.xlu0 18
        %2731 = vperm.xlu0 %2730, %v642
        %v2732 = vpop.permute.xlu0 %2731
        %v2734 = vmul.f32 %v2710, %v2732
        %v2735 = vmul.f32 %v2711, %v2732
        %2738 = vrot.lane.b32.xlu0 %v2734, 110
        %v2739 = vpop.permute.xlu0 %2738
        %2740 = vrot.lane.b32.xlu0 %v2735, 110
        %v2741 = vpop.permute.xlu0 %2740
        %v2742 = vsel %vm2724, %v2739, %v2741
        %v2745 = vadd.f32 %v2660, %v2742
        %v2746 = vadd.f32 %v2661, %v2741
        %2747 = vrot.lane.b32.xlu0 %v656, 13
        %v2748 = vpop.permute.xlu0 %2747
        %2749 = vrot.lane.b32.xlu0 %v660, 13
        %v2750 = vpop.permute.xlu0 %2749
        %vm2751 = vcmask 105472
        %v2752 = vsel %vm2751, %v2748, %v2750
        %2755 = vrot.lane.b32.xlu0 %v656, 39
        %v2756 = vpop.permute.xlu0 %2755
        %2757 = vrot.lane.b32.xlu0 %v660, 39
        %v2758 = vpop.permute.xlu0 %2757
        %v2759 = vsel %vm1521, %v2756, %v2758
        %2762 = vrot.lane.b32.xlu0 %v656, 91
        %v2763 = vpop.permute.xlu0 %2762
        %2764 = vrot.lane.b32.xlu0 %v660, 91
        %v2765 = vpop.permute.xlu0 %2764
        %vm2766 = vcmask 744448
        %v2767 = vsel %vm2766, %v2763, %v2765
        %2770 = vrot.lane.b32.xlu0 %v783, 67
        %v2771 = vpop.permute.xlu0 %2770
        %2772 = vrot.lane.b32.xlu0 %v787, 67
        %v2773 = vpop.permute.xlu0 %2772
        %vm2774 = vcmask 547840
        %v2775 = vsel %vm2774, %v2771, %v2773
        %2778 = vrot.lane.b32.xlu0 %v800, 19
        %v2779 = vpop.permute.xlu0 %2778
        %2780 = vrot.lane.b32.xlu0 %v804, 19
        %v2781 = vpop.permute.xlu0 %2780
        %v2782 = vsel %vm1949, %v2779, %v2781
        %2785 = vrot.lane.b32.xlu0 %v1273, 51
        %v2786 = vpop.permute.xlu0 %2785
        %2787 = vrot.lane.b32.xlu0 %v1277, 51
        %v2788 = vpop.permute.xlu0 %2787
        %v2789 = vsel %vm1041, %v2786, %v2788
        %2792 = vrot.lane.b32.xlu0 %v1406, 115
        %v2793 = vpop.permute.xlu0 %2792
        %v2795 = vsel %vm719, %v656, %v2748
        %v2796 = vsel %vm719, %v660, %v2752
        %v2797 = vsel %vm722, %v2795, %v2756
        %v2798 = vsel %vm722, %v2796, %v2759
        %v2799 = vsel %vm725, %v2797, %v2763
        %v2800 = vsel %vm725, %v2798, %v2767
        %v2801 = vsel %vm728, %v2799, %v2771
        %v2802 = vsel %vm728, %v2800, %v2775
        %v2803 = vsel %vm731, %v2801, %v2779
        %v2804 = vsel %vm731, %v2802, %v2782
        %v2805 = vsel %vm734, %v2803, %v2786
        %v2806 = vsel %vm734, %v2804, %v2789
        %v2807 = vsel %vm737, %v2805, %v2793
        %v2808 = vsel %vm737, %v2806, %v2793
        %2809 = vset.pattern.permute.xlu0 19
        %2810 = vperm.xlu0 %2809, %v641
        %v2811 = vpop.permute.xlu0 %2810
        %v2813 = vmul.f32 %v2807, %v2811
        %v2814 = vmul.f32 %v2808, %v2811
        %2817 = vrot.lane.b32.xlu0 %v2813, 109
        %v2818 = vpop.permute.xlu0 %2817
        %2819 = vrot.lane.b32.xlu0 %v2814, 109
        %v2820 = vpop.permute.xlu0 %2819
        %vm2821 = vcmask 891904
        %v2822 = vsel %vm2821, %v2818, %v2820
        %v2825 = vadd.f32 %v2728, %v2822
        %v2826 = vadd.f32 %v2729, %v2820
        %2827 = vset.pattern.permute.xlu0 19
        %2828 = vperm.xlu0 %2827, %v642
        %v2829 = vpop.permute.xlu0 %2828
        %v2831 = vmul.f32 %v2807, %v2829
        %v2832 = vmul.f32 %v2808, %v2829
        %2835 = vrot.lane.b32.xlu0 %v2831, 109
        %v2836 = vpop.permute.xlu0 %2835
        %2837 = vrot.lane.b32.xlu0 %v2832, 109
        %v2838 = vpop.permute.xlu0 %2837
        %v2839 = vsel %vm2821, %v2836, %v2838
        %v2842 = vadd.f32 %v2745, %v2839
        %v2843 = vadd.f32 %v2746, %v2838
        %2844 = vrot.lane.b32.xlu0 %v656, 12
        %v2845 = vpop.permute.xlu0 %2844
        %2846 = vrot.lane.b32.xlu0 %v660, 12
        %v2847 = vpop.permute.xlu0 %2846
        %v2848 = vsel %vm2066, %v2845, %v2847
        %2851 = vrot.lane.b32.xlu0 %v656, 36
        %v2852 = vpop.permute.xlu0 %2851
        %2853 = vrot.lane.b32.xlu0 %v660, 36
        %v2854 = vpop.permute.xlu0 %2853
        %v2855 = vsel %vm1158, %v2852, %v2854
        %2858 = vrot.lane.b32.xlu0 %v783, 52
        %v2859 = vpop.permute.xlu0 %2858
        %2860 = vrot.lane.b32.xlu0 %v787, 52
        %v2861 = vpop.permute.xlu0 %2860
        %vm2862 = vcmask 424960
        %v2863 = vsel %vm2862, %v2859, %v2861
        %2866 = vrot.lane.b32.xlu0 %v1614, 116
        %v2867 = vpop.permute.xlu0 %2866
        %2869 = vrot.lane.b32.xlu0 %v1622, 116
        %v2870 = vpop.permute.xlu0 %2869
        %2872 = vrot.lane.b32.xlu0 %v1630, 116
        %v2873 = vpop.permute.xlu0 %2872
        %v2875 = vsel %vm719, %v656, %v2845
        %v2876 = vsel %vm719, %v660, %v2848
        %v2877 = vsel %vm722, %v2875, %v2852
        %v2878 = vsel %vm722, %v2876, %v2855
        %v2879 = vsel %vm725, %v2877, %v1139
        %v2880 = vsel %vm725, %v2878, %v1143
        %v2881 = vsel %vm728, %v2879, %v2859
        %v2882 = vsel %vm728, %v2880, %v2863
        %v2883 = vsel %vm731, %v2881, %v2867
        %v2884 = vsel %vm731, %v2882, %v2867
        %v2885 = vsel %vm734, %v2883, %v2870
        %v2886 = vsel %vm734, %v2884, %v2870
        %v2887 = vsel %vm737, %v2885, %v2873
        %v2888 = vsel %vm737, %v2886, %v2873
        %2889 = vset.pattern.permute.xlu0 20
        %2890 = vperm.xlu0 %2889, %v641
        %v2891 = vpop.permute.xlu0 %2890
        %v2893 = vmul.f32 %v2887, %v2891
        %v2894 = vmul.f32 %v2888, %v2891
        %2897 = vrot.lane.b32.xlu0 %v2893, 108
        %v2898 = vpop.permute.xlu0 %2897
        %2899 = vrot.lane.b32.xlu0 %v2894, 108
        %v2900 = vpop.permute.xlu0 %2899
        %vm2901 = vcmask 883712
        %v2902 = vsel %vm2901, %v2898, %v2900
        %v2905 = vadd.f32 %v2825, %v2902
        %v2906 = vadd.f32 %v2826, %v2900
        %2907 = vset.pattern.permute.xlu0 20
        %2908 = vperm.xlu0 %2907, %v642
        %v2909 = vpop.permute.xlu0 %2908
        %v2911 = vmul.f32 %v2887, %v2909
        %v2912 = vmul.f32 %v2888, %v2909
        %2915 = vrot.lane.b32.xlu0 %v2911, 108
        %v2916 = vpop.permute.xlu0 %2915
        %2917 = vrot.lane.b32.xlu0 %v2912, 108
        %v2918 = vpop.permute.xlu0 %2917
        %v2919 = vsel %vm2901, %v2916, %v2918
        %v2922 = vadd.f32 %v2842, %v2919
        %v2923 = vadd.f32 %v2843, %v2918
        %2924 = vrot.lane.b32.xlu0 %v656, 11
        %v2925 = vpop.permute.xlu0 %2924
        %2926 = vrot.lane.b32.xlu0 %v660, 11
        %v2927 = vpop.permute.xlu0 %2926
        %v2928 = vsel %vm1965, %v2925, %v2927
        %2931 = vrot.lane.b32.xlu0 %v656, 33
        %v2932 = vpop.permute.xlu0 %2931
        %2933 = vrot.lane.b32.xlu0 %v660, 33
        %v2934 = vpop.permute.xlu0 %2933
        %v2935 = vsel %vm843, %v2932, %v2934
        %2938 = vrot.lane.b32.xlu0 %v656, 77
        %v2939 = vpop.permute.xlu0 %2938
        %2940 = vrot.lane.b32.xlu0 %v660, 77
        %v2941 = vpop.permute.xlu0 %2940
        %v2942 = vsel %vm2197, %v2939, %v2941
        %2945 = vrot.lane.b32.xlu0 %v783, 37
        %v2946 = vpop.permute.xlu0 %2945
        %2947 = vrot.lane.b32.xlu0 %v787, 37
        %v2948 = vpop.permute.xlu0 %2947
        %v2949 = vsel %vm1299, %v2946, %v2948
        %2952 = vrot.lane.b32.xlu0 %v1721, 85
        %v2953 = vpop.permute.xlu0 %2952
        %2954 = vrot.lane.b32.xlu0 %v1725, 85
        %v2955 = vpop.permute.xlu0 %2954
        %vm2956 = vcmask 695296
        %v2957 = vsel %vm2956, %v2953, %v2955
        %2960 = vrot.lane.b32.xlu0 %v1737, 53
        %v2961 = vpop.permute.xlu0 %2960
        %2962 = vrot.lane.b32.xlu0 %v1741, 53
        %v2963 = vpop.permute.xlu0 %2962
        %vm2964 = vcmask 433152
        %v2965 = vsel %vm2964, %v2961, %v2963
        %2968 = vrot.lane.b32.xlu0 %v1867, 117
        %v2969 = vpop.permute.xlu0 %2968
        %v2971 = vsel %vm719, %v656, %v2925
        %v2972 = vsel %vm719, %v660, %v2928
        %v2973 = vsel %vm722, %v2971, %v2932
        %v2974 = vsel %vm722, %v2972, %v2935
        %v2975 = vsel %vm725, %v2973, %v2939
        %v2976 = vsel %vm725, %v2974, %v2942
        %v2977 = vsel %vm728, %v2975, %v2946
        %v2978 = vsel %vm728, %v2976, %v2949
        %v2979 = vsel %vm731, %v2977, %v2953
        %v2980 = vsel %vm731, %v2978, %v2957
        %v2981 = vsel %vm734, %v2979, %v2961
        %v2982 = vsel %vm734, %v2980, %v2965
        %v2983 = vsel %vm737, %v2981, %v2969
        %v2984 = vsel %vm737, %v2982, %v2969
        %2985 = vset.pattern.permute.xlu0 21
        %2986 = vperm.xlu0 %2985, %v641
        %v2987 = vpop.permute.xlu0 %2986
        %v2989 = vmul.f32 %v2983, %v2987
        %v2990 = vmul.f32 %v2984, %v2987
        %2993 = vrot.lane.b32.xlu0 %v2989, 107
        %v2994 = vpop.permute.xlu0 %2993
        %2995 = vrot.lane.b32.xlu0 %v2990, 107
        %v2996 = vpop.permute.xlu0 %2995
        %vm2997 = vcmask 875520
        %v2998 = vsel %vm2997, %v2994, %v2996
        %v3001 = vadd.f32 %v2905, %v2998
        %v3002 = vadd.f32 %v2906, %v2996
        %3003 = vset.pattern.permute.xlu0 21
        %3004 = vperm.xlu0 %3003, %v642
        %v3005 = vpop.permute.xlu0 %3004
        %v3007 = vmul.f32 %v2983, %v3005
        %v3008 = vmul.f32 %v2984, %v3005
        %3011 = vrot.lane.b32.xlu0 %v3007, 107
        %v3012 = vpop.permute.xlu0 %3011
        %3013 = vrot.lane.b32.xlu0 %v3008, 107
        %v3014 = vpop.permute.xlu0 %3013
        %v3015 = vsel %vm2997, %v3012, %v3014
        %v3018 = vadd.f32 %v2922, %v3015
        %v3019 = vadd.f32 %v2923, %v3014
        %3020 = vrot.lane.b32.xlu0 %v656, 10
        %v3021 = vpop.permute.xlu0 %3020
        %3022 = vrot.lane.b32.xlu0 %v660, 10
        %v3023 = vpop.permute.xlu0 %3022
        %vm3024 = vcmask 80896
        %v3025 = vsel %vm3024, %v3021, %v3023
        %3028 = vrot.lane.b32.xlu0 %v656, 70
        %v3029 = vpop.permute.xlu0 %3028
        %3030 = vrot.lane.b32.xlu0 %v660, 70
        %v3031 = vpop.permute.xlu0 %3030
        %vm3032 = vcmask 572416
        %v3033 = vsel %vm3032, %v3029, %v3031
        %3036 = vrot.lane.b32.xlu0 %v783, 22
        %v3037 = vpop.permute.xlu0 %3036
        %3038 = vrot.lane.b32.xlu0 %v787, 22
        %v3039 = vpop.permute.xlu0 %3038
        %v3040 = vsel %vm1829, %v3037, %v3039
        %3043 = vrot.lane.b32.xlu0 %v1721, 54
        %v3044 = vpop.permute.xlu0 %3043
        %3045 = vrot.lane.b32.xlu0 %v1725, 54
        %v3046 = vpop.permute.xlu0 %3045
        %v3047 = vsel %vm1382, %v3044, %v3046
        %3050 = vrot.lane.b32.xlu0 %v2082, 118
        %v3051 = vpop.permute.xlu0 %3050
        %3053 = vrot.lane.b32.xlu0 %v2090, 118
        %v3054 = vpop.permute.xlu0 %3053
        %v3056 = vsel %vm719, %v656, %v3021
        %v3057 = vsel %vm719, %v660, %v3025
        %v3058 = vsel %vm722, %v3056, %v907
        %v3059 = vsel %vm722, %v3057, %v911
        %v3060 = vsel %vm725, %v3058, %v3029
        %v3061 = vsel %vm725, %v3059, %v3033
        %v3062 = vsel %vm728, %v3060, %v3037
        %v3063 = vsel %vm728, %v3061, %v3040
        %v3064 = vsel %vm731, %v3062, %v3044
        %v3065 = vsel %vm731, %v3063, %v3047
        %v3066 = vsel %vm734, %v3064, %v3051
        %v3067 = vsel %vm734, %v3065, %v3051
        %v3068 = vsel %vm737, %v3066, %v3054
        %v3069 = vsel %vm737, %v3067, %v3054
        %3070 = vset.pattern.permute.xlu0 22
        %3071 = vperm.xlu0 %3070, %v641
        %v3072 = vpop.permute.xlu0 %3071
        %v3074 = vmul.f32 %v3068, %v3072
        %v3075 = vmul.f32 %v3069, %v3072
        %3078 = vrot.lane.b32.xlu0 %v3074, 106
        %v3079 = vpop.permute.xlu0 %3078
        %3080 = vrot.lane.b32.xlu0 %v3075, 106
        %v3081 = vpop.permute.xlu0 %3080
        %vm3082 = vcmask 867328
        %v3083 = vsel %vm3082, %v3079, %v3081
        %v3086 = vadd.f32 %v3001, %v3083
        %v3087 = vadd.f32 %v3002, %v3081
        %3088 = vset.pattern.permute.xlu0 22
        %3089 = vperm.xlu0 %3088, %v642
        %v3090 = vpop.permute.xlu0 %3089
        %v3092 = vmul.f32 %v3068, %v3090
        %v3093 = vmul.f32 %v3069, %v3090
        %3096 = vrot.lane.b32.xlu0 %v3092, 106
        %v3097 = vpop.permute.xlu0 %3096
        %3098 = vrot.lane.b32.xlu0 %v3093, 106
        %v3099 = vpop.permute.xlu0 %3098
        %v3100 = vsel %vm3082, %v3097, %v3099
        %v3103 = vadd.f32 %v3018, %v3100
        %v3104 = vadd.f32 %v3019, %v3099
        %3105 = vrot.lane.b32.xlu0 %v656, 9
        %v3106 = vpop.permute.xlu0 %3105
        %3107 = vrot.lane.b32.xlu0 %v660, 9
        %v3108 = vpop.permute.xlu0 %3107
        %vm3109 = vcmask 72704
        %v3110 = vsel %vm3109, %v3106, %v3108
        %3113 = vrot.lane.b32.xlu0 %v783, 7
        %v3114 = vpop.permute.xlu0 %3113
        %3115 = vrot.lane.b32.xlu0 %v787, 7
        %v3116 = vpop.permute.xlu0 %3115
        %v3117 = vsel %vm1504, %v3114, %v3116
        %3120 = vrot.lane.b32.xlu0 %v1721, 23
        %v3121 = vpop.permute.xlu0 %3120
        %3122 = vrot.lane.b32.xlu0 %v1725, 23
        %v3123 = vpop.permute.xlu0 %3122
        %v3124 = vsel %vm1699, %v3121, %v3123
        %3127 = vrot.lane.b32.xlu0 %v2188, 55
        %v3128 = vpop.permute.xlu0 %3127
        %3129 = vrot.lane.b32.xlu0 %v2192, 55
        %v3130 = vpop.permute.xlu0 %3129
        %vm3131 = vcmask 449536
        %v3132 = vsel %vm3131, %v3128, %v3130
        %3135 = vrot.lane.b32.xlu0 %v2319, 119
        %v3136 = vpop.permute.xlu0 %3135
        %v3138 = vsel %vm719, %v656, %v3106
        %v3139 = vsel %vm719, %v660, %v3110
        %v3140 = vsel %vm722, %v3138, %v1239
        %v3141 = vsel %vm722, %v3139, %v1243
        %v3142 = vsel %vm725, %v3140, %v1938
        %v3143 = vsel %vm725, %v3141, %v1942
        %v3144 = vsel %vm728, %v3142, %v3114
        %v3145 = vsel %vm728, %v3143, %v3117
        %v3146 = vsel %vm731, %v3144, %v3121
        %v3147 = vsel %vm731, %v3145, %v3124
        %v3148 = vsel %vm734, %v3146, %v3128
        %v3149 = vsel %vm734, %v3147, %v3132
        %v3150 = vsel %vm737, %v3148, %v3136
        %v3151 = vsel %vm737, %v3149, %v3136
        %3152 = vset.pattern.permute.xlu0 23
        %3153 = vperm.xlu0 %3152, %v641
        %v3154 = vpop.permute.xlu0 %3153
        %v3156 = vmul.f32 %v3150, %v3154
        %v3157 = vmul.f32 %v3151, %v3154
        %3160 = vrot.lane.b32.xlu0 %v3156, 105
        %v3161 = vpop.permute.xlu0 %3160
        %3162 = vrot.lane.b32.xlu0 %v3157, 105
        %v3163 = vpop.permute.xlu0 %3162
        %v3164 = vsel %vm2590, %v3161, %v3163
        %v3167 = vadd.f32 %v3086, %v3164
        %v3168 = vadd.f32 %v3087, %v3163
        %3169 = vset.pattern.permute.xlu0 23
        %3170 = vperm.xlu0 %3169, %v642
        %v3171 = vpop.permute.xlu0 %3170
        %v3173 = vmul.f32 %v3150, %v3171
        %v3174 = vmul.f32 %v3151, %v3171
        %3177 = vrot.lane.b32.xlu0 %v3173, 105
        %v3178 = vpop.permute.xlu0 %3177
        %3179 = vrot.lane.b32.xlu0 %v3174, 105
        %v3180 = vpop.permute.xlu0 %3179
        %v3181 = vsel %vm2590, %v3178, %v3180
        %v3184 = vadd.f32 %v3103, %v3181
        %v3185 = vadd.f32 %v3104, %v3180
        %3186 = vrot.lane.b32.xlu0 %v656, 8
        %v3187 = vpop.permute.xlu0 %3186
        %3188 = vrot.lane.b32.xlu0 %v660, 8
        %v3189 = vpop.permute.xlu0 %3188
        %vm3190 = vcmask 64512
        %v3191 = vsel %vm3190, %v3187, %v3189
        %3194 = vrot.lane.b32.xlu0 %v656, 56
        %v3195 = vpop.permute.xlu0 %3194
        %3196 = vrot.lane.b32.xlu0 %v660, 56
        %v3197 = vpop.permute.xlu0 %3196
        %vm3198 = vcmask 457728
        %v3199 = vsel %vm3198, %v3195, %v3197
        %3202 = vrot.lane.b32.xlu0 %v675, 120
        %v3203 = vpop.permute.xlu0 %3202
        %3205 = vrot.lane.b32.xlu0 %v683, 120
        %v3206 = vpop.permute.xlu0 %3205
        %3208 = vrot.lane.b32.xlu0 %v691, 120
        %v3209 = vpop.permute.xlu0 %3208
        %3211 = vrot.lane.b32.xlu0 %v699, 120
        %v3212 = vpop.permute.xlu0 %3211
        %v3214 = vsel %vm719, %v656, %v3187
        %v3215 = vsel %vm719, %v660, %v3191
        %v3216 = vsel %vm722, %v3214, %v1587
        %v3217 = vsel %vm722, %v3215, %v1591
        %v3218 = vsel %vm725, %v3216, %v3195
        %v3219 = vsel %vm725, %v3217, %v3199
        %v3220 = vsel %vm728, %v3218, %v3203
        %v3221 = vsel %vm728, %v3219, %v3203
        %v3222 = vsel %vm731, %v3220, %v3206
        %v3223 = vsel %vm731, %v3221, %v3206
        %v3224 = vsel %vm734, %v3222, %v3209
        %v3225 = vsel %vm734, %v3223, %v3209
        %v3226 = vsel %vm737, %v3224, %v3212
        %v3227 = vsel %vm737, %v3225, %v3212
        %3228 = vset.pattern.permute.xlu0 24
        %3229 = vperm.xlu0 %3228, %v641
        %v3230 = vpop.permute.xlu0 %3229
        %v3232 = vmul.f32 %v3226, %v3230
        %v3233 = vmul.f32 %v3227, %v3230
        %3236 = vrot.lane.b32.xlu0 %v3232, 104
        %v3237 = vpop.permute.xlu0 %3236
        %3238 = vrot.lane.b32.xlu0 %v3233, 104
        %v3239 = vpop.permute.xlu0 %3238
        %vm3240 = vcmask 850944
        %v3241 = vsel %vm3240, %v3237, %v3239
        %v3244 = vadd.f32 %v3167, %v3241
        %v3245 = vadd.f32 %v3168, %v3239
        %3246 = vset.pattern.permute.xlu0 24
        %3247 = vperm.xlu0 %3246, %v642
        %v3248 = vpop.permute.xlu0 %3247
        %v3250 = vmul.f32 %v3226, %v3248
        %v3251 = vmul.f32 %v3227, %v3248
        %3254 = vrot.lane.b32.xlu0 %v3250, 104
        %v3255 = vpop.permute.xlu0 %3254
        %3256 = vrot.lane.b32.xlu0 %v3251, 104
        %v3257 = vpop.permute.xlu0 %3256
        %v3258 = vsel %vm3240, %v3255, %v3257
        %v3261 = vadd.f32 %v3184, %v3258
        %v3262 = vadd.f32 %v3185, %v3257
        %3263 = vrot.lane.b32.xlu0 %v656, 7
        %v3264 = vpop.permute.xlu0 %3263
        %3265 = vrot.lane.b32.xlu0 %v660, 7
        %v3266 = vpop.permute.xlu0 %3265
        %v3267 = vsel %vm1504, %v3264, %v3266
        %3270 = vrot.lane.b32.xlu0 %v656, 49
        %v3271 = vpop.permute.xlu0 %3270
        %3272 = vrot.lane.b32.xlu0 %v660, 49
        %v3273 = vpop.permute.xlu0 %3272
        %v3274 = vsel %vm2606, %v3271, %v3273
        %3277 = vrot.lane.b32.xlu0 %v800, 57
        %v3278 = vpop.permute.xlu0 %3277
        %3279 = vrot.lane.b32.xlu0 %v804, 57
        %v3280 = vpop.permute.xlu0 %3279
        %v3281 = vsel %vm2165, %v3278, %v3280
        %3284 = vrot.lane.b32.xlu0 %v1166, 121
        %v3285 = vpop.permute.xlu0 %3284
        %v3287 = vsel %vm719, %v656, %v3264
        %v3288 = vsel %vm719, %v660, %v3267
        %v3289 = vsel %vm722, %v3287, %v1931
        %v3290 = vsel %vm722, %v3288, %v1934
        %v3291 = vsel %vm725, %v3289, %v3271
        %v3292 = vsel %vm725, %v3290, %v3274
        %v3293 = vsel %vm728, %v3291, %v2587
        %v3294 = vsel %vm728, %v3292, %v2591
        %v3295 = vsel %vm731, %v3293, %v789
        %v3296 = vsel %vm731, %v3294, %v793
        %v3297 = vsel %vm734, %v3295, %v3278
        %v3298 = vsel %vm734, %v3296, %v3281
        %v3299 = vsel %vm737, %v3297, %v3285
        %v3300 = vsel %vm737, %v3298, %v3285
        %3301 = vset.pattern.permute.xlu0 25
        %3302 = vperm.xlu0 %3301, %v641
        %v3303 = vpop.permute.xlu0 %3302
        %v3305 = vmul.f32 %v3299, %v3303
        %v3306 = vmul.f32 %v3300, %v3303
        %3309 = vrot.lane.b32.xlu0 %v3305, 103
        %v3310 = vpop.permute.xlu0 %3309
        %3311 = vrot.lane.b32.xlu0 %v3306, 103
        %v3312 = vpop.permute.xlu0 %3311
        %vm3313 = vcmask 842752
        %v3314 = vsel %vm3313, %v3310, %v3312
        %v3317 = vadd.f32 %v3244, %v3314
        %v3318 = vadd.f32 %v3245, %v3312
        %3319 = vset.pattern.permute.xlu0 25
        %3320 = vperm.xlu0 %3319, %v642
        %v3321 = vpop.permute.xlu0 %3320
        %v3323 = vmul.f32 %v3299, %v3321
        %v3324 = vmul.f32 %v3300, %v3321
        %3327 = vrot.lane.b32.xlu0 %v3323, 103
        %v3328 = vpop.permute.xlu0 %3327
        %3329 = vrot.lane.b32.xlu0 %v3324, 103
        %v3330 = vpop.permute.xlu0 %3329
        %v3331 = vsel %vm3313, %v3328, %v3330
        %v3334 = vadd.f32 %v3261, %v3331
        %v3335 = vadd.f32 %v3262, %v3330
        %3336 = vrot.lane.b32.xlu0 %v656, 6
        %v3337 = vpop.permute.xlu0 %3336
        %3338 = vrot.lane.b32.xlu0 %v660, 6
        %v3339 = vpop.permute.xlu0 %3338
        %v3340 = vsel %vm1390, %v3337, %v3339
        %3343 = vrot.lane.b32.xlu0 %v783, 58
        %v3344 = vpop.permute.xlu0 %3343
        %3345 = vrot.lane.b32.xlu0 %v787, 58
        %v3346 = vpop.permute.xlu0 %3345
        %vm3347 = vcmask 474112
        %v3348 = vsel %vm3347, %v3344, %v3346
        %3351 = vrot.lane.b32.xlu0 %v1614, 122
        %v3352 = vpop.permute.xlu0 %3351
        %3354 = vrot.lane.b32.xlu0 %v1622, 122
        %v3355 = vpop.permute.xlu0 %3354
        %v3357 = vsel %vm719, %v656, %v3337
        %v3358 = vsel %vm719, %v660, %v3340
        %v3359 = vsel %vm722, %v3357, %v2278
        %v3360 = vsel %vm722, %v3358, %v2282
        %v3361 = vsel %vm725, %v3359, %v2670
        %v3362 = vsel %vm725, %v3360, %v2673
        %v3363 = vsel %vm728, %v3361, %v915
        %v3364 = vsel %vm728, %v3362, %v919
        %v3365 = vsel %vm731, %v3363, %v3344
        %v3366 = vsel %vm731, %v3364, %v3348
        %v3367 = vsel %vm734, %v3365, %v3352
        %v3368 = vsel %vm734, %v3366, %v3352
        %v3369 = vsel %vm737, %v3367, %v3355
        %v3370 = vsel %vm737, %v3368, %v3355
        %3371 = vset.pattern.permute.xlu0 26
        %3372 = vperm.xlu0 %3371, %v641
        %v3373 = vpop.permute.xlu0 %3372
        %v3375 = vmul.f32 %v3369, %v3373
        %v3376 = vmul.f32 %v3370, %v3373
        %3379 = vrot.lane.b32.xlu0 %v3375, 102
        %v3380 = vpop.permute.xlu0 %3379
        %3381 = vrot.lane.b32.xlu0 %v3376, 102
        %v3382 = vpop.permute.xlu0 %3381
        %vm3383 = vcmask 834560
        %v3384 = vsel %vm3383, %v3380, %v3382
        %v3387 = vadd.f32 %v3317, %v3384
        %v3388 = vadd.f32 %v3318, %v3382
        %3389 = vset.pattern.permute.xlu0 26
        %3390 = vperm.xlu0 %3389, %v642
        %v3391 = vpop.permute.xlu0 %3390
        %v3393 = vmul.f32 %v3369, %v3391
        %v3394 = vmul.f32 %v3370, %v3391
        %3397 = vrot.lane.b32.xlu0 %v3393, 102
        %v3398 = vpop.permute.xlu0 %3397
        %3399 = vrot.lane.b32.xlu0 %v3394, 102
        %v3400 = vpop.permute.xlu0 %3399
        %v3401 = vsel %vm3383, %v3398, %v3400
        %v3404 = vadd.f32 %v3334, %v3401
        %v3405 = vadd.f32 %v3335, %v3400
        %3406 = vrot.lane.b32.xlu0 %v656, 5
        %v3407 = vpop.permute.xlu0 %3406
        %3408 = vrot.lane.b32.xlu0 %v660, 5
        %v3409 = vpop.permute.xlu0 %3408
        %v3410 = vsel %vm2173, %v3407, %v3409
        %3413 = vrot.lane.b32.xlu0 %v656, 35
        %v3414 = vpop.permute.xlu0 %3413
        %3415 = vrot.lane.b32.xlu0 %v660, 35
        %v3416 = vpop.permute.xlu0 %3415
        %v3417 = vsel %vm1066, %v3414, %v3416
        %3420 = vrot.lane.b32.xlu0 %v783, 27
        %v3421 = vpop.permute.xlu0 %3420
        %3422 = vrot.lane.b32.xlu0 %v787, 27
        %v3423 = vpop.permute.xlu0 %3422
        %v3424 = vsel %vm1242, %v3421, %v3423
        %3427 = vrot.lane.b32.xlu0 %v2082, 123
        %v3428 = vpop.permute.xlu0 %3427
        %v3430 = vsel %vm719, %v656, %v3407
        %v3431 = vsel %vm719, %v660, %v3410
        %v3432 = vsel %vm722, %v3430, %v2573
        %v3433 = vsel %vm722, %v3431, %v2576
        %v3434 = vsel %vm725, %v3432, %v3414
        %v3435 = vsel %vm725, %v3433, %v3417
        %v3436 = vsel %vm728, %v3434, %v1478
        %v3437 = vsel %vm728, %v3435, %v1481
        %v3438 = vsel %vm731, %v3436, %v3421
        %v3439 = vsel %vm731, %v3437, %v3424
        %v3440 = vsel %vm734, %v3438, %v1954
        %v3441 = vsel %vm734, %v3439, %v1958
        %v3442 = vsel %vm737, %v3440, %v3428
        %v3443 = vsel %vm737, %v3441, %v3428
        %3444 = vset.pattern.permute.xlu0 27
        %3445 = vperm.xlu0 %3444, %v641
        %v3446 = vpop.permute.xlu0 %3445
        %v3448 = vmul.f32 %v3442, %v3446
        %v3449 = vmul.f32 %v3443, %v3446
        %3452 = vrot.lane.b32.xlu0 %v3448, 101
        %v3453 = vpop.permute.xlu0 %3452
        %3454 = vrot.lane.b32.xlu0 %v3449, 101
        %v3455 = vpop.permute.xlu0 %3454
        %vm3456 = vcmask 826368
        %v3457 = vsel %vm3456, %v3453, %v3455
        %v3460 = vadd.f32 %v3387, %v3457
        %v3461 = vadd.f32 %v3388, %v3455
        %3462 = vset.pattern.permute.xlu0 27
        %3463 = vperm.xlu0 %3462, %v642
        %v3464 = vpop.permute.xlu0 %3463
        %v3466 = vmul.f32 %v3442, %v3464
        %v3467 = vmul.f32 %v3443, %v3464
        %3470 = vrot.lane.b32.xlu0 %v3466, 101
        %v3471 = vpop.permute.xlu0 %3470
        %3472 = vrot.lane.b32.xlu0 %v3467, 101
        %v3473 = vpop.permute.xlu0 %3472
        %v3474 = vsel %vm3456, %v3471, %v3473
        %v3477 = vadd.f32 %v3404, %v3474
        %v3478 = vadd.f32 %v3405, %v3473
        %3479 = vrot.lane.b32.xlu0 %v656, 4
        %v3480 = vpop.permute.xlu0 %3479
        %3481 = vrot.lane.b32.xlu0 %v660, 4
        %v3482 = vpop.permute.xlu0 %3481
        %vm3483 = vcmask 31744
        %v3484 = vsel %vm3483, %v3480, %v3482
        %3487 = vrot.lane.b32.xlu0 %v675, 124
        %v3488 = vpop.permute.xlu0 %3487
        %3490 = vrot.lane.b32.xlu0 %v683, 124
        %v3491 = vpop.permute.xlu0 %3490
        %3493 = vrot.lane.b32.xlu0 %v691, 124
        %v3494 = vpop.permute.xlu0 %3493
        %v3496 = vsel %vm719, %v656, %v3480
        %v3497 = vsel %vm719, %v660, %v3484
        %v3498 = vsel %vm722, %v3496, %v2845
        %v3499 = vsel %vm722, %v3497, %v2848
        %v3500 = vsel %vm725, %v3498, %v1131
        %v3501 = vsel %vm725, %v3499, %v1135
        %v3502 = vsel %vm728, %v3500, %v2055
        %v3503 = vsel %vm728, %v3501, %v2059
        %v3504 = vsel %vm731, %v3502, %v3488
        %v3505 = vsel %vm731, %v3503, %v3488
        %v3506 = vsel %vm734, %v3504, %v3491
        %v3507 = vsel %vm734, %v3505, %v3491
        %v3508 = vsel %vm737, %v3506, %v3494
        %v3509 = vsel %vm737, %v3507, %v3494
        %3510 = vset.pattern.permute.xlu0 28
        %3511 = vperm.xlu0 %3510, %v641
        %v3512 = vpop.permute.xlu0 %3511
        %v3514 = vmul.f32 %v3508, %v3512
        %v3515 = vmul.f32 %v3509, %v3512
        %3518 = vrot.lane.b32.xlu0 %v3514, 100
        %v3519 = vpop.permute.xlu0 %3518
        %3520 = vrot.lane.b32.xlu0 %v3515, 100
        %v3521 = vpop.permute.xlu0 %3520
        %vm3522 = vcmask 818176
        %v3523 = vsel %vm3522, %v3519, %v3521
        %v3526 = vadd.f32 %v3460, %v3523
        %v3527 = vadd.f32 %v3461, %v3521
        %3528 = vset.pattern.permute.xlu0 28
        %3529 = vperm.xlu0 %3528, %v642
        %v3530 = vpop.permute.xlu0 %3529
        %v3532 = vmul.f32 %v3508, %v3530
        %v3533 = vmul.f32 %v3509, %v3530
        %3536 = vrot.lane.b32.xlu0 %v3532, 100
        %v3537 = vpop.permute.xlu0 %3536
        %3538 = vrot.lane.b32.xlu0 %v3533, 100
        %v3539 = vpop.permute.xlu0 %3538
        %v3540 = vsel %vm3522, %v3537, %v3539
        %v3543 = vadd.f32 %v3477, %v3540
        %v3544 = vadd.f32 %v3478, %v3539
        %3545 = vrot.lane.b32.xlu0 %v656, 3
        %v3546 = vpop.permute.xlu0 %3545
        %3547 = vrot.lane.b32.xlu0 %v660, 3
        %v3548 = vpop.permute.xlu0 %3547
        %v3549 = vsel %vm1049, %v3546, %v3548
        %3552 = vrot.lane.b32.xlu0 %v1614, 125
        %v3553 = vpop.permute.xlu0 %3552
        %v3555 = vsel %vm719, %v656, %v3546
        %v3556 = vsel %vm719, %v660, %v3549
        %v3557 = vsel %vm722, %v3555, %v3106
        %v3558 = vsel %vm722, %v3556, %v3110
        %v3559 = vsel %vm725, %v3557, %v1931
        %v3560 = vsel %vm725, %v3558, %v1934
        %v3561 = vsel %vm728, %v3559, %v2580
        %v3562 = vsel %vm728, %v3560, %v2583
        %v3563 = vsel %vm731, %v3561, %v772
        %v3564 = vsel %vm731, %v3562, %v776
        %v3565 = vsel %vm734, %v3563, %v1254
        %v3566 = vsel %vm734, %v3564, %v1258
        %v3567 = vsel %vm737, %v3565, %v3553
        %v3568 = vsel %vm737, %v3566, %v3553
        %3569 = vset.pattern.permute.xlu0 29
        %3570 = vperm.xlu0 %3569, %v641
        %v3571 = vpop.permute.xlu0 %3570
        %v3573 = vmul.f32 %v3567, %v3571
        %v3574 = vmul.f32 %v3568, %v3571
        %3577 = vrot.lane.b32.xlu0 %v3573, 99
        %v3578 = vpop.permute.xlu0 %3577
        %3579 = vrot.lane.b32.xlu0 %v3574, 99
        %v3580 = vpop.permute.xlu0 %3579
        %vm3581 = vcmask 809984
        %v3582 = vsel %vm3581, %v3578, %v3580
        %v3585 = vadd.f32 %v3526, %v3582
        %v3586 = vadd.f32 %v3527, %v3580
        %3587 = vset.pattern.permute.xlu0 29
        %3588 = vperm.xlu0 %3587, %v642
        %v3589 = vpop.permute.xlu0 %3588
        %v3591 = vmul.f32 %v3567, %v3589
        %v3592 = vmul.f32 %v3568, %v3589
        %3595 = vrot.lane.b32.xlu0 %v3591, 99
        %v3596 = vpop.permute.xlu0 %3595
        %3597 = vrot.lane.b32.xlu0 %v3592, 99
        %v3598 = vpop.permute.xlu0 %3597
        %v3599 = vsel %vm3581, %v3596, %v3598
        %v3602 = vadd.f32 %v3543, %v3599
        %v3603 = vadd.f32 %v3544, %v3598
        %3604 = vrot.lane.b32.xlu0 %v656, 2
        %v3605 = vpop.permute.xlu0 %3604
        %3606 = vrot.lane.b32.xlu0 %v660, 2
        %v3607 = vpop.permute.xlu0 %3606
        %vm3608 = vcmask 15360
        %v3609 = vsel %vm3608, %v3605, %v3607
        %3612 = vrot.lane.b32.xlu0 %v656, 62
        %v3613 = vpop.permute.xlu0 %3612
        %3614 = vrot.lane.b32.xlu0 %v660, 62
        %v3615 = vpop.permute.xlu0 %3614
        %vm3616 = vcmask 506880
        %v3617 = vsel %vm3616, %v3613, %v3615
        %3620 = vrot.lane.b32.xlu0 %v675, 126
        %v3621 = vpop.permute.xlu0 %3620
        %3623 = vrot.lane.b32.xlu0 %v683, 126
        %v3624 = vpop.permute.xlu0 %3623
        %v3626 = vsel %vm719, %v656, %v3605
        %v3627 = vsel %vm719, %v660, %v3609
        %v3628 = vsel %vm722, %v3626, %v3337
        %v3629 = vsel %vm722, %v3627, %v3340
        %v3630 = vsel %vm725, %v3628, %v2663
        %v3631 = vsel %vm725, %v3629, %v2666
        %v3632 = vsel %vm728, %v3630, %v907
        %v3633 = vsel %vm728, %v3631, %v911
        %v3634 = vsel %vm731, %v3632, %v3613
        %v3635 = vsel %vm731, %v3633, %v3617
        %v3636 = vsel %vm734, %v3634, %v3621
        %v3637 = vsel %vm734, %v3635, %v3621
        %v3638 = vsel %vm737, %v3636, %v3624
        %v3639 = vsel %vm737, %v3637, %v3624
        %3640 = vset.pattern.permute.xlu0 30
        %3641 = vperm.xlu0 %3640, %v641
        %v3642 = vpop.permute.xlu0 %3641
        %v3644 = vmul.f32 %v3638, %v3642
        %v3645 = vmul.f32 %v3639, %v3642
        %3648 = vrot.lane.b32.xlu0 %v3644, 98
        %v3649 = vpop.permute.xlu0 %3648
        %3650 = vrot.lane.b32.xlu0 %v3645, 98
        %v3651 = vpop.permute.xlu0 %3650
        %v3652 = vsel %vm2680, %v3649, %v3651
        %v3655 = vadd.f32 %v3585, %v3652
        %v3656 = vadd.f32 %v3586, %v3651
        %3657 = vset.pattern.permute.xlu0 30
        %3658 = vperm.xlu0 %3657, %v642
        %v3659 = vpop.permute.xlu0 %3658
        %v3661 = vmul.f32 %v3638, %v3659
        %v3662 = vmul.f32 %v3639, %v3659
        %3665 = vrot.lane.b32.xlu0 %v3661, 98
        %v3666 = vpop.permute.xlu0 %3665
        %3667 = vrot.lane.b32.xlu0 %v3662, 98
        %v3668 = vpop.permute.xlu0 %3667
        %v3669 = vsel %vm2680, %v3666, %v3668
        %v3672 = vadd.f32 %v3602, %v3669
        %v3673 = vadd.f32 %v3603, %v3668
        %3674 = vrot.lane.b32.xlu0 %v656, 1
        %v3675 = vpop.permute.xlu0 %3674
        %3676 = vrot.lane.b32.xlu0 %v660, 1
        %v3677 = vpop.permute.xlu0 %3676
        %vm3678 = vcmask 7168
        %v3679 = vsel %vm3678, %v3675, %v3677
        %3682 = vrot.lane.b32.xlu0 %v675, 127
        %v3683 = vpop.permute.xlu0 %3682
        %v3685 = vsel %vm719, %v656, %v3675
        %v3686 = vsel %vm719, %v660, %v3679
        %v3687 = vsel %vm722, %v3685, %v3546
        %v3688 = vsel %vm722, %v3686, %v3549
        %v3689 = vsel %vm725, %v3687, %v3264
        %v3690 = vsel %vm725, %v3688, %v3267
        %v3691 = vsel %vm728, %v3689, %v2573
        %v3692 = vsel %vm728, %v3690, %v2576
        %v3693 = vsel %vm731, %v3691, %v764
        %v3694 = vsel %vm731, %v3692, %v768
        %v3695 = vsel %vm734, %v3693, %v1938
        %v3696 = vsel %vm734, %v3694, %v1942
        %v3697 = vsel %vm737, %v3695, %v3683
        %v3698 = vsel %vm737, %v3696, %v3683
        %3699 = vset.pattern.permute.xlu0 31
        %3700 = vperm.xlu0 %3699, %v641
        %v3701 = vpop.permute.xlu0 %3700
        %v3703 = vmul.f32 %v3697, %v3701
        %v3704 = vmul.f32 %v3698, %v3701
        %3707 = vrot.lane.b32.xlu0 %v3703, 97
        %v3708 = vpop.permute.xlu0 %3707
        %3709 = vrot.lane.b32.xlu0 %v3704, 97
        %v3710 = vpop.permute.xlu0 %3709
        %v3711 = vsel %vm2598, %v3708, %v3710
        %v3714 = vadd.f32 %v3655, %v3711
        %v3715 = vadd.f32 %v3656, %v3710
        %3716 = vset.pattern.permute.xlu0 31
        %3717 = vperm.xlu0 %3716, %v642
        %v3718 = vpop.permute.xlu0 %3717
        %v3720 = vmul.f32 %v3697, %v3718
        %v3721 = vmul.f32 %v3698, %v3718
        %3724 = vrot.lane.b32.xlu0 %v3720, 97
        %v3725 = vpop.permute.xlu0 %3724
        %3726 = vrot.lane.b32.xlu0 %v3721, 97
        %v3727 = vpop.permute.xlu0 %3726
        %v3728 = vsel %vm2598, %v3725, %v3727
        %v3731 = vadd.f32 %v3672, %v3728
        %v3732 = vadd.f32 %v3673, %v3727
        %v3733 = vld [vmem:[#allocation2 + $0x20] sm:$0x1]
        %v3735 = vlaneseq
        %v3736 = vshrl.u32 %v3735, 7
        %v3737 = vsub.s32 0, %v3736
        %v3738 = vrot.slane %v3733, %v3737
        %v3740 = vsel %vm719, %v3733, %v3738
        %v3741 = vsel %vm722, %v3740, %v3738
        %v3742 = vsel %vm725, %v3741, %v3738
        %v3743 = vsel %vm728, %v3742, %v3738
        %v3744 = vsel %vm731, %v3743, %v3738
        %v3745 = vsel %vm734, %v3744, %v3738
        %v3746 = vsel %vm737, %v3745, %v3738
        %3747 = vset.pattern.permute.xlu0 32
        %3748 = vperm.xlu0 %3747, %v641
        %v3749 = vpop.permute.xlu0 %3748
        %v3751 = vmul.f32 %v3746, %v3749
        %3753 = vrot.lane.b32.xlu0 %v3751, 96
        %v3754 = vpop.permute.xlu0 %3753
        %v3756 = vadd.f32 %v3714, %v3754
        %v3757 = vadd.f32 %v3715, %v3754
        %3758 = vset.pattern.permute.xlu0 32
        %3759 = vperm.xlu0 %3758, %v642
        %v3760 = vpop.permute.xlu0 %3759
        %v3762 = vmul.f32 %v3746, %v3760
        %3764 = vrot.lane.b32.xlu0 %v3762, 96
        %v3765 = vpop.permute.xlu0 %3764
        %v3767 = vadd.f32 %v3731, %v3765
        %v3768 = vadd.f32 %v3732, %v3765
        %3770 = vset.pattern.permute.xlu0 0
        %3771 = vperm.xlu0 %3770, %v643
        %v3772 = vpop.permute.xlu0 %3771
        %3775 = vset.pattern.permute.xlu0 0
        %3776 = vperm.xlu0 %3775, %v644
        %v3777 = vpop.permute.xlu0 %3776
        %v3779 = vadd.f32 %v3756, %v3772
        %v3780 = vadd.f32 %v3757, %v3772
        %v3781 = vadd.f32 %v3767, %v3777
        %v3782 = vadd.f32 %v3768, %v3777
        %v3783 = vmax.f32 %v3779, 0.0
        %v3784 = vmax.f32 %v3780, 0.0
        %v3785 = vmax.f32 %v3781, 0.0
        %v3786 = vmax.f32 %v3782, 0.0
        %v3787 = vpack.c.bf16 %v3785, %v3783
        %v3788 = vpack.c.bf16 %v3786, %v3784
        %3791 = vrot.lane.b32.xlu0 %v3787, 32
        %v3792 = vpop.permute.xlu0 %3791
        %3793 = vrot.lane.b32.xlu0 %v3788, 32
        %v3794 = vpop.permute.xlu0 %3793
        %vm3795 = vcmask 261120
        %v3796 = vsel %vm3795, %v3792, %v3794
        %3798 = vst [vmem:[#allocation3 + $0x8] sm:$0xff] %v3796
        %v3799 = vld [vmem:[#allocation3] sm:$0xff]
        %v3800 = vld [vmem:[#allocation3] sm:$0xff]
        %v3801 = vld [vmem:[#allocation3 + $0x8] sm:$0xff]
        %3804 = vrot.lane.b32.xlu0 %v3800, 124
        %v3805 = vpop.permute.xlu0 %3804
        %3806 = vrot.lane.b32.xlu0 %v3801, 124
        %v3807 = vpop.permute.xlu0 %3806
        %vm3808 = vcmask 1014784
        %v3809 = vsel %vm3808, %v3805, %v3807
        %3811 = vrot.lane.b32.xlu0 %v3800, 120
        %v3812 = vpop.permute.xlu0 %3811
        %3813 = vrot.lane.b32.xlu0 %v3801, 120
        %v3814 = vpop.permute.xlu0 %3813
        %vm3815 = vcmask 982016
        %v3816 = vsel %vm3815, %v3812, %v3814
        %3818 = vrot.lane.b32.xlu0 %v3800, 116
        %v3819 = vpop.permute.xlu0 %3818
        %3820 = vrot.lane.b32.xlu0 %v3801, 116
        %v3821 = vpop.permute.xlu0 %3820
        %vm3822 = vcmask 949248
        %v3823 = vsel %vm3822, %v3819, %v3821
        %3825 = vrot.lane.b32.xlu0 %v3800, 112
        %v3826 = vpop.permute.xlu0 %3825
        %3827 = vrot.lane.b32.xlu0 %v3801, 112
        %v3828 = vpop.permute.xlu0 %3827
        %vm3829 = vcmask 916480
        %v3830 = vsel %vm3829, %v3826, %v3828
        %3832 = vrot.lane.b32.xlu0 %v3800, 108
        %v3833 = vpop.permute.xlu0 %3832
        %3834 = vrot.lane.b32.xlu0 %v3801, 108
        %v3835 = vpop.permute.xlu0 %3834
        %vm3836 = vcmask 883712
        %v3837 = vsel %vm3836, %v3833, %v3835
        %3839 = vrot.lane.b32.xlu0 %v3800, 104
        %v3840 = vpop.permute.xlu0 %3839
        %3841 = vrot.lane.b32.xlu0 %v3801, 104
        %v3842 = vpop.permute.xlu0 %3841
        %vm3843 = vcmask 850944
        %v3844 = vsel %vm3843, %v3840, %v3842
        %3846 = vrot.lane.b32.xlu0 %v3800, 100
        %v3847 = vpop.permute.xlu0 %3846
        %3848 = vrot.lane.b32.xlu0 %v3801, 100
        %v3849 = vpop.permute.xlu0 %3848
        %vm3850 = vcmask 818176
        %v3851 = vsel %vm3850, %v3847, %v3849
        %v3853 = vld [vmem:[%s3] sm:$0xf]
        %v3854 = vld [vmem:[%s3 + $0x4] sm:$0xf]
        %s3855 = scalar_lea.vmem %s3, 8
        %v3856 = vld [vmem:[%s3855] sm:$0xf]
        %v3857 = vld [vmem:[%s3855 + $0x4] sm:$0xf]
        %v3860 = vunpack.c.l.b16 %v3856
        %v3861 = vunpack.c.l.b16 %v3857
        %v3862 = vpack.c.b16 %v3861, %v3860
        %3864 = vrot.lane.b32.xlu0 %v3800, 96
        %v3865 = vpop.permute.xlu0 %3864
        %3866 = vrot.lane.b32.xlu0 %v3801, 96
        %v3867 = vpop.permute.xlu0 %3866
        %3868 = vrot.lane.b32.xlu0 %v3809, 96
        %v3869 = vpop.permute.xlu0 %3868
        %3870 = vrot.lane.b32.xlu0 %v3807, 96
        %v3871 = vpop.permute.xlu0 %3870
        %3872 = vrot.lane.b32.xlu0 %v3816, 96
        %v3873 = vpop.permute.xlu0 %3872
        %3874 = vrot.lane.b32.xlu0 %v3814, 96
        %v3875 = vpop.permute.xlu0 %3874
        %3876 = vrot.lane.b32.xlu0 %v3823, 96
        %v3877 = vpop.permute.xlu0 %3876
        %3878 = vrot.lane.b32.xlu0 %v3821, 96
        %v3879 = vpop.permute.xlu0 %3878
        %3880 = vrot.lane.b32.xlu0 %v3830, 96
        %v3881 = vpop.permute.xlu0 %3880
        %3882 = vrot.lane.b32.xlu0 %v3828, 96
        %v3883 = vpop.permute.xlu0 %3882
        %3884 = vrot.lane.b32.xlu0 %v3837, 96
        %v3885 = vpop.permute.xlu0 %3884
        %3886 = vrot.lane.b32.xlu0 %v3835, 96
        %v3887 = vpop.permute.xlu0 %3886
        %3888 = vrot.lane.b32.xlu0 %v3844, 96
        %v3889 = vpop.permute.xlu0 %3888
        %3890 = vrot.lane.b32.xlu0 %v3842, 96
        %v3891 = vpop.permute.xlu0 %3890
        %3892 = vrot.lane.b32.xlu0 %v3851, 96
        %v3893 = vpop.permute.xlu0 %3892
        %3894 = vrot.lane.b32.xlu0 %v3849, 96
        %v3895 = vpop.permute.xlu0 %3894
        %vm3896 = vcmask 785408
        %v3897 = vsel %vm3896, %v3865, %v3867
        %v3898 = vsel %vm3896, %v3869, %v3871
        %v3899 = vsel %vm3896, %v3873, %v3875
        %v3900 = vsel %vm3896, %v3877, %v3879
        %v3901 = vsel %vm3896, %v3881, %v3883
        %v3902 = vsel %vm3896, %v3885, %v3887
        %v3903 = vsel %vm3896, %v3889, %v3891
        %v3904 = vsel %vm3896, %v3893, %v3895
        %3913 = vmatprep.subr.bf16.mxu0 0
        %3914 = vmatpush1.bf16.msra.mxu0 %v3897
        %3915 = vmatprep.subr.bf16.mxu0 0
        %3916 = vmatpush1.bf16.msra.mxu0 %v3898
        %3917 = vmatprep.subr.bf16.mxu0 0
        %3918 = vmatpush1.bf16.msra.mxu0 %v3899
        %3919 = vmatprep.subr.bf16.mxu0 0
        %3920 = vmatpush1.bf16.msra.mxu0 %v3900
        %3921 = vmatprep.subr.bf16.mxu0 0
        %3922 = vmatpush1.bf16.msra.mxu0 %v3901
        %3923 = vmatprep.subr.bf16.mxu0 0
        %3924 = vmatpush1.bf16.msra.mxu0 %v3902
        %3925 = vmatprep.subr.bf16.mxu0 0
        %3926 = vmatpush1.bf16.msra.mxu0 %v3903
        %3927 = vmatprep.subr.bf16.mxu0 0
        %3928 = vmatpush1.bf16.msra.mxu0 %v3904
        %3929 = vmatprep.subr.bf16.mxu0 0
        %3930 = vmatpush1.bf16.msra.mxu0 0
        %3931 = vmatprep.subr.bf16.mxu0 0
        %3932 = vmatpush1.bf16.msra.mxu0 0
        %3933 = vmatprep.subr.bf16.mxu0 0
        %3934 = vmatpush1.bf16.msra.mxu0 0
        %3935 = vmatprep.subr.bf16.mxu0 0
        %3936 = vmatpush1.bf16.msra.mxu0 0
        %3937 = vmatprep.subr.bf16.mxu0 0
        %3938 = vmatpush1.bf16.msra.mxu0 0
        %3939 = vmatprep.subr.bf16.mxu0 0
        %3940 = vmatpush1.bf16.msra.mxu0 0
        %3941 = vmatprep.subr.bf16.mxu0 0
        %3942 = vmatpush1.bf16.msra.mxu0 0
        %3943 = vmatprep.subr.bf16.mxu0 0
        %3944 = vmatpush1.bf16.msra.mxu0 0
        %3945 = vmatprep.mubr.bf16.mxu0 0
        %3946 = vmatmul.mubr.bf16.gmra.mrb[0].mxu0 %v3862
        %v3947 = vpop.f32.mrb[0].mxu0
        %v3948 = vadd.f32 0.0, %v3947
        %v3949 = vpop.f32.mrb[0].mxu0
        %v3950 = vpop.f32.mrb[0].mxu0
        %v3951 = vadd.f32 0.0, %v3950
        %v3952 = vpop.f32.mrb[0].mxu0
        %3953 = vdwg.mxu0
        %v3956 = vunpack.c.l.b16 %v3853
        %v3957 = vunpack.c.l.b16 %v3854
        %v3958 = vpack.c.b16 %v3957, %v3956
        %3960 = vmatprep.subr.bf16.mxu0 0
        %3961 = vmatpush1.bf16.msra.mxu0 %v3799
        %3962 = vmatprep.subr.bf16.mxu0 0
        %3963 = vmatpush1.bf16.msra.mxu0 %v3809
        %3964 = vmatprep.subr.bf16.mxu0 0
        %3965 = vmatpush1.bf16.msra.mxu0 %v3816
        %3966 = vmatprep.subr.bf16.mxu0 0
        %3967 = vmatpush1.bf16.msra.mxu0 %v3823
        %3968 = vmatprep.subr.bf16.mxu0 0
        %3969 = vmatpush1.bf16.msra.mxu0 %v3830
        %3970 = vmatprep.subr.bf16.mxu0 0
        %3971 = vmatpush1.bf16.msra.mxu0 %v3837
        %3972 = vmatprep.subr.bf16.mxu0 0
        %3973 = vmatpush1.bf16.msra.mxu0 %v3844
        %3974 = vmatprep.subr.bf16.mxu0 0
        %3975 = vmatpush1.bf16.msra.mxu0 %v3851
        %3976 = vmatprep.subr.bf16.mxu0 0
        %3977 = vmatpush1.bf16.msra.mxu0 0
        %3978 = vmatprep.subr.bf16.mxu0 0
        %3979 = vmatpush1.bf16.msra.mxu0 0
        %3980 = vmatprep.subr.bf16.mxu0 0
        %3981 = vmatpush1.bf16.msra.mxu0 0
        %3982 = vmatprep.subr.bf16.mxu0 0
        %3983 = vmatpush1.bf16.msra.mxu0 0
        %3984 = vmatprep.subr.bf16.mxu0 0
        %3985 = vmatpush1.bf16.msra.mxu0 0
        %3986 = vmatprep.subr.bf16.mxu0 0
        %3987 = vmatpush1.bf16.msra.mxu0 0
        %3988 = vmatprep.subr.bf16.mxu0 0
        %3989 = vmatpush1.bf16.msra.mxu0 0
        %3990 = vmatprep.subr.bf16.mxu0 0
        %3991 = vmatpush1.bf16.msra.mxu0 0
        %3992 = vmatprep.mubr.bf16.mxu0 0
        %3993 = vmatmul.mubr.bf16.gmra.mrb[0].mxu0 %v3958
        %v3994 = vpop.f32.mrb[0].mxu0
        %v3995 = vadd.f32 %v3948, %v3994
        %v3996 = vpop.f32.mrb[0].mxu0
        %v3997 = vpop.f32.mrb[0].mxu0
        %v3998 = vadd.f32 %v3951, %v3997
        %v3999 = vpop.f32.mrb[0].mxu0
        %4000 = vdwg.mxu0
        %s4001 = scalar_lea.vmem %s3, 16
        %v4002 = vld [vmem:[%s4001] sm:$0xf]
        %v4003 = vld [vmem:[%s4001 + $0x4] sm:$0xf]
        %v4006 = vunpack.c.l.b16 %v4002
        %v4007 = vunpack.c.l.b16 %v4003
        %v4008 = vpack.c.b16 %v4007, %v4006
        %4010 = vrot.lane.b32.xlu0 %v3800, 64
        %v4011 = vpop.permute.xlu0 %4010
        %4012 = vrot.lane.b32.xlu0 %v3801, 64
        %v4013 = vpop.permute.xlu0 %4012
        %4014 = vrot.lane.b32.xlu0 %v3809, 64
        %v4015 = vpop.permute.xlu0 %4014
        %4016 = vrot.lane.b32.xlu0 %v3807, 64
        %v4017 = vpop.permute.xlu0 %4016
        %4018 = vrot.lane.b32.xlu0 %v3816, 64
        %v4019 = vpop.permute.xlu0 %4018
        %4020 = vrot.lane.b32.xlu0 %v3814, 64
        %v4021 = vpop.permute.xlu0 %4020
        %4022 = vrot.lane.b32.xlu0 %v3823, 64
        %v4023 = vpop.permute.xlu0 %4022
        %4024 = vrot.lane.b32.xlu0 %v3821, 64
        %v4025 = vpop.permute.xlu0 %4024
        %4026 = vrot.lane.b32.xlu0 %v3830, 64
        %v4027 = vpop.permute.xlu0 %4026
        %4028 = vrot.lane.b32.xlu0 %v3828, 64
        %v4029 = vpop.permute.xlu0 %4028
        %4030 = vrot.lane.b32.xlu0 %v3837, 64
        %v4031 = vpop.permute.xlu0 %4030
        %4032 = vrot.lane.b32.xlu0 %v3835, 64
        %v4033 = vpop.permute.xlu0 %4032
        %4034 = vrot.lane.b32.xlu0 %v3844, 64
        %v4035 = vpop.permute.xlu0 %4034
        %4036 = vrot.lane.b32.xlu0 %v3842, 64
        %v4037 = vpop.permute.xlu0 %4036
        %4038 = vrot.lane.b32.xlu0 %v3851, 64
        %v4039 = vpop.permute.xlu0 %4038
        %4040 = vrot.lane.b32.xlu0 %v3849, 64
        %v4041 = vpop.permute.xlu0 %4040
        %vm4042 = vcmask 523264
        %v4043 = vsel %vm4042, %v4011, %v4013
        %v4044 = vsel %vm4042, %v4015, %v4017
        %v4045 = vsel %vm4042, %v4019, %v4021
        %v4046 = vsel %vm4042, %v4023, %v4025
        %v4047 = vsel %vm4042, %v4027, %v4029
        %v4048 = vsel %vm4042, %v4031, %v4033
        %v4049 = vsel %vm4042, %v4035, %v4037
        %v4050 = vsel %vm4042, %v4039, %v4041
        %4059 = vmatprep.subr.bf16.mxu0 0
        %4060 = vmatpush1.bf16.msra.mxu0 %v4043
        %4061 = vmatprep.subr.bf16.mxu0 0
        %4062 = vmatpush1.bf16.msra.mxu0 %v4044
        %4063 = vmatprep.subr.bf16.mxu0 0
        %4064 = vmatpush1.bf16.msra.mxu0 %v4045
        %4065 = vmatprep.subr.bf16.mxu0 0
        %4066 = vmatpush1.bf16.msra.mxu0 %v4046
        %4067 = vmatprep.subr.bf16.mxu0 0
        %4068 = vmatpush1.bf16.msra.mxu0 %v4047
        %4069 = vmatprep.subr.bf16.mxu0 0
        %4070 = vmatpush1.bf16.msra.mxu0 %v4048
        %4071 = vmatprep.subr.bf16.mxu0 0
        %4072 = vmatpush1.bf16.msra.mxu0 %v4049
        %4073 = vmatprep.subr.bf16.mxu0 0
        %4074 = vmatpush1.bf16.msra.mxu0 %v4050
        %4075 = vmatprep.subr.bf16.mxu0 0
        %4076 = vmatpush1.bf16.msra.mxu0 0
        %4077 = vmatprep.subr.bf16.mxu0 0
        %4078 = vmatpush1.bf16.msra.mxu0 0
        %4079 = vmatprep.subr.bf16.mxu0 0
        %4080 = vmatpush1.bf16.msra.mxu0 0
        %4081 = vmatprep.subr.bf16.mxu0 0
        %4082 = vmatpush1.bf16.msra.mxu0 0
        %4083 = vmatprep.subr.bf16.mxu0 0
        %4084 = vmatpush1.bf16.msra.mxu0 0
        %4085 = vmatprep.subr.bf16.mxu0 0
        %4086 = vmatpush1.bf16.msra.mxu0 0
        %4087 = vmatprep.subr.bf16.mxu0 0
        %4088 = vmatpush1.bf16.msra.mxu0 0
        %4089 = vmatprep.subr.bf16.mxu0 0
        %4090 = vmatpush1.bf16.msra.mxu0 0
        %4091 = vmatprep.mubr.bf16.mxu0 0
        %4092 = vmatmul.mubr.bf16.gmra.mrb[0].mxu0 %v4008
        %v4093 = vpop.f32.mrb[0].mxu0
        %v4094 = vadd.f32 0.0, %v4093
        %v4095 = vpop.f32.mrb[0].mxu0
        %v4096 = vpop.f32.mrb[0].mxu0
        %v4097 = vadd.f32 0.0, %v4096
        %v4098 = vpop.f32.mrb[0].mxu0
        %4099 = vdwg.mxu0
        %v4100 = vadd.f32 %v3995, %v4094
        %v4101 = vadd.f32 %v3998, %v4097
        %s4102 = scalar_lea.vmem %s3, 24
        %v4103 = vld [vmem:[%s4102] sm:$0xf]
        %v4104 = vld [vmem:[%s4102 + $0x4] sm:$0xf]
        %v4107 = vunpack.c.l.b16 %v4103
        %v4108 = vunpack.c.l.b16 %v4104
        %v4109 = vpack.c.b16 %v4108, %v4107
        %4111 = vrot.lane.b32.xlu0 %v3800, 32
        %v4112 = vpop.permute.xlu0 %4111
        %4113 = vrot.lane.b32.xlu0 %v3801, 32
        %v4114 = vpop.permute.xlu0 %4113
        %4115 = vrot.lane.b32.xlu0 %v3809, 32
        %v4116 = vpop.permute.xlu0 %4115
        %4117 = vrot.lane.b32.xlu0 %v3807, 32
        %v4118 = vpop.permute.xlu0 %4117
        %4119 = vrot.lane.b32.xlu0 %v3816, 32
        %v4120 = vpop.permute.xlu0 %4119
        %4121 = vrot.lane.b32.xlu0 %v3814, 32
        %v4122 = vpop.permute.xlu0 %4121
        %4123 = vrot.lane.b32.xlu0 %v3823, 32
        %v4124 = vpop.permute.xlu0 %4123
        %4125 = vrot.lane.b32.xlu0 %v3821, 32
        %v4126 = vpop.permute.xlu0 %4125
        %4127 = vrot.lane.b32.xlu0 %v3830, 32
        %v4128 = vpop.permute.xlu0 %4127
        %4129 = vrot.lane.b32.xlu0 %v3828, 32
        %v4130 = vpop.permute.xlu0 %4129
        %4131 = vrot.lane.b32.xlu0 %v3837, 32
        %v4132 = vpop.permute.xlu0 %4131
        %4133 = vrot.lane.b32.xlu0 %v3835, 32
        %v4134 = vpop.permute.xlu0 %4133
        %4135 = vrot.lane.b32.xlu0 %v3844, 32
        %v4136 = vpop.permute.xlu0 %4135
        %4137 = vrot.lane.b32.xlu0 %v3842, 32
        %v4138 = vpop.permute.xlu0 %4137
        %4139 = vrot.lane.b32.xlu0 %v3851, 32
        %v4140 = vpop.permute.xlu0 %4139
        %4141 = vrot.lane.b32.xlu0 %v3849, 32
        %v4142 = vpop.permute.xlu0 %4141
        %v4143 = vsel %vm3795, %v4112, %v4114
        %v4144 = vsel %vm3795, %v4116, %v4118
        %v4145 = vsel %vm3795, %v4120, %v4122
        %v4146 = vsel %vm3795, %v4124, %v4126
        %v4147 = vsel %vm3795, %v4128, %v4130
        %v4148 = vsel %vm3795, %v4132, %v4134
        %v4149 = vsel %vm3795, %v4136, %v4138
        %v4150 = vsel %vm3795, %v4140, %v4142
        %4159 = vmatprep.subr.bf16.mxu0 0
        %4160 = vmatpush1.bf16.msra.mxu0 %v4143
        %4161 = vmatprep.subr.bf16.mxu0 0
        %4162 = vmatpush1.bf16.msra.mxu0 %v4144
        %4163 = vmatprep.subr.bf16.mxu0 0
        %4164 = vmatpush1.bf16.msra.mxu0 %v4145
        %4165 = vmatprep.subr.bf16.mxu0 0
        %4166 = vmatpush1.bf16.msra.mxu0 %v4146
        %4167 = vmatprep.subr.bf16.mxu0 0
        %4168 = vmatpush1.bf16.msra.mxu0 %v4147
        %4169 = vmatprep.subr.bf16.mxu0 0
        %4170 = vmatpush1.bf16.msra.mxu0 %v4148
        %4171 = vmatprep.subr.bf16.mxu0 0
        %4172 = vmatpush1.bf16.msra.mxu0 %v4149
        %4173 = vmatprep.subr.bf16.mxu0 0
        %4174 = vmatpush1.bf16.msra.mxu0 %v4150
        %4175 = vmatprep.subr.bf16.mxu0 0
        %4176 = vmatpush1.bf16.msra.mxu0 0
        %4177 = vmatprep.subr.bf16.mxu0 0
        %4178 = vmatpush1.bf16.msra.mxu0 0
        %4179 = vmatprep.subr.bf16.mxu0 0
        %4180 = vmatpush1.bf16.msra.mxu0 0
        %4181 = vmatprep.subr.bf16.mxu0 0
        %4182 = vmatpush1.bf16.msra.mxu0 0
        %4183 = vmatprep.subr.bf16.mxu0 0
        %4184 = vmatpush1.bf16.msra.mxu0 0
        %4185 = vmatprep.subr.bf16.mxu0 0
        %4186 = vmatpush1.bf16.msra.mxu0 0
        %4187 = vmatprep.subr.bf16.mxu0 0
        %4188 = vmatpush1.bf16.msra.mxu0 0
        %4189 = vmatprep.subr.bf16.mxu0 0
        %4190 = vmatpush1.bf16.msra.mxu0 0
        %4191 = vmatprep.mubr.bf16.mxu0 0
        %4192 = vmatmul.mubr.bf16.gmra.mrb[0].mxu0 %v4109
        %v4193 = vpop.f32.mrb[0].mxu0
        %v4194 = vadd.f32 0.0, %v4193
        %v4195 = vpop.f32.mrb[0].mxu0
        %v4196 = vpop.f32.mrb[0].mxu0
        %v4197 = vadd.f32 0.0, %v4196
        %v4198 = vpop.f32.mrb[0].mxu0
        %4199 = vdwg.mxu0
        %v4200 = vadd.f32 %v4100, %v4194
        %v4201 = vadd.f32 %v4101, %v4197
        %v4202 = vld [vmem:[%s4] sm:$0xf]
        %v4203 = vld [vmem:[%s4 + $0x4] sm:$0xf]
        %v4206 = vunpack.c.l.b16 %v4202
        %v4207 = vunpack.c.l.b16 %v4203
        %v4208 = vpack.c.b16 %v4207, %v4206
        %v4210 = vsel %vm2496, %v4208, 0
        %4212 = vmatprep.subr.bf16.mxu0 0
        %4213 = vmatpush1.bf16.msra.mxu0 %v3801
        %4214 = vmatprep.subr.bf16.mxu0 0
        %4215 = vmatpush1.bf16.msra.mxu0 0
        %4216 = vmatprep.subr.bf16.mxu0 0
        %4217 = vmatpush1.bf16.msra.mxu0 0
        %4218 = vmatprep.subr.bf16.mxu0 0
        %4219 = vmatpush1.bf16.msra.mxu0 0
        %4220 = vmatprep.subr.bf16.mxu0 0
        %4221 = vmatpush1.bf16.msra.mxu0 0
        %4222 = vmatprep.subr.bf16.mxu0 0
        %4223 = vmatpush1.bf16.msra.mxu0 0
        %4224 = vmatprep.subr.bf16.mxu0 0
        %4225 = vmatpush1.bf16.msra.mxu0 0
        %4226 = vmatprep.subr.bf16.mxu0 0
        %4227 = vmatpush1.bf16.msra.mxu0 0
        %4228 = vmatprep.subr.bf16.mxu0 0
        %4229 = vmatpush1.bf16.msra.mxu0 0
        %4230 = vmatprep.subr.bf16.mxu0 0
        %4231 = vmatpush1.bf16.msra.mxu0 0
        %4232 = vmatprep.subr.bf16.mxu0 0
        %4233 = vmatpush1.bf16.msra.mxu0 0
        %4234 = vmatprep.subr.bf16.mxu0 0
        %4235 = vmatpush1.bf16.msra.mxu0 0
        %4236 = vmatprep.subr.bf16.mxu0 0
        %4237 = vmatpush1.bf16.msra.mxu0 0
        %4238 = vmatprep.subr.bf16.mxu0 0
        %4239 = vmatpush1.bf16.msra.mxu0 0
        %4240 = vmatprep.subr.bf16.mxu0 0
        %4241 = vmatpush1.bf16.msra.mxu0 0
        %4242 = vmatprep.subr.bf16.mxu0 0
        %4243 = vmatpush1.bf16.msra.mxu0 0
        %4244 = vmatprep.mubr.bf16.mxu0 0
        %4245 = vmatmul.mubr.bf16.gmra.mrb[0].mxu0 %v4210
        %v4246 = vpop.f32.mrb[0].mxu0
        %v4247 = vadd.f32 0.0, %v4246
        %v4248 = vpop.f32.mrb[0].mxu0
        %v4249 = vpop.f32.mrb[0].mxu0
        %v4250 = vadd.f32 0.0, %v4249
        %v4251 = vpop.f32.mrb[0].mxu0
        %4252 = vdwg.mxu0
        %v4253 = vadd.f32 %v4200, %v4247
        %v4254 = vadd.f32 %v4201, %v4250
        %v4255 = vld [vmem:[%s5] sm:$0xff]
        %v4256 = vld [vmem:[%s5 + $0x8] sm:$0xff]
        %4258 = vset.pattern.permute.xlu0 0
        %4259 = vperm.xlu0 %4258, %v4255
        %v4260 = vpop.permute.xlu0 %4259
        %4263 = vset.pattern.permute.xlu0 0
        %4264 = vperm.xlu0 %4263, %v4256
        %v4265 = vpop.permute.xlu0 %4264
        %v4267 = vadd.f32 %v4253, %v4260
        %v4268 = vadd.f32 %v4254, %v4265
        %v4269 = vmax.f32 %v4267, 0.0
        %v4270 = vmax.f32 %v4268, 0.0
        %v4271 = vpack.c.bf16 %v4270, %v4269
        %4272 = vst [vmem:[#allocation4 + $0x8] sm:$0xff] %v4271
        %v4273 = vld [vmem:[#allocation4] sm:$0xff]
        %v4274 = vld [vmem:[#allocation4] sm:$0xff]
        %v4275 = vld [vmem:[#allocation4 + $0x8] sm:$0xff]
        %4278 = vrot.lane.b32.xlu0 %v4274, 124
        %v4279 = vpop.permute.xlu0 %4278
        %4280 = vrot.lane.b32.xlu0 %v4275, 124
        %v4281 = vpop.permute.xlu0 %4280
        %v4282 = vsel %vm3808, %v4279, %v4281
        %4284 = vrot.lane.b32.xlu0 %v4274, 120
        %v4285 = vpop.permute.xlu0 %4284
        %4286 = vrot.lane.b32.xlu0 %v4275, 120
        %v4287 = vpop.permute.xlu0 %4286
        %v4288 = vsel %vm3815, %v4285, %v4287
        %4290 = vrot.lane.b32.xlu0 %v4274, 116
        %v4291 = vpop.permute.xlu0 %4290
        %4292 = vrot.lane.b32.xlu0 %v4275, 116
        %v4293 = vpop.permute.xlu0 %4292
        %v4294 = vsel %vm3822, %v4291, %v4293
        %4296 = vrot.lane.b32.xlu0 %v4274, 112
        %v4297 = vpop.permute.xlu0 %4296
        %4298 = vrot.lane.b32.xlu0 %v4275, 112
        %v4299 = vpop.permute.xlu0 %4298
        %v4300 = vsel %vm3829, %v4297, %v4299
        %4302 = vrot.lane.b32.xlu0 %v4274, 108
        %v4303 = vpop.permute.xlu0 %4302
        %4304 = vrot.lane.b32.xlu0 %v4275, 108
        %v4305 = vpop.permute.xlu0 %4304
        %v4306 = vsel %vm3836, %v4303, %v4305
        %4308 = vrot.lane.b32.xlu0 %v4274, 104
        %v4309 = vpop.permute.xlu0 %4308
        %4310 = vrot.lane.b32.xlu0 %v4275, 104
        %v4311 = vpop.permute.xlu0 %4310
        %v4312 = vsel %vm3843, %v4309, %v4311
        %4314 = vrot.lane.b32.xlu0 %v4274, 100
        %v4315 = vpop.permute.xlu0 %4314
        %4316 = vrot.lane.b32.xlu0 %v4275, 100
        %v4317 = vpop.permute.xlu0 %4316
        %v4318 = vsel %vm3850, %v4315, %v4317
        %v4320 = vld [vmem:[%s6] sm:$0xf]
        %v4321 = vld [vmem:[%s6 + $0x4] sm:$0xf]
        %s4322 = scalar_lea.vmem %s6, 8
        %v4323 = vld [vmem:[%s4322] sm:$0xf]
        %v4324 = vld [vmem:[%s4322 + $0x4] sm:$0xf]
        %v4327 = vunpack.c.l.b16 %v4323
        %v4328 = vunpack.c.l.b16 %v4324
        %v4329 = vpack.c.b16 %v4328, %v4327
        %4331 = vrot.lane.b32.xlu0 %v4274, 96
        %v4332 = vpop.permute.xlu0 %4331
        %4333 = vrot.lane.b32.xlu0 %v4275, 96
        %v4334 = vpop.permute.xlu0 %4333
        %4335 = vrot.lane.b32.xlu0 %v4282, 96
        %v4336 = vpop.permute.xlu0 %4335
        %4337 = vrot.lane.b32.xlu0 %v4281, 96
        %v4338 = vpop.permute.xlu0 %4337
        %4339 = vrot.lane.b32.xlu0 %v4288, 96
        %v4340 = vpop.permute.xlu0 %4339
        %4341 = vrot.lane.b32.xlu0 %v4287, 96
        %v4342 = vpop.permute.xlu0 %4341
        %4343 = vrot.lane.b32.xlu0 %v4294, 96
        %v4344 = vpop.permute.xlu0 %4343
        %4345 = vrot.lane.b32.xlu0 %v4293, 96
        %v4346 = vpop.permute.xlu0 %4345
        %4347 = vrot.lane.b32.xlu0 %v4300, 96
        %v4348 = vpop.permute.xlu0 %4347
        %4349 = vrot.lane.b32.xlu0 %v4299, 96
        %v4350 = vpop.permute.xlu0 %4349
        %4351 = vrot.lane.b32.xlu0 %v4306, 96
        %v4352 = vpop.permute.xlu0 %4351
        %4353 = vrot.lane.b32.xlu0 %v4305, 96
        %v4354 = vpop.permute.xlu0 %4353
        %4355 = vrot.lane.b32.xlu0 %v4312, 96
        %v4356 = vpop.permute.xlu0 %4355
        %4357 = vrot.lane.b32.xlu0 %v4311, 96
        %v4358 = vpop.permute.xlu0 %4357
        %4359 = vrot.lane.b32.xlu0 %v4318, 96
        %v4360 = vpop.permute.xlu0 %4359
        %4361 = vrot.lane.b32.xlu0 %v4317, 96
        %v4362 = vpop.permute.xlu0 %4361
        %v4363 = vsel %vm3896, %v4332, %v4334
        %v4364 = vsel %vm3896, %v4336, %v4338
        %v4365 = vsel %vm3896, %v4340, %v4342
        %v4366 = vsel %vm3896, %v4344, %v4346
        %v4367 = vsel %vm3896, %v4348, %v4350
        %v4368 = vsel %vm3896, %v4352, %v4354
        %v4369 = vsel %vm3896, %v4356, %v4358
        %v4370 = vsel %vm3896, %v4360, %v4362
        %4379 = vmatprep.subr.bf16.mxu0 0
        %4380 = vmatpush1.bf16.msra.mxu0 %v4363
        %4381 = vmatprep.subr.bf16.mxu0 0
        %4382 = vmatpush1.bf16.msra.mxu0 %v4364
        %4383 = vmatprep.subr.bf16.mxu0 0
        %4384 = vmatpush1.bf16.msra.mxu0 %v4365
        %4385 = vmatprep.subr.bf16.mxu0 0
        %4386 = vmatpush1.bf16.msra.mxu0 %v4366
        %4387 = vmatprep.subr.bf16.mxu0 0
        %4388 = vmatpush1.bf16.msra.mxu0 %v4367
        %4389 = vmatprep.subr.bf16.mxu0 0
        %4390 = vmatpush1.bf16.msra.mxu0 %v4368
        %4391 = vmatprep.subr.bf16.mxu0 0
        %4392 = vmatpush1.bf16.msra.mxu0 %v4369
        %4393 = vmatprep.subr.bf16.mxu0 0
        %4394 = vmatpush1.bf16.msra.mxu0 %v4370
        %4395 = vmatprep.subr.bf16.mxu0 0
        %4396 = vmatpush1.bf16.msra.mxu0 0
        %4397 = vmatprep.subr.bf16.mxu0 0
        %4398 = vmatpush1.bf16.msra.mxu0 0
        %4399 = vmatprep.subr.bf16.mxu0 0
        %4400 = vmatpush1.bf16.msra.mxu0 0
        %4401 = vmatprep.subr.bf16.mxu0 0
        %4402 = vmatpush1.bf16.msra.mxu0 0
        %4403 = vmatprep.subr.bf16.mxu0 0
        %4404 = vmatpush1.bf16.msra.mxu0 0
        %4405 = vmatprep.subr.bf16.mxu0 0
        %4406 = vmatpush1.bf16.msra.mxu0 0
        %4407 = vmatprep.subr.bf16.mxu0 0
        %4408 = vmatpush1.bf16.msra.mxu0 0
        %4409 = vmatprep.subr.bf16.mxu0 0
        %4410 = vmatpush1.bf16.msra.mxu0 0
        %4411 = vmatprep.mubr.bf16.mxu0 0
        %4412 = vmatmul.mubr.bf16.gmra.mrb[0].mxu0 %v4329
        %v4413 = vpop.f32.mrb[0].mxu0
        %v4414 = vadd.f32 0.0, %v4413
        %v4415 = vpop.f32.mrb[0].mxu0
        %v4416 = vpop.f32.mrb[0].mxu0
        %v4417 = vadd.f32 0.0, %v4416
        %v4418 = vpop.f32.mrb[0].mxu0
        %4419 = vdwg.mxu0
        %v4422 = vunpack.c.l.b16 %v4320
        %v4423 = vunpack.c.l.b16 %v4321
        %v4424 = vpack.c.b16 %v4423, %v4422
        %4426 = vmatprep.subr.bf16.mxu0 0
        %4427 = vmatpush1.bf16.msra.mxu0 %v4273
        %4428 = vmatprep.subr.bf16.mxu0 0
        %4429 = vmatpush1.bf16.msra.mxu0 %v4282
        %4430 = vmatprep.subr.bf16.mxu0 0
        %4431 = vmatpush1.bf16.msra.mxu0 %v4288
        %4432 = vmatprep.subr.bf16.mxu0 0
        %4433 = vmatpush1.bf16.msra.mxu0 %v4294
        %4434 = vmatprep.subr.bf16.mxu0 0
        %4435 = vmatpush1.bf16.msra.mxu0 %v4300
        %4436 = vmatprep.subr.bf16.mxu0 0
        %4437 = vmatpush1.bf16.msra.mxu0 %v4306
        %4438 = vmatprep.subr.bf16.mxu0 0
        %4439 = vmatpush1.bf16.msra.mxu0 %v4312
        %4440 = vmatprep.subr.bf16.mxu0 0
        %4441 = vmatpush1.bf16.msra.mxu0 %v4318
        %4442 = vmatprep.subr.bf16.mxu0 0
        %4443 = vmatpush1.bf16.msra.mxu0 0
        %4444 = vmatprep.subr.bf16.mxu0 0
        %4445 = vmatpush1.bf16.msra.mxu0 0
        %4446 = vmatprep.subr.bf16.mxu0 0
        %4447 = vmatpush1.bf16.msra.mxu0 0
        %4448 = vmatprep.subr.bf16.mxu0 0
        %4449 = vmatpush1.bf16.msra.mxu0 0
        %4450 = vmatprep.subr.bf16.mxu0 0
        %4451 = vmatpush1.bf16.msra.mxu0 0
        %4452 = vmatprep.subr.bf16.mxu0 0
        %4453 = vmatpush1.bf16.msra.mxu0 0
        %4454 = vmatprep.subr.bf16.mxu0 0
        %4455 = vmatpush1.bf16.msra.mxu0 0
        %4456 = vmatprep.subr.bf16.mxu0 0
        %4457 = vmatpush1.bf16.msra.mxu0 0
        %4458 = vmatprep.mubr.bf16.mxu0 0
        %4459 = vmatmul.mubr.bf16.gmra.mrb[0].mxu0 %v4424
        %v4460 = vpop.f32.mrb[0].mxu0
        %v4461 = vadd.f32 %v4414, %v4460
        %v4462 = vpop.f32.mrb[0].mxu0
        %v4463 = vpop.f32.mrb[0].mxu0
        %v4464 = vadd.f32 %v4417, %v4463
        %v4465 = vpop.f32.mrb[0].mxu0
        %4466 = vdwg.mxu0
        %s4467 = scalar_lea.vmem %s6, 16
        %v4468 = vld [vmem:[%s4467] sm:$0xf]
        %v4469 = vld [vmem:[%s4467 + $0x4] sm:$0xf]
        %v4472 = vunpack.c.l.b16 %v4468
        %v4473 = vunpack.c.l.b16 %v4469
        %v4474 = vpack.c.b16 %v4473, %v4472
        %4476 = vrot.lane.b32.xlu0 %v4274, 64
        %v4477 = vpop.permute.xlu0 %4476
        %4478 = vrot.lane.b32.xlu0 %v4275, 64
        %v4479 = vpop.permute.xlu0 %4478
        %4480 = vrot.lane.b32.xlu0 %v4282, 64
        %v4481 = vpop.permute.xlu0 %4480
        %4482 = vrot.lane.b32.xlu0 %v4281, 64
        %v4483 = vpop.permute.xlu0 %4482
        %4484 = vrot.lane.b32.xlu0 %v4288, 64
        %v4485 = vpop.permute.xlu0 %4484
        %4486 = vrot.lane.b32.xlu0 %v4287, 64
        %v4487 = vpop.permute.xlu0 %4486
        %4488 = vrot.lane.b32.xlu0 %v4294, 64
        %v4489 = vpop.permute.xlu0 %4488
        %4490 = vrot.lane.b32.xlu0 %v4293, 64
        %v4491 = vpop.permute.xlu0 %4490
        %4492 = vrot.lane.b32.xlu0 %v4300, 64
        %v4493 = vpop.permute.xlu0 %4492
        %4494 = vrot.lane.b32.xlu0 %v4299, 64
        %v4495 = vpop.permute.xlu0 %4494
        %4496 = vrot.lane.b32.xlu0 %v4306, 64
        %v4497 = vpop.permute.xlu0 %4496
        %4498 = vrot.lane.b32.xlu0 %v4305, 64
        %v4499 = vpop.permute.xlu0 %4498
        %4500 = vrot.lane.b32.xlu0 %v4312, 64
        %v4501 = vpop.permute.xlu0 %4500
        %4502 = vrot.lane.b32.xlu0 %v4311, 64
        %v4503 = vpop.permute.xlu0 %4502
        %4504 = vrot.lane.b32.xlu0 %v4318, 64
        %v4505 = vpop.permute.xlu0 %4504
        %4506 = vrot.lane.b32.xlu0 %v4317, 64
        %v4507 = vpop.permute.xlu0 %4506
        %v4508 = vsel %vm4042, %v4477, %v4479
        %v4509 = vsel %vm4042, %v4481, %v4483
        %v4510 = vsel %vm4042, %v4485, %v4487
        %v4511 = vsel %vm4042, %v4489, %v4491
        %v4512 = vsel %vm4042, %v4493, %v4495
        %v4513 = vsel %vm4042, %v4497, %v4499
        %v4514 = vsel %vm4042, %v4501, %v4503
        %v4515 = vsel %vm4042, %v4505, %v4507
        %4524 = vmatprep.subr.bf16.mxu0 0
        %4525 = vmatpush1.bf16.msra.mxu0 %v4508
        %4526 = vmatprep.subr.bf16.mxu0 0
        %4527 = vmatpush1.bf16.msra.mxu0 %v4509
        %4528 = vmatprep.subr.bf16.mxu0 0
        %4529 = vmatpush1.bf16.msra.mxu0 %v4510
        %4530 = vmatprep.subr.bf16.mxu0 0
        %4531 = vmatpush1.bf16.msra.mxu0 %v4511
        %4532 = vmatprep.subr.bf16.mxu0 0
        %4533 = vmatpush1.bf16.msra.mxu0 %v4512
        %4534 = vmatprep.subr.bf16.mxu0 0
        %4535 = vmatpush1.bf16.msra.mxu0 %v4513
        %4536 = vmatprep.subr.bf16.mxu0 0
        %4537 = vmatpush1.bf16.msra.mxu0 %v4514
        %4538 = vmatprep.subr.bf16.mxu0 0
        %4539 = vmatpush1.bf16.msra.mxu0 %v4515
        %4540 = vmatprep.subr.bf16.mxu0 0
        %4541 = vmatpush1.bf16.msra.mxu0 0
        %4542 = vmatprep.subr.bf16.mxu0 0
        %4543 = vmatpush1.bf16.msra.mxu0 0
        %4544 = vmatprep.subr.bf16.mxu0 0
        %4545 = vmatpush1.bf16.msra.mxu0 0
        %4546 = vmatprep.subr.bf16.mxu0 0
        %4547 = vmatpush1.bf16.msra.mxu0 0
        %4548 = vmatprep.subr.bf16.mxu0 0
        %4549 = vmatpush1.bf16.msra.mxu0 0
        %4550 = vmatprep.subr.bf16.mxu0 0
        %4551 = vmatpush1.bf16.msra.mxu0 0
        %4552 = vmatprep.subr.bf16.mxu0 0
        %4553 = vmatpush1.bf16.msra.mxu0 0
        %4554 = vmatprep.subr.bf16.mxu0 0
        %4555 = vmatpush1.bf16.msra.mxu0 0
        %4556 = vmatprep.mubr.bf16.mxu0 0
        %4557 = vmatmul.mubr.bf16.gmra.mrb[0].mxu0 %v4474
        %v4558 = vpop.f32.mrb[0].mxu0
        %v4559 = vadd.f32 0.0, %v4558
        %v4560 = vpop.f32.mrb[0].mxu0
        %v4561 = vpop.f32.mrb[0].mxu0
        %v4562 = vadd.f32 0.0, %v4561
        %v4563 = vpop.f32.mrb[0].mxu0
        %4564 = vdwg.mxu0
        %v4565 = vadd.f32 %v4461, %v4559
        %v4566 = vadd.f32 %v4464, %v4562
        %s4567 = scalar_lea.vmem %s6, 24
        %v4568 = vld [vmem:[%s4567] sm:$0xf]
        %v4569 = vld [vmem:[%s4567 + $0x4] sm:$0xf]
        %v4572 = vunpack.c.l.b16 %v4568
        %v4573 = vunpack.c.l.b16 %v4569
        %v4574 = vpack.c.b16 %v4573, %v4572
        %4576 = vrot.lane.b32.xlu0 %v4274, 32
        %v4577 = vpop.permute.xlu0 %4576
        %4578 = vrot.lane.b32.xlu0 %v4275, 32
        %v4579 = vpop.permute.xlu0 %4578
        %4580 = vrot.lane.b32.xlu0 %v4282, 32
        %v4581 = vpop.permute.xlu0 %4580
        %4582 = vrot.lane.b32.xlu0 %v4281, 32
        %v4583 = vpop.permute.xlu0 %4582
        %4584 = vrot.lane.b32.xlu0 %v4288, 32
        %v4585 = vpop.permute.xlu0 %4584
        %4586 = vrot.lane.b32.xlu0 %v4287, 32
        %v4587 = vpop.permute.xlu0 %4586
        %4588 = vrot.lane.b32.xlu0 %v4294, 32
        %v4589 = vpop.permute.xlu0 %4588
        %4590 = vrot.lane.b32.xlu0 %v4293, 32
        %v4591 = vpop.permute.xlu0 %4590
        %4592 = vrot.lane.b32.xlu0 %v4300, 32
        %v4593 = vpop.permute.xlu0 %4592
        %4594 = vrot.lane.b32.xlu0 %v4299, 32
        %v4595 = vpop.permute.xlu0 %4594
        %4596 = vrot.lane.b32.xlu0 %v4306, 32
        %v4597 = vpop.permute.xlu0 %4596
        %4598 = vrot.lane.b32.xlu0 %v4305, 32
        %v4599 = vpop.permute.xlu0 %4598
        %4600 = vrot.lane.b32.xlu0 %v4312, 32
        %v4601 = vpop.permute.xlu0 %4600
        %4602 = vrot.lane.b32.xlu0 %v4311, 32
        %v4603 = vpop.permute.xlu0 %4602
        %4604 = vrot.lane.b32.xlu0 %v4318, 32
        %v4605 = vpop.permute.xlu0 %4604
        %4606 = vrot.lane.b32.xlu0 %v4317, 32
        %v4607 = vpop.permute.xlu0 %4606
        %v4608 = vsel %vm3795, %v4577, %v4579
        %v4609 = vsel %vm3795, %v4581, %v4583
        %v4610 = vsel %vm3795, %v4585, %v4587
        %v4611 = vsel %vm3795, %v4589, %v4591
        %v4612 = vsel %vm3795, %v4593, %v4595
        %v4613 = vsel %vm3795, %v4597, %v4599
        %v4614 = vsel %vm3795, %v4601, %v4603
        %v4615 = vsel %vm3795, %v4605, %v4607
        %4624 = vmatprep.subr.bf16.mxu0 0
        %4625 = vmatpush1.bf16.msra.mxu0 %v4608
        %4626 = vmatprep.subr.bf16.mxu0 0
        %4627 = vmatpush1.bf16.msra.mxu0 %v4609
        %4628 = vmatprep.subr.bf16.mxu0 0
        %4629 = vmatpush1.bf16.msra.mxu0 %v4610
        %4630 = vmatprep.subr.bf16.mxu0 0
        %4631 = vmatpush1.bf16.msra.mxu0 %v4611
        %4632 = vmatprep.subr.bf16.mxu0 0
        %4633 = vmatpush1.bf16.msra.mxu0 %v4612
        %4634 = vmatprep.subr.bf16.mxu0 0
        %4635 = vmatpush1.bf16.msra.mxu0 %v4613
        %4636 = vmatprep.subr.bf16.mxu0 0
        %4637 = vmatpush1.bf16.msra.mxu0 %v4614
        %4638 = vmatprep.subr.bf16.mxu0 0
        %4639 = vmatpush1.bf16.msra.mxu0 %v4615
        %4640 = vmatprep.subr.bf16.mxu0 0
        %4641 = vmatpush1.bf16.msra.mxu0 0
        %4642 = vmatprep.subr.bf16.mxu0 0
        %4643 = vmatpush1.bf16.msra.mxu0 0
        %4644 = vmatprep.subr.bf16.mxu0 0
        %4645 = vmatpush1.bf16.msra.mxu0 0
        %4646 = vmatprep.subr.bf16.mxu0 0
        %4647 = vmatpush1.bf16.msra.mxu0 0
        %4648 = vmatprep.subr.bf16.mxu0 0
        %4649 = vmatpush1.bf16.msra.mxu0 0
        %4650 = vmatprep.subr.bf16.mxu0 0
        %4651 = vmatpush1.bf16.msra.mxu0 0
        %4652 = vmatprep.subr.bf16.mxu0 0
        %4653 = vmatpush1.bf16.msra.mxu0 0
        %4654 = vmatprep.subr.bf16.mxu0 0
        %4655 = vmatpush1.bf16.msra.mxu0 0
        %4656 = vmatprep.mubr.bf16.mxu0 0
        %4657 = vmatmul.mubr.bf16.gmra.mrb[0].mxu0 %v4574
        %v4658 = vpop.f32.mrb[0].mxu0
        %v4659 = vadd.f32 0.0, %v4658
        %v4660 = vpop.f32.mrb[0].mxu0
        %v4661 = vpop.f32.mrb[0].mxu0
        %v4662 = vadd.f32 0.0, %v4661
        %v4663 = vpop.f32.mrb[0].mxu0
        %4664 = vdwg.mxu0
        %v4665 = vadd.f32 %v4565, %v4659
        %v4666 = vadd.f32 %v4566, %v4662
        %v4667 = vld [vmem:[%s7] sm:$0xf]
        %v4668 = vld [vmem:[%s7 + $0x4] sm:$0xf]
        %v4671 = vunpack.c.l.b16 %v4667
        %v4672 = vunpack.c.l.b16 %v4668
        %v4673 = vpack.c.b16 %v4672, %v4671
        %v4675 = vsel %vm2496, %v4673, 0
        %4677 = vmatprep.subr.bf16.mxu0 0
        %4678 = vmatpush1.bf16.msra.mxu0 %v4275
        %4679 = vmatprep.subr.bf16.mxu0 0
        %4680 = vmatpush1.bf16.msra.mxu0 0
        %4681 = vmatprep.subr.bf16.mxu0 0
        %4682 = vmatpush1.bf16.msra.mxu0 0
        %4683 = vmatprep.subr.bf16.mxu0 0
        %4684 = vmatpush1.bf16.msra.mxu0 0
        %4685 = vmatprep.subr.bf16.mxu0 0
        %4686 = vmatpush1.bf16.msra.mxu0 0
        %4687 = vmatprep.subr.bf16.mxu0 0
        %4688 = vmatpush1.bf16.msra.mxu0 0
        %4689 = vmatprep.subr.bf16.mxu0 0
        %4690 = vmatpush1.bf16.msra.mxu0 0
        %4691 = vmatprep.subr.bf16.mxu0 0
        %4692 = vmatpush1.bf16.msra.mxu0 0
        %4693 = vmatprep.subr.bf16.mxu0 0
        %4694 = vmatpush1.bf16.msra.mxu0 0
        %4695 = vmatprep.subr.bf16.mxu0 0
        %4696 = vmatpush1.bf16.msra.mxu0 0
        %4697 = vmatprep.subr.bf16.mxu0 0
        %4698 = vmatpush1.bf16.msra.mxu0 0
        %4699 = vmatprep.subr.bf16.mxu0 0
        %4700 = vmatpush1.bf16.msra.mxu0 0
        %4701 = vmatprep.subr.bf16.mxu0 0
        %4702 = vmatpush1.bf16.msra.mxu0 0
        %4703 = vmatprep.subr.bf16.mxu0 0
        %4704 = vmatpush1.bf16.msra.mxu0 0
        %4705 = vmatprep.subr.bf16.mxu0 0
        %4706 = vmatpush1.bf16.msra.mxu0 0
        %4707 = vmatprep.subr.bf16.mxu0 0
        %4708 = vmatpush1.bf16.msra.mxu0 0
        %4709 = vmatprep.mubr.bf16.mxu0 0
        %4710 = vmatmul.mubr.bf16.gmra.mrb[0].mxu0 %v4675
        %v4711 = vpop.f32.mrb[0].mxu0
        %v4712 = vadd.f32 0.0, %v4711
        %v4713 = vpop.f32.mrb[0].mxu0
        %v4714 = vpop.f32.mrb[0].mxu0
        %v4715 = vadd.f32 0.0, %v4714
        %v4716 = vpop.f32.mrb[0].mxu0
        %4717 = vdwg.mxu0
        %v4718 = vadd.f32 %v4665, %v4712
        %v4719 = vadd.f32 %v4666, %v4715
        %v4720 = vld [vmem:[%s8] sm:$0xff]
        %v4721 = vld [vmem:[%s8 + $0x8] sm:$0xff]
        %4723 = vset.pattern.permute.xlu0 0
        %4724 = vperm.xlu0 %4723, %v4720
        %v4725 = vpop.permute.xlu0 %4724
        %4728 = vset.pattern.permute.xlu0 0
        %4729 = vperm.xlu0 %4728, %v4721
        %v4730 = vpop.permute.xlu0 %4729
        %v4732 = vadd.f32 %v4718, %v4725
        %v4733 = vadd.f32 %v4719, %v4730
        %v4734 = vmax.f32 %v4732, 0.0
        %v4735 = vmax.f32 %v4733, 0.0
        %v4736 = vpack.c.bf16 %v4735, %v4734
        %4737 = vst [vmem:[#allocation5 + $0x8] sm:$0xff] %v4736
        %v4738 = vld [vmem:[#allocation5] sm:$0xff]
        %v4739 = vld [vmem:[#allocation5] sm:$0xff]
        %v4740 = vld [vmem:[#allocation5 + $0x8] sm:$0xff]
        %4743 = vrot.lane.b32.xlu0 %v4739, 124
        %v4744 = vpop.permute.xlu0 %4743
        %4745 = vrot.lane.b32.xlu0 %v4740, 124
        %v4746 = vpop.permute.xlu0 %4745
        %v4747 = vsel %vm3808, %v4744, %v4746
        %4749 = vrot.lane.b32.xlu0 %v4739, 120
        %v4750 = vpop.permute.xlu0 %4749
        %4751 = vrot.lane.b32.xlu0 %v4740, 120
        %v4752 = vpop.permute.xlu0 %4751
        %v4753 = vsel %vm3815, %v4750, %v4752
        %4755 = vrot.lane.b32.xlu0 %v4739, 116
        %v4756 = vpop.permute.xlu0 %4755
        %4757 = vrot.lane.b32.xlu0 %v4740, 116
        %v4758 = vpop.permute.xlu0 %4757
        %v4759 = vsel %vm3822, %v4756, %v4758
        %4761 = vrot.lane.b32.xlu0 %v4739, 112
        %v4762 = vpop.permute.xlu0 %4761
        %4763 = vrot.lane.b32.xlu0 %v4740, 112
        %v4764 = vpop.permute.xlu0 %4763
        %v4765 = vsel %vm3829, %v4762, %v4764
        %4767 = vrot.lane.b32.xlu0 %v4739, 108
        %v4768 = vpop.permute.xlu0 %4767
        %4769 = vrot.lane.b32.xlu0 %v4740, 108
        %v4770 = vpop.permute.xlu0 %4769
        %v4771 = vsel %vm3836, %v4768, %v4770
        %4773 = vrot.lane.b32.xlu0 %v4739, 104
        %v4774 = vpop.permute.xlu0 %4773
        %4775 = vrot.lane.b32.xlu0 %v4740, 104
        %v4776 = vpop.permute.xlu0 %4775
        %v4777 = vsel %vm3843, %v4774, %v4776
        %4779 = vrot.lane.b32.xlu0 %v4739, 100
        %v4780 = vpop.permute.xlu0 %4779
        %4781 = vrot.lane.b32.xlu0 %v4740, 100
        %v4782 = vpop.permute.xlu0 %4781
        %v4783 = vsel %vm3850, %v4780, %v4782
        %v4785 = vld [vmem:[%s9] sm:$0xf]
        %v4786 = vld [vmem:[%s9 + $0x4] sm:$0xf]
        %s4787 = scalar_lea.vmem %s9, 8
        %v4788 = vld [vmem:[%s4787] sm:$0xf]
        %v4789 = vld [vmem:[%s4787 + $0x4] sm:$0xf]
        %v4792 = vunpack.c.l.b16 %v4788
        %v4793 = vunpack.c.l.b16 %v4789
        %v4794 = vpack.c.b16 %v4793, %v4792
        %4796 = vrot.lane.b32.xlu0 %v4739, 96
        %v4797 = vpop.permute.xlu0 %4796
        %4798 = vrot.lane.b32.xlu0 %v4740, 96
        %v4799 = vpop.permute.xlu0 %4798
        %4800 = vrot.lane.b32.xlu0 %v4747, 96
        %v4801 = vpop.permute.xlu0 %4800
        %4802 = vrot.lane.b32.xlu0 %v4746, 96
        %v4803 = vpop.permute.xlu0 %4802
        %4804 = vrot.lane.b32.xlu0 %v4753, 96
        %v4805 = vpop.permute.xlu0 %4804
        %4806 = vrot.lane.b32.xlu0 %v4752, 96
        %v4807 = vpop.permute.xlu0 %4806
        %4808 = vrot.lane.b32.xlu0 %v4759, 96
        %v4809 = vpop.permute.xlu0 %4808
        %4810 = vrot.lane.b32.xlu0 %v4758, 96
        %v4811 = vpop.permute.xlu0 %4810
        %4812 = vrot.lane.b32.xlu0 %v4765, 96
        %v4813 = vpop.permute.xlu0 %4812
        %4814 = vrot.lane.b32.xlu0 %v4764, 96
        %v4815 = vpop.permute.xlu0 %4814
        %4816 = vrot.lane.b32.xlu0 %v4771, 96
        %v4817 = vpop.permute.xlu0 %4816
        %4818 = vrot.lane.b32.xlu0 %v4770, 96
        %v4819 = vpop.permute.xlu0 %4818
        %4820 = vrot.lane.b32.xlu0 %v4777, 96
        %v4821 = vpop.permute.xlu0 %4820
        %4822 = vrot.lane.b32.xlu0 %v4776, 96
        %v4823 = vpop.permute.xlu0 %4822
        %4824 = vrot.lane.b32.xlu0 %v4783, 96
        %v4825 = vpop.permute.xlu0 %4824
        %4826 = vrot.lane.b32.xlu0 %v4782, 96
        %v4827 = vpop.permute.xlu0 %4826
        %v4828 = vsel %vm3896, %v4797, %v4799
        %v4829 = vsel %vm3896, %v4801, %v4803
        %v4830 = vsel %vm3896, %v4805, %v4807
        %v4831 = vsel %vm3896, %v4809, %v4811
        %v4832 = vsel %vm3896, %v4813, %v4815
        %v4833 = vsel %vm3896, %v4817, %v4819
        %v4834 = vsel %vm3896, %v4821, %v4823
        %v4835 = vsel %vm3896, %v4825, %v4827
        %4844 = vmatprep.subr.bf16.mxu0 0
        %4845 = vmatpush1.bf16.msra.mxu0 %v4828
        %4846 = vmatprep.subr.bf16.mxu0 0
        %4847 = vmatpush1.bf16.msra.mxu0 %v4829
        %4848 = vmatprep.subr.bf16.mxu0 0
        %4849 = vmatpush1.bf16.msra.mxu0 %v4830
        %4850 = vmatprep.subr.bf16.mxu0 0
        %4851 = vmatpush1.bf16.msra.mxu0 %v4831
        %4852 = vmatprep.subr.bf16.mxu0 0
        %4853 = vmatpush1.bf16.msra.mxu0 %v4832
        %4854 = vmatprep.subr.bf16.mxu0 0
        %4855 = vmatpush1.bf16.msra.mxu0 %v4833
        %4856 = vmatprep.subr.bf16.mxu0 0
        %4857 = vmatpush1.bf16.msra.mxu0 %v4834
        %4858 = vmatprep.subr.bf16.mxu0 0
        %4859 = vmatpush1.bf16.msra.mxu0 %v4835
        %4860 = vmatprep.subr.bf16.mxu0 0
        %4861 = vmatpush1.bf16.msra.mxu0 0
        %4862 = vmatprep.subr.bf16.mxu0 0
        %4863 = vmatpush1.bf16.msra.mxu0 0
        %4864 = vmatprep.subr.bf16.mxu0 0
        %4865 = vmatpush1.bf16.msra.mxu0 0
        %4866 = vmatprep.subr.bf16.mxu0 0
        %4867 = vmatpush1.bf16.msra.mxu0 0
        %4868 = vmatprep.subr.bf16.mxu0 0
        %4869 = vmatpush1.bf16.msra.mxu0 0
        %4870 = vmatprep.subr.bf16.mxu0 0
        %4871 = vmatpush1.bf16.msra.mxu0 0
        %4872 = vmatprep.subr.bf16.mxu0 0
        %4873 = vmatpush1.bf16.msra.mxu0 0
        %4874 = vmatprep.subr.bf16.mxu0 0
        %4875 = vmatpush1.bf16.msra.mxu0 0
        %4876 = vmatprep.mubr.bf16.mxu0 0
        %4877 = vmatmul.mubr.bf16.gmra.mrb[0].mxu0 %v4794
        %v4878 = vpop.f32.mrb[0].mxu0
        %v4879 = vadd.f32 0.0, %v4878
        %v4880 = vpop.f32.mrb[0].mxu0
        %v4881 = vpop.f32.mrb[0].mxu0
        %v4882 = vadd.f32 0.0, %v4881
        %v4883 = vpop.f32.mrb[0].mxu0
        %4884 = vdwg.mxu0
        %v4887 = vunpack.c.l.b16 %v4785
        %v4888 = vunpack.c.l.b16 %v4786
        %v4889 = vpack.c.b16 %v4888, %v4887
        %4891 = vmatprep.subr.bf16.mxu0 0
        %4892 = vmatpush1.bf16.msra.mxu0 %v4738
        %4893 = vmatprep.subr.bf16.mxu0 0
        %4894 = vmatpush1.bf16.msra.mxu0 %v4747
        %4895 = vmatprep.subr.bf16.mxu0 0
        %4896 = vmatpush1.bf16.msra.mxu0 %v4753
        %4897 = vmatprep.subr.bf16.mxu0 0
        %4898 = vmatpush1.bf16.msra.mxu0 %v4759
        %4899 = vmatprep.subr.bf16.mxu0 0
        %4900 = vmatpush1.bf16.msra.mxu0 %v4765
        %4901 = vmatprep.subr.bf16.mxu0 0
        %4902 = vmatpush1.bf16.msra.mxu0 %v4771
        %4903 = vmatprep.subr.bf16.mxu0 0
        %4904 = vmatpush1.bf16.msra.mxu0 %v4777
        %4905 = vmatprep.subr.bf16.mxu0 0
        %4906 = vmatpush1.bf16.msra.mxu0 %v4783
        %4907 = vmatprep.subr.bf16.mxu0 0
        %4908 = vmatpush1.bf16.msra.mxu0 0
        %4909 = vmatprep.subr.bf16.mxu0 0
        %4910 = vmatpush1.bf16.msra.mxu0 0
        %4911 = vmatprep.subr.bf16.mxu0 0
        %4912 = vmatpush1.bf16.msra.mxu0 0
        %4913 = vmatprep.subr.bf16.mxu0 0
        %4914 = vmatpush1.bf16.msra.mxu0 0
        %4915 = vmatprep.subr.bf16.mxu0 0
        %4916 = vmatpush1.bf16.msra.mxu0 0
        %4917 = vmatprep.subr.bf16.mxu0 0
        %4918 = vmatpush1.bf16.msra.mxu0 0
        %4919 = vmatprep.subr.bf16.mxu0 0
        %4920 = vmatpush1.bf16.msra.mxu0 0
        %4921 = vmatprep.subr.bf16.mxu0 0
        %4922 = vmatpush1.bf16.msra.mxu0 0
        %4923 = vmatprep.mubr.bf16.mxu0 0
        %4924 = vmatmul.mubr.bf16.gmra.mrb[0].mxu0 %v4889
        %v4925 = vpop.f32.mrb[0].mxu0
        %v4926 = vadd.f32 %v4879, %v4925
        %v4927 = vpop.f32.mrb[0].mxu0
        %v4928 = vpop.f32.mrb[0].mxu0
        %v4929 = vadd.f32 %v4882, %v4928
        %v4930 = vpop.f32.mrb[0].mxu0
        %4931 = vdwg.mxu0
        %s4932 = scalar_lea.vmem %s9, 16
        %v4933 = vld [vmem:[%s4932] sm:$0xf]
        %v4934 = vld [vmem:[%s4932 + $0x4] sm:$0xf]
        %v4937 = vunpack.c.l.b16 %v4933
        %v4938 = vunpack.c.l.b16 %v4934
        %v4939 = vpack.c.b16 %v4938, %v4937
        %4941 = vrot.lane.b32.xlu0 %v4739, 64
        %v4942 = vpop.permute.xlu0 %4941
        %4943 = vrot.lane.b32.xlu0 %v4740, 64
        %v4944 = vpop.permute.xlu0 %4943
        %4945 = vrot.lane.b32.xlu0 %v4747, 64
        %v4946 = vpop.permute.xlu0 %4945
        %4947 = vrot.lane.b32.xlu0 %v4746, 64
        %v4948 = vpop.permute.xlu0 %4947
        %4949 = vrot.lane.b32.xlu0 %v4753, 64
        %v4950 = vpop.permute.xlu0 %4949
        %4951 = vrot.lane.b32.xlu0 %v4752, 64
        %v4952 = vpop.permute.xlu0 %4951
        %4953 = vrot.lane.b32.xlu0 %v4759, 64
        %v4954 = vpop.permute.xlu0 %4953
        %4955 = vrot.lane.b32.xlu0 %v4758, 64
        %v4956 = vpop.permute.xlu0 %4955
        %4957 = vrot.lane.b32.xlu0 %v4765, 64
        %v4958 = vpop.permute.xlu0 %4957
        %4959 = vrot.lane.b32.xlu0 %v4764, 64
        %v4960 = vpop.permute.xlu0 %4959
        %4961 = vrot.lane.b32.xlu0 %v4771, 64
        %v4962 = vpop.permute.xlu0 %4961
        %4963 = vrot.lane.b32.xlu0 %v4770, 64
        %v4964 = vpop.permute.xlu0 %4963
        %4965 = vrot.lane.b32.xlu0 %v4777, 64
        %v4966 = vpop.permute.xlu0 %4965
        %4967 = vrot.lane.b32.xlu0 %v4776, 64
        %v4968 = vpop.permute.xlu0 %4967
        %4969 = vrot.lane.b32.xlu0 %v4783, 64
        %v4970 = vpop.permute.xlu0 %4969
        %4971 = vrot.lane.b32.xlu0 %v4782, 64
        %v4972 = vpop.permute.xlu0 %4971
        %v4973 = vsel %vm4042, %v4942, %v4944
        %v4974 = vsel %vm4042, %v4946, %v4948
        %v4975 = vsel %vm4042, %v4950, %v4952
        %v4976 = vsel %vm4042, %v4954, %v4956
        %v4977 = vsel %vm4042, %v4958, %v4960
        %v4978 = vsel %vm4042, %v4962, %v4964
        %v4979 = vsel %vm4042, %v4966, %v4968
        %v4980 = vsel %vm4042, %v4970, %v4972
        %4989 = vmatprep.subr.bf16.mxu0 0
        %4990 = vmatpush1.bf16.msra.mxu0 %v4973
        %4991 = vmatprep.subr.bf16.mxu0 0
        %4992 = vmatpush1.bf16.msra.mxu0 %v4974
        %4993 = vmatprep.subr.bf16.mxu0 0
        %4994 = vmatpush1.bf16.msra.mxu0 %v4975
        %4995 = vmatprep.subr.bf16.mxu0 0
        %4996 = vmatpush1.bf16.msra.mxu0 %v4976
        %4997 = vmatprep.subr.bf16.mxu0 0
        %4998 = vmatpush1.bf16.msra.mxu0 %v4977
        %4999 = vmatprep.subr.bf16.mxu0 0
        %5000 = vmatpush1.bf16.msra.mxu0 %v4978
        %5001 = vmatprep.subr.bf16.mxu0 0
        %5002 = vmatpush1.bf16.msra.mxu0 %v4979
        %5003 = vmatprep.subr.bf16.mxu0 0
        %5004 = vmatpush1.bf16.msra.mxu0 %v4980
        %5005 = vmatprep.subr.bf16.mxu0 0
        %5006 = vmatpush1.bf16.msra.mxu0 0
        %5007 = vmatprep.subr.bf16.mxu0 0
        %5008 = vmatpush1.bf16.msra.mxu0 0
        %5009 = vmatprep.subr.bf16.mxu0 0
        %5010 = vmatpush1.bf16.msra.mxu0 0
        %5011 = vmatprep.subr.bf16.mxu0 0
        %5012 = vmatpush1.bf16.msra.mxu0 0
        %5013 = vmatprep.subr.bf16.mxu0 0
        %5014 = vmatpush1.bf16.msra.mxu0 0
        %5015 = vmatprep.subr.bf16.mxu0 0
        %5016 = vmatpush1.bf16.msra.mxu0 0
        %5017 = vmatprep.subr.bf16.mxu0 0
        %5018 = vmatpush1.bf16.msra.mxu0 0
        %5019 = vmatprep.subr.bf16.mxu0 0
        %5020 = vmatpush1.bf16.msra.mxu0 0
        %5021 = vmatprep.mubr.bf16.mxu0 0
        %5022 = vmatmul.mubr.bf16.gmra.mrb[0].mxu0 %v4939
        %v5023 = vpop.f32.mrb[0].mxu0
        %v5024 = vadd.f32 0.0, %v5023
        %v5025 = vpop.f32.mrb[0].mxu0
        %v5026 = vpop.f32.mrb[0].mxu0
        %v5027 = vadd.f32 0.0, %v5026
        %v5028 = vpop.f32.mrb[0].mxu0
        %5029 = vdwg.mxu0
        %v5030 = vadd.f32 %v4926, %v5024
        %v5031 = vadd.f32 %v4929, %v5027
        %s5032 = scalar_lea.vmem %s9, 24
        %v5033 = vld [vmem:[%s5032] sm:$0xf]
        %v5034 = vld [vmem:[%s5032 + $0x4] sm:$0xf]
        %v5037 = vunpack.c.l.b16 %v5033
        %v5038 = vunpack.c.l.b16 %v5034
        %v5039 = vpack.c.b16 %v5038, %v5037
        %5041 = vrot.lane.b32.xlu0 %v4739, 32
        %v5042 = vpop.permute.xlu0 %5041
        %5043 = vrot.lane.b32.xlu0 %v4740, 32
        %v5044 = vpop.permute.xlu0 %5043
        %5045 = vrot.lane.b32.xlu0 %v4747, 32
        %v5046 = vpop.permute.xlu0 %5045
        %5047 = vrot.lane.b32.xlu0 %v4746, 32
        %v5048 = vpop.permute.xlu0 %5047
        %5049 = vrot.lane.b32.xlu0 %v4753, 32
        %v5050 = vpop.permute.xlu0 %5049
        %5051 = vrot.lane.b32.xlu0 %v4752, 32
        %v5052 = vpop.permute.xlu0 %5051
        %5053 = vrot.lane.b32.xlu0 %v4759, 32
        %v5054 = vpop.permute.xlu0 %5053
        %5055 = vrot.lane.b32.xlu0 %v4758, 32
        %v5056 = vpop.permute.xlu0 %5055
        %5057 = vrot.lane.b32.xlu0 %v4765, 32
        %v5058 = vpop.permute.xlu0 %5057
        %5059 = vrot.lane.b32.xlu0 %v4764, 32
        %v5060 = vpop.permute.xlu0 %5059
        %5061 = vrot.lane.b32.xlu0 %v4771, 32
        %v5062 = vpop.permute.xlu0 %5061
        %5063 = vrot.lane.b32.xlu0 %v4770, 32
        %v5064 = vpop.permute.xlu0 %5063
        %5065 = vrot.lane.b32.xlu0 %v4777, 32
        %v5066 = vpop.permute.xlu0 %5065
        %5067 = vrot.lane.b32.xlu0 %v4776, 32
        %v5068 = vpop.permute.xlu0 %5067
        %5069 = vrot.lane.b32.xlu0 %v4783, 32
        %v5070 = vpop.permute.xlu0 %5069
        %5071 = vrot.lane.b32.xlu0 %v4782, 32
        %v5072 = vpop.permute.xlu0 %5071
        %v5073 = vsel %vm3795, %v5042, %v5044
        %v5074 = vsel %vm3795, %v5046, %v5048
        %v5075 = vsel %vm3795, %v5050, %v5052
        %v5076 = vsel %vm3795, %v5054, %v5056
        %v5077 = vsel %vm3795, %v5058, %v5060
        %v5078 = vsel %vm3795, %v5062, %v5064
        %v5079 = vsel %vm3795, %v5066, %v5068
        %v5080 = vsel %vm3795, %v5070, %v5072
        %5089 = vmatprep.subr.bf16.mxu0 0
        %5090 = vmatpush1.bf16.msra.mxu0 %v5073
        %5091 = vmatprep.subr.bf16.mxu0 0
        %5092 = vmatpush1.bf16.msra.mxu0 %v5074
        %5093 = vmatprep.subr.bf16.mxu0 0
        %5094 = vmatpush1.bf16.msra.mxu0 %v5075
        %5095 = vmatprep.subr.bf16.mxu0 0
        %5096 = vmatpush1.bf16.msra.mxu0 %v5076
        %5097 = vmatprep.subr.bf16.mxu0 0
        %5098 = vmatpush1.bf16.msra.mxu0 %v5077
        %5099 = vmatprep.subr.bf16.mxu0 0
        %5100 = vmatpush1.bf16.msra.mxu0 %v5078
        %5101 = vmatprep.subr.bf16.mxu0 0
        %5102 = vmatpush1.bf16.msra.mxu0 %v5079
        %5103 = vmatprep.subr.bf16.mxu0 0
        %5104 = vmatpush1.bf16.msra.mxu0 %v5080
        %5105 = vmatprep.subr.bf16.mxu0 0
        %5106 = vmatpush1.bf16.msra.mxu0 0
        %5107 = vmatprep.subr.bf16.mxu0 0
        %5108 = vmatpush1.bf16.msra.mxu0 0
        %5109 = vmatprep.subr.bf16.mxu0 0
        %5110 = vmatpush1.bf16.msra.mxu0 0
        %5111 = vmatprep.subr.bf16.mxu0 0
        %5112 = vmatpush1.bf16.msra.mxu0 0
        %5113 = vmatprep.subr.bf16.mxu0 0
        %5114 = vmatpush1.bf16.msra.mxu0 0
        %5115 = vmatprep.subr.bf16.mxu0 0
        %5116 = vmatpush1.bf16.msra.mxu0 0
        %5117 = vmatprep.subr.bf16.mxu0 0
        %5118 = vmatpush1.bf16.msra.mxu0 0
        %5119 = vmatprep.subr.bf16.mxu0 0
        %5120 = vmatpush1.bf16.msra.mxu0 0
        %5121 = vmatprep.mubr.bf16.mxu0 0
        %5122 = vmatmul.mubr.bf16.gmra.mrb[0].mxu0 %v5039
        %v5123 = vpop.f32.mrb[0].mxu0
        %v5124 = vadd.f32 0.0, %v5123
        %v5125 = vpop.f32.mrb[0].mxu0
        %v5126 = vpop.f32.mrb[0].mxu0
        %v5127 = vadd.f32 0.0, %v5126
        %v5128 = vpop.f32.mrb[0].mxu0
        %5129 = vdwg.mxu0
        %v5130 = vadd.f32 %v5030, %v5124
        %v5131 = vadd.f32 %v5031, %v5127
        %v5132 = vld [vmem:[%s10] sm:$0xf]
        %v5133 = vld [vmem:[%s10 + $0x4] sm:$0xf]
        %v5136 = vunpack.c.l.b16 %v5132
        %v5137 = vunpack.c.l.b16 %v5133
        %v5138 = vpack.c.b16 %v5137, %v5136
        %v5140 = vsel %vm2496, %v5138, 0
        %5142 = vmatprep.subr.bf16.mxu0 0
        %5143 = vmatpush1.bf16.msra.mxu0 %v4740
        %5144 = vmatprep.subr.bf16.mxu0 0
        %5145 = vmatpush1.bf16.msra.mxu0 0
        %5146 = vmatprep.subr.bf16.mxu0 0
        %5147 = vmatpush1.bf16.msra.mxu0 0
        %5148 = vmatprep.subr.bf16.mxu0 0
        %5149 = vmatpush1.bf16.msra.mxu0 0
        %5150 = vmatprep.subr.bf16.mxu0 0
        %5151 = vmatpush1.bf16.msra.mxu0 0
        %5152 = vmatprep.subr.bf16.mxu0 0
        %5153 = vmatpush1.bf16.msra.mxu0 0
        %5154 = vmatprep.subr.bf16.mxu0 0
        %5155 = vmatpush1.bf16.msra.mxu0 0
        %5156 = vmatprep.subr.bf16.mxu0 0
        %5157 = vmatpush1.bf16.msra.mxu0 0
        %5158 = vmatprep.subr.bf16.mxu0 0
        %5159 = vmatpush1.bf16.msra.mxu0 0
        %5160 = vmatprep.subr.bf16.mxu0 0
        %5161 = vmatpush1.bf16.msra.mxu0 0
        %5162 = vmatprep.subr.bf16.mxu0 0
        %5163 = vmatpush1.bf16.msra.mxu0 0
        %5164 = vmatprep.subr.bf16.mxu0 0
        %5165 = vmatpush1.bf16.msra.mxu0 0
        %5166 = vmatprep.subr.bf16.mxu0 0
        %5167 = vmatpush1.bf16.msra.mxu0 0
        %5168 = vmatprep.subr.bf16.mxu0 0
        %5169 = vmatpush1.bf16.msra.mxu0 0
        %5170 = vmatprep.subr.bf16.mxu0 0
        %5171 = vmatpush1.bf16.msra.mxu0 0
        %5172 = vmatprep.subr.bf16.mxu0 0
        %5173 = vmatpush1.bf16.msra.mxu0 0
        %5174 = vmatprep.mubr.bf16.mxu0 0
        %5175 = vmatmul.mubr.bf16.gmra.mrb[0].mxu0 %v5140
        %v5176 = vpop.f32.mrb[0].mxu0
        %v5177 = vadd.f32 0.0, %v5176
        %v5178 = vpop.f32.mrb[0].mxu0
        %v5179 = vpop.f32.mrb[0].mxu0
        %v5180 = vadd.f32 0.0, %v5179
        %v5181 = vpop.f32.mrb[0].mxu0
        %5182 = vdwg.mxu0
        %v5183 = vadd.f32 %v5130, %v5177
        %v5184 = vadd.f32 %v5131, %v5180
        %v5185 = vld [vmem:[%s11] sm:$0xff]
        %v5186 = vld [vmem:[%s11 + $0x8] sm:$0xff]
        %5188 = vset.pattern.permute.xlu0 0
        %5189 = vperm.xlu0 %5188, %v5185
        %v5190 = vpop.permute.xlu0 %5189
        %5193 = vset.pattern.permute.xlu0 0
        %5194 = vperm.xlu0 %5193, %v5186
        %v5195 = vpop.permute.xlu0 %5194
        %v5197 = vadd.f32 %v5183, %v5190
        %v5198 = vadd.f32 %v5184, %v5195
        %v5199 = vmax.f32 %v5197, 0.0
        %v5200 = vmax.f32 %v5198, 0.0
        %v5201 = vpack.c.bf16 %v5200, %v5199
        %5202 = vst [vmem:[#allocation4 + $0x8] sm:$0xff] %v5201
        %v5203 = vld [vmem:[#allocation4] sm:$0xff]
        %v5204 = vld [vmem:[#allocation4] sm:$0xff]
        %v5205 = vld [vmem:[#allocation4 + $0x8] sm:$0xff]
        %5208 = vrot.lane.b32.xlu0 %v5204, 124
        %v5209 = vpop.permute.xlu0 %5208
        %5210 = vrot.lane.b32.xlu0 %v5205, 124
        %v5211 = vpop.permute.xlu0 %5210
        %v5212 = vsel %vm3808, %v5209, %v5211
        %5214 = vrot.lane.b32.xlu0 %v5204, 120
        %v5215 = vpop.permute.xlu0 %5214
        %5216 = vrot.lane.b32.xlu0 %v5205, 120
        %v5217 = vpop.permute.xlu0 %5216
        %v5218 = vsel %vm3815, %v5215, %v5217
        %5220 = vrot.lane.b32.xlu0 %v5204, 116
        %v5221 = vpop.permute.xlu0 %5220
        %5222 = vrot.lane.b32.xlu0 %v5205, 116
        %v5223 = vpop.permute.xlu0 %5222
        %v5224 = vsel %vm3822, %v5221, %v5223
        %5226 = vrot.lane.b32.xlu0 %v5204, 112
        %v5227 = vpop.permute.xlu0 %5226
        %5228 = vrot.lane.b32.xlu0 %v5205, 112
        %v5229 = vpop.permute.xlu0 %5228
        %v5230 = vsel %vm3829, %v5227, %v5229
        %5232 = vrot.lane.b32.xlu0 %v5204, 108
        %v5233 = vpop.permute.xlu0 %5232
        %5234 = vrot.lane.b32.xlu0 %v5205, 108
        %v5235 = vpop.permute.xlu0 %5234
        %v5236 = vsel %vm3836, %v5233, %v5235
        %5238 = vrot.lane.b32.xlu0 %v5204, 104
        %v5239 = vpop.permute.xlu0 %5238
        %5240 = vrot.lane.b32.xlu0 %v5205, 104
        %v5241 = vpop.permute.xlu0 %5240
        %v5242 = vsel %vm3843, %v5239, %v5241
        %5244 = vrot.lane.b32.xlu0 %v5204, 100
        %v5245 = vpop.permute.xlu0 %5244
        %5246 = vrot.lane.b32.xlu0 %v5205, 100
        %v5247 = vpop.permute.xlu0 %5246
        %v5248 = vsel %vm3850, %v5245, %v5247
        %v5250 = vld [vmem:[%s12] sm:$0xf]
        %v5251 = vld [vmem:[%s12 + $0x4] sm:$0xf]
        %s5252 = scalar_lea.vmem %s12, 8
        %v5253 = vld [vmem:[%s5252] sm:$0xf]
        %v5254 = vld [vmem:[%s5252 + $0x4] sm:$0xf]
        %v5257 = vunpack.c.l.b16 %v5253
        %v5258 = vunpack.c.l.b16 %v5254
        %v5259 = vpack.c.b16 %v5258, %v5257
        %5261 = vrot.lane.b32.xlu0 %v5204, 96
        %v5262 = vpop.permute.xlu0 %5261
        %5263 = vrot.lane.b32.xlu0 %v5205, 96
        %v5264 = vpop.permute.xlu0 %5263
        %5265 = vrot.lane.b32.xlu0 %v5212, 96
        %v5266 = vpop.permute.xlu0 %5265
        %5267 = vrot.lane.b32.xlu0 %v5211, 96
        %v5268 = vpop.permute.xlu0 %5267
        %5269 = vrot.lane.b32.xlu0 %v5218, 96
        %v5270 = vpop.permute.xlu0 %5269
        %5271 = vrot.lane.b32.xlu0 %v5217, 96
        %v5272 = vpop.permute.xlu0 %5271
        %5273 = vrot.lane.b32.xlu0 %v5224, 96
        %v5274 = vpop.permute.xlu0 %5273
        %5275 = vrot.lane.b32.xlu0 %v5223, 96
        %v5276 = vpop.permute.xlu0 %5275
        %5277 = vrot.lane.b32.xlu0 %v5230, 96
        %v5278 = vpop.permute.xlu0 %5277
        %5279 = vrot.lane.b32.xlu0 %v5229, 96
        %v5280 = vpop.permute.xlu0 %5279
        %5281 = vrot.lane.b32.xlu0 %v5236, 96
        %v5282 = vpop.permute.xlu0 %5281
        %5283 = vrot.lane.b32.xlu0 %v5235, 96
        %v5284 = vpop.permute.xlu0 %5283
        %5285 = vrot.lane.b32.xlu0 %v5242, 96
        %v5286 = vpop.permute.xlu0 %5285
        %5287 = vrot.lane.b32.xlu0 %v5241, 96
        %v5288 = vpop.permute.xlu0 %5287
        %5289 = vrot.lane.b32.xlu0 %v5248, 96
        %v5290 = vpop.permute.xlu0 %5289
        %5291 = vrot.lane.b32.xlu0 %v5247, 96
        %v5292 = vpop.permute.xlu0 %5291
        %v5293 = vsel %vm3896, %v5262, %v5264
        %v5294 = vsel %vm3896, %v5266, %v5268
        %v5295 = vsel %vm3896, %v5270, %v5272
        %v5296 = vsel %vm3896, %v5274, %v5276
        %v5297 = vsel %vm3896, %v5278, %v5280
        %v5298 = vsel %vm3896, %v5282, %v5284
        %v5299 = vsel %vm3896, %v5286, %v5288
        %v5300 = vsel %vm3896, %v5290, %v5292
        %5309 = vmatprep.subr.bf16.mxu0 0
        %5310 = vmatpush1.bf16.msra.mxu0 %v5293
        %5311 = vmatprep.subr.bf16.mxu0 0
        %5312 = vmatpush1.bf16.msra.mxu0 %v5294
        %5313 = vmatprep.subr.bf16.mxu0 0
        %5314 = vmatpush1.bf16.msra.mxu0 %v5295
        %5315 = vmatprep.subr.bf16.mxu0 0
        %5316 = vmatpush1.bf16.msra.mxu0 %v5296
        %5317 = vmatprep.subr.bf16.mxu0 0
        %5318 = vmatpush1.bf16.msra.mxu0 %v5297
        %5319 = vmatprep.subr.bf16.mxu0 0
        %5320 = vmatpush1.bf16.msra.mxu0 %v5298
        %5321 = vmatprep.subr.bf16.mxu0 0
        %5322 = vmatpush1.bf16.msra.mxu0 %v5299
        %5323 = vmatprep.subr.bf16.mxu0 0
        %5324 = vmatpush1.bf16.msra.mxu0 %v5300
        %5325 = vmatprep.subr.bf16.mxu0 0
        %5326 = vmatpush1.bf16.msra.mxu0 0
        %5327 = vmatprep.subr.bf16.mxu0 0
        %5328 = vmatpush1.bf16.msra.mxu0 0
        %5329 = vmatprep.subr.bf16.mxu0 0
        %5330 = vmatpush1.bf16.msra.mxu0 0
        %5331 = vmatprep.subr.bf16.mxu0 0
        %5332 = vmatpush1.bf16.msra.mxu0 0
        %5333 = vmatprep.subr.bf16.mxu0 0
        %5334 = vmatpush1.bf16.msra.mxu0 0
        %5335 = vmatprep.subr.bf16.mxu0 0
        %5336 = vmatpush1.bf16.msra.mxu0 0
        %5337 = vmatprep.subr.bf16.mxu0 0
        %5338 = vmatpush1.bf16.msra.mxu0 0
        %5339 = vmatprep.subr.bf16.mxu0 0
        %5340 = vmatpush1.bf16.msra.mxu0 0
        %5341 = vmatprep.mubr.bf16.mxu0 0
        %5342 = vmatmul.mubr.bf16.gmra.mrb[0].mxu0 %v5259
        %v5343 = vpop.f32.mrb[0].mxu0
        %v5344 = vadd.f32 0.0, %v5343
        %v5345 = vpop.f32.mrb[0].mxu0
        %v5346 = vpop.f32.mrb[0].mxu0
        %v5347 = vadd.f32 0.0, %v5346
        %v5348 = vpop.f32.mrb[0].mxu0
        %5349 = vdwg.mxu0
        %v5352 = vunpack.c.l.b16 %v5250
        %v5353 = vunpack.c.l.b16 %v5251
        %v5354 = vpack.c.b16 %v5353, %v5352
        %5356 = vmatprep.subr.bf16.mxu0 0
        %5357 = vmatpush1.bf16.msra.mxu0 %v5203
        %5358 = vmatprep.subr.bf16.mxu0 0
        %5359 = vmatpush1.bf16.msra.mxu0 %v5212
        %5360 = vmatprep.subr.bf16.mxu0 0
        %5361 = vmatpush1.bf16.msra.mxu0 %v5218
        %5362 = vmatprep.subr.bf16.mxu0 0
        %5363 = vmatpush1.bf16.msra.mxu0 %v5224
        %5364 = vmatprep.subr.bf16.mxu0 0
        %5365 = vmatpush1.bf16.msra.mxu0 %v5230
        %5366 = vmatprep.subr.bf16.mxu0 0
        %5367 = vmatpush1.bf16.msra.mxu0 %v5236
        %5368 = vmatprep.subr.bf16.mxu0 0
        %5369 = vmatpush1.bf16.msra.mxu0 %v5242
        %5370 = vmatprep.subr.bf16.mxu0 0
        %5371 = vmatpush1.bf16.msra.mxu0 %v5248
        %5372 = vmatprep.subr.bf16.mxu0 0
        %5373 = vmatpush1.bf16.msra.mxu0 0
        %5374 = vmatprep.subr.bf16.mxu0 0
        %5375 = vmatpush1.bf16.msra.mxu0 0
        %5376 = vmatprep.subr.bf16.mxu0 0
        %5377 = vmatpush1.bf16.msra.mxu0 0
        %5378 = vmatprep.subr.bf16.mxu0 0
        %5379 = vmatpush1.bf16.msra.mxu0 0
        %5380 = vmatprep.subr.bf16.mxu0 0
        %5381 = vmatpush1.bf16.msra.mxu0 0
        %5382 = vmatprep.subr.bf16.mxu0 0
        %5383 = vmatpush1.bf16.msra.mxu0 0
        %5384 = vmatprep.subr.bf16.mxu0 0
        %5385 = vmatpush1.bf16.msra.mxu0 0
        %5386 = vmatprep.subr.bf16.mxu0 0
        %5387 = vmatpush1.bf16.msra.mxu0 0
        %5388 = vmatprep.mubr.bf16.mxu0 0
        %5389 = vmatmul.mubr.bf16.gmra.mrb[0].mxu0 %v5354
        %v5390 = vpop.f32.mrb[0].mxu0
        %v5391 = vadd.f32 %v5344, %v5390
        %v5392 = vpop.f32.mrb[0].mxu0
        %v5393 = vpop.f32.mrb[0].mxu0
        %v5394 = vadd.f32 %v5347, %v5393
        %v5395 = vpop.f32.mrb[0].mxu0
        %5396 = vdwg.mxu0
        %s5397 = scalar_lea.vmem %s12, 16
        %v5398 = vld [vmem:[%s5397] sm:$0xf]
        %v5399 = vld [vmem:[%s5397 + $0x4] sm:$0xf]
        %v5402 = vunpack.c.l.b16 %v5398
        %v5403 = vunpack.c.l.b16 %v5399
        %v5404 = vpack.c.b16 %v5403, %v5402
        %5406 = vrot.lane.b32.xlu0 %v5204, 64
        %v5407 = vpop.permute.xlu0 %5406
        %5408 = vrot.lane.b32.xlu0 %v5205, 64
        %v5409 = vpop.permute.xlu0 %5408
        %5410 = vrot.lane.b32.xlu0 %v5212, 64
        %v5411 = vpop.permute.xlu0 %5410
        %5412 = vrot.lane.b32.xlu0 %v5211, 64
        %v5413 = vpop.permute.xlu0 %5412
        %5414 = vrot.lane.b32.xlu0 %v5218, 64
        %v5415 = vpop.permute.xlu0 %5414
        %5416 = vrot.lane.b32.xlu0 %v5217, 64
        %v5417 = vpop.permute.xlu0 %5416
        %5418 = vrot.lane.b32.xlu0 %v5224, 64
        %v5419 = vpop.permute.xlu0 %5418
        %5420 = vrot.lane.b32.xlu0 %v5223, 64
        %v5421 = vpop.permute.xlu0 %5420
        %5422 = vrot.lane.b32.xlu0 %v5230, 64
        %v5423 = vpop.permute.xlu0 %5422
        %5424 = vrot.lane.b32.xlu0 %v5229, 64
        %v5425 = vpop.permute.xlu0 %5424
        %5426 = vrot.lane.b32.xlu0 %v5236, 64
        %v5427 = vpop.permute.xlu0 %5426
        %5428 = vrot.lane.b32.xlu0 %v5235, 64
        %v5429 = vpop.permute.xlu0 %5428
        %5430 = vrot.lane.b32.xlu0 %v5242, 64
        %v5431 = vpop.permute.xlu0 %5430
        %5432 = vrot.lane.b32.xlu0 %v5241, 64
        %v5433 = vpop.permute.xlu0 %5432
        %5434 = vrot.lane.b32.xlu0 %v5248, 64
        %v5435 = vpop.permute.xlu0 %5434
        %5436 = vrot.lane.b32.xlu0 %v5247, 64
        %v5437 = vpop.permute.xlu0 %5436
        %v5438 = vsel %vm4042, %v5407, %v5409
        %v5439 = vsel %vm4042, %v5411, %v5413
        %v5440 = vsel %vm4042, %v5415, %v5417
        %v5441 = vsel %vm4042, %v5419, %v5421
        %v5442 = vsel %vm4042, %v5423, %v5425
        %v5443 = vsel %vm4042, %v5427, %v5429
        %v5444 = vsel %vm4042, %v5431, %v5433
        %v5445 = vsel %vm4042, %v5435, %v5437
        %5454 = vmatprep.subr.bf16.mxu0 0
        %5455 = vmatpush1.bf16.msra.mxu0 %v5438
        %5456 = vmatprep.subr.bf16.mxu0 0
        %5457 = vmatpush1.bf16.msra.mxu0 %v5439
        %5458 = vmatprep.subr.bf16.mxu0 0
        %5459 = vmatpush1.bf16.msra.mxu0 %v5440
        %5460 = vmatprep.subr.bf16.mxu0 0
        %5461 = vmatpush1.bf16.msra.mxu0 %v5441
        %5462 = vmatprep.subr.bf16.mxu0 0
        %5463 = vmatpush1.bf16.msra.mxu0 %v5442
        %5464 = vmatprep.subr.bf16.mxu0 0
        %5465 = vmatpush1.bf16.msra.mxu0 %v5443
        %5466 = vmatprep.subr.bf16.mxu0 0
        %5467 = vmatpush1.bf16.msra.mxu0 %v5444
        %5468 = vmatprep.subr.bf16.mxu0 0
        %5469 = vmatpush1.bf16.msra.mxu0 %v5445
        %5470 = vmatprep.subr.bf16.mxu0 0
        %5471 = vmatpush1.bf16.msra.mxu0 0
        %5472 = vmatprep.subr.bf16.mxu0 0
        %5473 = vmatpush1.bf16.msra.mxu0 0
        %5474 = vmatprep.subr.bf16.mxu0 0
        %5475 = vmatpush1.bf16.msra.mxu0 0
        %5476 = vmatprep.subr.bf16.mxu0 0
        %5477 = vmatpush1.bf16.msra.mxu0 0
        %5478 = vmatprep.subr.bf16.mxu0 0
        %5479 = vmatpush1.bf16.msra.mxu0 0
        %5480 = vmatprep.subr.bf16.mxu0 0
        %5481 = vmatpush1.bf16.msra.mxu0 0
        %5482 = vmatprep.subr.bf16.mxu0 0
        %5483 = vmatpush1.bf16.msra.mxu0 0
        %5484 = vmatprep.subr.bf16.mxu0 0
        %5485 = vmatpush1.bf16.msra.mxu0 0
        %5486 = vmatprep.mubr.bf16.mxu0 0
        %5487 = vmatmul.mubr.bf16.gmra.mrb[0].mxu0 %v5404
        %v5488 = vpop.f32.mrb[0].mxu0
        %v5489 = vadd.f32 0.0, %v5488
        %v5490 = vpop.f32.mrb[0].mxu0
        %v5491 = vpop.f32.mrb[0].mxu0
        %v5492 = vadd.f32 0.0, %v5491
        %v5493 = vpop.f32.mrb[0].mxu0
        %5494 = vdwg.mxu0
        %v5495 = vadd.f32 %v5391, %v5489
        %v5496 = vadd.f32 %v5394, %v5492
        %s5497 = scalar_lea.vmem %s12, 24
        %v5498 = vld [vmem:[%s5497] sm:$0xf]
        %v5499 = vld [vmem:[%s5497 + $0x4] sm:$0xf]
        %v5502 = vunpack.c.l.b16 %v5498
        %v5503 = vunpack.c.l.b16 %v5499
        %v5504 = vpack.c.b16 %v5503, %v5502
        %5506 = vrot.lane.b32.xlu0 %v5204, 32
        %v5507 = vpop.permute.xlu0 %5506
        %5508 = vrot.lane.b32.xlu0 %v5205, 32
        %v5509 = vpop.permute.xlu0 %5508
        %5510 = vrot.lane.b32.xlu0 %v5212, 32
        %v5511 = vpop.permute.xlu0 %5510
        %5512 = vrot.lane.b32.xlu0 %v5211, 32
        %v5513 = vpop.permute.xlu0 %5512
        %5514 = vrot.lane.b32.xlu0 %v5218, 32
        %v5515 = vpop.permute.xlu0 %5514
        %5516 = vrot.lane.b32.xlu0 %v5217, 32
        %v5517 = vpop.permute.xlu0 %5516
        %5518 = vrot.lane.b32.xlu0 %v5224, 32
        %v5519 = vpop.permute.xlu0 %5518
        %5520 = vrot.lane.b32.xlu0 %v5223, 32
        %v5521 = vpop.permute.xlu0 %5520
        %5522 = vrot.lane.b32.xlu0 %v5230, 32
        %v5523 = vpop.permute.xlu0 %5522
        %5524 = vrot.lane.b32.xlu0 %v5229, 32
        %v5525 = vpop.permute.xlu0 %5524
        %5526 = vrot.lane.b32.xlu0 %v5236, 32
        %v5527 = vpop.permute.xlu0 %5526
        %5528 = vrot.lane.b32.xlu0 %v5235, 32
        %v5529 = vpop.permute.xlu0 %5528
        %5530 = vrot.lane.b32.xlu0 %v5242, 32
        %v5531 = vpop.permute.xlu0 %5530
        %5532 = vrot.lane.b32.xlu0 %v5241, 32
        %v5533 = vpop.permute.xlu0 %5532
        %5534 = vrot.lane.b32.xlu0 %v5248, 32
        %v5535 = vpop.permute.xlu0 %5534
        %5536 = vrot.lane.b32.xlu0 %v5247, 32
        %v5537 = vpop.permute.xlu0 %5536
        %v5538 = vsel %vm3795, %v5507, %v5509
        %v5539 = vsel %vm3795, %v5511, %v5513
        %v5540 = vsel %vm3795, %v5515, %v5517
        %v5541 = vsel %vm3795, %v5519, %v5521
        %v5542 = vsel %vm3795, %v5523, %v5525
        %v5543 = vsel %vm3795, %v5527, %v5529
        %v5544 = vsel %vm3795, %v5531, %v5533
        %v5545 = vsel %vm3795, %v5535, %v5537
        %5554 = vmatprep.subr.bf16.mxu0 0
        %5555 = vmatpush1.bf16.msra.mxu0 %v5538
        %5556 = vmatprep.subr.bf16.mxu0 0
        %5557 = vmatpush1.bf16.msra.mxu0 %v5539
        %5558 = vmatprep.subr.bf16.mxu0 0
        %5559 = vmatpush1.bf16.msra.mxu0 %v5540
        %5560 = vmatprep.subr.bf16.mxu0 0
        %5561 = vmatpush1.bf16.msra.mxu0 %v5541
        %5562 = vmatprep.subr.bf16.mxu0 0
        %5563 = vmatpush1.bf16.msra.mxu0 %v5542
        %5564 = vmatprep.subr.bf16.mxu0 0
        %5565 = vmatpush1.bf16.msra.mxu0 %v5543
        %5566 = vmatprep.subr.bf16.mxu0 0
        %5567 = vmatpush1.bf16.msra.mxu0 %v5544
        %5568 = vmatprep.subr.bf16.mxu0 0
        %5569 = vmatpush1.bf16.msra.mxu0 %v5545
        %5570 = vmatprep.subr.bf16.mxu0 0
        %5571 = vmatpush1.bf16.msra.mxu0 0
        %5572 = vmatprep.subr.bf16.mxu0 0
        %5573 = vmatpush1.bf16.msra.mxu0 0
        %5574 = vmatprep.subr.bf16.mxu0 0
        %5575 = vmatpush1.bf16.msra.mxu0 0
        %5576 = vmatprep.subr.bf16.mxu0 0
        %5577 = vmatpush1.bf16.msra.mxu0 0
        %5578 = vmatprep.subr.bf16.mxu0 0
        %5579 = vmatpush1.bf16.msra.mxu0 0
        %5580 = vmatprep.subr.bf16.mxu0 0
        %5581 = vmatpush1.bf16.msra.mxu0 0
        %5582 = vmatprep.subr.bf16.mxu0 0
        %5583 = vmatpush1.bf16.msra.mxu0 0
        %5584 = vmatprep.subr.bf16.mxu0 0
        %5585 = vmatpush1.bf16.msra.mxu0 0
        %5586 = vmatprep.mubr.bf16.mxu0 0
        %5587 = vmatmul.mubr.bf16.gmra.mrb[0].mxu0 %v5504
        %v5588 = vpop.f32.mrb[0].mxu0
        %v5589 = vadd.f32 0.0, %v5588
        %v5590 = vpop.f32.mrb[0].mxu0
        %v5591 = vpop.f32.mrb[0].mxu0
        %v5592 = vadd.f32 0.0, %v5591
        %v5593 = vpop.f32.mrb[0].mxu0
        %5594 = vdwg.mxu0
        %v5595 = vadd.f32 %v5495, %v5589
        %v5596 = vadd.f32 %v5496, %v5592
        %v5597 = vld [vmem:[%s13] sm:$0xf]
        %v5598 = vld [vmem:[%s13 + $0x4] sm:$0xf]
        %v5601 = vunpack.c.l.b16 %v5597
        %v5602 = vunpack.c.l.b16 %v5598
        %v5603 = vpack.c.b16 %v5602, %v5601
        %v5605 = vsel %vm2496, %v5603, 0
        %5607 = vmatprep.subr.bf16.mxu0 0
        %5608 = vmatpush1.bf16.msra.mxu0 %v5205
        %5609 = vmatprep.subr.bf16.mxu0 0
        %5610 = vmatpush1.bf16.msra.mxu0 0
        %5611 = vmatprep.subr.bf16.mxu0 0
        %5612 = vmatpush1.bf16.msra.mxu0 0
        %5613 = vmatprep.subr.bf16.mxu0 0
        %5614 = vmatpush1.bf16.msra.mxu0 0
        %5615 = vmatprep.subr.bf16.mxu0 0
        %5616 = vmatpush1.bf16.msra.mxu0 0
        %5617 = vmatprep.subr.bf16.mxu0 0
        %5618 = vmatpush1.bf16.msra.mxu0 0
        %5619 = vmatprep.subr.bf16.mxu0 0
        %5620 = vmatpush1.bf16.msra.mxu0 0
        %5621 = vmatprep.subr.bf16.mxu0 0
        %5622 = vmatpush1.bf16.msra.mxu0 0
        %5623 = vmatprep.subr.bf16.mxu0 0
        %5624 = vmatpush1.bf16.msra.mxu0 0
        %5625 = vmatprep.subr.bf16.mxu0 0
        %5626 = vmatpush1.bf16.msra.mxu0 0
        %5627 = vmatprep.subr.bf16.mxu0 0
        %5628 = vmatpush1.bf16.msra.mxu0 0
        %5629 = vmatprep.subr.bf16.mxu0 0
        %5630 = vmatpush1.bf16.msra.mxu0 0
        %5631 = vmatprep.subr.bf16.mxu0 0
        %5632 = vmatpush1.bf16.msra.mxu0 0
        %5633 = vmatprep.subr.bf16.mxu0 0
        %5634 = vmatpush1.bf16.msra.mxu0 0
        %5635 = vmatprep.subr.bf16.mxu0 0
        %5636 = vmatpush1.bf16.msra.mxu0 0
        %5637 = vmatprep.subr.bf16.mxu0 0
        %5638 = vmatpush1.bf16.msra.mxu0 0
        %5639 = vmatprep.mubr.bf16.mxu0 0
        %5640 = vmatmul.mubr.bf16.gmra.mrb[0].mxu0 %v5605
        %v5641 = vpop.f32.mrb[0].mxu0
        %v5642 = vadd.f32 0.0, %v5641
        %v5643 = vpop.f32.mrb[0].mxu0
        %v5644 = vpop.f32.mrb[0].mxu0
        %v5645 = vadd.f32 0.0, %v5644
        %v5646 = vpop.f32.mrb[0].mxu0
        %5647 = vdwg.mxu0
        %v5648 = vadd.f32 %v5595, %v5642
        %v5649 = vadd.f32 %v5596, %v5645
        %v5650 = vld [vmem:[%s14] sm:$0xff]
        %v5651 = vld [vmem:[%s14 + $0x8] sm:$0xff]
        %5653 = vset.pattern.permute.xlu0 0
        %5654 = vperm.xlu0 %5653, %v5650
        %v5655 = vpop.permute.xlu0 %5654
        %5658 = vset.pattern.permute.xlu0 0
        %5659 = vperm.xlu0 %5658, %v5651
        %v5660 = vpop.permute.xlu0 %5659
        %v5662 = vadd.f32 %v5648, %v5655
        %v5663 = vadd.f32 %v5649, %v5660
        %v5664 = vadd.f32 %v5662, %v5663
        %v5665 = vrot.slane %v5664, 4
        %v5666 = vadd.f32 %v5664, %v5665
        %v5667 = vrot.slane %v5666, 2
        %v5668 = vadd.f32 %v5666, %v5667
        %v5669 = vrot.slane %v5668, 1
        %v5670 = vadd.f32 %v5668, %v5669
        %v5671 = vrcp.pop 16.0
        %v5672 = vmul.f32 %v5670, %v5671
        %v5673 = vsub.f32 %v5662, %v5672
        %v5674 = vsub.f32 %v5663, %v5672
        %v5675 = vmul.f32 %v5673, %v5673
        %v5676 = vmul.f32 %v5674, %v5674
        %v5677 = vadd.f32 %v5675, %v5676
        %v5678 = vrot.slane %v5677, 4
        %v5679 = vadd.f32 %v5677, %v5678
        %v5680 = vrot.slane %v5679, 2
        %v5681 = vadd.f32 %v5679, %v5680
        %v5682 = vrot.slane %v5681, 1
        %v5683 = vadd.f32 %v5681, %v5682
        %v5684 = vmul.f32 %v5683, %v5671
        %v5685 = vadd.f32 %v5684, 1e-05
        %v5686 = vrsqrt.pop %v5685
        %v5687 = vmul.f32 %v5673, %v5686
        %v5688 = vmul.f32 %v5674, %v5686
        %v5689 = vld [vmem:[#allocation3 + $0x8] sm:$0xff]
        %v5690 = vunpack.c.l.bf16 %v5689
        %v5691 = vunpack.c.h.bf16 %v5689
        %v5692 = vmax.f32 %v5687, 0.0
        %v5693 = vmax.f32 %v5688, 0.0
        %v5694 = vadd.f32 %v5692, %v5690
        %v5695 = vadd.f32 %v5693, %v5691
        %v5696 = vpack.c.bf16 %v5695, %v5694
        %5697 = vst [vmem:[#allocation6 + $0x20] sm:$0xff] %v5696
        %v5698 = vld [vmem:[#allocation6] sm:$0xff]
        %v5699 = vld [vmem:[#allocation6 + $0x8] sm:$0xff]
        %5702 = vrot.lane.b32.xlu0 %v5698, 124
        %v5703 = vpop.permute.xlu0 %5702
        %5704 = vrot.lane.b32.xlu0 %v5699, 124
        %v5705 = vpop.permute.xlu0 %5704
        %v5706 = vsel %vm3808, %v5703, %v5705
        %5708 = vrot.lane.b32.xlu0 %v5698, 120
        %v5709 = vpop.permute.xlu0 %5708
        %5710 = vrot.lane.b32.xlu0 %v5699, 120
        %v5711 = vpop.permute.xlu0 %5710
        %v5712 = vsel %vm3815, %v5709, %v5711
        %5714 = vrot.lane.b32.xlu0 %v5698, 116
        %v5715 = vpop.permute.xlu0 %5714
        %5716 = vrot.lane.b32.xlu0 %v5699, 116
        %v5717 = vpop.permute.xlu0 %5716
        %v5718 = vsel %vm3822, %v5715, %v5717
        %5720 = vrot.lane.b32.xlu0 %v5698, 112
        %v5721 = vpop.permute.xlu0 %5720
        %5722 = vrot.lane.b32.xlu0 %v5699, 112
        %v5723 = vpop.permute.xlu0 %5722
        %v5724 = vsel %vm3829, %v5721, %v5723
        %5726 = vrot.lane.b32.xlu0 %v5698, 108
        %v5727 = vpop.permute.xlu0 %5726
        %5728 = vrot.lane.b32.xlu0 %v5699, 108
        %v5729 = vpop.permute.xlu0 %5728
        %v5730 = vsel %vm3836, %v5727, %v5729
        %5732 = vrot.lane.b32.xlu0 %v5698, 104
        %v5733 = vpop.permute.xlu0 %5732
        %5734 = vrot.lane.b32.xlu0 %v5699, 104
        %v5735 = vpop.permute.xlu0 %5734
        %v5736 = vsel %vm3843, %v5733, %v5735
        %5738 = vrot.lane.b32.xlu0 %v5698, 100
        %v5739 = vpop.permute.xlu0 %5738
        %5740 = vrot.lane.b32.xlu0 %v5699, 100
        %v5741 = vpop.permute.xlu0 %5740
        %v5742 = vsel %vm3850, %v5739, %v5741
        %v5744 = vld [vmem:[%s15] sm:$0xf]
        %v5745 = vld [vmem:[%s15 + $0x4] sm:$0xf]
        %s5746 = scalar_lea.vmem %s15, 8
        %v5747 = vld [vmem:[%s5746] sm:$0xf]
        %v5748 = vld [vmem:[%s5746 + $0x4] sm:$0xf]
        %v5751 = vunpack.c.l.b16 %v5747
        %v5752 = vunpack.c.l.b16 %v5748
        %v5753 = vpack.c.b16 %v5752, %v5751
        %5755 = vrot.lane.b32.xlu0 %v5698, 96
        %v5756 = vpop.permute.xlu0 %5755
        %5757 = vrot.lane.b32.xlu0 %v5699, 96
        %v5758 = vpop.permute.xlu0 %5757
        %5759 = vrot.lane.b32.xlu0 %v5706, 96
        %v5760 = vpop.permute.xlu0 %5759
        %5761 = vrot.lane.b32.xlu0 %v5705, 96
        %v5762 = vpop.permute.xlu0 %5761
        %5763 = vrot.lane.b32.xlu0 %v5712, 96
        %v5764 = vpop.permute.xlu0 %5763
        %5765 = vrot.lane.b32.xlu0 %v5711, 96
        %v5766 = vpop.permute.xlu0 %5765
        %5767 = vrot.lane.b32.xlu0 %v5718, 96
        %v5768 = vpop.permute.xlu0 %5767
        %5769 = vrot.lane.b32.xlu0 %v5717, 96
        %v5770 = vpop.permute.xlu0 %5769
        %5771 = vrot.lane.b32.xlu0 %v5724, 96
        %v5772 = vpop.permute.xlu0 %5771
        %5773 = vrot.lane.b32.xlu0 %v5723, 96
        %v5774 = vpop.permute.xlu0 %5773
        %5775 = vrot.lane.b32.xlu0 %v5730, 96
        %v5776 = vpop.permute.xlu0 %5775
        %5777 = vrot.lane.b32.xlu0 %v5729, 96
        %v5778 = vpop.permute.xlu0 %5777
        %5779 = vrot.lane.b32.xlu0 %v5736, 96
        %v5780 = vpop.permute.xlu0 %5779
        %5781 = vrot.lane.b32.xlu0 %v5735, 96
        %v5782 = vpop.permute.xlu0 %5781
        %5783 = vrot.lane.b32.xlu0 %v5742, 96
        %v5784 = vpop.permute.xlu0 %5783
        %5785 = vrot.lane.b32.xlu0 %v5741, 96
        %v5786 = vpop.permute.xlu0 %5785
        %v5787 = vsel %vm3896, %v5756, %v5758
        %v5788 = vsel %vm3896, %v5760, %v5762
        %v5789 = vsel %vm3896, %v5764, %v5766
        %v5790 = vsel %vm3896, %v5768, %v5770
        %v5791 = vsel %vm3896, %v5772, %v5774
        %v5792 = vsel %vm3896, %v5776, %v5778
        %v5793 = vsel %vm3896, %v5780, %v5782
        %v5794 = vsel %vm3896, %v5784, %v5786
        %5803 = vmatprep.subr.bf16.mxu0 0
        %5804 = vmatpush1.bf16.msra.mxu0 %v5787
        %5805 = vmatprep.subr.bf16.mxu0 0
        %5806 = vmatpush1.bf16.msra.mxu0 %v5788
        %5807 = vmatprep.subr.bf16.mxu0 0
        %5808 = vmatpush1.bf16.msra.mxu0 %v5789
        %5809 = vmatprep.subr.bf16.mxu0 0
        %5810 = vmatpush1.bf16.msra.mxu0 %v5790
        %5811 = vmatprep.subr.bf16.mxu0 0
        %5812 = vmatpush1.bf16.msra.mxu0 %v5791
        %5813 = vmatprep.subr.bf16.mxu0 0
        %5814 = vmatpush1.bf16.msra.mxu0 %v5792
        %5815 = vmatprep.subr.bf16.mxu0 0
        %5816 = vmatpush1.bf16.msra.mxu0 %v5793
        %5817 = vmatprep.subr.bf16.mxu0 0
        %5818 = vmatpush1.bf16.msra.mxu0 %v5794
        %5819 = vmatprep.subr.bf16.mxu0 0
        %5820 = vmatpush1.bf16.msra.mxu0 0
        %5821 = vmatprep.subr.bf16.mxu0 0
        %5822 = vmatpush1.bf16.msra.mxu0 0
        %5823 = vmatprep.subr.bf16.mxu0 0
        %5824 = vmatpush1.bf16.msra.mxu0 0
        %5825 = vmatprep.subr.bf16.mxu0 0
        %5826 = vmatpush1.bf16.msra.mxu0 0
        %5827 = vmatprep.subr.bf16.mxu0 0
        %5828 = vmatpush1.bf16.msra.mxu0 0
        %5829 = vmatprep.subr.bf16.mxu0 0
        %5830 = vmatpush1.bf16.msra.mxu0 0
        %5831 = vmatprep.subr.bf16.mxu0 0
        %5832 = vmatpush1.bf16.msra.mxu0 0
        %5833 = vmatprep.subr.bf16.mxu0 0
        %5834 = vmatpush1.bf16.msra.mxu0 0
        %5835 = vmatprep.mubr.bf16.mxu0 0
        %5836 = vmatmul.mubr.bf16.gmra.mrb[0].mxu0 %v5753
        %v5837 = vpop.f32.mrb[0].mxu0
        %v5838 = vadd.f32 0.0, %v5837
        %v5839 = vpop.f32.mrb[0].mxu0
        %v5840 = vpop.f32.mrb[0].mxu0
        %v5841 = vadd.f32 0.0, %v5840
        %v5842 = vpop.f32.mrb[0].mxu0
        %5843 = vdwg.mxu0
        %v5846 = vunpack.c.l.b16 %v5744
        %v5847 = vunpack.c.l.b16 %v5745
        %v5848 = vpack.c.b16 %v5847, %v5846
        %5850 = vmatprep.subr.bf16.mxu0 0
        %5851 = vmatpush1.bf16.msra.mxu0 %v5698
        %5852 = vmatprep.subr.bf16.mxu0 0
        %5853 = vmatpush1.bf16.msra.mxu0 %v5706
        %5854 = vmatprep.subr.bf16.mxu0 0
        %5855 = vmatpush1.bf16.msra.mxu0 %v5712
        %5856 = vmatprep.subr.bf16.mxu0 0
        %5857 = vmatpush1.bf16.msra.mxu0 %v5718
        %5858 = vmatprep.subr.bf16.mxu0 0
        %5859 = vmatpush1.bf16.msra.mxu0 %v5724
        %5860 = vmatprep.subr.bf16.mxu0 0
        %5861 = vmatpush1.bf16.msra.mxu0 %v5730
        %5862 = vmatprep.subr.bf16.mxu0 0
        %5863 = vmatpush1.bf16.msra.mxu0 %v5736
        %5864 = vmatprep.subr.bf16.mxu0 0
        %5865 = vmatpush1.bf16.msra.mxu0 %v5742
        %5866 = vmatprep.subr.bf16.mxu0 0
        %5867 = vmatpush1.bf16.msra.mxu0 0
        %5868 = vmatprep.subr.bf16.mxu0 0
        %5869 = vmatpush1.bf16.msra.mxu0 0
        %5870 = vmatprep.subr.bf16.mxu0 0
        %5871 = vmatpush1.bf16.msra.mxu0 0
        %5872 = vmatprep.subr.bf16.mxu0 0
        %5873 = vmatpush1.bf16.msra.mxu0 0
        %5874 = vmatprep.subr.bf16.mxu0 0
        %5875 = vmatpush1.bf16.msra.mxu0 0
        %5876 = vmatprep.subr.bf16.mxu0 0
        %5877 = vmatpush1.bf16.msra.mxu0 0
        %5878 = vmatprep.subr.bf16.mxu0 0
        %5879 = vmatpush1.bf16.msra.mxu0 0
        %5880 = vmatprep.subr.bf16.mxu0 0
        %5881 = vmatpush1.bf16.msra.mxu0 0
        %5882 = vmatprep.mubr.bf16.mxu0 0
        %5883 = vmatmul.mubr.bf16.gmra.mrb[0].mxu0 %v5848
        %v5884 = vpop.f32.mrb[0].mxu0
        %v5885 = vadd.f32 %v5838, %v5884
        %v5886 = vpop.f32.mrb[0].mxu0
        %v5887 = vpop.f32.mrb[0].mxu0
        %v5888 = vadd.f32 %v5841, %v5887
        %v5889 = vpop.f32.mrb[0].mxu0
        %5890 = vdwg.mxu0
        %s5891 = scalar_lea.vmem %s15, 16
        %v5892 = vld [vmem:[%s5891] sm:$0xf]
        %v5893 = vld [vmem:[%s5891 + $0x4] sm:$0xf]
        %v5896 = vunpack.c.l.b16 %v5892
        %v5897 = vunpack.c.l.b16 %v5893
        %v5898 = vpack.c.b16 %v5897, %v5896
        %5900 = vrot.lane.b32.xlu0 %v5698, 64
        %v5901 = vpop.permute.xlu0 %5900
        %5902 = vrot.lane.b32.xlu0 %v5699, 64
        %v5903 = vpop.permute.xlu0 %5902
        %5904 = vrot.lane.b32.xlu0 %v5706, 64
        %v5905 = vpop.permute.xlu0 %5904
        %5906 = vrot.lane.b32.xlu0 %v5705, 64
        %v5907 = vpop.permute.xlu0 %5906
        %5908 = vrot.lane.b32.xlu0 %v5712, 64
        %v5909 = vpop.permute.xlu0 %5908
        %5910 = vrot.lane.b32.xlu0 %v5711, 64
        %v5911 = vpop.permute.xlu0 %5910
        %5912 = vrot.lane.b32.xlu0 %v5718, 64
        %v5913 = vpop.permute.xlu0 %5912
        %5914 = vrot.lane.b32.xlu0 %v5717, 64
        %v5915 = vpop.permute.xlu0 %5914
        %5916 = vrot.lane.b32.xlu0 %v5724, 64
        %v5917 = vpop.permute.xlu0 %5916
        %5918 = vrot.lane.b32.xlu0 %v5723, 64
        %v5919 = vpop.permute.xlu0 %5918
        %5920 = vrot.lane.b32.xlu0 %v5730, 64
        %v5921 = vpop.permute.xlu0 %5920
        %5922 = vrot.lane.b32.xlu0 %v5729, 64
        %v5923 = vpop.permute.xlu0 %5922
        %5924 = vrot.lane.b32.xlu0 %v5736, 64
        %v5925 = vpop.permute.xlu0 %5924
        %5926 = vrot.lane.b32.xlu0 %v5735, 64
        %v5927 = vpop.permute.xlu0 %5926
        %5928 = vrot.lane.b32.xlu0 %v5742, 64
        %v5929 = vpop.permute.xlu0 %5928
        %5930 = vrot.lane.b32.xlu0 %v5741, 64
        %v5931 = vpop.permute.xlu0 %5930
        %v5932 = vsel %vm4042, %v5901, %v5903
        %v5933 = vsel %vm4042, %v5905, %v5907
        %v5934 = vsel %vm4042, %v5909, %v5911
        %v5935 = vsel %vm4042, %v5913, %v5915
        %v5936 = vsel %vm4042, %v5917, %v5919
        %v5937 = vsel %vm4042, %v5921, %v5923
        %v5938 = vsel %vm4042, %v5925, %v5927
        %v5939 = vsel %vm4042, %v5929, %v5931
        %5948 = vmatprep.subr.bf16.mxu0 0
        %5949 = vmatpush1.bf16.msra.mxu0 %v5932
        %5950 = vmatprep.subr.bf16.mxu0 0
        %5951 = vmatpush1.bf16.msra.mxu0 %v5933
        %5952 = vmatprep.subr.bf16.mxu0 0
        %5953 = vmatpush1.bf16.msra.mxu0 %v5934
        %5954 = vmatprep.subr.bf16.mxu0 0
        %5955 = vmatpush1.bf16.msra.mxu0 %v5935
        %5956 = vmatprep.subr.bf16.mxu0 0
        %5957 = vmatpush1.bf16.msra.mxu0 %v5936
        %5958 = vmatprep.subr.bf16.mxu0 0
        %5959 = vmatpush1.bf16.msra.mxu0 %v5937
        %5960 = vmatprep.subr.bf16.mxu0 0
        %5961 = vmatpush1.bf16.msra.mxu0 %v5938
        %5962 = vmatprep.subr.bf16.mxu0 0
        %5963 = vmatpush1.bf16.msra.mxu0 %v5939
        %5964 = vmatprep.subr.bf16.mxu0 0
        %5965 = vmatpush1.bf16.msra.mxu0 0
        %5966 = vmatprep.subr.bf16.mxu0 0
        %5967 = vmatpush1.bf16.msra.mxu0 0
        %5968 = vmatprep.subr.bf16.mxu0 0
        %5969 = vmatpush1.bf16.msra.mxu0 0
        %5970 = vmatprep.subr.bf16.mxu0 0
        %5971 = vmatpush1.bf16.msra.mxu0 0
        %5972 = vmatprep.subr.bf16.mxu0 0
        %5973 = vmatpush1.bf16.msra.mxu0 0
        %5974 = vmatprep.subr.bf16.mxu0 0
        %5975 = vmatpush1.bf16.msra.mxu0 0
        %5976 = vmatprep.subr.bf16.mxu0 0
        %5977 = vmatpush1.bf16.msra.mxu0 0
        %5978 = vmatprep.subr.bf16.mxu0 0
        %5979 = vmatpush1.bf16.msra.mxu0 0
        %5980 = vmatprep.mubr.bf16.mxu0 0
        %5981 = vmatmul.mubr.bf16.gmra.mrb[0].mxu0 %v5898
        %v5982 = vpop.f32.mrb[0].mxu0
        %v5983 = vadd.f32 0.0, %v5982
        %v5984 = vpop.f32.mrb[0].mxu0
        %v5985 = vpop.f32.mrb[0].mxu0
        %v5986 = vadd.f32 0.0, %v5985
        %v5987 = vpop.f32.mrb[0].mxu0
        %5988 = vdwg.mxu0
        %v5989 = vadd.f32 %v5885, %v5983
        %v5990 = vadd.f32 %v5888, %v5986
        %s5991 = scalar_lea.vmem %s15, 24
        %v5992 = vld [vmem:[%s5991] sm:$0xf]
        %v5993 = vld [vmem:[%s5991 + $0x4] sm:$0xf]
        %v5996 = vunpack.c.l.b16 %v5992
        %v5997 = vunpack.c.l.b16 %v5993
        %v5998 = vpack.c.b16 %v5997, %v5996
        %6000 = vrot.lane.b32.xlu0 %v5698, 32
        %v6001 = vpop.permute.xlu0 %6000
        %6002 = vrot.lane.b32.xlu0 %v5699, 32
        %v6003 = vpop.permute.xlu0 %6002
        %6004 = vrot.lane.b32.xlu0 %v5706, 32
        %v6005 = vpop.permute.xlu0 %6004
        %6006 = vrot.lane.b32.xlu0 %v5705, 32
        %v6007 = vpop.permute.xlu0 %6006
        %6008 = vrot.lane.b32.xlu0 %v5712, 32
        %v6009 = vpop.permute.xlu0 %6008
        %6010 = vrot.lane.b32.xlu0 %v5711, 32
        %v6011 = vpop.permute.xlu0 %6010
        %6012 = vrot.lane.b32.xlu0 %v5718, 32
        %v6013 = vpop.permute.xlu0 %6012
        %6014 = vrot.lane.b32.xlu0 %v5717, 32
        %v6015 = vpop.permute.xlu0 %6014
        %6016 = vrot.lane.b32.xlu0 %v5724, 32
        %v6017 = vpop.permute.xlu0 %6016
        %6018 = vrot.lane.b32.xlu0 %v5723, 32
        %v6019 = vpop.permute.xlu0 %6018
        %6020 = vrot.lane.b32.xlu0 %v5730, 32
        %v6021 = vpop.permute.xlu0 %6020
        %6022 = vrot.lane.b32.xlu0 %v5729, 32
        %v6023 = vpop.permute.xlu0 %6022
        %6024 = vrot.lane.b32.xlu0 %v5736, 32
        %v6025 = vpop.permute.xlu0 %6024
        %6026 = vrot.lane.b32.xlu0 %v5735, 32
        %v6027 = vpop.permute.xlu0 %6026
        %6028 = vrot.lane.b32.xlu0 %v5742, 32
        %v6029 = vpop.permute.xlu0 %6028
        %6030 = vrot.lane.b32.xlu0 %v5741, 32
        %v6031 = vpop.permute.xlu0 %6030
        %v6032 = vsel %vm3795, %v6001, %v6003
        %v6033 = vsel %vm3795, %v6005, %v6007
        %v6034 = vsel %vm3795, %v6009, %v6011
        %v6035 = vsel %vm3795, %v6013, %v6015
        %v6036 = vsel %vm3795, %v6017, %v6019
        %v6037 = vsel %vm3795, %v6021, %v6023
        %v6038 = vsel %vm3795, %v6025, %v6027
        %v6039 = vsel %vm3795, %v6029, %v6031
        %6048 = vmatprep.subr.bf16.mxu0 0
        %6049 = vmatpush1.bf16.msra.mxu0 %v6032
        %6050 = vmatprep.subr.bf16.mxu0 0
        %6051 = vmatpush1.bf16.msra.mxu0 %v6033
        %6052 = vmatprep.subr.bf16.mxu0 0
        %6053 = vmatpush1.bf16.msra.mxu0 %v6034
        %6054 = vmatprep.subr.bf16.mxu0 0
        %6055 = vmatpush1.bf16.msra.mxu0 %v6035
        %6056 = vmatprep.subr.bf16.mxu0 0
        %6057 = vmatpush1.bf16.msra.mxu0 %v6036
        %6058 = vmatprep.subr.bf16.mxu0 0
        %6059 = vmatpush1.bf16.msra.mxu0 %v6037
        %6060 = vmatprep.subr.bf16.mxu0 0
        %6061 = vmatpush1.bf16.msra.mxu0 %v6038
        %6062 = vmatprep.subr.bf16.mxu0 0
        %6063 = vmatpush1.bf16.msra.mxu0 %v6039
        %6064 = vmatprep.subr.bf16.mxu0 0
        %6065 = vmatpush1.bf16.msra.mxu0 0
        %6066 = vmatprep.subr.bf16.mxu0 0
        %6067 = vmatpush1.bf16.msra.mxu0 0
        %6068 = vmatprep.subr.bf16.mxu0 0
        %6069 = vmatpush1.bf16.msra.mxu0 0
        %6070 = vmatprep.subr.bf16.mxu0 0
        %6071 = vmatpush1.bf16.msra.mxu0 0
        %6072 = vmatprep.subr.bf16.mxu0 0
        %6073 = vmatpush1.bf16.msra.mxu0 0
        %6074 = vmatprep.subr.bf16.mxu0 0
        %6075 = vmatpush1.bf16.msra.mxu0 0
        %6076 = vmatprep.subr.bf16.mxu0 0
        %6077 = vmatpush1.bf16.msra.mxu0 0
        %6078 = vmatprep.subr.bf16.mxu0 0
        %6079 = vmatpush1.bf16.msra.mxu0 0
        %6080 = vmatprep.mubr.bf16.mxu0 0
        %6081 = vmatmul.mubr.bf16.gmra.mrb[0].mxu0 %v5998
        %v6082 = vpop.f32.mrb[0].mxu0
        %v6083 = vadd.f32 0.0, %v6082
        %v6084 = vpop.f32.mrb[0].mxu0
        %v6085 = vpop.f32.mrb[0].mxu0
        %v6086 = vadd.f32 0.0, %v6085
        %v6087 = vpop.f32.mrb[0].mxu0
        %6088 = vdwg.mxu0
        %v6089 = vadd.f32 %v5989, %v6083
        %v6090 = vadd.f32 %v5990, %v6086
        %v6091 = vld [vmem:[#allocation6 + $0x8] sm:$0xff]
        %v6092 = vld [vmem:[#allocation6 + $0x10] sm:$0xff]
        %6095 = vrot.lane.b32.xlu0 %v6091, 124
        %v6096 = vpop.permute.xlu0 %6095
        %6097 = vrot.lane.b32.xlu0 %v6092, 124
        %v6098 = vpop.permute.xlu0 %6097
        %v6099 = vsel %vm3808, %v6096, %v6098
        %6101 = vrot.lane.b32.xlu0 %v6091, 120
        %v6102 = vpop.permute.xlu0 %6101
        %6103 = vrot.lane.b32.xlu0 %v6092, 120
        %v6104 = vpop.permute.xlu0 %6103
        %v6105 = vsel %vm3815, %v6102, %v6104
        %6107 = vrot.lane.b32.xlu0 %v6091, 116
        %v6108 = vpop.permute.xlu0 %6107
        %6109 = vrot.lane.b32.xlu0 %v6092, 116
        %v6110 = vpop.permute.xlu0 %6109
        %v6111 = vsel %vm3822, %v6108, %v6110
        %6113 = vrot.lane.b32.xlu0 %v6091, 112
        %v6114 = vpop.permute.xlu0 %6113
        %6115 = vrot.lane.b32.xlu0 %v6092, 112
        %v6116 = vpop.permute.xlu0 %6115
        %v6117 = vsel %vm3829, %v6114, %v6116
        %6119 = vrot.lane.b32.xlu0 %v6091, 108
        %v6120 = vpop.permute.xlu0 %6119
        %6121 = vrot.lane.b32.xlu0 %v6092, 108
        %v6122 = vpop.permute.xlu0 %6121
        %v6123 = vsel %vm3836, %v6120, %v6122
        %6125 = vrot.lane.b32.xlu0 %v6091, 104
        %v6126 = vpop.permute.xlu0 %6125
        %6127 = vrot.lane.b32.xlu0 %v6092, 104
        %v6128 = vpop.permute.xlu0 %6127
        %v6129 = vsel %vm3843, %v6126, %v6128
        %6131 = vrot.lane.b32.xlu0 %v6091, 100
        %v6132 = vpop.permute.xlu0 %6131
        %6133 = vrot.lane.b32.xlu0 %v6092, 100
        %v6134 = vpop.permute.xlu0 %6133
        %v6135 = vsel %vm3850, %v6132, %v6134
        %s6137 = scalar_lea.vmem %s15, 32
        %v6138 = vld [vmem:[%s6137] sm:$0xf]
        %v6139 = vld [vmem:[%s6137 + $0x4] sm:$0xf]
        %v6142 = vunpack.c.l.b16 %v6138
        %v6143 = vunpack.c.l.b16 %v6139
        %v6144 = vpack.c.b16 %v6143, %v6142
        %6146 = vmatprep.subr.bf16.mxu0 0
        %6147 = vmatpush1.bf16.msra.mxu0 %v5699
        %6148 = vmatprep.subr.bf16.mxu0 0
        %6149 = vmatpush1.bf16.msra.mxu0 %v6099
        %6150 = vmatprep.subr.bf16.mxu0 0
        %6151 = vmatpush1.bf16.msra.mxu0 %v6105
        %6152 = vmatprep.subr.bf16.mxu0 0
        %6153 = vmatpush1.bf16.msra.mxu0 %v6111
        %6154 = vmatprep.subr.bf16.mxu0 0
        %6155 = vmatpush1.bf16.msra.mxu0 %v6117
        %6156 = vmatprep.subr.bf16.mxu0 0
        %6157 = vmatpush1.bf16.msra.mxu0 %v6123
        %6158 = vmatprep.subr.bf16.mxu0 0
        %6159 = vmatpush1.bf16.msra.mxu0 %v6129
        %6160 = vmatprep.subr.bf16.mxu0 0
        %6161 = vmatpush1.bf16.msra.mxu0 %v6135
        %6162 = vmatprep.subr.bf16.mxu0 0
        %6163 = vmatpush1.bf16.msra.mxu0 0
        %6164 = vmatprep.subr.bf16.mxu0 0
        %6165 = vmatpush1.bf16.msra.mxu0 0
        %6166 = vmatprep.subr.bf16.mxu0 0
        %6167 = vmatpush1.bf16.msra.mxu0 0
        %6168 = vmatprep.subr.bf16.mxu0 0
        %6169 = vmatpush1.bf16.msra.mxu0 0
        %6170 = vmatprep.subr.bf16.mxu0 0
        %6171 = vmatpush1.bf16.msra.mxu0 0
        %6172 = vmatprep.subr.bf16.mxu0 0
        %6173 = vmatpush1.bf16.msra.mxu0 0
        %6174 = vmatprep.subr.bf16.mxu0 0
        %6175 = vmatpush1.bf16.msra.mxu0 0
        %6176 = vmatprep.subr.bf16.mxu0 0
        %6177 = vmatpush1.bf16.msra.mxu0 0
        %6178 = vmatprep.mubr.bf16.mxu0 0
        %6179 = vmatmul.mubr.bf16.gmra.mrb[0].mxu0 %v6144
        %v6180 = vpop.f32.mrb[0].mxu0
        %v6181 = vadd.f32 0.0, %v6180
        %v6182 = vpop.f32.mrb[0].mxu0
        %v6183 = vpop.f32.mrb[0].mxu0
        %v6184 = vadd.f32 0.0, %v6183
        %v6185 = vpop.f32.mrb[0].mxu0
        %6186 = vdwg.mxu0
        %v6187 = vadd.f32 %v6089, %v6181
        %v6188 = vadd.f32 %v6090, %v6184
        %s6189 = scalar_lea.vmem %s15, 40
        %v6190 = vld [vmem:[%s6189] sm:$0xf]
        %v6191 = vld [vmem:[%s6189 + $0x4] sm:$0xf]
        %v6194 = vunpack.c.l.b16 %v6190
        %v6195 = vunpack.c.l.b16 %v6191
        %v6196 = vpack.c.b16 %v6195, %v6194
        %6198 = vrot.lane.b32.xlu0 %v6091, 96
        %v6199 = vpop.permute.xlu0 %6198
        %6200 = vrot.lane.b32.xlu0 %v6092, 96
        %v6201 = vpop.permute.xlu0 %6200
        %6202 = vrot.lane.b32.xlu0 %v6099, 96
        %v6203 = vpop.permute.xlu0 %6202
        %6204 = vrot.lane.b32.xlu0 %v6098, 96
        %v6205 = vpop.permute.xlu0 %6204
        %6206 = vrot.lane.b32.xlu0 %v6105, 96
        %v6207 = vpop.permute.xlu0 %6206
        %6208 = vrot.lane.b32.xlu0 %v6104, 96
        %v6209 = vpop.permute.xlu0 %6208
        %6210 = vrot.lane.b32.xlu0 %v6111, 96
        %v6211 = vpop.permute.xlu0 %6210
        %6212 = vrot.lane.b32.xlu0 %v6110, 96
        %v6213 = vpop.permute.xlu0 %6212
        %6214 = vrot.lane.b32.xlu0 %v6117, 96
        %v6215 = vpop.permute.xlu0 %6214
        %6216 = vrot.lane.b32.xlu0 %v6116, 96
        %v6217 = vpop.permute.xlu0 %6216
        %6218 = vrot.lane.b32.xlu0 %v6123, 96
        %v6219 = vpop.permute.xlu0 %6218
        %6220 = vrot.lane.b32.xlu0 %v6122, 96
        %v6221 = vpop.permute.xlu0 %6220
        %6222 = vrot.lane.b32.xlu0 %v6129, 96
        %v6223 = vpop.permute.xlu0 %6222
        %6224 = vrot.lane.b32.xlu0 %v6128, 96
        %v6225 = vpop.permute.xlu0 %6224
        %6226 = vrot.lane.b32.xlu0 %v6135, 96
        %v6227 = vpop.permute.xlu0 %6226
        %6228 = vrot.lane.b32.xlu0 %v6134, 96
        %v6229 = vpop.permute.xlu0 %6228
        %v6230 = vsel %vm3896, %v6199, %v6201
        %v6231 = vsel %vm3896, %v6203, %v6205
        %v6232 = vsel %vm3896, %v6207, %v6209
        %v6233 = vsel %vm3896, %v6211, %v6213
        %v6234 = vsel %vm3896, %v6215, %v6217
        %v6235 = vsel %vm3896, %v6219, %v6221
        %v6236 = vsel %vm3896, %v6223, %v6225
        %v6237 = vsel %vm3896, %v6227, %v6229
        %6246 = vmatprep.subr.bf16.mxu0 0
        %6247 = vmatpush1.bf16.msra.mxu0 %v6230
        %6248 = vmatprep.subr.bf16.mxu0 0
        %6249 = vmatpush1.bf16.msra.mxu0 %v6231
        %6250 = vmatprep.subr.bf16.mxu0 0
        %6251 = vmatpush1.bf16.msra.mxu0 %v6232
        %6252 = vmatprep.subr.bf16.mxu0 0
        %6253 = vmatpush1.bf16.msra.mxu0 %v6233
        %6254 = vmatprep.subr.bf16.mxu0 0
        %6255 = vmatpush1.bf16.msra.mxu0 %v6234
        %6256 = vmatprep.subr.bf16.mxu0 0
        %6257 = vmatpush1.bf16.msra.mxu0 %v6235
        %6258 = vmatprep.subr.bf16.mxu0 0
        %6259 = vmatpush1.bf16.msra.mxu0 %v6236
        %6260 = vmatprep.subr.bf16.mxu0 0
        %6261 = vmatpush1.bf16.msra.mxu0 %v6237
        %6262 = vmatprep.subr.bf16.mxu0 0
        %6263 = vmatpush1.bf16.msra.mxu0 0
        %6264 = vmatprep.subr.bf16.mxu0 0
        %6265 = vmatpush1.bf16.msra.mxu0 0
        %6266 = vmatprep.subr.bf16.mxu0 0
        %6267 = vmatpush1.bf16.msra.mxu0 0
        %6268 = vmatprep.subr.bf16.mxu0 0
        %6269 = vmatpush1.bf16.msra.mxu0 0
        %6270 = vmatprep.subr.bf16.mxu0 0
        %6271 = vmatpush1.bf16.msra.mxu0 0
        %6272 = vmatprep.subr.bf16.mxu0 0
        %6273 = vmatpush1.bf16.msra.mxu0 0
        %6274 = vmatprep.subr.bf16.mxu0 0
        %6275 = vmatpush1.bf16.msra.mxu0 0
        %6276 = vmatprep.subr.bf16.mxu0 0
        %6277 = vmatpush1.bf16.msra.mxu0 0
        %6278 = vmatprep.mubr.bf16.mxu0 0
        %6279 = vmatmul.mubr.bf16.gmra.mrb[0].mxu0 %v6196
        %v6280 = vpop.f32.mrb[0].mxu0
        %v6281 = vadd.f32 0.0, %v6280
        %v6282 = vpop.f32.mrb[0].mxu0
        %v6283 = vpop.f32.mrb[0].mxu0
        %v6284 = vadd.f32 0.0, %v6283
        %v6285 = vpop.f32.mrb[0].mxu0
        %6286 = vdwg.mxu0
        %v6287 = vadd.f32 %v6187, %v6281
        %v6288 = vadd.f32 %v6188, %v6284
        %s6289 = scalar_lea.vmem %s15, 48
        %v6290 = vld [vmem:[%s6289] sm:$0xf]
        %v6291 = vld [vmem:[%s6289 + $0x4] sm:$0xf]
        %v6294 = vunpack.c.l.b16 %v6290
        %v6295 = vunpack.c.l.b16 %v6291
        %v6296 = vpack.c.b16 %v6295, %v6294
        %6298 = vrot.lane.b32.xlu0 %v6091, 64
        %v6299 = vpop.permute.xlu0 %6298
        %6300 = vrot.lane.b32.xlu0 %v6092, 64
        %v6301 = vpop.permute.xlu0 %6300
        %6302 = vrot.lane.b32.xlu0 %v6099, 64
        %v6303 = vpop.permute.xlu0 %6302
        %6304 = vrot.lane.b32.xlu0 %v6098, 64
        %v6305 = vpop.permute.xlu0 %6304
        %6306 = vrot.lane.b32.xlu0 %v6105, 64
        %v6307 = vpop.permute.xlu0 %6306
        %6308 = vrot.lane.b32.xlu0 %v6104, 64
        %v6309 = vpop.permute.xlu0 %6308
        %6310 = vrot.lane.b32.xlu0 %v6111, 64
        %v6311 = vpop.permute.xlu0 %6310
        %6312 = vrot.lane.b32.xlu0 %v6110, 64
        %v6313 = vpop.permute.xlu0 %6312
        %6314 = vrot.lane.b32.xlu0 %v6117, 64
        %v6315 = vpop.permute.xlu0 %6314
        %6316 = vrot.lane.b32.xlu0 %v6116, 64
        %v6317 = vpop.permute.xlu0 %6316
        %6318 = vrot.lane.b32.xlu0 %v6123, 64
        %v6319 = vpop.permute.xlu0 %6318
        %6320 = vrot.lane.b32.xlu0 %v6122, 64
        %v6321 = vpop.permute.xlu0 %6320
        %6322 = vrot.lane.b32.xlu0 %v6129, 64
        %v6323 = vpop.permute.xlu0 %6322
        %6324 = vrot.lane.b32.xlu0 %v6128, 64
        %v6325 = vpop.permute.xlu0 %6324
        %6326 = vrot.lane.b32.xlu0 %v6135, 64
        %v6327 = vpop.permute.xlu0 %6326
        %6328 = vrot.lane.b32.xlu0 %v6134, 64
        %v6329 = vpop.permute.xlu0 %6328
        %v6330 = vsel %vm4042, %v6299, %v6301
        %v6331 = vsel %vm4042, %v6303, %v6305
        %v6332 = vsel %vm4042, %v6307, %v6309
        %v6333 = vsel %vm4042, %v6311, %v6313
        %v6334 = vsel %vm4042, %v6315, %v6317
        %v6335 = vsel %vm4042, %v6319, %v6321
        %v6336 = vsel %vm4042, %v6323, %v6325
        %v6337 = vsel %vm4042, %v6327, %v6329
        %6346 = vmatprep.subr.bf16.mxu0 0
        %6347 = vmatpush1.bf16.msra.mxu0 %v6330
        %6348 = vmatprep.subr.bf16.mxu0 0
        %6349 = vmatpush1.bf16.msra.mxu0 %v6331
        %6350 = vmatprep.subr.bf16.mxu0 0
        %6351 = vmatpush1.bf16.msra.mxu0 %v6332
        %6352 = vmatprep.subr.bf16.mxu0 0
        %6353 = vmatpush1.bf16.msra.mxu0 %v6333
        %6354 = vmatprep.subr.bf16.mxu0 0
        %6355 = vmatpush1.bf16.msra.mxu0 %v6334
        %6356 = vmatprep.subr.bf16.mxu0 0
        %6357 = vmatpush1.bf16.msra.mxu0 %v6335
        %6358 = vmatprep.subr.bf16.mxu0 0
        %6359 = vmatpush1.bf16.msra.mxu0 %v6336
        %6360 = vmatprep.subr.bf16.mxu0 0
        %6361 = vmatpush1.bf16.msra.mxu0 %v6337
        %6362 = vmatprep.subr.bf16.mxu0 0
        %6363 = vmatpush1.bf16.msra.mxu0 0
        %6364 = vmatprep.subr.bf16.mxu0 0
        %6365 = vmatpush1.bf16.msra.mxu0 0
        %6366 = vmatprep.subr.bf16.mxu0 0
        %6367 = vmatpush1.bf16.msra.mxu0 0
        %6368 = vmatprep.subr.bf16.mxu0 0
        %6369 = vmatpush1.bf16.msra.mxu0 0
        %6370 = vmatprep.subr.bf16.mxu0 0
        %6371 = vmatpush1.bf16.msra.mxu0 0
        %6372 = vmatprep.subr.bf16.mxu0 0
        %6373 = vmatpush1.bf16.msra.mxu0 0
        %6374 = vmatprep.subr.bf16.mxu0 0
        %6375 = vmatpush1.bf16.msra.mxu0 0
        %6376 = vmatprep.subr.bf16.mxu0 0
        %6377 = vmatpush1.bf16.msra.mxu0 0
        %6378 = vmatprep.mubr.bf16.mxu0 0
        %6379 = vmatmul.mubr.bf16.gmra.mrb[0].mxu0 %v6296
        %v6380 = vpop.f32.mrb[0].mxu0
        %v6381 = vadd.f32 0.0, %v6380
        %v6382 = vpop.f32.mrb[0].mxu0
        %v6383 = vpop.f32.mrb[0].mxu0
        %v6384 = vadd.f32 0.0, %v6383
        %v6385 = vpop.f32.mrb[0].mxu0
        %6386 = vdwg.mxu0
        %v6387 = vadd.f32 %v6287, %v6381
        %v6388 = vadd.f32 %v6288, %v6384
        %s6389 = scalar_lea.vmem %s15, 56
        %v6390 = vld [vmem:[%s6389] sm:$0xf]
        %v6391 = vld [vmem:[%s6389 + $0x4] sm:$0xf]
        %v6394 = vunpack.c.l.b16 %v6390
        %v6395 = vunpack.c.l.b16 %v6391
        %v6396 = vpack.c.b16 %v6395, %v6394
        %6398 = vrot.lane.b32.xlu0 %v6091, 32
        %v6399 = vpop.permute.xlu0 %6398
        %6400 = vrot.lane.b32.xlu0 %v6092, 32
        %v6401 = vpop.permute.xlu0 %6400
        %6402 = vrot.lane.b32.xlu0 %v6099, 32
        %v6403 = vpop.permute.xlu0 %6402
        %6404 = vrot.lane.b32.xlu0 %v6098, 32
        %v6405 = vpop.permute.xlu0 %6404
        %6406 = vrot.lane.b32.xlu0 %v6105, 32
        %v6407 = vpop.permute.xlu0 %6406
        %6408 = vrot.lane.b32.xlu0 %v6104, 32
        %v6409 = vpop.permute.xlu0 %6408
        %6410 = vrot.lane.b32.xlu0 %v6111, 32
        %v6411 = vpop.permute.xlu0 %6410
        %6412 = vrot.lane.b32.xlu0 %v6110, 32
        %v6413 = vpop.permute.xlu0 %6412
        %6414 = vrot.lane.b32.xlu0 %v6117, 32
        %v6415 = vpop.permute.xlu0 %6414
        %6416 = vrot.lane.b32.xlu0 %v6116, 32
        %v6417 = vpop.permute.xlu0 %6416
        %6418 = vrot.lane.b32.xlu0 %v6123, 32
        %v6419 = vpop.permute.xlu0 %6418
        %6420 = vrot.lane.b32.xlu0 %v6122, 32
        %v6421 = vpop.permute.xlu0 %6420
        %6422 = vrot.lane.b32.xlu0 %v6129, 32
        %v6423 = vpop.permute.xlu0 %6422
        %6424 = vrot.lane.b32.xlu0 %v6128, 32
        %v6425 = vpop.permute.xlu0 %6424
        %6426 = vrot.lane.b32.xlu0 %v6135, 32
        %v6427 = vpop.permute.xlu0 %6426
        %6428 = vrot.lane.b32.xlu0 %v6134, 32
        %v6429 = vpop.permute.xlu0 %6428
        %v6430 = vsel %vm3795, %v6399, %v6401
        %v6431 = vsel %vm3795, %v6403, %v6405
        %v6432 = vsel %vm3795, %v6407, %v6409
        %v6433 = vsel %vm3795, %v6411, %v6413
        %v6434 = vsel %vm3795, %v6415, %v6417
        %v6435 = vsel %vm3795, %v6419, %v6421
        %v6436 = vsel %vm3795, %v6423, %v6425
        %v6437 = vsel %vm3795, %v6427, %v6429
        %6446 = vmatprep.subr.bf16.mxu0 0
        %6447 = vmatpush1.bf16.msra.mxu0 %v6430
        %6448 = vmatprep.subr.bf16.mxu0 0
        %6449 = vmatpush1.bf16.msra.mxu0 %v6431
        %6450 = vmatprep.subr.bf16.mxu0 0
        %6451 = vmatpush1.bf16.msra.mxu0 %v6432
        %6452 = vmatprep.subr.bf16.mxu0 0
        %6453 = vmatpush1.bf16.msra.mxu0 %v6433
        %6454 = vmatprep.subr.bf16.mxu0 0
        %6455 = vmatpush1.bf16.msra.mxu0 %v6434
        %6456 = vmatprep.subr.bf16.mxu0 0
        %6457 = vmatpush1.bf16.msra.mxu0 %v6435
        %6458 = vmatprep.subr.bf16.mxu0 0
        %6459 = vmatpush1.bf16.msra.mxu0 %v6436
        %6460 = vmatprep.subr.bf16.mxu0 0
        %6461 = vmatpush1.bf16.msra.mxu0 %v6437
        %6462 = vmatprep.subr.bf16.mxu0 0
        %6463 = vmatpush1.bf16.msra.mxu0 0
        %6464 = vmatprep.subr.bf16.mxu0 0
        %6465 = vmatpush1.bf16.msra.mxu0 0
        %6466 = vmatprep.subr.bf16.mxu0 0
        %6467 = vmatpush1.bf16.msra.mxu0 0
        %6468 = vmatprep.subr.bf16.mxu0 0
        %6469 = vmatpush1.bf16.msra.mxu0 0
        %6470 = vmatprep.subr.bf16.mxu0 0
        %6471 = vmatpush1.bf16.msra.mxu0 0
        %6472 = vmatprep.subr.bf16.mxu0 0
        %6473 = vmatpush1.bf16.msra.mxu0 0
        %6474 = vmatprep.subr.bf16.mxu0 0
        %6475 = vmatpush1.bf16.msra.mxu0 0
        %6476 = vmatprep.subr.bf16.mxu0 0
        %6477 = vmatpush1.bf16.msra.mxu0 0
        %6478 = vmatprep.mubr.bf16.mxu0 0
        %6479 = vmatmul.mubr.bf16.gmra.mrb[0].mxu0 %v6396
        %v6480 = vpop.f32.mrb[0].mxu0
        %v6481 = vadd.f32 0.0, %v6480
        %v6482 = vpop.f32.mrb[0].mxu0
        %v6483 = vpop.f32.mrb[0].mxu0
        %v6484 = vadd.f32 0.0, %v6483
        %v6485 = vpop.f32.mrb[0].mxu0
        %6486 = vdwg.mxu0
        %v6487 = vadd.f32 %v6387, %v6481
        %v6488 = vadd.f32 %v6388, %v6484
        %v6489 = vld [vmem:[#allocation6 + $0x10] sm:$0xff]
        %v6490 = vld [vmem:[#allocation6 + $0x18] sm:$0xff]
        %6493 = vrot.lane.b32.xlu0 %v6489, 124
        %v6494 = vpop.permute.xlu0 %6493
        %6495 = vrot.lane.b32.xlu0 %v6490, 124
        %v6496 = vpop.permute.xlu0 %6495
        %v6497 = vsel %vm3808, %v6494, %v6496
        %6499 = vrot.lane.b32.xlu0 %v6489, 120
        %v6500 = vpop.permute.xlu0 %6499
        %6501 = vrot.lane.b32.xlu0 %v6490, 120
        %v6502 = vpop.permute.xlu0 %6501
        %v6503 = vsel %vm3815, %v6500, %v6502
        %6505 = vrot.lane.b32.xlu0 %v6489, 116
        %v6506 = vpop.permute.xlu0 %6505
        %6507 = vrot.lane.b32.xlu0 %v6490, 116
        %v6508 = vpop.permute.xlu0 %6507
        %v6509 = vsel %vm3822, %v6506, %v6508
        %6511 = vrot.lane.b32.xlu0 %v6489, 112
        %v6512 = vpop.permute.xlu0 %6511
        %6513 = vrot.lane.b32.xlu0 %v6490, 112
        %v6514 = vpop.permute.xlu0 %6513
        %v6515 = vsel %vm3829, %v6512, %v6514
        %6517 = vrot.lane.b32.xlu0 %v6489, 108
        %v6518 = vpop.permute.xlu0 %6517
        %6519 = vrot.lane.b32.xlu0 %v6490, 108
        %v6520 = vpop.permute.xlu0 %6519
        %v6521 = vsel %vm3836, %v6518, %v6520
        %6523 = vrot.lane.b32.xlu0 %v6489, 104
        %v6524 = vpop.permute.xlu0 %6523
        %6525 = vrot.lane.b32.xlu0 %v6490, 104
        %v6526 = vpop.permute.xlu0 %6525
        %v6527 = vsel %vm3843, %v6524, %v6526
        %6529 = vrot.lane.b32.xlu0 %v6489, 100
        %v6530 = vpop.permute.xlu0 %6529
        %6531 = vrot.lane.b32.xlu0 %v6490, 100
        %v6532 = vpop.permute.xlu0 %6531
        %v6533 = vsel %vm3850, %v6530, %v6532
        %s6535 = scalar_lea.vmem %s15, 64
        %v6536 = vld [vmem:[%s6535] sm:$0xf]
        %v6537 = vld [vmem:[%s6535 + $0x4] sm:$0xf]
        %v6540 = vunpack.c.l.b16 %v6536
        %v6541 = vunpack.c.l.b16 %v6537
        %v6542 = vpack.c.b16 %v6541, %v6540
        %6544 = vmatprep.subr.bf16.mxu0 0
        %6545 = vmatpush1.bf16.msra.mxu0 %v6092
        %6546 = vmatprep.subr.bf16.mxu0 0
        %6547 = vmatpush1.bf16.msra.mxu0 %v6497
        %6548 = vmatprep.subr.bf16.mxu0 0
        %6549 = vmatpush1.bf16.msra.mxu0 %v6503
        %6550 = vmatprep.subr.bf16.mxu0 0
        %6551 = vmatpush1.bf16.msra.mxu0 %v6509
        %6552 = vmatprep.subr.bf16.mxu0 0
        %6553 = vmatpush1.bf16.msra.mxu0 %v6515
        %6554 = vmatprep.subr.bf16.mxu0 0
        %6555 = vmatpush1.bf16.msra.mxu0 %v6521
        %6556 = vmatprep.subr.bf16.mxu0 0
        %6557 = vmatpush1.bf16.msra.mxu0 %v6527
        %6558 = vmatprep.subr.bf16.mxu0 0
        %6559 = vmatpush1.bf16.msra.mxu0 %v6533
        %6560 = vmatprep.subr.bf16.mxu0 0
        %6561 = vmatpush1.bf16.msra.mxu0 0
        %6562 = vmatprep.subr.bf16.mxu0 0
        %6563 = vmatpush1.bf16.msra.mxu0 0
        %6564 = vmatprep.subr.bf16.mxu0 0
        %6565 = vmatpush1.bf16.msra.mxu0 0
        %6566 = vmatprep.subr.bf16.mxu0 0
        %6567 = vmatpush1.bf16.msra.mxu0 0
        %6568 = vmatprep.subr.bf16.mxu0 0
        %6569 = vmatpush1.bf16.msra.mxu0 0
        %6570 = vmatprep.subr.bf16.mxu0 0
        %6571 = vmatpush1.bf16.msra.mxu0 0
        %6572 = vmatprep.subr.bf16.mxu0 0
        %6573 = vmatpush1.bf16.msra.mxu0 0
        %6574 = vmatprep.subr.bf16.mxu0 0
        %6575 = vmatpush1.bf16.msra.mxu0 0
        %6576 = vmatprep.mubr.bf16.mxu0 0
        %6577 = vmatmul.mubr.bf16.gmra.mrb[0].mxu0 %v6542
        %v6578 = vpop.f32.mrb[0].mxu0
        %v6579 = vadd.f32 0.0, %v6578
        %v6580 = vpop.f32.mrb[0].mxu0
        %v6581 = vpop.f32.mrb[0].mxu0
        %v6582 = vadd.f32 0.0, %v6581
        %v6583 = vpop.f32.mrb[0].mxu0
        %6584 = vdwg.mxu0
        %v6585 = vadd.f32 %v6487, %v6579
        %v6586 = vadd.f32 %v6488, %v6582
        %s6587 = scalar_lea.vmem %s15, 72
        %v6588 = vld [vmem:[%s6587] sm:$0xf]
        %v6589 = vld [vmem:[%s6587 + $0x4] sm:$0xf]
        %v6592 = vunpack.c.l.b16 %v6588
        %v6593 = vunpack.c.l.b16 %v6589
        %v6594 = vpack.c.b16 %v6593, %v6592
        %6596 = vrot.lane.b32.xlu0 %v6489, 96
        %v6597 = vpop.permute.xlu0 %6596
        %6598 = vrot.lane.b32.xlu0 %v6490, 96
        %v6599 = vpop.permute.xlu0 %6598
        %6600 = vrot.lane.b32.xlu0 %v6497, 96
        %v6601 = vpop.permute.xlu0 %6600
        %6602 = vrot.lane.b32.xlu0 %v6496, 96
        %v6603 = vpop.permute.xlu0 %6602
        %6604 = vrot.lane.b32.xlu0 %v6503, 96
        %v6605 = vpop.permute.xlu0 %6604
        %6606 = vrot.lane.b32.xlu0 %v6502, 96
        %v6607 = vpop.permute.xlu0 %6606
        %6608 = vrot.lane.b32.xlu0 %v6509, 96
        %v6609 = vpop.permute.xlu0 %6608
        %6610 = vrot.lane.b32.xlu0 %v6508, 96
        %v6611 = vpop.permute.xlu0 %6610
        %6612 = vrot.lane.b32.xlu0 %v6515, 96
        %v6613 = vpop.permute.xlu0 %6612
        %6614 = vrot.lane.b32.xlu0 %v6514, 96
        %v6615 = vpop.permute.xlu0 %6614
        %6616 = vrot.lane.b32.xlu0 %v6521, 96
        %v6617 = vpop.permute.xlu0 %6616
        %6618 = vrot.lane.b32.xlu0 %v6520, 96
        %v6619 = vpop.permute.xlu0 %6618
        %6620 = vrot.lane.b32.xlu0 %v6527, 96
        %v6621 = vpop.permute.xlu0 %6620
        %6622 = vrot.lane.b32.xlu0 %v6526, 96
        %v6623 = vpop.permute.xlu0 %6622
        %6624 = vrot.lane.b32.xlu0 %v6533, 96
        %v6625 = vpop.permute.xlu0 %6624
        %6626 = vrot.lane.b32.xlu0 %v6532, 96
        %v6627 = vpop.permute.xlu0 %6626
        %v6628 = vsel %vm3896, %v6597, %v6599
        %v6629 = vsel %vm3896, %v6601, %v6603
        %v6630 = vsel %vm3896, %v6605, %v6607
        %v6631 = vsel %vm3896, %v6609, %v6611
        %v6632 = vsel %vm3896, %v6613, %v6615
        %v6633 = vsel %vm3896, %v6617, %v6619
        %v6634 = vsel %vm3896, %v6621, %v6623
        %v6635 = vsel %vm3896, %v6625, %v6627
        %6644 = vmatprep.subr.bf16.mxu0 0
        %6645 = vmatpush1.bf16.msra.mxu0 %v6628
        %6646 = vmatprep.subr.bf16.mxu0 0
        %6647 = vmatpush1.bf16.msra.mxu0 %v6629
        %6648 = vmatprep.subr.bf16.mxu0 0
        %6649 = vmatpush1.bf16.msra.mxu0 %v6630
        %6650 = vmatprep.subr.bf16.mxu0 0
        %6651 = vmatpush1.bf16.msra.mxu0 %v6631
        %6652 = vmatprep.subr.bf16.mxu0 0
        %6653 = vmatpush1.bf16.msra.mxu0 %v6632
        %6654 = vmatprep.subr.bf16.mxu0 0
        %6655 = vmatpush1.bf16.msra.mxu0 %v6633
        %6656 = vmatprep.subr.bf16.mxu0 0
        %6657 = vmatpush1.bf16.msra.mxu0 %v6634
        %6658 = vmatprep.subr.bf16.mxu0 0
        %6659 = vmatpush1.bf16.msra.mxu0 %v6635
        %6660 = vmatprep.subr.bf16.mxu0 0
        %6661 = vmatpush1.bf16.msra.mxu0 0
        %6662 = vmatprep.subr.bf16.mxu0 0
        %6663 = vmatpush1.bf16.msra.mxu0 0
        %6664 = vmatprep.subr.bf16.mxu0 0
        %6665 = vmatpush1.bf16.msra.mxu0 0
        %6666 = vmatprep.subr.bf16.mxu0 0
        %6667 = vmatpush1.bf16.msra.mxu0 0
        %6668 = vmatprep.subr.bf16.mxu0 0
        %6669 = vmatpush1.bf16.msra.mxu0 0
        %6670 = vmatprep.subr.bf16.mxu0 0
        %6671 = vmatpush1.bf16.msra.mxu0 0
        %6672 = vmatprep.subr.bf16.mxu0 0
        %6673 = vmatpush1.bf16.msra.mxu0 0
        %6674 = vmatprep.subr.bf16.mxu0 0
        %6675 = vmatpush1.bf16.msra.mxu0 0
        %6676 = vmatprep.mubr.bf16.mxu0 0
        %6677 = vmatmul.mubr.bf16.gmra.mrb[0].mxu0 %v6594
        %v6678 = vpop.f32.mrb[0].mxu0
        %v6679 = vadd.f32 0.0, %v6678
        %v6680 = vpop.f32.mrb[0].mxu0
        %v6681 = vpop.f32.mrb[0].mxu0
        %v6682 = vadd.f32 0.0, %v6681
        %v6683 = vpop.f32.mrb[0].mxu0
        %6684 = vdwg.mxu0
        %v6685 = vadd.f32 %v6585, %v6679
        %v6686 = vadd.f32 %v6586, %v6682
        %s6687 = scalar_lea.vmem %s15, 80
        %v6688 = vld [vmem:[%s6687] sm:$0xf]
        %v6689 = vld [vmem:[%s6687 + $0x4] sm:$0xf]
        %v6692 = vunpack.c.l.b16 %v6688
        %v6693 = vunpack.c.l.b16 %v6689
        %v6694 = vpack.c.b16 %v6693, %v6692
        %6696 = vrot.lane.b32.xlu0 %v6489, 64
        %v6697 = vpop.permute.xlu0 %6696
        %6698 = vrot.lane.b32.xlu0 %v6490, 64
        %v6699 = vpop.permute.xlu0 %6698
        %6700 = vrot.lane.b32.xlu0 %v6497, 64
        %v6701 = vpop.permute.xlu0 %6700
        %6702 = vrot.lane.b32.xlu0 %v6496, 64
        %v6703 = vpop.permute.xlu0 %6702
        %6704 = vrot.lane.b32.xlu0 %v6503, 64
        %v6705 = vpop.permute.xlu0 %6704
        %6706 = vrot.lane.b32.xlu0 %v6502, 64
        %v6707 = vpop.permute.xlu0 %6706
        %6708 = vrot.lane.b32.xlu0 %v6509, 64
        %v6709 = vpop.permute.xlu0 %6708
        %6710 = vrot.lane.b32.xlu0 %v6508, 64
        %v6711 = vpop.permute.xlu0 %6710
        %6712 = vrot.lane.b32.xlu0 %v6515, 64
        %v6713 = vpop.permute.xlu0 %6712
        %6714 = vrot.lane.b32.xlu0 %v6514, 64
        %v6715 = vpop.permute.xlu0 %6714
        %6716 = vrot.lane.b32.xlu0 %v6521, 64
        %v6717 = vpop.permute.xlu0 %6716
        %6718 = vrot.lane.b32.xlu0 %v6520, 64
        %v6719 = vpop.permute.xlu0 %6718
        %6720 = vrot.lane.b32.xlu0 %v6527, 64
        %v6721 = vpop.permute.xlu0 %6720
        %6722 = vrot.lane.b32.xlu0 %v6526, 64
        %v6723 = vpop.permute.xlu0 %6722
        %6724 = vrot.lane.b32.xlu0 %v6533, 64
        %v6725 = vpop.permute.xlu0 %6724
        %6726 = vrot.lane.b32.xlu0 %v6532, 64
        %v6727 = vpop.permute.xlu0 %6726
        %v6728 = vsel %vm4042, %v6697, %v6699
        %v6729 = vsel %vm4042, %v6701, %v6703
        %v6730 = vsel %vm4042, %v6705, %v6707
        %v6731 = vsel %vm4042, %v6709, %v6711
        %v6732 = vsel %vm4042, %v6713, %v6715
        %v6733 = vsel %vm4042, %v6717, %v6719
        %v6734 = vsel %vm4042, %v6721, %v6723
        %v6735 = vsel %vm4042, %v6725, %v6727
        %6744 = vmatprep.subr.bf16.mxu0 0
        %6745 = vmatpush1.bf16.msra.mxu0 %v6728
        %6746 = vmatprep.subr.bf16.mxu0 0
        %6747 = vmatpush1.bf16.msra.mxu0 %v6729
        %6748 = vmatprep.subr.bf16.mxu0 0
        %6749 = vmatpush1.bf16.msra.mxu0 %v6730
        %6750 = vmatprep.subr.bf16.mxu0 0
        %6751 = vmatpush1.bf16.msra.mxu0 %v6731
        %6752 = vmatprep.subr.bf16.mxu0 0
        %6753 = vmatpush1.bf16.msra.mxu0 %v6732
        %6754 = vmatprep.subr.bf16.mxu0 0
        %6755 = vmatpush1.bf16.msra.mxu0 %v6733
        %6756 = vmatprep.subr.bf16.mxu0 0
        %6757 = vmatpush1.bf16.msra.mxu0 %v6734
        %6758 = vmatprep.subr.bf16.mxu0 0
        %6759 = vmatpush1.bf16.msra.mxu0 %v6735
        %6760 = vmatprep.subr.bf16.mxu0 0
        %6761 = vmatpush1.bf16.msra.mxu0 0
        %6762 = vmatprep.subr.bf16.mxu0 0
        %6763 = vmatpush1.bf16.msra.mxu0 0
        %6764 = vmatprep.subr.bf16.mxu0 0
        %6765 = vmatpush1.bf16.msra.mxu0 0
        %6766 = vmatprep.subr.bf16.mxu0 0
        %6767 = vmatpush1.bf16.msra.mxu0 0
        %6768 = vmatprep.subr.bf16.mxu0 0
        %6769 = vmatpush1.bf16.msra.mxu0 0
        %6770 = vmatprep.subr.bf16.mxu0 0
        %6771 = vmatpush1.bf16.msra.mxu0 0
        %6772 = vmatprep.subr.bf16.mxu0 0
        %6773 = vmatpush1.bf16.msra.mxu0 0
        %6774 = vmatprep.subr.bf16.mxu0 0
        %6775 = vmatpush1.bf16.msra.mxu0 0
        %6776 = vmatprep.mubr.bf16.mxu0 0
        %6777 = vmatmul.mubr.bf16.gmra.mrb[0].mxu0 %v6694
        %v6778 = vpop.f32.mrb[0].mxu0
        %v6779 = vadd.f32 0.0, %v6778
        %v6780 = vpop.f32.mrb[0].mxu0
        %v6781 = vpop.f32.mrb[0].mxu0
        %v6782 = vadd.f32 0.0, %v6781
        %v6783 = vpop.f32.mrb[0].mxu0
        %6784 = vdwg.mxu0
        %v6785 = vadd.f32 %v6685, %v6779
        %v6786 = vadd.f32 %v6686, %v6782
        %s6787 = scalar_lea.vmem %s15, 88
        %v6788 = vld [vmem:[%s6787] sm:$0xf]
        %v6789 = vld [vmem:[%s6787 + $0x4] sm:$0xf]
        %v6792 = vunpack.c.l.b16 %v6788
        %v6793 = vunpack.c.l.b16 %v6789
        %v6794 = vpack.c.b16 %v6793, %v6792
        %6796 = vrot.lane.b32.xlu0 %v6489, 32
        %v6797 = vpop.permute.xlu0 %6796
        %6798 = vrot.lane.b32.xlu0 %v6490, 32
        %v6799 = vpop.permute.xlu0 %6798
        %6800 = vrot.lane.b32.xlu0 %v6497, 32
        %v6801 = vpop.permute.xlu0 %6800
        %6802 = vrot.lane.b32.xlu0 %v6496, 32
        %v6803 = vpop.permute.xlu0 %6802
        %6804 = vrot.lane.b32.xlu0 %v6503, 32
        %v6805 = vpop.permute.xlu0 %6804
        %6806 = vrot.lane.b32.xlu0 %v6502, 32
        %v6807 = vpop.permute.xlu0 %6806
        %6808 = vrot.lane.b32.xlu0 %v6509, 32
        %v6809 = vpop.permute.xlu0 %6808
        %6810 = vrot.lane.b32.xlu0 %v6508, 32
        %v6811 = vpop.permute.xlu0 %6810
        %6812 = vrot.lane.b32.xlu0 %v6515, 32
        %v6813 = vpop.permute.xlu0 %6812
        %6814 = vrot.lane.b32.xlu0 %v6514, 32
        %v6815 = vpop.permute.xlu0 %6814
        %6816 = vrot.lane.b32.xlu0 %v6521, 32
        %v6817 = vpop.permute.xlu0 %6816
        %6818 = vrot.lane.b32.xlu0 %v6520, 32
        %v6819 = vpop.permute.xlu0 %6818
        %6820 = vrot.lane.b32.xlu0 %v6527, 32
        %v6821 = vpop.permute.xlu0 %6820
        %6822 = vrot.lane.b32.xlu0 %v6526, 32
        %v6823 = vpop.permute.xlu0 %6822
        %6824 = vrot.lane.b32.xlu0 %v6533, 32
        %v6825 = vpop.permute.xlu0 %6824
        %6826 = vrot.lane.b32.xlu0 %v6532, 32
        %v6827 = vpop.permute.xlu0 %6826
        %v6828 = vsel %vm3795, %v6797, %v6799
        %v6829 = vsel %vm3795, %v6801, %v6803
        %v6830 = vsel %vm3795, %v6805, %v6807
        %v6831 = vsel %vm3795, %v6809, %v6811
        %v6832 = vsel %vm3795, %v6813, %v6815
        %v6833 = vsel %vm3795, %v6817, %v6819
        %v6834 = vsel %vm3795, %v6821, %v6823
        %v6835 = vsel %vm3795, %v6825, %v6827
        %6844 = vmatprep.subr.bf16.mxu0 0
        %6845 = vmatpush1.bf16.msra.mxu0 %v6828
        %6846 = vmatprep.subr.bf16.mxu0 0
        %6847 = vmatpush1.bf16.msra.mxu0 %v6829
        %6848 = vmatprep.subr.bf16.mxu0 0
        %6849 = vmatpush1.bf16.msra.mxu0 %v6830
        %6850 = vmatprep.subr.bf16.mxu0 0
        %6851 = vmatpush1.bf16.msra.mxu0 %v6831
        %6852 = vmatprep.subr.bf16.mxu0 0
        %6853 = vmatpush1.bf16.msra.mxu0 %v6832
        %6854 = vmatprep.subr.bf16.mxu0 0
        %6855 = vmatpush1.bf16.msra.mxu0 %v6833
        %6856 = vmatprep.subr.bf16.mxu0 0
        %6857 = vmatpush1.bf16.msra.mxu0 %v6834
        %6858 = vmatprep.subr.bf16.mxu0 0
        %6859 = vmatpush1.bf16.msra.mxu0 %v6835
        %6860 = vmatprep.subr.bf16.mxu0 0
        %6861 = vmatpush1.bf16.msra.mxu0 0
        %6862 = vmatprep.subr.bf16.mxu0 0
        %6863 = vmatpush1.bf16.msra.mxu0 0
        %6864 = vmatprep.subr.bf16.mxu0 0
        %6865 = vmatpush1.bf16.msra.mxu0 0
        %6866 = vmatprep.subr.bf16.mxu0 0
        %6867 = vmatpush1.bf16.msra.mxu0 0
        %6868 = vmatprep.subr.bf16.mxu0 0
        %6869 = vmatpush1.bf16.msra.mxu0 0
        %6870 = vmatprep.subr.bf16.mxu0 0
        %6871 = vmatpush1.bf16.msra.mxu0 0
        %6872 = vmatprep.subr.bf16.mxu0 0
        %6873 = vmatpush1.bf16.msra.mxu0 0
        %6874 = vmatprep.subr.bf16.mxu0 0
        %6875 = vmatpush1.bf16.msra.mxu0 0
        %6876 = vmatprep.mubr.bf16.mxu0 0
        %6877 = vmatmul.mubr.bf16.gmra.mrb[0].mxu0 %v6794
        %v6878 = vpop.f32.mrb[0].mxu0
        %v6879 = vadd.f32 0.0, %v6878
        %v6880 = vpop.f32.mrb[0].mxu0
        %v6881 = vpop.f32.mrb[0].mxu0
        %v6882 = vadd.f32 0.0, %v6881
        %v6883 = vpop.f32.mrb[0].mxu0
        %6884 = vdwg.mxu0
        %v6885 = vadd.f32 %v6785, %v6879
        %v6886 = vadd.f32 %v6786, %v6882
        %v6887 = vld [vmem:[#allocation6 + $0x18] sm:$0xff]
        %v6888 = vld [vmem:[#allocation6 + $0x20] sm:$0xff]
        %6891 = vrot.lane.b32.xlu0 %v6887, 124
        %v6892 = vpop.permute.xlu0 %6891
        %6893 = vrot.lane.b32.xlu0 %v6888, 124
        %v6894 = vpop.permute.xlu0 %6893
        %v6895 = vsel %vm3808, %v6892, %v6894
        %6897 = vrot.lane.b32.xlu0 %v6887, 120
        %v6898 = vpop.permute.xlu0 %6897
        %6899 = vrot.lane.b32.xlu0 %v6888, 120
        %v6900 = vpop.permute.xlu0 %6899
        %v6901 = vsel %vm3815, %v6898, %v6900
        %6903 = vrot.lane.b32.xlu0 %v6887, 116
        %v6904 = vpop.permute.xlu0 %6903
        %6905 = vrot.lane.b32.xlu0 %v6888, 116
        %v6906 = vpop.permute.xlu0 %6905
        %v6907 = vsel %vm3822, %v6904, %v6906
        %6909 = vrot.lane.b32.xlu0 %v6887, 112
        %v6910 = vpop.permute.xlu0 %6909
        %6911 = vrot.lane.b32.xlu0 %v6888, 112
        %v6912 = vpop.permute.xlu0 %6911
        %v6913 = vsel %vm3829, %v6910, %v6912
        %6915 = vrot.lane.b32.xlu0 %v6887, 108
        %v6916 = vpop.permute.xlu0 %6915
        %6917 = vrot.lane.b32.xlu0 %v6888, 108
        %v6918 = vpop.permute.xlu0 %6917
        %v6919 = vsel %vm3836, %v6916, %v6918
        %6921 = vrot.lane.b32.xlu0 %v6887, 104
        %v6922 = vpop.permute.xlu0 %6921
        %6923 = vrot.lane.b32.xlu0 %v6888, 104
        %v6924 = vpop.permute.xlu0 %6923
        %v6925 = vsel %vm3843, %v6922, %v6924
        %6927 = vrot.lane.b32.xlu0 %v6887, 100
        %v6928 = vpop.permute.xlu0 %6927
        %6929 = vrot.lane.b32.xlu0 %v6888, 100
        %v6930 = vpop.permute.xlu0 %6929
        %v6931 = vsel %vm3850, %v6928, %v6930
        %s6933 = scalar_lea.vmem %s15, 96
        %v6934 = vld [vmem:[%s6933] sm:$0xf]
        %v6935 = vld [vmem:[%s6933 + $0x4] sm:$0xf]
        %v6938 = vunpack.c.l.b16 %v6934
        %v6939 = vunpack.c.l.b16 %v6935
        %v6940 = vpack.c.b16 %v6939, %v6938
        %6942 = vmatprep.subr.bf16.mxu0 0
        %6943 = vmatpush1.bf16.msra.mxu0 %v6490
        %6944 = vmatprep.subr.bf16.mxu0 0
        %6945 = vmatpush1.bf16.msra.mxu0 %v6895
        %6946 = vmatprep.subr.bf16.mxu0 0
        %6947 = vmatpush1.bf16.msra.mxu0 %v6901
        %6948 = vmatprep.subr.bf16.mxu0 0
        %6949 = vmatpush1.bf16.msra.mxu0 %v6907
        %6950 = vmatprep.subr.bf16.mxu0 0
        %6951 = vmatpush1.bf16.msra.mxu0 %v6913
        %6952 = vmatprep.subr.bf16.mxu0 0
        %6953 = vmatpush1.bf16.msra.mxu0 %v6919
        %6954 = vmatprep.subr.bf16.mxu0 0
        %6955 = vmatpush1.bf16.msra.mxu0 %v6925
        %6956 = vmatprep.subr.bf16.mxu0 0
        %6957 = vmatpush1.bf16.msra.mxu0 %v6931
        %6958 = vmatprep.subr.bf16.mxu0 0
        %6959 = vmatpush1.bf16.msra.mxu0 0
        %6960 = vmatprep.subr.bf16.mxu0 0
        %6961 = vmatpush1.bf16.msra.mxu0 0
        %6962 = vmatprep.subr.bf16.mxu0 0
        %6963 = vmatpush1.bf16.msra.mxu0 0
        %6964 = vmatprep.subr.bf16.mxu0 0
        %6965 = vmatpush1.bf16.msra.mxu0 0
        %6966 = vmatprep.subr.bf16.mxu0 0
        %6967 = vmatpush1.bf16.msra.mxu0 0
        %6968 = vmatprep.subr.bf16.mxu0 0
        %6969 = vmatpush1.bf16.msra.mxu0 0
        %6970 = vmatprep.subr.bf16.mxu0 0
        %6971 = vmatpush1.bf16.msra.mxu0 0
        %6972 = vmatprep.subr.bf16.mxu0 0
        %6973 = vmatpush1.bf16.msra.mxu0 0
        %6974 = vmatprep.mubr.bf16.mxu0 0
        %6975 = vmatmul.mubr.bf16.gmra.mrb[0].mxu0 %v6940
        %v6976 = vpop.f32.mrb[0].mxu0
        %v6977 = vadd.f32 0.0, %v6976
        %v6978 = vpop.f32.mrb[0].mxu0
        %v6979 = vpop.f32.mrb[0].mxu0
        %v6980 = vadd.f32 0.0, %v6979
        %v6981 = vpop.f32.mrb[0].mxu0
        %6982 = vdwg.mxu0
        %v6983 = vadd.f32 %v6885, %v6977
        %v6984 = vadd.f32 %v6886, %v6980
        %s6985 = scalar_lea.vmem %s15, 104
        %v6986 = vld [vmem:[%s6985] sm:$0xf]
        %v6987 = vld [vmem:[%s6985 + $0x4] sm:$0xf]
        %v6990 = vunpack.c.l.b16 %v6986
        %v6991 = vunpack.c.l.b16 %v6987
        %v6992 = vpack.c.b16 %v6991, %v6990
        %6994 = vrot.lane.b32.xlu0 %v6887, 96
        %v6995 = vpop.permute.xlu0 %6994
        %6996 = vrot.lane.b32.xlu0 %v6888, 96
        %v6997 = vpop.permute.xlu0 %6996
        %6998 = vrot.lane.b32.xlu0 %v6895, 96
        %v6999 = vpop.permute.xlu0 %6998
        %7000 = vrot.lane.b32.xlu0 %v6894, 96
        %v7001 = vpop.permute.xlu0 %7000
        %7002 = vrot.lane.b32.xlu0 %v6901, 96
        %v7003 = vpop.permute.xlu0 %7002
        %7004 = vrot.lane.b32.xlu0 %v6900, 96
        %v7005 = vpop.permute.xlu0 %7004
        %7006 = vrot.lane.b32.xlu0 %v6907, 96
        %v7007 = vpop.permute.xlu0 %7006
        %7008 = vrot.lane.b32.xlu0 %v6906, 96
        %v7009 = vpop.permute.xlu0 %7008
        %7010 = vrot.lane.b32.xlu0 %v6913, 96
        %v7011 = vpop.permute.xlu0 %7010
        %7012 = vrot.lane.b32.xlu0 %v6912, 96
        %v7013 = vpop.permute.xlu0 %7012
        %7014 = vrot.lane.b32.xlu0 %v6919, 96
        %v7015 = vpop.permute.xlu0 %7014
        %7016 = vrot.lane.b32.xlu0 %v6918, 96
        %v7017 = vpop.permute.xlu0 %7016
        %7018 = vrot.lane.b32.xlu0 %v6925, 96
        %v7019 = vpop.permute.xlu0 %7018
        %7020 = vrot.lane.b32.xlu0 %v6924, 96
        %v7021 = vpop.permute.xlu0 %7020
        %7022 = vrot.lane.b32.xlu0 %v6931, 96
        %v7023 = vpop.permute.xlu0 %7022
        %7024 = vrot.lane.b32.xlu0 %v6930, 96
        %v7025 = vpop.permute.xlu0 %7024
        %v7026 = vsel %vm3896, %v6995, %v6997
        %v7027 = vsel %vm3896, %v6999, %v7001
        %v7028 = vsel %vm3896, %v7003, %v7005
        %v7029 = vsel %vm3896, %v7007, %v7009
        %v7030 = vsel %vm3896, %v7011, %v7013
        %v7031 = vsel %vm3896, %v7015, %v7017
        %v7032 = vsel %vm3896, %v7019, %v7021
        %v7033 = vsel %vm3896, %v7023, %v7025
        %7042 = vmatprep.subr.bf16.mxu0 0
        %7043 = vmatpush1.bf16.msra.mxu0 %v7026
        %7044 = vmatprep.subr.bf16.mxu0 0
        %7045 = vmatpush1.bf16.msra.mxu0 %v7027
        %7046 = vmatprep.subr.bf16.mxu0 0
        %7047 = vmatpush1.bf16.msra.mxu0 %v7028
        %7048 = vmatprep.subr.bf16.mxu0 0
        %7049 = vmatpush1.bf16.msra.mxu0 %v7029
        %7050 = vmatprep.subr.bf16.mxu0 0
        %7051 = vmatpush1.bf16.msra.mxu0 %v7030
        %7052 = vmatprep.subr.bf16.mxu0 0
        %7053 = vmatpush1.bf16.msra.mxu0 %v7031
        %7054 = vmatprep.subr.bf16.mxu0 0
        %7055 = vmatpush1.bf16.msra.mxu0 %v7032
        %7056 = vmatprep.subr.bf16.mxu0 0
        %7057 = vmatpush1.bf16.msra.mxu0 %v7033
        %7058 = vmatprep.subr.bf16.mxu0 0
        %7059 = vmatpush1.bf16.msra.mxu0 0
        %7060 = vmatprep.subr.bf16.mxu0 0
        %7061 = vmatpush1.bf16.msra.mxu0 0
        %7062 = vmatprep.subr.bf16.mxu0 0
        %7063 = vmatpush1.bf16.msra.mxu0 0
        %7064 = vmatprep.subr.bf16.mxu0 0
        %7065 = vmatpush1.bf16.msra.mxu0 0
        %7066 = vmatprep.subr.bf16.mxu0 0
        %7067 = vmatpush1.bf16.msra.mxu0 0
        %7068 = vmatprep.subr.bf16.mxu0 0
        %7069 = vmatpush1.bf16.msra.mxu0 0
        %7070 = vmatprep.subr.bf16.mxu0 0
        %7071 = vmatpush1.bf16.msra.mxu0 0
        %7072 = vmatprep.subr.bf16.mxu0 0
        %7073 = vmatpush1.bf16.msra.mxu0 0
        %7074 = vmatprep.mubr.bf16.mxu0 0
        %7075 = vmatmul.mubr.bf16.gmra.mrb[0].mxu0 %v6992
        %v7076 = vpop.f32.mrb[0].mxu0
        %v7077 = vadd.f32 0.0, %v7076
        %v7078 = vpop.f32.mrb[0].mxu0
        %v7079 = vpop.f32.mrb[0].mxu0
        %v7080 = vadd.f32 0.0, %v7079
        %v7081 = vpop.f32.mrb[0].mxu0
        %7082 = vdwg.mxu0
        %v7083 = vadd.f32 %v6983, %v7077
        %v7084 = vadd.f32 %v6984, %v7080
        %s7085 = scalar_lea.vmem %s15, 112
        %v7086 = vld [vmem:[%s7085] sm:$0xf]
        %v7087 = vld [vmem:[%s7085 + $0x4] sm:$0xf]
        %v7090 = vunpack.c.l.b16 %v7086
        %v7091 = vunpack.c.l.b16 %v7087
        %v7092 = vpack.c.b16 %v7091, %v7090
        %7094 = vrot.lane.b32.xlu0 %v6887, 64
        %v7095 = vpop.permute.xlu0 %7094
        %7096 = vrot.lane.b32.xlu0 %v6888, 64
        %v7097 = vpop.permute.xlu0 %7096
        %7098 = vrot.lane.b32.xlu0 %v6895, 64
        %v7099 = vpop.permute.xlu0 %7098
        %7100 = vrot.lane.b32.xlu0 %v6894, 64
        %v7101 = vpop.permute.xlu0 %7100
        %7102 = vrot.lane.b32.xlu0 %v6901, 64
        %v7103 = vpop.permute.xlu0 %7102
        %7104 = vrot.lane.b32.xlu0 %v6900, 64
        %v7105 = vpop.permute.xlu0 %7104
        %7106 = vrot.lane.b32.xlu0 %v6907, 64
        %v7107 = vpop.permute.xlu0 %7106
        %7108 = vrot.lane.b32.xlu0 %v6906, 64
        %v7109 = vpop.permute.xlu0 %7108
        %7110 = vrot.lane.b32.xlu0 %v6913, 64
        %v7111 = vpop.permute.xlu0 %7110
        %7112 = vrot.lane.b32.xlu0 %v6912, 64
        %v7113 = vpop.permute.xlu0 %7112
        %7114 = vrot.lane.b32.xlu0 %v6919, 64
        %v7115 = vpop.permute.xlu0 %7114
        %7116 = vrot.lane.b32.xlu0 %v6918, 64
        %v7117 = vpop.permute.xlu0 %7116
        %7118 = vrot.lane.b32.xlu0 %v6925, 64
        %v7119 = vpop.permute.xlu0 %7118
        %7120 = vrot.lane.b32.xlu0 %v6924, 64
        %v7121 = vpop.permute.xlu0 %7120
        %7122 = vrot.lane.b32.xlu0 %v6931, 64
        %v7123 = vpop.permute.xlu0 %7122
        %7124 = vrot.lane.b32.xlu0 %v6930, 64
        %v7125 = vpop.permute.xlu0 %7124
        %v7126 = vsel %vm4042, %v7095, %v7097
        %v7127 = vsel %vm4042, %v7099, %v7101
        %v7128 = vsel %vm4042, %v7103, %v7105
        %v7129 = vsel %vm4042, %v7107, %v7109
        %v7130 = vsel %vm4042, %v7111, %v7113
        %v7131 = vsel %vm4042, %v7115, %v7117
        %v7132 = vsel %vm4042, %v7119, %v7121
        %v7133 = vsel %vm4042, %v7123, %v7125
        %7142 = vmatprep.subr.bf16.mxu0 0
        %7143 = vmatpush1.bf16.msra.mxu0 %v7126
        %7144 = vmatprep.subr.bf16.mxu0 0
        %7145 = vmatpush1.bf16.msra.mxu0 %v7127
        %7146 = vmatprep.subr.bf16.mxu0 0
        %7147 = vmatpush1.bf16.msra.mxu0 %v7128
        %7148 = vmatprep.subr.bf16.mxu0 0
        %7149 = vmatpush1.bf16.msra.mxu0 %v7129
        %7150 = vmatprep.subr.bf16.mxu0 0
        %7151 = vmatpush1.bf16.msra.mxu0 %v7130
        %7152 = vmatprep.subr.bf16.mxu0 0
        %7153 = vmatpush1.bf16.msra.mxu0 %v7131
        %7154 = vmatprep.subr.bf16.mxu0 0
        %7155 = vmatpush1.bf16.msra.mxu0 %v7132
        %7156 = vmatprep.subr.bf16.mxu0 0
        %7157 = vmatpush1.bf16.msra.mxu0 %v7133
        %7158 = vmatprep.subr.bf16.mxu0 0
        %7159 = vmatpush1.bf16.msra.mxu0 0
        %7160 = vmatprep.subr.bf16.mxu0 0
        %7161 = vmatpush1.bf16.msra.mxu0 0
        %7162 = vmatprep.subr.bf16.mxu0 0
        %7163 = vmatpush1.bf16.msra.mxu0 0
        %7164 = vmatprep.subr.bf16.mxu0 0
        %7165 = vmatpush1.bf16.msra.mxu0 0
        %7166 = vmatprep.subr.bf16.mxu0 0
        %7167 = vmatpush1.bf16.msra.mxu0 0
        %7168 = vmatprep.subr.bf16.mxu0 0
        %7169 = vmatpush1.bf16.msra.mxu0 0
        %7170 = vmatprep.subr.bf16.mxu0 0
        %7171 = vmatpush1.bf16.msra.mxu0 0
        %7172 = vmatprep.subr.bf16.mxu0 0
        %7173 = vmatpush1.bf16.msra.mxu0 0
        %7174 = vmatprep.mubr.bf16.mxu0 0
        %7175 = vmatmul.mubr.bf16.gmra.mrb[0].mxu0 %v7092
        %v7176 = vpop.f32.mrb[0].mxu0
        %v7177 = vadd.f32 0.0, %v7176
        %v7178 = vpop.f32.mrb[0].mxu0
        %v7179 = vpop.f32.mrb[0].mxu0
        %v7180 = vadd.f32 0.0, %v7179
        %v7181 = vpop.f32.mrb[0].mxu0
        %7182 = vdwg.mxu0
        %v7183 = vadd.f32 %v7083, %v7177
        %v7184 = vadd.f32 %v7084, %v7180
        %s7185 = scalar_lea.vmem %s15, 120
        %v7186 = vld [vmem:[%s7185] sm:$0xf]
        %v7187 = vld [vmem:[%s7185 + $0x4] sm:$0xf]
        %v7190 = vunpack.c.l.b16 %v7186
        %v7191 = vunpack.c.l.b16 %v7187
        %v7192 = vpack.c.b16 %v7191, %v7190
        %7194 = vrot.lane.b32.xlu0 %v6887, 32
        %v7195 = vpop.permute.xlu0 %7194
        %7196 = vrot.lane.b32.xlu0 %v6888, 32
        %v7197 = vpop.permute.xlu0 %7196
        %7198 = vrot.lane.b32.xlu0 %v6895, 32
        %v7199 = vpop.permute.xlu0 %7198
        %7200 = vrot.lane.b32.xlu0 %v6894, 32
        %v7201 = vpop.permute.xlu0 %7200
        %7202 = vrot.lane.b32.xlu0 %v6901, 32
        %v7203 = vpop.permute.xlu0 %7202
        %7204 = vrot.lane.b32.xlu0 %v6900, 32
        %v7205 = vpop.permute.xlu0 %7204
        %7206 = vrot.lane.b32.xlu0 %v6907, 32
        %v7207 = vpop.permute.xlu0 %7206
        %7208 = vrot.lane.b32.xlu0 %v6906, 32
        %v7209 = vpop.permute.xlu0 %7208
        %7210 = vrot.lane.b32.xlu0 %v6913, 32
        %v7211 = vpop.permute.xlu0 %7210
        %7212 = vrot.lane.b32.xlu0 %v6912, 32
        %v7213 = vpop.permute.xlu0 %7212
        %7214 = vrot.lane.b32.xlu0 %v6919, 32
        %v7215 = vpop.permute.xlu0 %7214
        %7216 = vrot.lane.b32.xlu0 %v6918, 32
        %v7217 = vpop.permute.xlu0 %7216
        %7218 = vrot.lane.b32.xlu0 %v6925, 32
        %v7219 = vpop.permute.xlu0 %7218
        %7220 = vrot.lane.b32.xlu0 %v6924, 32
        %v7221 = vpop.permute.xlu0 %7220
        %7222 = vrot.lane.b32.xlu0 %v6931, 32
        %v7223 = vpop.permute.xlu0 %7222
        %7224 = vrot.lane.b32.xlu0 %v6930, 32
        %v7225 = vpop.permute.xlu0 %7224
        %v7226 = vsel %vm3795, %v7195, %v7197
        %v7227 = vsel %vm3795, %v7199, %v7201
        %v7228 = vsel %vm3795, %v7203, %v7205
        %v7229 = vsel %vm3795, %v7207, %v7209
        %v7230 = vsel %vm3795, %v7211, %v7213
        %v7231 = vsel %vm3795, %v7215, %v7217
        %v7232 = vsel %vm3795, %v7219, %v7221
        %v7233 = vsel %vm3795, %v7223, %v7225
        %7242 = vmatprep.subr.bf16.mxu0 0
        %7243 = vmatpush1.bf16.msra.mxu0 %v7226
        %7244 = vmatprep.subr.bf16.mxu0 0
        %7245 = vmatpush1.bf16.msra.mxu0 %v7227
        %7246 = vmatprep.subr.bf16.mxu0 0
        %7247 = vmatpush1.bf16.msra.mxu0 %v7228
        %7248 = vmatprep.subr.bf16.mxu0 0
        %7249 = vmatpush1.bf16.msra.mxu0 %v7229
        %7250 = vmatprep.subr.bf16.mxu0 0
        %7251 = vmatpush1.bf16.msra.mxu0 %v7230
        %7252 = vmatprep.subr.bf16.mxu0 0
        %7253 = vmatpush1.bf16.msra.mxu0 %v7231
        %7254 = vmatprep.subr.bf16.mxu0 0
        %7255 = vmatpush1.bf16.msra.mxu0 %v7232
        %7256 = vmatprep.subr.bf16.mxu0 0
        %7257 = vmatpush1.bf16.msra.mxu0 %v7233
        %7258 = vmatprep.subr.bf16.mxu0 0
        %7259 = vmatpush1.bf16.msra.mxu0 0
        %7260 = vmatprep.subr.bf16.mxu0 0
        %7261 = vmatpush1.bf16.msra.mxu0 0
        %7262 = vmatprep.subr.bf16.mxu0 0
        %7263 = vmatpush1.bf16.msra.mxu0 0
        %7264 = vmatprep.subr.bf16.mxu0 0
        %7265 = vmatpush1.bf16.msra.mxu0 0
        %7266 = vmatprep.subr.bf16.mxu0 0
        %7267 = vmatpush1.bf16.msra.mxu0 0
        %7268 = vmatprep.subr.bf16.mxu0 0
        %7269 = vmatpush1.bf16.msra.mxu0 0
        %7270 = vmatprep.subr.bf16.mxu0 0
        %7271 = vmatpush1.bf16.msra.mxu0 0
        %7272 = vmatprep.subr.bf16.mxu0 0
        %7273 = vmatpush1.bf16.msra.mxu0 0
        %7274 = vmatprep.mubr.bf16.mxu0 0
        %7275 = vmatmul.mubr.bf16.gmra.mrb[0].mxu0 %v7192
        %v7276 = vpop.f32.mrb[0].mxu0
        %v7277 = vadd.f32 0.0, %v7276
        %v7278 = vpop.f32.mrb[0].mxu0
        %v7279 = vpop.f32.mrb[0].mxu0
        %v7280 = vadd.f32 0.0, %v7279
        %v7281 = vpop.f32.mrb[0].mxu0
        %7282 = vdwg.mxu0
        %v7283 = vadd.f32 %v7183, %v7277
        %v7284 = vadd.f32 %v7184, %v7280
        %v7285 = vld [vmem:[%s16] sm:$0xf]
        %v7286 = vld [vmem:[%s16 + $0x4] sm:$0xf]
        %v7289 = vunpack.c.l.b16 %v7285
        %v7290 = vunpack.c.l.b16 %v7286
        %v7291 = vpack.c.b16 %v7290, %v7289
        %v7293 = vsel %vm2496, %v7291, 0
        %7295 = vmatprep.subr.bf16.mxu0 0
        %7296 = vmatpush1.bf16.msra.mxu0 %v6888
        %7297 = vmatprep.subr.bf16.mxu0 0
        %7298 = vmatpush1.bf16.msra.mxu0 0
        %7299 = vmatprep.subr.bf16.mxu0 0
        %7300 = vmatpush1.bf16.msra.mxu0 0
        %7301 = vmatprep.subr.bf16.mxu0 0
        %7302 = vmatpush1.bf16.msra.mxu0 0
        %7303 = vmatprep.subr.bf16.mxu0 0
        %7304 = vmatpush1.bf16.msra.mxu0 0
        %7305 = vmatprep.subr.bf16.mxu0 0
        %7306 = vmatpush1.bf16.msra.mxu0 0
        %7307 = vmatprep.subr.bf16.mxu0 0
        %7308 = vmatpush1.bf16.msra.mxu0 0
        %7309 = vmatprep.subr.bf16.mxu0 0
        %7310 = vmatpush1.bf16.msra.mxu0 0
        %7311 = vmatprep.subr.bf16.mxu0 0
        %7312 = vmatpush1.bf16.msra.mxu0 0
        %7313 = vmatprep.subr.bf16.mxu0 0
        %7314 = vmatpush1.bf16.msra.mxu0 0
        %7315 = vmatprep.subr.bf16.mxu0 0
        %7316 = vmatpush1.bf16.msra.mxu0 0
        %7317 = vmatprep.subr.bf16.mxu0 0
        %7318 = vmatpush1.bf16.msra.mxu0 0
        %7319 = vmatprep.subr.bf16.mxu0 0
        %7320 = vmatpush1.bf16.msra.mxu0 0
        %7321 = vmatprep.subr.bf16.mxu0 0
        %7322 = vmatpush1.bf16.msra.mxu0 0
        %7323 = vmatprep.subr.bf16.mxu0 0
        %7324 = vmatpush1.bf16.msra.mxu0 0
        %7325 = vmatprep.subr.bf16.mxu0 0
        %7326 = vmatpush1.bf16.msra.mxu0 0
        %7327 = vmatprep.mubr.bf16.mxu0 0
        %7328 = vmatmul.mubr.bf16.gmra.mrb[0].mxu0 %v7293
        %v7329 = vpop.f32.mrb[0].mxu0
        %v7330 = vadd.f32 0.0, %v7329
        %v7331 = vpop.f32.mrb[0].mxu0
        %v7332 = vpop.f32.mrb[0].mxu0
        %v7333 = vadd.f32 0.0, %v7332
        %v7334 = vpop.f32.mrb[0].mxu0
        %7335 = vdwg.mxu0
        %v7336 = vadd.f32 %v7283, %v7330
        %v7337 = vadd.f32 %v7284, %v7333
        %v7338 = vld [vmem:[%s17] sm:$0xff]
        %v7339 = vld [vmem:[%s17 + $0x8] sm:$0xff]
        %7341 = vset.pattern.permute.xlu0 0
        %7342 = vperm.xlu0 %7341, %v7338
        %v7343 = vpop.permute.xlu0 %7342
        %7346 = vset.pattern.permute.xlu0 0
        %7347 = vperm.xlu0 %7346, %v7339
        %v7348 = vpop.permute.xlu0 %7347
        %v7350 = vadd.f32 %v7336, %v7343
        %v7351 = vadd.f32 %v7337, %v7348
        %v7352 = vunpack.c.l.bf16 %v6888
        %v7353 = vunpack.c.h.bf16 %v6888
        %v7354 = vmax.f32 %v7350, 0.0
        %v7355 = vmax.f32 %v7351, 0.0
        %v7356 = vadd.f32 %v7354, %v7352
        %v7357 = vadd.f32 %v7355, %v7353
        %v7358 = vld [vmem:[%s18] sm:$0x1]
        %v7359 = vld [vmem:[#allocation8] sm:$0x1]
        %7361 = vset.pattern.permute.xlu0 0
        %7362 = vperm.xlu0 %7361, %v7359
        %v7363 = vpop.permute.xlu0 %7362
        %v7365 = vlaneseq
        %v7366 = vshrl.u32 %v7365, 7
        %v7367 = vsub.s32 0, %v7366
        %v7368 = vrot.slane %v7363, %v7367
        %v7370 = vsel %vm2496, %v7358, 0
        %7372 = vmatprep.subr.mxu0 0.0
        %7373 = vmatpush1.msra.mxu0 %v7356
        %7374 = vmatprep.subr.mxu0 0.0
        %7375 = vmatpush1.msra.mxu0 %v7357
        %7376 = vmatprep.subr.mxu0 0.0
        %7377 = vmatpush1.msra.mxu0 0.0
        %7378 = vmatprep.subr.mxu0 0.0
        %7379 = vmatpush1.msra.mxu0 0.0
        %7380 = vmatprep.subr.mxu0 0.0
        %7381 = vmatpush1.msra.mxu0 0.0
        %7382 = vmatprep.subr.mxu0 0.0
        %7383 = vmatpush1.msra.mxu0 0.0
        %7384 = vmatprep.subr.mxu0 0.0
        %7385 = vmatpush1.msra.mxu0 0.0
        %7386 = vmatprep.subr.mxu0 0.0
        %7387 = vmatpush1.msra.mxu0 0.0
        %7388 = vmatprep.subr.mxu0 0.0
        %7389 = vmatpush1.msra.mxu0 0.0
        %7390 = vmatprep.subr.mxu0 0.0
        %7391 = vmatpush1.msra.mxu0 0.0
        %7392 = vmatprep.subr.mxu0 0.0
        %7393 = vmatpush1.msra.mxu0 0.0
        %7394 = vmatprep.subr.mxu0 0.0
        %7395 = vmatpush1.msra.mxu0 0.0
        %7396 = vmatprep.subr.mxu0 0.0
        %7397 = vmatpush1.msra.mxu0 0.0
        %7398 = vmatprep.subr.mxu0 0.0
        %7399 = vmatpush1.msra.mxu0 0.0
        %7400 = vmatprep.subr.mxu0 0.0
        %7401 = vmatpush1.msra.mxu0 0.0
        %7402 = vmatprep.subr.mxu0 0.0
        %7403 = vmatpush1.msra.mxu0 0.0
        %7404 = vmatprep.subr.mxu0 0.0
        %7405 = vmatpush1.msra.mxu0 0.0
        %7406 = vmatprep.subr.mxu0 0.0
        %7407 = vmatpush1.msra.mxu0 0.0
        %7408 = vmatprep.subr.mxu0 0.0
        %7409 = vmatpush1.msra.mxu0 0.0
        %7410 = vmatprep.subr.mxu0 0.0
        %7411 = vmatpush1.msra.mxu0 0.0
        %7412 = vmatprep.subr.mxu0 0.0
        %7413 = vmatpush1.msra.mxu0 0.0
        %7414 = vmatprep.subr.mxu0 0.0
        %7415 = vmatpush1.msra.mxu0 0.0
        %7416 = vmatprep.subr.mxu0 0.0
        %7417 = vmatpush1.msra.mxu0 0.0
        %7418 = vmatprep.subr.mxu0 0.0
        %7419 = vmatpush1.msra.mxu0 0.0
        %7420 = vmatprep.subr.mxu0 0.0
        %7421 = vmatpush1.msra.mxu0 0.0
        %7422 = vmatprep.subr.mxu0 0.0
        %7423 = vmatpush1.msra.mxu0 0.0
        %7424 = vmatprep.subr.mxu0 0.0
        %7425 = vmatpush1.msra.mxu0 0.0
        %7426 = vmatprep.subr.mxu0 0.0
        %7427 = vmatpush1.msra.mxu0 0.0
        %7428 = vmatprep.subr.mxu0 0.0
        %7429 = vmatpush1.msra.mxu0 0.0
        %7430 = vmatprep.subr.mxu0 0.0
        %7431 = vmatpush1.msra.mxu0 0.0
        %7432 = vmatprep.subr.mxu0 0.0
        %7433 = vmatpush1.msra.mxu0 0.0
        %7434 = vmatprep.subr.mxu0 0.0
        %7435 = vmatpush1.msra.mxu0 0.0
        %7436 = vmatprep.mubr.f32.mxu0 0.0
        %7437 = vmatmul.mubr.f32.gmra.mrb[0].mxu0 %v7370
        %v7438 = vpop.f32.mrb[0].mxu0
        %v7439 = vadd.f32 %v7368, %v7438
        %v7440 = vpop.f32.mrb[0].mxu0
        %7441 = vdwg.mxu0
        %7442 = vst [vmem:[#allocation7] sm:$0x1] %v7439
        %v7443 = vld [vmem:[#allocation7] sm:$0x1]
        %7444 = vst [vmem:[%s619] sm:$0x1] %v7443
        %s7445 = sand.u32 %s469, 1
        %s7446 = scalar_lea.sflag [#allocation10], %s7445
        %s7447 = sand.u32 %s469, 1
        %s7448 = scalar_lea.vmem [#allocation9], %s7447
        // Predicated region
        $region101: #{seq2seq_forward.1} parent=99 // pred_check
          %p7449 = pneg %p479
        $region102: #{seq2seq_forward.1} parent=99 // pred_check_branch
          %7451 = sbr.rel (%p7449) target = $region104
        $region103: #{seq2seq_forward.1} parent=99 // pred_region
          %s7453 = ssub.s32 16, 16
          %7454 = vsyncadd %s7446, %s7453
          %s7455 = smul.addr %s36, 16
          %s7456 = scalar_lea.hbm %s20, %s7455
          %s7458 = sshll.u32 %s7448, 4
          %s7459 = int_to_ptr.vmem [resolvable:$true] %s7458
          %7461 = dma.vmem_to_hbm [thread:$0]  %s7459, 16, %s7456, %s7446
        $region104: #{seq2seq_forward.1} parent=99 // pred_fallthru
          _
      $region100: #{seq2seq_forward.1} parent=5 // pred_fallthru
        _
      %p7462 = scmp.le.s32.totalorder 2, %s31
      // Predicated region
      $region105: #{seq2seq_forward.1} parent=5 // pred_check
        %p7463 = pneg %p7462
      $region106: #{seq2seq_forward.1} parent=5 // pred_check_branch
        %7465 = sbr.rel (%p7463) target = $region108
      $region107: #{seq2seq_forward.1} parent=5 // pred_region
        %s7466 = ssub.s32 %s31, 2
        // Predicated region
        $region109: #{seq2seq_forward.1} parent=107 // pred_check
          %p7467 = pneg %p485
        $region110: #{seq2seq_forward.1} parent=107 // pred_check_branch
          %7469 = sbr.rel (%p7467) target = $region112
        $region111: #{seq2seq_forward.1} parent=107 // pred_region
          %s7470 = sand.u32 %s470, 1
          %s7471 = scalar_lea.sflag [#allocation10], %s7470
          %s7472 = sand.u32 %s470, 1
          %s7473 = scalar_lea.vmem [#allocation9], %s7472
          %7474 = dma.done %s7471, 16
        $region112: #{seq2seq_forward.1} parent=107 // pred_fallthru
          _
      $region108: #{seq2seq_forward.1} parent=5 // pred_fallthru
        _
    $region6: #{seq2seq_forward.1} parent=1 // loop_footer
      %s35 = sadd.s32 1, %s31
    $region7: #{seq2seq_forward.1} parent=1 // loop_footer_branch
      %30 = sbr.rel target = $region3
    $region8: #{seq2seq_forward.1} parent=1 // loop_exit
      _
    %7475 = vsyncpa [#allocation10], 1
    %s7476 = scalar_lea.sflag [#allocation10], 1
    %7477 = vsyncpa %s7476, 1

</llo_original>
